<compile_context>
chip_gen: v7x
topology: tpu7x:2x2x1
jax: 0.10.0
libtpu: 0.0.40
codegen_flags: <defaults>
</compile_context>

<pallas_src>
import jax
import jax.numpy as jnp
import numpy as np
from jax.experimental import pallas as pl
from jax.experimental.pallas import tpu as pltpu


_TAPS = [(dy, dx) for dy in range(3) for dx in range(3)]   # HWIO spatial order


# ----------------------------------------------------------------------------
# Fused per-image RDB kernel (built by a factory so block structure is static)
# ----------------------------------------------------------------------------
def _make_rdb_kernel(H, W, G0, C, G):
    HW = H * W
    blk_ch = [G0] + [G] * C                  # channels per dense block
    blk_off = [0]
    for c in blk_ch:
        blk_off.append(blk_off[-1] + c)
    CF = blk_off[C]                          # channels that feed later convs
    dims = (((1,), (0,)), ((), ()))
    f32 = jnp.float32

    def im2col_group(feat_ref, ch_off, cb):
        # 9 shifted views of one block's padded interior -> (HW, 9*cb).
        pieces = [
            feat_ref[dy:dy + H, dx:dx + W, ch_off:ch_off + cb].reshape(HW, cb)
            for (dy, dx) in _TAPS
        ]
        return jnp.concatenate(pieces, axis=-1)

    def kernel(*refs):
        x_ref = refs[0]                       # (H, W, G0)   this image
        conv_refs = refs[1:1 + 2 * C]         # (wp_i (9*cin_i, G), b_i (1, G))
        w_lff_ref = refs[1 + 2 * C]           # (Ctot, G0)
        b_lff_ref = refs[2 + 2 * C]           # (1, G0)
        o_ref = refs[3 + 2 * C]               # (H, W*G0)    lane-dense output
        feat_ref = refs[4 + 2 * C]            # (H+2, W+2, CF) f32 padded feats
        cols_ref = refs[5 + 2 * C]            # (HW, 9*CF)     f32 im2col
        lff_ref = refs[6 + 2 * C]             # (H, W, G0)     f32 LFF acc

        # --- zero ONLY the 1-pixel halo (interior is always overwritten) ----
        feat_ref[0:1, :, :] = jnp.zeros((1, W + 2, CF), f32)
        feat_ref[H + 1:H + 2, :, :] = jnp.zeros((1, W + 2, CF), f32)
        feat_ref[:, 0:1, :] = jnp.zeros((H + 2, 1, CF), f32)
        feat_ref[:, W + 1:W + 2, :] = jnp.zeros((H + 2, 1, CF), f32)

        # --- dense block 0 = the input ---------------------------------------
        xf = x_ref[...].astype(f32)                       # (H, W, G0)
        feat_ref[1:H + 1, 1:W + 1, 0:G0] = xf
        cols_ref[:, 0:9 * G0] = im2col_group(feat_ref, 0, G0)

        # LFF folded into the pipeline: init accumulator with input + bias.
        lff_ref[...] = (
            jax.lax.dot_general(xf.reshape(HW, G0), w_lff_ref[0:G0, :], dims,
                                preferred_element_type=f32).reshape(H, W, G0)
            + b_lff_ref[...].astype(f32))

        # --- C dense stages: one deep-K MXU matmul per stage ------------------
        for i in range(C):
            cin = blk_off[i + 1]              # = G0 + i*G
            K = 9 * cin
            wp_ref = conv_refs[2 * i]         # (9*cin, G) packed taps
            b_ref = conv_refs[2 * i + 1]      # (1, G)

            y = jax.lax.dot_general(cols_ref[:, 0:K], wp_ref[...], dims,
                                    preferred_element_type=f32)     # (HW, G)
            y = y + b_ref[...].astype(f32)
            y = jnp.maximum(y, 0.1 * y)       # LeakyReLU(0.1)

            off = blk_off[i + 1]              # channel offset of this block
            lff_ref[...] = lff_ref[...] + jax.lax.dot_general(
                y, w_lff_ref[off:off + G, :], dims,
                preferred_element_type=f32).reshape(H, W, G0)

            if i < C - 1:                     # last stage feeds only the LFF
                feat_ref[1:H + 1, 1:W + 1, off:off + G] = y.reshape(H, W, G)
                cols_ref[:, 9 * off:9 * off + 9 * G] = (
                    im2col_group(feat_ref, off, G))

        # --- residual add + ONE lane-dense (H, W*G0) store --------------------
        pieces = [lff_ref[:, w, :] + x_ref[:, w, :].astype(f32)
                  for w in range(W)]
        o_ref[...] = jnp.concatenate(pieces, axis=-1).astype(o_ref.dtype)

    return kernel


# ----------------------------------------------------------------------------
# Wrapper: one pallas_call, grid over the batch dim
# ----------------------------------------------------------------------------
def rdb_forward(params, x_nhwc):
    """x_nhwc: (N, H, W, G0) -> (N, H, W, G0)."""
    N, H, W, G0 = x_nhwc.shape
    C = len(params["convs"])
    G = params["convs"][0][0].shape[-1]
    blk_ch = [G0] + [G] * C
    blk_off = [0]
    for c in blk_ch:
        blk_off.append(blk_off[-1] + c)
    Ctot = blk_off[C + 1]
    CF = blk_off[C]
    HW = H * W
    dtype = x_nhwc.dtype
    f32 = jnp.float32

    # Pack the 9 taps of every conv into (9*cin_i, G), rows grouped per dense
    # block to match the im2col column layout (block s, tap dy*3+dx, channel).
    inputs = [x_nhwc]
    in_specs = [pl.BlockSpec((None, H, W, G0), lambda n: (n, 0, 0, 0))]
    for i, (w, b) in enumerate(params["convs"]):
        wp = jnp.concatenate(
            [w[:, :, blk_off[s]:blk_off[s] + blk_ch[s], :]
             .reshape(9 * blk_ch[s], G) for s in range(i + 1)],
            axis=0).astype(f32)                               # (9*cin_i, G)
        inputs.append(wp)
        in_specs.append(pl.BlockSpec(wp.shape, lambda n: (0, 0)))
        inputs.append(b.reshape(1, G).astype(f32))
        in_specs.append(pl.BlockSpec((1, G), lambda n: (0, 0)))
    w_lff, b_lff = params["lff"]
    inputs.append(w_lff.astype(f32))                          # (Ctot, G0)
    in_specs.append(pl.BlockSpec((Ctot, G0), lambda n: (0, 0)))
    inputs.append(b_lff.reshape(1, G0).astype(f32))           # (1, G0)
    in_specs.append(pl.BlockSpec((1, G0), lambda n: (0, 0)))

    scratch = [pltpu.VMEM((H + 2, W + 2, CF), f32),           # padded features
               pltpu.VMEM((HW, 9 * CF), f32),                 # im2col
               pltpu.VMEM((H, W, G0), f32)]                   # LFF accumulator

    # Advisory cost estimate so XLA schedules the fused call sensibly.
    flops = 0
    for i in range(C):
        flops += 2 * N * HW * 9 * blk_off[i + 1] * G
    flops += 2 * N * HW * Ctot * G0
    bytes_accessed = sum(int(np.prod(a.shape)) * a.dtype.itemsize for a in inputs)
    bytes_accessed += N * HW * G0 * x_nhwc.dtype.itemsize

    out2d = pl.pallas_call(
        _make_rdb_kernel(H, W, G0, C, G),
        out_shape=jax.ShapeDtypeStruct((N * H, W * G0), dtype),
        grid=(N,),
        in_specs=in_specs,
        out_specs=pl.BlockSpec((H, W * G0), lambda n: (n, 0)),
        scratch_shapes=scratch,
        compiler_params=pltpu.CompilerParams(
            dimension_semantics=("parallel",),
            vmem_limit_bytes=32 * 1024 * 1024),
        cost_estimate=pl.CostEstimate(flops=int(flops), transcendentals=0,
                                      bytes_accessed=int(bytes_accessed)),
    )(*inputs)
    # (N*H, W*G0) row-major == (N, H, W, G0) row-major -> free metadata reshape.
    return out2d.reshape(N, H, W, G0)


# ----------------------------------------------------------------------------
# Params + pure-JAX reference (matches PyTorch semantics) for validation
# ----------------------------------------------------------------------------
def init_rdb_params(key, G0, C, G, dtype=jnp.float32):
    params = {"convs": [], "lff": None}
    for i in range(C):
        cin = G0 + i * G
        key, kw, kb = jax.random.split(key, 3)
        w = jax.random.normal(kw, (3, 3, cin, G), dtype) * 0.05   # HWIO
        b = jax.random.normal(kb, (G,), dtype) * 0.05
        params["convs"].append((w, b))
    cin = G0 + C * G
    key, kw, kb = jax.random.split(key, 3)
    w = jax.random.normal(kw, (cin, G0), dtype) * 0.05
    b = jax.random.normal(kb, (G0,), dtype) * 0.05
    params["lff"] = (w, b)
    return params


def rdb_reference(params, x_nhwc):
    dn = ("NHWC", "HWIO", "NHWC")
    cur = x_nhwc
    for (w, b) in params["convs"]:
        y = jax.lax.conv_general_dilated(
            cur, w, window_strides=(1, 1), padding="SAME",
            dimension_numbers=dn) + b
        y = jnp.where(y >= 0, y, 0.1 * y)
        cur = jnp.concatenate([cur, y], axis=-1)
    w_lff, b_lff = params["lff"]
    y = jnp.einsum("nhwc,cg->nhwg", cur, w_lff) + b_lff
    return y + x_nhwc


# ----------------------------------------------------------------------------
if __name__ == "__main__":
    G0, C, G = 8, 3, 8
    N, H, W = 2, 16, 16

    key = jax.random.PRNGKey(0)
    key, kx = jax.random.split(key)
    # PyTorch input layout is NCHW: (N, G0, H, W); transpose to NHWC for TPU.
    x_nchw = jax.random.normal(kx, (N, G0, H, W), jnp.float32)
    x_nhwc = jnp.transpose(x_nchw, (0, 2, 3, 1))

    params = init_rdb_params(key, G0, C, G)

    out = jax.block_until_ready(jax.jit(rdb_forward)(params, x_nhwc))
    ref = jax.block_until_ready(rdb_reference(params, x_nhwc))
    if not np.allclose(np.asarray(out), np.asarray(ref), atol=1e-4, rtol=1e-4):
        raise AssertionError("Pallas RDB output mismatch vs reference")

    print("KERNEL_OK")
</pallas_src>

<mosaic_0001>
module attributes {stable_mosaic.version = 11 : i64} {
  func.func @kernel(%arg0: i32, %arg1: memref<1x16x16x8xf32, #tpu.memory_space<vmem>>, %arg2: memref<72x8xf32, #tpu.memory_space<vmem>>, %arg3: memref<1x8xf32, #tpu.memory_space<vmem>>, %arg4: memref<144x8xf32, #tpu.memory_space<vmem>>, %arg5: memref<1x8xf32, #tpu.memory_space<vmem>>, %arg6: memref<216x8xf32, #tpu.memory_space<vmem>>, %arg7: memref<1x8xf32, #tpu.memory_space<vmem>>, %arg8: memref<32x8xf32, #tpu.memory_space<vmem>>, %arg9: memref<1x8xf32, #tpu.memory_space<vmem>>, %arg10: memref<16x128xf32, #tpu.memory_space<vmem>>, %arg11: memref<18x18x24xf32, #tpu.memory_space<vmem>>, %arg12: memref<256x216xf32, #tpu.memory_space<vmem>>, %arg13: memref<16x16x8xf32, #tpu.memory_space<vmem>>) attributes {dimension_semantics = [#tpu.dimension_semantics<parallel>], iteration_bounds = array<i64: 2>, scalar_prefetch = 0 : i64, scratch_operands = 3 : i64, tpu.core_type = #tpu.core_type<tc>, window_params = [{transform_indices = @transform_0, window_bounds = array<i64: 1, 16, 16, 8>}, {pipeline_mode = #tpu.pipeline_mode<synchronous>, transform_indices = @transform_1, window_bounds = array<i64: 72, 8>}, {pipeline_mode = #tpu.pipeline_mode<synchronous>, transform_indices = @transform_2, window_bounds = array<i64: 1, 8>}, {pipeline_mode = #tpu.pipeline_mode<synchronous>, transform_indices = @transform_3, window_bounds = array<i64: 144, 8>}, {pipeline_mode = #tpu.pipeline_mode<synchronous>, transform_indices = @transform_4, window_bounds = array<i64: 1, 8>}, {pipeline_mode = #tpu.pipeline_mode<synchronous>, transform_indices = @transform_5, window_bounds = array<i64: 216, 8>}, {pipeline_mode = #tpu.pipeline_mode<synchronous>, transform_indices = @transform_6, window_bounds = array<i64: 1, 8>}, {pipeline_mode = #tpu.pipeline_mode<synchronous>, transform_indices = @transform_7, window_bounds = array<i64: 32, 8>}, {pipeline_mode = #tpu.pipeline_mode<synchronous>, transform_indices = @transform_8, window_bounds = array<i64: 1, 8>}, {transform_indices = @transform_9, window_bounds = array<i64: 16, 128>}]} {
    %cst = arith.constant 0.000000e+00 : f32
    %0 = vector.broadcast %cst : f32 to vector<1x18x24xf32>
    %c0 = arith.constant 0 : index
    %c0_0 = arith.constant 0 : index
    %c0_1 = arith.constant 0 : index
    %1 = vector.load %arg11[%c0, %c0_0, %c0_1] : memref<18x18x24xf32, #tpu.memory_space<vmem>>, vector<1x18x24xf32>
    tpu.vector_store %arg11[%c0, %c0_0, %c0_1], %0 {strides = array<i32>} : memref<18x18x24xf32, #tpu.memory_space<vmem>>, vector<1x18x24xf32>,
    %cst_2 = arith.constant 0.000000e+00 : f32
    %2 = vector.broadcast %cst_2 : f32 to vector<1x18x24xf32>
    %c17 = arith.constant 17 : index
    %c0_3 = arith.constant 0 : index
    %c0_4 = arith.constant 0 : index
    %3 = vector.load %arg11[%c17, %c0_3, %c0_4] : memref<18x18x24xf32, #tpu.memory_space<vmem>>, vector<1x18x24xf32>
    tpu.vector_store %arg11[%c17, %c0_3, %c0_4], %2 {strides = array<i32>} : memref<18x18x24xf32, #tpu.memory_space<vmem>>, vector<1x18x24xf32>,
    %cst_5 = arith.constant 0.000000e+00 : f32
    %4 = vector.broadcast %cst_5 : f32 to vector<18x1x24xf32>
    %c0_6 = arith.constant 0 : index
    %c0_7 = arith.constant 0 : index
    %c0_8 = arith.constant 0 : index
    %5 = vector.load %arg11[%c0_6, %c0_7, %c0_8] : memref<18x18x24xf32, #tpu.memory_space<vmem>>, vector<18x1x24xf32>
    tpu.vector_store %arg11[%c0_6, %c0_7, %c0_8], %4 {strides = array<i32>} : memref<18x18x24xf32, #tpu.memory_space<vmem>>, vector<18x1x24xf32>,
    %cst_9 = arith.constant 0.000000e+00 : f32
    %6 = vector.broadcast %cst_9 : f32 to vector<18x1x24xf32>
    %c0_10 = arith.constant 0 : index
    %c17_11 = arith.constant 17 : index
    %c0_12 = arith.constant 0 : index
    %7 = vector.load %arg11[%c0_10, %c17_11, %c0_12] : memref<18x18x24xf32, #tpu.memory_space<vmem>>, vector<18x1x24xf32>
    tpu.vector_store %arg11[%c0_10, %c17_11, %c0_12], %6 {strides = array<i32>} : memref<18x18x24xf32, #tpu.memory_space<vmem>>, vector<18x1x24xf32>,
    %c0_13 = arith.constant 0 : index
    %c0_14 = arith.constant 0 : index
    %c0_15 = arith.constant 0 : index
    %c0_16 = arith.constant 0 : index
    %8 = vector.load %arg1[%c0_13, %c0_14, %c0_15, %c0_16] : memref<1x16x16x8xf32, #tpu.memory_space<vmem>>, vector<1x16x16x8xf32>
    %9 = vector.shape_cast %8 : vector<1x16x16x8xf32> to vector<16x16x8xf32>
    %c1 = arith.constant 1 : index
    %c1_17 = arith.constant 1 : index
    %c0_18 = arith.constant 0 : index
    %10 = vector.load %arg11[%c1, %c1_17, %c0_18] : memref<18x18x24xf32, #tpu.memory_space<vmem>>, vector<16x16x8xf32>
    tpu.vector_store %arg11[%c1, %c1_17, %c0_18], %9 {strides = array<i32>} : memref<18x18x24xf32, #tpu.memory_space<vmem>>, vector<16x16x8xf32>,
    %c0_19 = arith.constant 0 : index
    %c0_20 = arith.constant 0 : index
    %c0_21 = arith.constant 0 : index
    %11 = vector.load %arg11[%c0_19, %c0_20, %c0_21] : memref<18x18x24xf32, #tpu.memory_space<vmem>>, vector<16x16x8xf32>
    %12 = vector.shape_cast %11 : vector<16x16x8xf32> to vector<256x8xf32>
    %c0_22 = arith.constant 0 : index
    %c1_23 = arith.constant 1 : index
    %c0_24 = arith.constant 0 : index
    %13 = vector.load %arg11[%c0_22, %c1_23, %c0_24] : memref<18x18x24xf32, #tpu.memory_space<vmem>>, vector<16x16x8xf32>
    %14 = vector.shape_cast %13 : vector<16x16x8xf32> to vector<256x8xf32>
    %c0_25 = arith.constant 0 : index
    %c2 = arith.constant 2 : index
    %c0_26 = arith.constant 0 : index
    %15 = vector.load %arg11[%c0_25, %c2, %c0_26] : memref<18x18x24xf32, #tpu.memory_space<vmem>>, vector<16x16x8xf32>
    %16 = vector.shape_cast %15 : vector<16x16x8xf32> to vector<256x8xf32>
    %c1_27 = arith.constant 1 : index
    %c0_28 = arith.constant 0 : index
    %c0_29 = arith.constant 0 : index
    %17 = vector.load %arg11[%c1_27, %c0_28, %c0_29] : memref<18x18x24xf32, #tpu.memory_space<vmem>>, vector<16x16x8xf32>
    %18 = vector.shape_cast %17 : vector<16x16x8xf32> to vector<256x8xf32>
    %c1_30 = arith.constant 1 : index
    %c1_31 = arith.constant 1 : index
    %c0_32 = arith.constant 0 : index
    %19 = vector.load %arg11[%c1_30, %c1_31, %c0_32] : memref<18x18x24xf32, #tpu.memory_space<vmem>>, vector<16x16x8xf32>
    %20 = vector.shape_cast %19 : vector<16x16x8xf32> to vector<256x8xf32>
    %c1_33 = arith.constant 1 : index
    %c2_34 = arith.constant 2 : index
    %c0_35 = arith.constant 0 : index
    %21 = vector.load %arg11[%c1_33, %c2_34, %c0_35] : memref<18x18x24xf32, #tpu.memory_space<vmem>>, vector<16x16x8xf32>
    %22 = vector.shape_cast %21 : vector<16x16x8xf32> to vector<256x8xf32>
    %c2_36 = arith.constant 2 : index
    %c0_37 = arith.constant 0 : index
    %c0_38 = arith.constant 0 : index
    %23 = vector.load %arg11[%c2_36, %c0_37, %c0_38] : memref<18x18x24xf32, #tpu.memory_space<vmem>>, vector<16x16x8xf32>
    %24 = vector.shape_cast %23 : vector<16x16x8xf32> to vector<256x8xf32>
    %c2_39 = arith.constant 2 : index
    %c1_40 = arith.constant 1 : index
    %c0_41 = arith.constant 0 : index
    %25 = vector.load %arg11[%c2_39, %c1_40, %c0_41] : memref<18x18x24xf32, #tpu.memory_space<vmem>>, vector<16x16x8xf32>
    %26 = vector.shape_cast %25 : vector<16x16x8xf32> to vector<256x8xf32>
    %c2_42 = arith.constant 2 : index
    %c2_43 = arith.constant 2 : index
    %c0_44 = arith.constant 0 : index
    %27 = vector.load %arg11[%c2_42, %c2_43, %c0_44] : memref<18x18x24xf32, #tpu.memory_space<vmem>>, vector<16x16x8xf32>
    %28 = vector.shape_cast %27 : vector<16x16x8xf32> to vector<256x8xf32>
    %29 = tpu.concatenate %12, %14, %16, %18, %20, %22, %24, %26, %28 in 1 : vector<256x8xf32>, vector<256x8xf32>, vector<256x8xf32>, vector<256x8xf32>, vector<256x8xf32>, vector<256x8xf32>, vector<256x8xf32>, vector<256x8xf32>, vector<256x8xf32> -> vector<256x72xf32>
    %c0_45 = arith.constant 0 : index
    %c0_46 = arith.constant 0 : index
    %30 = vector.load %arg12[%c0_45, %c0_46] : memref<256x216xf32, #tpu.memory_space<vmem>>, vector<256x72xf32>
    tpu.vector_store %arg12[%c0_45, %c0_46], %29 {strides = array<i32>} : memref<256x216xf32, #tpu.memory_space<vmem>>, vector<256x72xf32>,
    %31 = vector.shape_cast %9 : vector<16x16x8xf32> to vector<256x8xf32>
    %c0_47 = arith.constant 0 : index
    %c0_48 = arith.constant 0 : index
    %32 = vector.load %arg8[%c0_47, %c0_48] : memref<32x8xf32, #tpu.memory_space<vmem>>, vector<8x8xf32>
    %cst_49 = arith.constant dense<0.000000e+00> : vector<256x8xf32>
    %33 = tpu.matmul %31, %32, %cst_49 {dimension_numbers = #tpu.dot_dimension_numbers<[1], [0], [0], [1], [0, 0, 1, 1], [], []>} : vector<256x8xf32>, vector<8x8xf32>, vector<256x8xf32> -> vector<256x8xf32>
    %34 = vector.shape_cast %33 : vector<256x8xf32> to vector<16x16x8xf32>
    %c0_50 = arith.constant 0 : index
    %c0_51 = arith.constant 0 : index
    %35 = vector.load %arg9[%c0_50, %c0_51] : memref<1x8xf32, #tpu.memory_space<vmem>>, vector<1x8xf32>
    %36 = vector.shape_cast %35 : vector<1x8xf32> to vector<1x1x8xf32>
    %37 = vector.broadcast %36 : vector<1x1x8xf32> to vector<16x16x8xf32>
    %38 = arith.addf %34, %37 : vector<16x16x8xf32>
    %c0_52 = arith.constant 0 : index
    %c0_53 = arith.constant 0 : index
    %c0_54 = arith.constant 0 : index
    %39 = vector.load %arg13[%c0_52, %c0_53, %c0_54] : memref<16x16x8xf32, #tpu.memory_space<vmem>>, vector<16x16x8xf32>
    tpu.vector_store %arg13[%c0_52, %c0_53, %c0_54], %38 {strides = array<i32>} : memref<16x16x8xf32, #tpu.memory_space<vmem>>, vector<16x16x8xf32>,
    %c0_55 = arith.constant 0 : index
    %c0_56 = arith.constant 0 : index
    %40 = vector.load %arg12[%c0_55, %c0_56] : memref<256x216xf32, #tpu.memory_space<vmem>>, vector<256x72xf32>
    %c0_57 = arith.constant 0 : index
    %c0_58 = arith.constant 0 : index
    %41 = vector.load %arg2[%c0_57, %c0_58] : memref<72x8xf32, #tpu.memory_space<vmem>>, vector<72x8xf32>
    %cst_59 = arith.constant dense<0.000000e+00> : vector<256x8xf32>
    %42 = tpu.matmul %40, %41, %cst_59 {dimension_numbers = #tpu.dot_dimension_numbers<[1], [0], [0], [1], [0, 0, 1, 1], [], []>} : vector<256x72xf32>, vector<72x8xf32>, vector<256x8xf32> -> vector<256x8xf32>
    %c0_60 = arith.constant 0 : index
    %c0_61 = arith.constant 0 : index
    %43 = vector.load %arg3[%c0_60, %c0_61] : memref<1x8xf32, #tpu.memory_space<vmem>>, vector<1x8xf32>
    %44 = vector.broadcast %43 : vector<1x8xf32> to vector<256x8xf32>
    %45 = arith.addf %42, %44 : vector<256x8xf32>
    %cst_62 = arith.constant 1.000000e-01 : f32
    %46 = vector.broadcast %cst_62 : f32 to vector<256x8xf32>
    %47 = arith.mulf %46, %45 : vector<256x8xf32>
    %48 = arith.maximumf %45, %47 : vector<256x8xf32>
    %c0_63 = arith.constant 0 : index
    %c0_64 = arith.constant 0 : index
    %c0_65 = arith.constant 0 : index
    %49 = vector.load %arg13[%c0_63, %c0_64, %c0_65] : memref<16x16x8xf32, #tpu.memory_space<vmem>>, vector<16x16x8xf32>
    %c8 = arith.constant 8 : index
    %c0_66 = arith.constant 0 : index
    %50 = vector.load %arg8[%c8, %c0_66] : memref<32x8xf32, #tpu.memory_space<vmem>>, vector<8x8xf32>
    %cst_67 = arith.constant dense<0.000000e+00> : vector<256x8xf32>
    %51 = tpu.matmul %48, %50, %cst_67 {dimension_numbers = #tpu.dot_dimension_numbers<[1], [0], [0], [1], [0, 0, 1, 1], [], []>} : vector<256x8xf32>, vector<8x8xf32>, vector<256x8xf32> -> vector<256x8xf32>
    %52 = vector.shape_cast %51 : vector<256x8xf32> to vector<16x16x8xf32>
    %53 = arith.addf %49, %52 : vector<16x16x8xf32>
    %c0_68 = arith.constant 0 : index
    %c0_69 = arith.constant 0 : index
    %c0_70 = arith.constant 0 : index
    %54 = vector.load %arg13[%c0_68, %c0_69, %c0_70] : memref<16x16x8xf32, #tpu.memory_space<vmem>>, vector<16x16x8xf32>
    tpu.vector_store %arg13[%c0_68, %c0_69, %c0_70], %53 {strides = array<i32>} : memref<16x16x8xf32, #tpu.memory_space<vmem>>, vector<16x16x8xf32>,
    %55 = vector.shape_cast %48 : vector<256x8xf32> to vector<16x16x8xf32>
    %c1_71 = arith.constant 1 : index
    %c1_72 = arith.constant 1 : index
    %c8_73 = arith.constant 8 : index
    %56 = vector.load %arg11[%c1_71, %c1_72, %c8_73] : memref<18x18x24xf32, #tpu.memory_space<vmem>>, vector<16x16x8xf32>
    tpu.vector_store %arg11[%c1_71, %c1_72, %c8_73], %55 {strides = array<i32>} : memref<18x18x24xf32, #tpu.memory_space<vmem>>, vector<16x16x8xf32>,
    %c0_74 = arith.constant 0 : index
    %c0_75 = arith.constant 0 : index
    %c8_76 = arith.constant 8 : index
    %57 = vector.load %arg11[%c0_74, %c0_75, %c8_76] : memref<18x18x24xf32, #tpu.memory_space<vmem>>, vector<16x16x8xf32>
    %58 = vector.shape_cast %57 : vector<16x16x8xf32> to vector<256x8xf32>
    %c0_77 = arith.constant 0 : index
    %c1_78 = arith.constant 1 : index
    %c8_79 = arith.constant 8 : index
    %59 = vector.load %arg11[%c0_77, %c1_78, %c8_79] : memref<18x18x24xf32, #tpu.memory_space<vmem>>, vector<16x16x8xf32>
    %60 = vector.shape_cast %59 : vector<16x16x8xf32> to vector<256x8xf32>
    %c0_80 = arith.constant 0 : index
    %c2_81 = arith.constant 2 : index
    %c8_82 = arith.constant 8 : index
    %61 = vector.load %arg11[%c0_80, %c2_81, %c8_82] : memref<18x18x24xf32, #tpu.memory_space<vmem>>, vector<16x16x8xf32>
    %62 = vector.shape_cast %61 : vector<16x16x8xf32> to vector<256x8xf32>
    %c1_83 = arith.constant 1 : index
    %c0_84 = arith.constant 0 : index
    %c8_85 = arith.constant 8 : index
    %63 = vector.load %arg11[%c1_83, %c0_84, %c8_85] : memref<18x18x24xf32, #tpu.memory_space<vmem>>, vector<16x16x8xf32>
    %64 = vector.shape_cast %63 : vector<16x16x8xf32> to vector<256x8xf32>
    %c1_86 = arith.constant 1 : index
    %c1_87 = arith.constant 1 : index
    %c8_88 = arith.constant 8 : index
    %65 = vector.load %arg11[%c1_86, %c1_87, %c8_88] : memref<18x18x24xf32, #tpu.memory_space<vmem>>, vector<16x16x8xf32>
    %66 = vector.shape_cast %65 : vector<16x16x8xf32> to vector<256x8xf32>
    %c1_89 = arith.constant 1 : index
    %c2_90 = arith.constant 2 : index
    %c8_91 = arith.constant 8 : index
    %67 = vector.load %arg11[%c1_89, %c2_90, %c8_91] : memref<18x18x24xf32, #tpu.memory_space<vmem>>, vector<16x16x8xf32>
    %68 = vector.shape_cast %67 : vector<16x16x8xf32> to vector<256x8xf32>
    %c2_92 = arith.constant 2 : index
    %c0_93 = arith.constant 0 : index
    %c8_94 = arith.constant 8 : index
    %69 = vector.load %arg11[%c2_92, %c0_93, %c8_94] : memref<18x18x24xf32, #tpu.memory_space<vmem>>, vector<16x16x8xf32>
    %70 = vector.shape_cast %69 : vector<16x16x8xf32> to vector<256x8xf32>
    %c2_95 = arith.constant 2 : index
    %c1_96 = arith.constant 1 : index
    %c8_97 = arith.constant 8 : index
    %71 = vector.load %arg11[%c2_95, %c1_96, %c8_97] : memref<18x18x24xf32, #tpu.memory_space<vmem>>, vector<16x16x8xf32>
    %72 = vector.shape_cast %71 : vector<16x16x8xf32> to vector<256x8xf32>
    %c2_98 = arith.constant 2 : index
    %c2_99 = arith.constant 2 : index
    %c8_100 = arith.constant 8 : index
    %73 = vector.load %arg11[%c2_98, %c2_99, %c8_100] : memref<18x18x24xf32, #tpu.memory_space<vmem>>, vector<16x16x8xf32>
    %74 = vector.shape_cast %73 : vector<16x16x8xf32> to vector<256x8xf32>
    %75 = tpu.concatenate %58, %60, %62, %64, %66, %68, %70, %72, %74 in 1 : vector<256x8xf32>, vector<256x8xf32>, vector<256x8xf32>, vector<256x8xf32>, vector<256x8xf32>, vector<256x8xf32>, vector<256x8xf32>, vector<256x8xf32>, vector<256x8xf32> -> vector<256x72xf32>
    %c0_101 = arith.constant 0 : index
    %c72 = arith.constant 72 : index
    %76 = vector.load %arg12[%c0_101, %c72] : memref<256x216xf32, #tpu.memory_space<vmem>>, vector<256x72xf32>
    tpu.vector_store %arg12[%c0_101, %c72], %75 {strides = array<i32>} : memref<256x216xf32, #tpu.memory_space<vmem>>, vector<256x72xf32>,
    %c0_102 = arith.constant 0 : index
    %c0_103 = arith.constant 0 : index
    %77 = vector.load %arg12[%c0_102, %c0_103] : memref<256x216xf32, #tpu.memory_space<vmem>>, vector<256x144xf32>
    %c0_104 = arith.constant 0 : index
    %c0_105 = arith.constant 0 : index
    %78 = vector.load %arg4[%c0_104, %c0_105] : memref<144x8xf32, #tpu.memory_space<vmem>>, vector<144x8xf32>
    %cst_106 = arith.constant dense<0.000000e+00> : vector<256x8xf32>
    %79 = tpu.matmul %77, %78, %cst_106 {dimension_numbers = #tpu.dot_dimension_numbers<[1], [0], [0], [1], [0, 0, 1, 1], [], []>} : vector<256x144xf32>, vector<144x8xf32>, vector<256x8xf32> -> vector<256x8xf32>
    %c0_107 = arith.constant 0 : index
    %c0_108 = arith.constant 0 : index
    %80 = vector.load %arg5[%c0_107, %c0_108] : memref<1x8xf32, #tpu.memory_space<vmem>>, vector<1x8xf32>
    %81 = vector.broadcast %80 : vector<1x8xf32> to vector<256x8xf32>
    %82 = arith.addf %79, %81 : vector<256x8xf32>
    %cst_109 = arith.constant 1.000000e-01 : f32
    %83 = vector.broadcast %cst_109 : f32 to vector<256x8xf32>
    %84 = arith.mulf %83, %82 : vector<256x8xf32>
    %85 = arith.maximumf %82, %84 : vector<256x8xf32>
    %c0_110 = arith.constant 0 : index
    %c0_111 = arith.constant 0 : index
    %c0_112 = arith.constant 0 : index
    %86 = vector.load %arg13[%c0_110, %c0_111, %c0_112] : memref<16x16x8xf32, #tpu.memory_space<vmem>>, vector<16x16x8xf32>
    %c16 = arith.constant 16 : index
    %c0_113 = arith.constant 0 : index
    %87 = vector.load %arg8[%c16, %c0_113] : memref<32x8xf32, #tpu.memory_space<vmem>>, vector<8x8xf32>
    %cst_114 = arith.constant dense<0.000000e+00> : vector<256x8xf32>
    %88 = tpu.matmul %85, %87, %cst_114 {dimension_numbers = #tpu.dot_dimension_numbers<[1], [0], [0], [1], [0, 0, 1, 1], [], []>} : vector<256x8xf32>, vector<8x8xf32>, vector<256x8xf32> -> vector<256x8xf32>
    %89 = vector.shape_cast %88 : vector<256x8xf32> to vector<16x16x8xf32>
    %90 = arith.addf %86, %89 : vector<16x16x8xf32>
    %c0_115 = arith.constant 0 : index
    %c0_116 = arith.constant 0 : index
    %c0_117 = arith.constant 0 : index
    %91 = vector.load %arg13[%c0_115, %c0_116, %c0_117] : memref<16x16x8xf32, #tpu.memory_space<vmem>>, vector<16x16x8xf32>
    tpu.vector_store %arg13[%c0_115, %c0_116, %c0_117], %90 {strides = array<i32>} : memref<16x16x8xf32, #tpu.memory_space<vmem>>, vector<16x16x8xf32>,
    %92 = vector.shape_cast %85 : vector<256x8xf32> to vector<16x16x8xf32>
    %c1_118 = arith.constant 1 : index
    %c1_119 = arith.constant 1 : index
    %c16_120 = arith.constant 16 : index
    %93 = vector.load %arg11[%c1_118, %c1_119, %c16_120] : memref<18x18x24xf32, #tpu.memory_space<vmem>>, vector<16x16x8xf32>
    tpu.vector_store %arg11[%c1_118, %c1_119, %c16_120], %92 {strides = array<i32>} : memref<18x18x24xf32, #tpu.memory_space<vmem>>, vector<16x16x8xf32>,
    %c0_121 = arith.constant 0 : index
    %c0_122 = arith.constant 0 : index
    %c16_123 = arith.constant 16 : index
    %94 = vector.load %arg11[%c0_121, %c0_122, %c16_123] : memref<18x18x24xf32, #tpu.memory_space<vmem>>, vector<16x16x8xf32>
    %95 = vector.shape_cast %94 : vector<16x16x8xf32> to vector<256x8xf32>
    %c0_124 = arith.constant 0 : index
    %c1_125 = arith.constant 1 : index
    %c16_126 = arith.constant 16 : index
    %96 = vector.load %arg11[%c0_124, %c1_125, %c16_126] : memref<18x18x24xf32, #tpu.memory_space<vmem>>, vector<16x16x8xf32>
    %97 = vector.shape_cast %96 : vector<16x16x8xf32> to vector<256x8xf32>
    %c0_127 = arith.constant 0 : index
    %c2_128 = arith.constant 2 : index
    %c16_129 = arith.constant 16 : index
    %98 = vector.load %arg11[%c0_127, %c2_128, %c16_129] : memref<18x18x24xf32, #tpu.memory_space<vmem>>, vector<16x16x8xf32>
    %99 = vector.shape_cast %98 : vector<16x16x8xf32> to vector<256x8xf32>
    %c1_130 = arith.constant 1 : index
    %c0_131 = arith.constant 0 : index
    %c16_132 = arith.constant 16 : index
    %100 = vector.load %arg11[%c1_130, %c0_131, %c16_132] : memref<18x18x24xf32, #tpu.memory_space<vmem>>, vector<16x16x8xf32>
    %101 = vector.shape_cast %100 : vector<16x16x8xf32> to vector<256x8xf32>
    %c1_133 = arith.constant 1 : index
    %c1_134 = arith.constant 1 : index
    %c16_135 = arith.constant 16 : index
    %102 = vector.load %arg11[%c1_133, %c1_134, %c16_135] : memref<18x18x24xf32, #tpu.memory_space<vmem>>, vector<16x16x8xf32>
    %103 = vector.shape_cast %102 : vector<16x16x8xf32> to vector<256x8xf32>
    %c1_136 = arith.constant 1 : index
    %c2_137 = arith.constant 2 : index
    %c16_138 = arith.constant 16 : index
    %104 = vector.load %arg11[%c1_136, %c2_137, %c16_138] : memref<18x18x24xf32, #tpu.memory_space<vmem>>, vector<16x16x8xf32>
    %105 = vector.shape_cast %104 : vector<16x16x8xf32> to vector<256x8xf32>
    %c2_139 = arith.constant 2 : index
    %c0_140 = arith.constant 0 : index
    %c16_141 = arith.constant 16 : index
    %106 = vector.load %arg11[%c2_139, %c0_140, %c16_141] : memref<18x18x24xf32, #tpu.memory_space<vmem>>, vector<16x16x8xf32>
    %107 = vector.shape_cast %106 : vector<16x16x8xf32> to vector<256x8xf32>
    %c2_142 = arith.constant 2 : index
    %c1_143 = arith.constant 1 : index
    %c16_144 = arith.constant 16 : index
    %108 = vector.load %arg11[%c2_142, %c1_143, %c16_144] : memref<18x18x24xf32, #tpu.memory_space<vmem>>, vector<16x16x8xf32>
    %109 = vector.shape_cast %108 : vector<16x16x8xf32> to vector<256x8xf32>
    %c2_145 = arith.constant 2 : index
    %c2_146 = arith.constant 2 : index
    %c16_147 = arith.constant 16 : index
    %110 = vector.load %arg11[%c2_145, %c2_146, %c16_147] : memref<18x18x24xf32, #tpu.memory_space<vmem>>, vector<16x16x8xf32>
    %111 = vector.shape_cast %110 : vector<16x16x8xf32> to vector<256x8xf32>
    %112 = tpu.concatenate %95, %97, %99, %101, %103, %105, %107, %109, %111 in 1 : vector<256x8xf32>, vector<256x8xf32>, vector<256x8xf32>, vector<256x8xf32>, vector<256x8xf32>, vector<256x8xf32>, vector<256x8xf32>, vector<256x8xf32>, vector<256x8xf32> -> vector<256x72xf32>
    %c0_148 = arith.constant 0 : index
    %c144 = arith.constant 144 : index
    %113 = vector.load %arg12[%c0_148, %c144] : memref<256x216xf32, #tpu.memory_space<vmem>>, vector<256x72xf32>
    tpu.vector_store %arg12[%c0_148, %c144], %112 {strides = array<i32>} : memref<256x216xf32, #tpu.memory_space<vmem>>, vector<256x72xf32>,
    %c0_149 = arith.constant 0 : index
    %c0_150 = arith.constant 0 : index
    %114 = vector.load %arg12[%c0_149, %c0_150] : memref<256x216xf32, #tpu.memory_space<vmem>>, vector<256x216xf32>
    %c0_151 = arith.constant 0 : index
    %c0_152 = arith.constant 0 : index
    %115 = vector.load %arg6[%c0_151, %c0_152] : memref<216x8xf32, #tpu.memory_space<vmem>>, vector<216x8xf32>
    %cst_153 = arith.constant dense<0.000000e+00> : vector<256x8xf32>
    %116 = tpu.matmul %114, %115, %cst_153 {dimension_numbers = #tpu.dot_dimension_numbers<[1], [0], [0], [1], [0, 0, 1, 1], [], []>} : vector<256x216xf32>, vector<216x8xf32>, vector<256x8xf32> -> vector<256x8xf32>
    %c0_154 = arith.constant 0 : index
    %c0_155 = arith.constant 0 : index
    %117 = vector.load %arg7[%c0_154, %c0_155] : memref<1x8xf32, #tpu.memory_space<vmem>>, vector<1x8xf32>
    %118 = vector.broadcast %117 : vector<1x8xf32> to vector<256x8xf32>
    %119 = arith.addf %116, %118 : vector<256x8xf32>
    %cst_156 = arith.constant 1.000000e-01 : f32
    %120 = vector.broadcast %cst_156 : f32 to vector<256x8xf32>
    %121 = arith.mulf %120, %119 : vector<256x8xf32>
    %122 = arith.maximumf %119, %121 : vector<256x8xf32>
    %c0_157 = arith.constant 0 : index
    %c0_158 = arith.constant 0 : index
    %c0_159 = arith.constant 0 : index
    %123 = vector.load %arg13[%c0_157, %c0_158, %c0_159] : memref<16x16x8xf32, #tpu.memory_space<vmem>>, vector<16x16x8xf32>
    %c24 = arith.constant 24 : index
    %c0_160 = arith.constant 0 : index
    %124 = vector.load %arg8[%c24, %c0_160] : memref<32x8xf32, #tpu.memory_space<vmem>>, vector<8x8xf32>
    %cst_161 = arith.constant dense<0.000000e+00> : vector<256x8xf32>
    %125 = tpu.matmul %122, %124, %cst_161 {dimension_numbers = #tpu.dot_dimension_numbers<[1], [0], [0], [1], [0, 0, 1, 1], [], []>} : vector<256x8xf32>, vector<8x8xf32>, vector<256x8xf32> -> vector<256x8xf32>
    %126 = vector.shape_cast %125 : vector<256x8xf32> to vector<16x16x8xf32>
    %127 = arith.addf %123, %126 : vector<16x16x8xf32>
    %c0_162 = arith.constant 0 : index
    %c0_163 = arith.constant 0 : index
    %c0_164 = arith.constant 0 : index
    %128 = vector.load %arg13[%c0_162, %c0_163, %c0_164] : memref<16x16x8xf32, #tpu.memory_space<vmem>>, vector<16x16x8xf32>
    tpu.vector_store %arg13[%c0_162, %c0_163, %c0_164], %127 {strides = array<i32>} : memref<16x16x8xf32, #tpu.memory_space<vmem>>, vector<16x16x8xf32>,
    %c0_165 = arith.constant 0 : index
    %c0_166 = arith.constant 0 : index
    %c0_167 = arith.constant 0 : index
    %129 = vector.load %arg13[%c0_165, %c0_166, %c0_167] : memref<16x16x8xf32, #tpu.memory_space<vmem>>, vector<16x1x8xf32>
    %130 = vector.shape_cast %129 : vector<16x1x8xf32> to vector<16x8xf32>
    %c0_168 = arith.constant 0 : index
    %c0_169 = arith.constant 0 : index
    %c0_170 = arith.constant 0 : index
    %c0_171 = arith.constant 0 : index
    %131 = vector.load %arg1[%c0_168, %c0_169, %c0_170, %c0_171] : memref<1x16x16x8xf32, #tpu.memory_space<vmem>>, vector<1x16x1x8xf32>
    %132 = vector.shape_cast %131 : vector<1x16x1x8xf32> to vector<16x8xf32>
    %133 = arith.addf %130, %132 : vector<16x8xf32>
    %c0_172 = arith.constant 0 : index
    %c1_173 = arith.constant 1 : index
    %c0_174 = arith.constant 0 : index
    %134 = vector.load %arg13[%c0_172, %c1_173, %c0_174] : memref<16x16x8xf32, #tpu.memory_space<vmem>>, vector<16x1x8xf32>
    %135 = vector.shape_cast %134 : vector<16x1x8xf32> to vector<16x8xf32>
    %c0_175 = arith.constant 0 : index
    %c0_176 = arith.constant 0 : index
    %c1_177 = arith.constant 1 : index
    %c0_178 = arith.constant 0 : index
    %136 = vector.load %arg1[%c0_175, %c0_176, %c1_177, %c0_178] : memref<1x16x16x8xf32, #tpu.memory_space<vmem>>, vector<1x16x1x8xf32>
    %137 = vector.shape_cast %136 : vector<1x16x1x8xf32> to vector<16x8xf32>
    %138 = arith.addf %135, %137 : vector<16x8xf32>
    %c0_179 = arith.constant 0 : index
    %c2_180 = arith.constant 2 : index
    %c0_181 = arith.constant 0 : index
    %139 = vector.load %arg13[%c0_179, %c2_180, %c0_181] : memref<16x16x8xf32, #tpu.memory_space<vmem>>, vector<16x1x8xf32>
    %140 = vector.shape_cast %139 : vector<16x1x8xf32> to vector<16x8xf32>
    %c0_182 = arith.constant 0 : index
    %c0_183 = arith.constant 0 : index
    %c2_184 = arith.constant 2 : index
    %c0_185 = arith.constant 0 : index
    %141 = vector.load %arg1[%c0_182, %c0_183, %c2_184, %c0_185] : memref<1x16x16x8xf32, #tpu.memory_space<vmem>>, vector<1x16x1x8xf32>
    %142 = vector.shape_cast %141 : vector<1x16x1x8xf32> to vector<16x8xf32>
    %143 = arith.addf %140, %142 : vector<16x8xf32>
    %c0_186 = arith.constant 0 : index
    %c3 = arith.constant 3 : index
    %c0_187 = arith.constant 0 : index
    %144 = vector.load %arg13[%c0_186, %c3, %c0_187] : memref<16x16x8xf32, #tpu.memory_space<vmem>>, vector<16x1x8xf32>
    %145 = vector.shape_cast %144 : vector<16x1x8xf32> to vector<16x8xf32>
    %c0_188 = arith.constant 0 : index
    %c0_189 = arith.constant 0 : index
    %c3_190 = arith.constant 3 : index
    %c0_191 = arith.constant 0 : index
    %146 = vector.load %arg1[%c0_188, %c0_189, %c3_190, %c0_191] : memref<1x16x16x8xf32, #tpu.memory_space<vmem>>, vector<1x16x1x8xf32>
    %147 = vector.shape_cast %146 : vector<1x16x1x8xf32> to vector<16x8xf32>
    %148 = arith.addf %145, %147 : vector<16x8xf32>
    %c0_192 = arith.constant 0 : index
    %c4 = arith.constant 4 : index
    %c0_193 = arith.constant 0 : index
    %149 = vector.load %arg13[%c0_192, %c4, %c0_193] : memref<16x16x8xf32, #tpu.memory_space<vmem>>, vector<16x1x8xf32>
    %150 = vector.shape_cast %149 : vector<16x1x8xf32> to vector<16x8xf32>
    %c0_194 = arith.constant 0 : index
    %c0_195 = arith.constant 0 : index
    %c4_196 = arith.constant 4 : index
    %c0_197 = arith.constant 0 : index
    %151 = vector.load %arg1[%c0_194, %c0_195, %c4_196, %c0_197] : memref<1x16x16x8xf32, #tpu.memory_space<vmem>>, vector<1x16x1x8xf32>
    %152 = vector.shape_cast %151 : vector<1x16x1x8xf32> to vector<16x8xf32>
    %153 = arith.addf %150, %152 : vector<16x8xf32>
    %c0_198 = arith.constant 0 : index
    %c5 = arith.constant 5 : index
    %c0_199 = arith.constant 0 : index
    %154 = vector.load %arg13[%c0_198, %c5, %c0_199] : memref<16x16x8xf32, #tpu.memory_space<vmem>>, vector<16x1x8xf32>
    %155 = vector.shape_cast %154 : vector<16x1x8xf32> to vector<16x8xf32>
    %c0_200 = arith.constant 0 : index
    %c0_201 = arith.constant 0 : index
    %c5_202 = arith.constant 5 : index
    %c0_203 = arith.constant 0 : index
    %156 = vector.load %arg1[%c0_200, %c0_201, %c5_202, %c0_203] : memref<1x16x16x8xf32, #tpu.memory_space<vmem>>, vector<1x16x1x8xf32>
    %157 = vector.shape_cast %156 : vector<1x16x1x8xf32> to vector<16x8xf32>
    %158 = arith.addf %155, %157 : vector<16x8xf32>
    %c0_204 = arith.constant 0 : index
    %c6 = arith.constant 6 : index
    %c0_205 = arith.constant 0 : index
    %159 = vector.load %arg13[%c0_204, %c6, %c0_205] : memref<16x16x8xf32, #tpu.memory_space<vmem>>, vector<16x1x8xf32>
    %160 = vector.shape_cast %159 : vector<16x1x8xf32> to vector<16x8xf32>
    %c0_206 = arith.constant 0 : index
    %c0_207 = arith.constant 0 : index
    %c6_208 = arith.constant 6 : index
    %c0_209 = arith.constant 0 : index
    %161 = vector.load %arg1[%c0_206, %c0_207, %c6_208, %c0_209] : memref<1x16x16x8xf32, #tpu.memory_space<vmem>>, vector<1x16x1x8xf32>
    %162 = vector.shape_cast %161 : vector<1x16x1x8xf32> to vector<16x8xf32>
    %163 = arith.addf %160, %162 : vector<16x8xf32>
    %c0_210 = arith.constant 0 : index
    %c7 = arith.constant 7 : index
    %c0_211 = arith.constant 0 : index
    %164 = vector.load %arg13[%c0_210, %c7, %c0_211] : memref<16x16x8xf32, #tpu.memory_space<vmem>>, vector<16x1x8xf32>
    %165 = vector.shape_cast %164 : vector<16x1x8xf32> to vector<16x8xf32>
    %c0_212 = arith.constant 0 : index
    %c0_213 = arith.constant 0 : index
    %c7_214 = arith.constant 7 : index
    %c0_215 = arith.constant 0 : index
    %166 = vector.load %arg1[%c0_212, %c0_213, %c7_214, %c0_215] : memref<1x16x16x8xf32, #tpu.memory_space<vmem>>, vector<1x16x1x8xf32>
    %167 = vector.shape_cast %166 : vector<1x16x1x8xf32> to vector<16x8xf32>
    %168 = arith.addf %165, %167 : vector<16x8xf32>
    %c0_216 = arith.constant 0 : index
    %c8_217 = arith.constant 8 : index
    %c0_218 = arith.constant 0 : index
    %169 = vector.load %arg13[%c0_216, %c8_217, %c0_218] : memref<16x16x8xf32, #tpu.memory_space<vmem>>, vector<16x1x8xf32>
    %170 = vector.shape_cast %169 : vector<16x1x8xf32> to vector<16x8xf32>
    %c0_219 = arith.constant 0 : index
    %c0_220 = arith.constant 0 : index
    %c8_221 = arith.constant 8 : index
    %c0_222 = arith.constant 0 : index
    %171 = vector.load %arg1[%c0_219, %c0_220, %c8_221, %c0_222] : memref<1x16x16x8xf32, #tpu.memory_space<vmem>>, vector<1x16x1x8xf32>
    %172 = vector.shape_cast %171 : vector<1x16x1x8xf32> to vector<16x8xf32>
    %173 = arith.addf %170, %172 : vector<16x8xf32>
    %c0_223 = arith.constant 0 : index
    %c9 = arith.constant 9 : index
    %c0_224 = arith.constant 0 : index
    %174 = vector.load %arg13[%c0_223, %c9, %c0_224] : memref<16x16x8xf32, #tpu.memory_space<vmem>>, vector<16x1x8xf32>
    %175 = vector.shape_cast %174 : vector<16x1x8xf32> to vector<16x8xf32>
    %c0_225 = arith.constant 0 : index
    %c0_226 = arith.constant 0 : index
    %c9_227 = arith.constant 9 : index
    %c0_228 = arith.constant 0 : index
    %176 = vector.load %arg1[%c0_225, %c0_226, %c9_227, %c0_228] : memref<1x16x16x8xf32, #tpu.memory_space<vmem>>, vector<1x16x1x8xf32>
    %177 = vector.shape_cast %176 : vector<1x16x1x8xf32> to vector<16x8xf32>
    %178 = arith.addf %175, %177 : vector<16x8xf32>
    %c0_229 = arith.constant 0 : index
    %c10 = arith.constant 10 : index
    %c0_230 = arith.constant 0 : index
    %179 = vector.load %arg13[%c0_229, %c10, %c0_230] : memref<16x16x8xf32, #tpu.memory_space<vmem>>, vector<16x1x8xf32>
    %180 = vector.shape_cast %179 : vector<16x1x8xf32> to vector<16x8xf32>
    %c0_231 = arith.constant 0 : index
    %c0_232 = arith.constant 0 : index
    %c10_233 = arith.constant 10 : index
    %c0_234 = arith.constant 0 : index
    %181 = vector.load %arg1[%c0_231, %c0_232, %c10_233, %c0_234] : memref<1x16x16x8xf32, #tpu.memory_space<vmem>>, vector<1x16x1x8xf32>
    %182 = vector.shape_cast %181 : vector<1x16x1x8xf32> to vector<16x8xf32>
    %183 = arith.addf %180, %182 : vector<16x8xf32>
    %c0_235 = arith.constant 0 : index
    %c11 = arith.constant 11 : index
    %c0_236 = arith.constant 0 : index
    %184 = vector.load %arg13[%c0_235, %c11, %c0_236] : memref<16x16x8xf32, #tpu.memory_space<vmem>>, vector<16x1x8xf32>
    %185 = vector.shape_cast %184 : vector<16x1x8xf32> to vector<16x8xf32>
    %c0_237 = arith.constant 0 : index
    %c0_238 = arith.constant 0 : index
    %c11_239 = arith.constant 11 : index
    %c0_240 = arith.constant 0 : index
    %186 = vector.load %arg1[%c0_237, %c0_238, %c11_239, %c0_240] : memref<1x16x16x8xf32, #tpu.memory_space<vmem>>, vector<1x16x1x8xf32>
    %187 = vector.shape_cast %186 : vector<1x16x1x8xf32> to vector<16x8xf32>
    %188 = arith.addf %185, %187 : vector<16x8xf32>
    %c0_241 = arith.constant 0 : index
    %c12 = arith.constant 12 : index
    %c0_242 = arith.constant 0 : index
    %189 = vector.load %arg13[%c0_241, %c12, %c0_242] : memref<16x16x8xf32, #tpu.memory_space<vmem>>, vector<16x1x8xf32>
    %190 = vector.shape_cast %189 : vector<16x1x8xf32> to vector<16x8xf32>
    %c0_243 = arith.constant 0 : index
    %c0_244 = arith.constant 0 : index
    %c12_245 = arith.constant 12 : index
    %c0_246 = arith.constant 0 : index
    %191 = vector.load %arg1[%c0_243, %c0_244, %c12_245, %c0_246] : memref<1x16x16x8xf32, #tpu.memory_space<vmem>>, vector<1x16x1x8xf32>
    %192 = vector.shape_cast %191 : vector<1x16x1x8xf32> to vector<16x8xf32>
    %193 = arith.addf %190, %192 : vector<16x8xf32>
    %c0_247 = arith.constant 0 : index
    %c13 = arith.constant 13 : index
    %c0_248 = arith.constant 0 : index
    %194 = vector.load %arg13[%c0_247, %c13, %c0_248] : memref<16x16x8xf32, #tpu.memory_space<vmem>>, vector<16x1x8xf32>
    %195 = vector.shape_cast %194 : vector<16x1x8xf32> to vector<16x8xf32>
    %c0_249 = arith.constant 0 : index
    %c0_250 = arith.constant 0 : index
    %c13_251 = arith.constant 13 : index
    %c0_252 = arith.constant 0 : index
    %196 = vector.load %arg1[%c0_249, %c0_250, %c13_251, %c0_252] : memref<1x16x16x8xf32, #tpu.memory_space<vmem>>, vector<1x16x1x8xf32>
    %197 = vector.shape_cast %196 : vector<1x16x1x8xf32> to vector<16x8xf32>
    %198 = arith.addf %195, %197 : vector<16x8xf32>
    %c0_253 = arith.constant 0 : index
    %c14 = arith.constant 14 : index
    %c0_254 = arith.constant 0 : index
    %199 = vector.load %arg13[%c0_253, %c14, %c0_254] : memref<16x16x8xf32, #tpu.memory_space<vmem>>, vector<16x1x8xf32>
    %200 = vector.shape_cast %199 : vector<16x1x8xf32> to vector<16x8xf32>
    %c0_255 = arith.constant 0 : index
    %c0_256 = arith.constant 0 : index
    %c14_257 = arith.constant 14 : index
    %c0_258 = arith.constant 0 : index
    %201 = vector.load %arg1[%c0_255, %c0_256, %c14_257, %c0_258] : memref<1x16x16x8xf32, #tpu.memory_space<vmem>>, vector<1x16x1x8xf32>
    %202 = vector.shape_cast %201 : vector<1x16x1x8xf32> to vector<16x8xf32>
    %203 = arith.addf %200, %202 : vector<16x8xf32>
    %c0_259 = arith.constant 0 : index
    %c15 = arith.constant 15 : index
    %c0_260 = arith.constant 0 : index
    %204 = vector.load %arg13[%c0_259, %c15, %c0_260] : memref<16x16x8xf32, #tpu.memory_space<vmem>>, vector<16x1x8xf32>
    %205 = vector.shape_cast %204 : vector<16x1x8xf32> to vector<16x8xf32>
    %c0_261 = arith.constant 0 : index
    %c0_262 = arith.constant 0 : index
    %c15_263 = arith.constant 15 : index
    %c0_264 = arith.constant 0 : index
    %206 = vector.load %arg1[%c0_261, %c0_262, %c15_263, %c0_264] : memref<1x16x16x8xf32, #tpu.memory_space<vmem>>, vector<1x16x1x8xf32>
    %207 = vector.shape_cast %206 : vector<1x16x1x8xf32> to vector<16x8xf32>
    %208 = arith.addf %205, %207 : vector<16x8xf32>
    %209 = tpu.concatenate %133, %138, %143, %148, %153, %158, %163, %168, %173, %178, %183, %188, %193, %198, %203, %208 in 1 : vector<16x8xf32>, vector<16x8xf32>, vector<16x8xf32>, vector<16x8xf32>, vector<16x8xf32>, vector<16x8xf32>, vector<16x8xf32>, vector<16x8xf32>, vector<16x8xf32>, vector<16x8xf32>, vector<16x8xf32>, vector<16x8xf32>, vector<16x8xf32>, vector<16x8xf32>, vector<16x8xf32>, vector<16x8xf32> -> vector<16x128xf32>
    %c0_265 = arith.constant 0 : index
    %c0_266 = arith.constant 0 : index
    %210 = vector.load %arg10[%c0_265, %c0_266] : memref<16x128xf32, #tpu.memory_space<vmem>>, vector<16x128xf32>
    tpu.vector_store %arg10[%c0_265, %c0_266], %209 {strides = array<i32>} : memref<16x128xf32, #tpu.memory_space<vmem>>, vector<16x128xf32>,
    return
  }
  func.func @transform_0(%arg0: i32) -> (i32, i32, i32, i32) {
    %c0_i32 = arith.constant 0 : i32
    %c0_i32_0 = arith.constant 0 : i32
    %c0_i32_1 = arith.constant 0 : i32
    %c0_i32_2 = arith.constant 0 : i32
    return %arg0, %c0_i32, %c0_i32_0, %c0_i32_1 : i32, i32, i32, i32
  }
  func.func @transform_1(%arg0: i32) -> (i32, i32) {
    %c0_i32 = arith.constant 0 : i32
    %c0_i32_0 = arith.constant 0 : i32
    %c0_i32_1 = arith.constant 0 : i32
    return %c0_i32, %c0_i32_0 : i32, i32
  }
  func.func @transform_2(%arg0: i32) -> (i32, i32) {
    %c0_i32 = arith.constant 0 : i32
    %c0_i32_0 = arith.constant 0 : i32
    %c0_i32_1 = arith.constant 0 : i32
    return %c0_i32, %c0_i32_0 : i32, i32
  }
  func.func @transform_3(%arg0: i32) -> (i32, i32) {
    %c0_i32 = arith.constant 0 : i32
    %c0_i32_0 = arith.constant 0 : i32
    %c0_i32_1 = arith.constant 0 : i32
    return %c0_i32, %c0_i32_0 : i32, i32
  }
  func.func @transform_4(%arg0: i32) -> (i32, i32) {
    %c0_i32 = arith.constant 0 : i32
    %c0_i32_0 = arith.constant 0 : i32
    %c0_i32_1 = arith.constant 0 : i32
    return %c0_i32, %c0_i32_0 : i32, i32
  }
  func.func @transform_5(%arg0: i32) -> (i32, i32) {
    %c0_i32 = arith.constant 0 : i32
    %c0_i32_0 = arith.constant 0 : i32
    %c0_i32_1 = arith.constant 0 : i32
    return %c0_i32, %c0_i32_0 : i32, i32
  }
  func.func @transform_6(%arg0: i32) -> (i32, i32) {
    %c0_i32 = arith.constant 0 : i32
    %c0_i32_0 = arith.constant 0 : i32
    %c0_i32_1 = arith.constant 0 : i32
    return %c0_i32, %c0_i32_0 : i32, i32
  }
  func.func @transform_7(%arg0: i32) -> (i32, i32) {
    %c0_i32 = arith.constant 0 : i32
    %c0_i32_0 = arith.constant 0 : i32
    %c0_i32_1 = arith.constant 0 : i32
    return %c0_i32, %c0_i32_0 : i32, i32
  }
  func.func @transform_8(%arg0: i32) -> (i32, i32) {
    %c0_i32 = arith.constant 0 : i32
    %c0_i32_0 = arith.constant 0 : i32
    %c0_i32_1 = arith.constant 0 : i32
    return %c0_i32, %c0_i32_0 : i32, i32
  }
  func.func @transform_9(%arg0: i32) -> (i32, i32) {
    %c0_i32 = arith.constant 0 : i32
    %c0_i32_0 = arith.constant 0 : i32
    return %arg0, %c0_i32 : i32, i32
  }
}

</mosaic_0001>

<llo_original>
// kernel: rdb_forward.1
$region0: #{rdb_forward.1}
  #allocation0 [shape = 'u32[]', space=smem, size = 0x4, offset = 0x4, fixed_abs, tag = 'smem constant byte address 0x4 - core index']
  #allocation1 [shape = 'u32[144,128]{1,0:T(1,128)}', space=vmem, size = 0x12000, scoped, tag = 'internal scratch']
  #allocation2 [shape = 'f32[18,18,24]{2,1,0:T(8,128)}', space=vmem, size = 0x36000, scoped, tag = 'scratch operand']
  #allocation3 [shape = 'f32[256,216]{1,0:T(8,128)}', space=vmem, size = 0x40000, scoped, tag = 'scratch operand']
  #allocation4 [shape = 'f32[16,16,8]{2,1,0:T(8,128)}', space=vmem, size = 0x20000, scoped, tag = 'scratch operand']
  %s0 = inlined_call_operand.vmem [shape: f32[2,16,16,8], index: 0, kind: input, shape index: {}]
  %s1 = inlined_call_operand.vmem [shape: f32[72,8], index: 1, kind: input, shape index: {}]
  %s2 = inlined_call_operand.vmem [shape: f32[1,8], index: 2, kind: input, shape index: {}]
  %s3 = inlined_call_operand.vmem [shape: f32[144,8], index: 3, kind: input, shape index: {}]
  %s4 = inlined_call_operand.vmem [shape: f32[1,8], index: 4, kind: input, shape index: {}]
  %s5 = inlined_call_operand.vmem [shape: f32[216,8], index: 5, kind: input, shape index: {}]
  %s6 = inlined_call_operand.vmem [shape: f32[1,8], index: 6, kind: input, shape index: {}]
  %s7 = inlined_call_operand.vmem [shape: f32[32,8], index: 7, kind: input, shape index: {}]
  %s8 = inlined_call_operand.vmem [shape: f32[1,8], index: 8, kind: input, shape index: {}]
  %s9 = inlined_call_operand.vmem [shape: f32[32,128], index: 9, kind: output, shape index: {}]
  %s10 = sld [smem:[#allocation0]]
  $region69: #{rdb_forward.1} parent=0
    _
  %s12 = ssub.s32 1, %s10
  %s13 = scalar_select 0, %s12, %s10
  loop: start=0, step=1, limit=4
  $region2: #{rdb_forward.1} parent=0 // loop_pre_header
    _
  $region3: #{rdb_forward.1} parent=0 // loop_header
    %s15 = sphi 0, %s19
    %p16 = scmp.ge.s32.totalorder %s15, 4
    %s25 = sphi 0, %s27
    %s28 = sphi 0, %s25
    %s29 = sphi 0, %s28
    %s45 = sphi 0, %s29
    %s49 = sphi 0, %s49
    %s51 = sphi 0, %s49
    %s52 = sphi 0, %s51
    %s66 = sphi 0, %s52
    %s70 = sphi 0, %s70
    %s72 = sphi 0, %s70
    %s73 = sphi 0, %s72
    %s87 = sphi 0, %s73
    %s91 = sphi 0, %s91
    %s93 = sphi 0, %s91
    %s94 = sphi 0, %s93
    %s108 = sphi 0, %s94
    %s112 = sphi 0, %s112
    %s114 = sphi 0, %s112
    %s115 = sphi 0, %s114
    %s129 = sphi 0, %s115
    %s133 = sphi 0, %s133
    %s135 = sphi 0, %s133
    %s136 = sphi 0, %s135
    %s150 = sphi 0, %s136
    %s154 = sphi 0, %s154
    %s156 = sphi 0, %s154
    %s157 = sphi 0, %s156
    %s171 = sphi 0, %s157
    %s175 = sphi 0, %s175
    %s177 = sphi 0, %s175
    %s178 = sphi 0, %s177
    %s192 = sphi 0, %s178
    %s196 = sphi 0, %s196
    %s198 = sphi 0, %s196
    %s199 = sphi 0, %s198
    %s213 = sphi 0, %s199
    %s219 = sphi 0, %s221
    %s222 = sphi 0, %s219
    %s223 = sphi 0, %s222
    %s239 = sphi 0, %s223
  $region4: #{rdb_forward.1} parent=0 // loop_header_branch
    %18 = sbr.rel (%p16) target = $region8
  $region5: #{rdb_forward.1} parent=0 // loop_body
    %s20 = ssub.s32 %s15, 1
    %s21 = ssub.s32 %s15, 2
    %s22 = sadd.s32 %s15, 1
    %s23 = ssub.s32 %s15, %s22
    %p24 = scmp.eq.s32.totalorder %s23, 0
    %s26 = sadd.s32 %s25, 1
    %s27 = scalar_select %p24, %s25, %s26
    %p30 = pneg %p24
    %p31 = scmp.eq.s32.totalorder %s15, 1
    %p32 = por %p30, %p31
    %p33 = scmp.ne.s32.totalorder %s25, %s28
    %p34 = scmp.eq.s32.totalorder %s15, 0
    %p35 = por %p33, %p34
    %p36 = scmp.ne.s32.totalorder %s25, %s28
    %p37 = scmp.eq.s32.totalorder %s20, 1
    %p38 = por %p36, %p37
    %p39 = scmp.ne.s32.totalorder %s28, %s29
    %p40 = scmp.eq.s32.totalorder %s20, 0
    %p41 = por %p39, %p40
    %p42 = scmp.ne.s32.totalorder %s28, %s29
    %p43 = scmp.eq.s32.totalorder %s21, 1
    %p44 = por %p42, %p43
    %p46 = scmp.ne.s32.totalorder %s29, %s45
    %p47 = scmp.eq.s32.totalorder %s21, 0
    %p48 = por %p46, %p47
    %s50 = sadd.s32 %s49, 1
    %p53 = scmp.eq.s32.totalorder %s15, 1
    %p54 = scmp.ne.s32.totalorder %s49, %s51
    %p55 = scmp.eq.s32.totalorder %s15, 0
    %p56 = por %p54, %p55
    %p57 = scmp.ne.s32.totalorder %s49, %s51
    %p58 = scmp.eq.s32.totalorder %s20, 1
    %p59 = por %p57, %p58
    %p60 = scmp.ne.s32.totalorder %s51, %s52
    %p61 = scmp.eq.s32.totalorder %s20, 0
    %p62 = por %p60, %p61
    %p63 = scmp.ne.s32.totalorder %s51, %s52
    %p64 = scmp.eq.s32.totalorder %s21, 1
    %p65 = por %p63, %p64
    %p67 = scmp.ne.s32.totalorder %s52, %s66
    %p68 = scmp.eq.s32.totalorder %s21, 0
    %p69 = por %p67, %p68
    %s71 = sadd.s32 %s70, 1
    %p74 = scmp.eq.s32.totalorder %s15, 1
    %p75 = scmp.ne.s32.totalorder %s70, %s72
    %p76 = scmp.eq.s32.totalorder %s15, 0
    %p77 = por %p75, %p76
    %p78 = scmp.ne.s32.totalorder %s70, %s72
    %p79 = scmp.eq.s32.totalorder %s20, 1
    %p80 = por %p78, %p79
    %p81 = scmp.ne.s32.totalorder %s72, %s73
    %p82 = scmp.eq.s32.totalorder %s20, 0
    %p83 = por %p81, %p82
    %p84 = scmp.ne.s32.totalorder %s72, %s73
    %p85 = scmp.eq.s32.totalorder %s21, 1
    %p86 = por %p84, %p85
    %p88 = scmp.ne.s32.totalorder %s73, %s87
    %p89 = scmp.eq.s32.totalorder %s21, 0
    %p90 = por %p88, %p89
    %s92 = sadd.s32 %s91, 1
    %p95 = scmp.eq.s32.totalorder %s15, 1
    %p96 = scmp.ne.s32.totalorder %s91, %s93
    %p97 = scmp.eq.s32.totalorder %s15, 0
    %p98 = por %p96, %p97
    %p99 = scmp.ne.s32.totalorder %s91, %s93
    %p100 = scmp.eq.s32.totalorder %s20, 1
    %p101 = por %p99, %p100
    %p102 = scmp.ne.s32.totalorder %s93, %s94
    %p103 = scmp.eq.s32.totalorder %s20, 0
    %p104 = por %p102, %p103
    %p105 = scmp.ne.s32.totalorder %s93, %s94
    %p106 = scmp.eq.s32.totalorder %s21, 1
    %p107 = por %p105, %p106
    %p109 = scmp.ne.s32.totalorder %s94, %s108
    %p110 = scmp.eq.s32.totalorder %s21, 0
    %p111 = por %p109, %p110
    %s113 = sadd.s32 %s112, 1
    %p116 = scmp.eq.s32.totalorder %s15, 1
    %p117 = scmp.ne.s32.totalorder %s112, %s114
    %p118 = scmp.eq.s32.totalorder %s15, 0
    %p119 = por %p117, %p118
    %p120 = scmp.ne.s32.totalorder %s112, %s114
    %p121 = scmp.eq.s32.totalorder %s20, 1
    %p122 = por %p120, %p121
    %p123 = scmp.ne.s32.totalorder %s114, %s115
    %p124 = scmp.eq.s32.totalorder %s20, 0
    %p125 = por %p123, %p124
    %p126 = scmp.ne.s32.totalorder %s114, %s115
    %p127 = scmp.eq.s32.totalorder %s21, 1
    %p128 = por %p126, %p127
    %p130 = scmp.ne.s32.totalorder %s115, %s129
    %p131 = scmp.eq.s32.totalorder %s21, 0
    %p132 = por %p130, %p131
    %s134 = sadd.s32 %s133, 1
    %p137 = scmp.eq.s32.totalorder %s15, 1
    %p138 = scmp.ne.s32.totalorder %s133, %s135
    %p139 = scmp.eq.s32.totalorder %s15, 0
    %p140 = por %p138, %p139
    %p141 = scmp.ne.s32.totalorder %s133, %s135
    %p142 = scmp.eq.s32.totalorder %s20, 1
    %p143 = por %p141, %p142
    %p144 = scmp.ne.s32.totalorder %s135, %s136
    %p145 = scmp.eq.s32.totalorder %s20, 0
    %p146 = por %p144, %p145
    %p147 = scmp.ne.s32.totalorder %s135, %s136
    %p148 = scmp.eq.s32.totalorder %s21, 1
    %p149 = por %p147, %p148
    %p151 = scmp.ne.s32.totalorder %s136, %s150
    %p152 = scmp.eq.s32.totalorder %s21, 0
    %p153 = por %p151, %p152
    %s155 = sadd.s32 %s154, 1
    %p158 = scmp.eq.s32.totalorder %s15, 1
    %p159 = scmp.ne.s32.totalorder %s154, %s156
    %p160 = scmp.eq.s32.totalorder %s15, 0
    %p161 = por %p159, %p160
    %p162 = scmp.ne.s32.totalorder %s154, %s156
    %p163 = scmp.eq.s32.totalorder %s20, 1
    %p164 = por %p162, %p163
    %p165 = scmp.ne.s32.totalorder %s156, %s157
    %p166 = scmp.eq.s32.totalorder %s20, 0
    %p167 = por %p165, %p166
    %p168 = scmp.ne.s32.totalorder %s156, %s157
    %p169 = scmp.eq.s32.totalorder %s21, 1
    %p170 = por %p168, %p169
    %p172 = scmp.ne.s32.totalorder %s157, %s171
    %p173 = scmp.eq.s32.totalorder %s21, 0
    %p174 = por %p172, %p173
    %s176 = sadd.s32 %s175, 1
    %p179 = scmp.eq.s32.totalorder %s15, 1
    %p180 = scmp.ne.s32.totalorder %s175, %s177
    %p181 = scmp.eq.s32.totalorder %s15, 0
    %p182 = por %p180, %p181
    %p183 = scmp.ne.s32.totalorder %s175, %s177
    %p184 = scmp.eq.s32.totalorder %s20, 1
    %p185 = por %p183, %p184
    %p186 = scmp.ne.s32.totalorder %s177, %s178
    %p187 = scmp.eq.s32.totalorder %s20, 0
    %p188 = por %p186, %p187
    %p189 = scmp.ne.s32.totalorder %s177, %s178
    %p190 = scmp.eq.s32.totalorder %s21, 1
    %p191 = por %p189, %p190
    %p193 = scmp.ne.s32.totalorder %s178, %s192
    %p194 = scmp.eq.s32.totalorder %s21, 0
    %p195 = por %p193, %p194
    %s197 = sadd.s32 %s196, 1
    %p200 = scmp.eq.s32.totalorder %s15, 1
    %p201 = scmp.ne.s32.totalorder %s196, %s198
    %p202 = scmp.eq.s32.totalorder %s15, 0
    %p203 = por %p201, %p202
    %p204 = scmp.ne.s32.totalorder %s196, %s198
    %p205 = scmp.eq.s32.totalorder %s20, 1
    %p206 = por %p204, %p205
    %p207 = scmp.ne.s32.totalorder %s198, %s199
    %p208 = scmp.eq.s32.totalorder %s20, 0
    %p209 = por %p207, %p208
    %p210 = scmp.ne.s32.totalorder %s198, %s199
    %p211 = scmp.eq.s32.totalorder %s21, 1
    %p212 = por %p210, %p211
    %p214 = scmp.ne.s32.totalorder %s199, %s213
    %p215 = scmp.eq.s32.totalorder %s21, 0
    %p216 = por %p214, %p215
    %s217 = ssub.s32 %s15, %s22
    %p218 = scmp.eq.s32.totalorder %s217, 0
    %s220 = sadd.s32 %s219, 1
    %s221 = scalar_select %p218, %s219, %s220
    %p224 = pneg %p218
    %p225 = scmp.eq.s32.totalorder %s15, 1
    %p226 = por %p224, %p225
    %p227 = scmp.ne.s32.totalorder %s219, %s222
    %p228 = scmp.eq.s32.totalorder %s15, 0
    %p229 = por %p227, %p228
    %p230 = scmp.ne.s32.totalorder %s219, %s222
    %p231 = scmp.eq.s32.totalorder %s20, 1
    %p232 = por %p230, %p231
    %p233 = scmp.ne.s32.totalorder %s222, %s223
    %p234 = scmp.eq.s32.totalorder %s20, 0
    %p235 = por %p233, %p234
    %p236 = scmp.ne.s32.totalorder %s222, %s223
    %p237 = scmp.eq.s32.totalorder %s21, 1
    %p238 = por %p236, %p237
    %p240 = scmp.ne.s32.totalorder %s223, %s239
    %p241 = scmp.eq.s32.totalorder %s21, 0
    %p242 = por %p240, %p241
    %p243 = scmp.le.s32.totalorder 1, %s15
    %p244 = scmp.lt.s32.totalorder %s15, 3
    %p245 = pnand %p243, %p244
    %p246 = pneg %p245
    // Predicated region
    $region9: #{rdb_forward.1} parent=5 // pred_check
      _
    $region10: #{rdb_forward.1} parent=5 // pred_check_branch
      %248 = sbr.rel (%p245) target = $region12
    $region11: #{rdb_forward.1} parent=5 // pred_region
      %s249 = ssub.s32 %s15, 1
      // Predicated region
      $region13: #{rdb_forward.1} parent=11 // pred_check
        %p250 = pneg %p62
      $region14: #{rdb_forward.1} parent=11 // pred_check_branch
        %252 = sbr.rel (%p250) target = $region16
      $region15: #{rdb_forward.1} parent=11 // pred_region
        _
      $region16: #{rdb_forward.1} parent=11 // pred_fallthru
        _
      // Predicated region
      $region17: #{rdb_forward.1} parent=11 // pred_check
        %p253 = pneg %p83
      $region18: #{rdb_forward.1} parent=11 // pred_check_branch
        %255 = sbr.rel (%p253) target = $region20
      $region19: #{rdb_forward.1} parent=11 // pred_region
        _
      $region20: #{rdb_forward.1} parent=11 // pred_fallthru
        _
      // Predicated region
      $region21: #{rdb_forward.1} parent=11 // pred_check
        %p256 = pneg %p104
      $region22: #{rdb_forward.1} parent=11 // pred_check_branch
        %258 = sbr.rel (%p256) target = $region24
      $region23: #{rdb_forward.1} parent=11 // pred_region
        _
      $region24: #{rdb_forward.1} parent=11 // pred_fallthru
        _
      // Predicated region
      $region25: #{rdb_forward.1} parent=11 // pred_check
        %p259 = pneg %p125
      $region26: #{rdb_forward.1} parent=11 // pred_check_branch
        %261 = sbr.rel (%p259) target = $region28
      $region27: #{rdb_forward.1} parent=11 // pred_region
        _
      $region28: #{rdb_forward.1} parent=11 // pred_fallthru
        _
      // Predicated region
      $region29: #{rdb_forward.1} parent=11 // pred_check
        %p262 = pneg %p146
      $region30: #{rdb_forward.1} parent=11 // pred_check_branch
        %264 = sbr.rel (%p262) target = $region32
      $region31: #{rdb_forward.1} parent=11 // pred_region
        _
      $region32: #{rdb_forward.1} parent=11 // pred_fallthru
        _
      // Predicated region
      $region33: #{rdb_forward.1} parent=11 // pred_check
        %p265 = pneg %p167
      $region34: #{rdb_forward.1} parent=11 // pred_check_branch
        %267 = sbr.rel (%p265) target = $region36
      $region35: #{rdb_forward.1} parent=11 // pred_region
        _
      $region36: #{rdb_forward.1} parent=11 // pred_fallthru
        _
      // Predicated region
      $region37: #{rdb_forward.1} parent=11 // pred_check
        %p268 = pneg %p188
      $region38: #{rdb_forward.1} parent=11 // pred_check_branch
        %270 = sbr.rel (%p268) target = $region40
      $region39: #{rdb_forward.1} parent=11 // pred_region
        _
      $region40: #{rdb_forward.1} parent=11 // pred_fallthru
        _
      // Predicated region
      $region41: #{rdb_forward.1} parent=11 // pred_check
        %p271 = pneg %p209
      $region42: #{rdb_forward.1} parent=11 // pred_check_branch
        %273 = sbr.rel (%p271) target = $region44
      $region43: #{rdb_forward.1} parent=11 // pred_region
        _
      $region44: #{rdb_forward.1} parent=11 // pred_fallthru
        _
    $region12: #{rdb_forward.1} parent=5 // pred_fallthru
      _
    %p274 = scmp.lt.s32.totalorder %s15, 2
    // Predicated region
    $region45: #{rdb_forward.1} parent=5 // pred_check
      %p275 = pneg %p274
    $region46: #{rdb_forward.1} parent=5 // pred_check_branch
      %277 = sbr.rel (%p275) target = $region48
    $region47: #{rdb_forward.1} parent=5 // pred_region
      // Predicated region
      $region49: #{rdb_forward.1} parent=47 // pred_check
        %p278 = pneg %p35
      $region50: #{rdb_forward.1} parent=47 // pred_check_branch
        %280 = sbr.rel (%p278) target = $region52
      $region51: #{rdb_forward.1} parent=47 // pred_region
        %p281 = scmp.lt.s32.totalorder %s15, 1
        %s282 = scalar_select %p281, %s15, 1
        %s283 = smul.addr %s282, 32
        %s284 = smul.addr %s283, 8
        %s285 = scalar_lea.vmem %s0, %s284
      $region52: #{rdb_forward.1} parent=47 // pred_fallthru
        _
    $region48: #{rdb_forward.1} parent=5 // pred_fallthru
      _
    %p286 = scmp.le.s32.totalorder 1, %s15
    %p287 = scmp.lt.s32.totalorder %s15, 3
    %p288 = pnand %p286, %p287
    %p289 = pneg %p288
    // Predicated region
    $region53: #{rdb_forward.1} parent=5 // pred_check
      _
    $region54: #{rdb_forward.1} parent=5 // pred_check_branch
      %291 = sbr.rel (%p288) target = $region56
    $region55: #{rdb_forward.1} parent=5 // pred_region
      %s292 = ssub.s32 %s15, 1
      %p293 = scmp.lt.s32.totalorder %s20, 1
      %s294 = scalar_select %p293, %s20, 1
      %s295 = smul.addr %s294, 32
      %s296 = smul.addr %s295, 8
      %s297 = scalar_lea.vmem %s0, %s296
      %p298 = pneg %p41
      %p299 = pneg %p38
      %p300 = pneg %p62
      %p301 = pneg %p59
      %p302 = pneg %p83
      %p303 = pneg %p80
      %p304 = pneg %p104
      %p305 = pneg %p101
      %p306 = pneg %p125
      %p307 = pneg %p122
      %p308 = pneg %p146
      %p309 = pneg %p143
      %p310 = pneg %p167
      %p311 = pneg %p164
      %p312 = pneg %p188
      %p313 = pneg %p185
      %p314 = pneg %p209
      %p315 = pneg %p206
      %p316 = pneg %p235
      %p317 = pneg %p232
      %s318 = smul.u32 2, %s20
      %p319 = scmp.lt.s32.totalorder %s318, 3
      %s320 = scalar_select %p319, %s318, 3
      %s321 = smul.addr %s320, 8
      %s322 = scalar_lea.vmem %s9, %s321
      %p323 = scmp.lt.s32.totalorder %s20, 1
      %s324 = scalar_select %p323, %s20, 1
      %s325 = smul.addr %s324, 32
      %s326 = smul.addr %s325, 8
      %s327 = scalar_lea.vmem %s0, %s326
      %s328 = smul.u32 2, %s20
      %p329 = scmp.lt.s32.totalorder %s328, 3
      %s330 = scalar_select %p329, %s328, 3
      %s331 = smul.addr %s330, 8
      %s332 = scalar_lea.vmem %s9, %s331
      %s333 = smul.u32 2, %s20
      %vm334 = vcmask 195584
      %335 = vst.msk [vmem:[#allocation2] sm:$0xff] %vm334, 0.0
      %336 = vst.msk [vmem:[#allocation2 + $0x8] sm:$0xff] %vm334, 0.0
      %vm337 = vcmask 189440
      %338 = vst.msk [vmem:[#allocation2 + $0x10] sm:$0x3] %vm337, 0.0
      %s339 = scalar_lea.vmem [#allocation2], 408
      %340 = vst.msk [vmem:[%s339] sm:$0xff] %vm334, 0.0
      %341 = vst.msk [vmem:[%s339 + $0x8] sm:$0xff] %vm334, 0.0
      %342 = vst.msk [vmem:[%s339 + $0x10] sm:$0x3] %vm337, 0.0
      %vm343 = vcmask 188416
      %344 = vst.msk [vmem:[#allocation2] sm:$0x1] %vm343, 0.0
      %345 = vst.msk [vmem:[#allocation2 + $0x18] sm:$0x1] %vm343, 0.0
      %346 = vst.msk [vmem:[#allocation2 + $0x30] sm:$0x1] %vm343, 0.0
      %347 = vst.msk [vmem:[#allocation2 + $0x48] sm:$0x1] %vm343, 0.0
      %348 = vst.msk [vmem:[#allocation2 + $0x60] sm:$0x1] %vm343, 0.0
      %349 = vst.msk [vmem:[#allocation2 + $0x78] sm:$0x1] %vm343, 0.0
      %350 = vst.msk [vmem:[#allocation2 + $0x90] sm:$0x1] %vm343, 0.0
      %351 = vst.msk [vmem:[#allocation2 + $0xa8] sm:$0x1] %vm343, 0.0
      %352 = vst.msk [vmem:[#allocation2 + $0xc0] sm:$0x1] %vm343, 0.0
      %353 = vst.msk [vmem:[#allocation2 + $0xd8] sm:$0x1] %vm343, 0.0
      %354 = vst.msk [vmem:[#allocation2 + $0xf0] sm:$0x1] %vm343, 0.0
      %355 = vst.msk [vmem:[#allocation2 + $0x108] sm:$0x1] %vm343, 0.0
      %356 = vst.msk [vmem:[#allocation2 + $0x120] sm:$0x1] %vm343, 0.0
      %357 = vst.msk [vmem:[#allocation2 + $0x138] sm:$0x1] %vm343, 0.0
      %358 = vst.msk [vmem:[#allocation2 + $0x150] sm:$0x1] %vm343, 0.0
      %359 = vst.msk [vmem:[#allocation2 + $0x168] sm:$0x1] %vm343, 0.0
      %360 = vst.msk [vmem:[#allocation2 + $0x180] sm:$0x1] %vm343, 0.0
      %361 = vst.msk [vmem:[#allocation2 + $0x198] sm:$0x1] %vm343, 0.0
      %362 = vst.msk [vmem:[#allocation2 + $0x11] sm:$0x1] %vm343, 0.0
      %363 = vst.msk [vmem:[#allocation2 + $0x29] sm:$0x1] %vm343, 0.0
      %364 = vst.msk [vmem:[#allocation2 + $0x41] sm:$0x1] %vm343, 0.0
      %365 = vst.msk [vmem:[#allocation2 + $0x59] sm:$0x1] %vm343, 0.0
      %366 = vst.msk [vmem:[#allocation2 + $0x71] sm:$0x1] %vm343, 0.0
      %367 = vst.msk [vmem:[#allocation2 + $0x89] sm:$0x1] %vm343, 0.0
      %368 = vst.msk [vmem:[#allocation2 + $0xa1] sm:$0x1] %vm343, 0.0
      %369 = vst.msk [vmem:[#allocation2 + $0xb9] sm:$0x1] %vm343, 0.0
      %370 = vst.msk [vmem:[#allocation2 + $0xd1] sm:$0x1] %vm343, 0.0
      %371 = vst.msk [vmem:[#allocation2 + $0xe9] sm:$0x1] %vm343, 0.0
      %372 = vst.msk [vmem:[#allocation2 + $0x101] sm:$0x1] %vm343, 0.0
      %373 = vst.msk [vmem:[#allocation2 + $0x119] sm:$0x1] %vm343, 0.0
      %374 = vst.msk [vmem:[#allocation2 + $0x131] sm:$0x1] %vm343, 0.0
      %375 = vst.msk [vmem:[#allocation2 + $0x149] sm:$0x1] %vm343, 0.0
      %376 = vst.msk [vmem:[#allocation2 + $0x161] sm:$0x1] %vm343, 0.0
      %377 = vst.msk [vmem:[#allocation2 + $0x179] sm:$0x1] %vm343, 0.0
      %378 = vst.msk [vmem:[#allocation2 + $0x191] sm:$0x1] %vm343, 0.0
      %379 = vst.msk [vmem:[#allocation2 + $0x1a9] sm:$0x1] %vm343, 0.0
      %v380 = vld [vmem:[%s327] sm:$0xff]
      %v381 = vld [vmem:[%s327 + $0x8] sm:$0xff]
      %v382 = vld [vmem:[%s327 + $0x10] sm:$0xff]
      %v383 = vld [vmem:[%s327 + $0x18] sm:$0xff]
      %v384 = vld [vmem:[%s327 + $0x20] sm:$0xff]
      %v385 = vld [vmem:[%s327 + $0x28] sm:$0xff]
      %v386 = vld [vmem:[%s327 + $0x30] sm:$0xff]
      %v387 = vld [vmem:[%s327 + $0x38] sm:$0xff]
      %v388 = vld [vmem:[%s327 + $0x40] sm:$0xff]
      %v389 = vld [vmem:[%s327 + $0x48] sm:$0xff]
      %v390 = vld [vmem:[%s327 + $0x50] sm:$0xff]
      %v391 = vld [vmem:[%s327 + $0x58] sm:$0xff]
      %v392 = vld [vmem:[%s327 + $0x60] sm:$0xff]
      %v393 = vld [vmem:[%s327 + $0x68] sm:$0xff]
      %v394 = vld [vmem:[%s327 + $0x70] sm:$0xff]
      %v395 = vld [vmem:[%s327 + $0x78] sm:$0xff]
      %v396 = vld [vmem:[%s327 + $0x80] sm:$0xff]
      %v397 = vld [vmem:[%s327 + $0x88] sm:$0xff]
      %v398 = vld [vmem:[%s327 + $0x90] sm:$0xff]
      %v399 = vld [vmem:[%s327 + $0x98] sm:$0xff]
      %v400 = vld [vmem:[%s327 + $0xa0] sm:$0xff]
      %v401 = vld [vmem:[%s327 + $0xa8] sm:$0xff]
      %v402 = vld [vmem:[%s327 + $0xb0] sm:$0xff]
      %v403 = vld [vmem:[%s327 + $0xb8] sm:$0xff]
      %v404 = vld [vmem:[%s327 + $0xc0] sm:$0xff]
      %v405 = vld [vmem:[%s327 + $0xc8] sm:$0xff]
      %v406 = vld [vmem:[%s327 + $0xd0] sm:$0xff]
      %v407 = vld [vmem:[%s327 + $0xd8] sm:$0xff]
      %v408 = vld [vmem:[%s327 + $0xe0] sm:$0xff]
      %v409 = vld [vmem:[%s327 + $0xe8] sm:$0xff]
      %v410 = vld [vmem:[%s327 + $0xf0] sm:$0xff]
      %v411 = vld [vmem:[%s327 + $0xf8] sm:$0xff]
      %s412 = scalar_lea.vmem [#allocation2], 24
      %vm413 = vcmask 64512
      %414 = vst.msk [vmem:[%s412 + $0x1] sm:$0xff] %vm413, %v380
      %415 = vst.msk [vmem:[%s412 + $0x9] sm:$0xff] %vm413, %v381
      %416 = vst.msk [vmem:[%s412 + $0x19] sm:$0xff] %vm413, %v382
      %417 = vst.msk [vmem:[%s412 + $0x21] sm:$0xff] %vm413, %v383
      %418 = vst.msk [vmem:[%s412 + $0x31] sm:$0xff] %vm413, %v384
      %419 = vst.msk [vmem:[%s412 + $0x39] sm:$0xff] %vm413, %v385
      %420 = vst.msk [vmem:[%s412 + $0x49] sm:$0xff] %vm413, %v386
      %421 = vst.msk [vmem:[%s412 + $0x51] sm:$0xff] %vm413, %v387
      %422 = vst.msk [vmem:[%s412 + $0x61] sm:$0xff] %vm413, %v388
      %423 = vst.msk [vmem:[%s412 + $0x69] sm:$0xff] %vm413, %v389
      %424 = vst.msk [vmem:[%s412 + $0x79] sm:$0xff] %vm413, %v390
      %425 = vst.msk [vmem:[%s412 + $0x81] sm:$0xff] %vm413, %v391
      %426 = vst.msk [vmem:[%s412 + $0x91] sm:$0xff] %vm413, %v392
      %427 = vst.msk [vmem:[%s412 + $0x99] sm:$0xff] %vm413, %v393
      %428 = vst.msk [vmem:[%s412 + $0xa9] sm:$0xff] %vm413, %v394
      %429 = vst.msk [vmem:[%s412 + $0xb1] sm:$0xff] %vm413, %v395
      %430 = vst.msk [vmem:[%s412 + $0xc1] sm:$0xff] %vm413, %v396
      %431 = vst.msk [vmem:[%s412 + $0xc9] sm:$0xff] %vm413, %v397
      %432 = vst.msk [vmem:[%s412 + $0xd9] sm:$0xff] %vm413, %v398
      %433 = vst.msk [vmem:[%s412 + $0xe1] sm:$0xff] %vm413, %v399
      %434 = vst.msk [vmem:[%s412 + $0xf1] sm:$0xff] %vm413, %v400
      %435 = vst.msk [vmem:[%s412 + $0xf9] sm:$0xff] %vm413, %v401
      %436 = vst.msk [vmem:[%s412 + $0x109] sm:$0xff] %vm413, %v402
      %437 = vst.msk [vmem:[%s412 + $0x111] sm:$0xff] %vm413, %v403
      %438 = vst.msk [vmem:[%s412 + $0x121] sm:$0xff] %vm413, %v404
      %439 = vst.msk [vmem:[%s412 + $0x129] sm:$0xff] %vm413, %v405
      %440 = vst.msk [vmem:[%s412 + $0x139] sm:$0xff] %vm413, %v406
      %441 = vst.msk [vmem:[%s412 + $0x141] sm:$0xff] %vm413, %v407
      %442 = vst.msk [vmem:[%s412 + $0x151] sm:$0xff] %vm413, %v408
      %443 = vst.msk [vmem:[%s412 + $0x159] sm:$0xff] %vm413, %v409
      %444 = vst.msk [vmem:[%s412 + $0x169] sm:$0xff] %vm413, %v410
      %445 = vst.msk [vmem:[%s412 + $0x171] sm:$0xff] %vm413, %v411
      %v446 = vld [vmem:[#allocation2] sm:$0xff]
      %v447 = vld [vmem:[#allocation2 + $0x8] sm:$0xff]
      %v448 = vld [vmem:[#allocation2 + $0x18] sm:$0xff]
      %v449 = vld [vmem:[#allocation2 + $0x20] sm:$0xff]
      %v450 = vld [vmem:[#allocation2 + $0x30] sm:$0xff]
      %v451 = vld [vmem:[#allocation2 + $0x38] sm:$0xff]
      %v452 = vld [vmem:[#allocation2 + $0x48] sm:$0xff]
      %v453 = vld [vmem:[#allocation2 + $0x50] sm:$0xff]
      %v454 = vld [vmem:[#allocation2 + $0x60] sm:$0xff]
      %v455 = vld [vmem:[#allocation2 + $0x68] sm:$0xff]
      %v456 = vld [vmem:[#allocation2 + $0x78] sm:$0xff]
      %v457 = vld [vmem:[#allocation2 + $0x80] sm:$0xff]
      %v458 = vld [vmem:[#allocation2 + $0x90] sm:$0xff]
      %v459 = vld [vmem:[#allocation2 + $0x98] sm:$0xff]
      %v460 = vld [vmem:[#allocation2 + $0xa8] sm:$0xff]
      %v461 = vld [vmem:[#allocation2 + $0xb0] sm:$0xff]
      %v462 = vld [vmem:[#allocation2 + $0xc0] sm:$0xff]
      %v463 = vld [vmem:[#allocation2 + $0xc8] sm:$0xff]
      %v464 = vld [vmem:[#allocation2 + $0xd8] sm:$0xff]
      %v465 = vld [vmem:[#allocation2 + $0xe0] sm:$0xff]
      %v466 = vld [vmem:[#allocation2 + $0xf0] sm:$0xff]
      %v467 = vld [vmem:[#allocation2 + $0xf8] sm:$0xff]
      %v468 = vld [vmem:[#allocation2 + $0x108] sm:$0xff]
      %v469 = vld [vmem:[#allocation2 + $0x110] sm:$0xff]
      %v470 = vld [vmem:[#allocation2 + $0x120] sm:$0xff]
      %v471 = vld [vmem:[#allocation2 + $0x128] sm:$0xff]
      %v472 = vld [vmem:[#allocation2 + $0x138] sm:$0xff]
      %v473 = vld [vmem:[#allocation2 + $0x140] sm:$0xff]
      %v474 = vld [vmem:[#allocation2 + $0x150] sm:$0xff]
      %v475 = vld [vmem:[#allocation2 + $0x158] sm:$0xff]
      %v476 = vld [vmem:[#allocation2 + $0x168] sm:$0xff]
      %v477 = vld [vmem:[#allocation2 + $0x170] sm:$0xff]
      %v478 = vld [vmem:[#allocation2 + $0x1] sm:$0xff]
      %v479 = vld [vmem:[#allocation2 + $0x9] sm:$0xff]
      %v480 = vld [vmem:[#allocation2 + $0x19] sm:$0xff]
      %v481 = vld [vmem:[#allocation2 + $0x21] sm:$0xff]
      %v482 = vld [vmem:[#allocation2 + $0x31] sm:$0xff]
      %v483 = vld [vmem:[#allocation2 + $0x39] sm:$0xff]
      %v484 = vld [vmem:[#allocation2 + $0x49] sm:$0xff]
      %v485 = vld [vmem:[#allocation2 + $0x51] sm:$0xff]
      %v486 = vld [vmem:[#allocation2 + $0x61] sm:$0xff]
      %v487 = vld [vmem:[#allocation2 + $0x69] sm:$0xff]
      %v488 = vld [vmem:[#allocation2 + $0x79] sm:$0xff]
      %v489 = vld [vmem:[#allocation2 + $0x81] sm:$0xff]
      %v490 = vld [vmem:[#allocation2 + $0x91] sm:$0xff]
      %v491 = vld [vmem:[#allocation2 + $0x99] sm:$0xff]
      %v492 = vld [vmem:[#allocation2 + $0xa9] sm:$0xff]
      %v493 = vld [vmem:[#allocation2 + $0xb1] sm:$0xff]
      %v494 = vld [vmem:[#allocation2 + $0xc1] sm:$0xff]
      %v495 = vld [vmem:[#allocation2 + $0xc9] sm:$0xff]
      %v496 = vld [vmem:[#allocation2 + $0xd9] sm:$0xff]
      %v497 = vld [vmem:[#allocation2 + $0xe1] sm:$0xff]
      %v498 = vld [vmem:[#allocation2 + $0xf1] sm:$0xff]
      %v499 = vld [vmem:[#allocation2 + $0xf9] sm:$0xff]
      %v500 = vld [vmem:[#allocation2 + $0x109] sm:$0xff]
      %v501 = vld [vmem:[#allocation2 + $0x111] sm:$0xff]
      %v502 = vld [vmem:[#allocation2 + $0x121] sm:$0xff]
      %v503 = vld [vmem:[#allocation2 + $0x129] sm:$0xff]
      %v504 = vld [vmem:[#allocation2 + $0x139] sm:$0xff]
      %v505 = vld [vmem:[#allocation2 + $0x141] sm:$0xff]
      %v506 = vld [vmem:[#allocation2 + $0x151] sm:$0xff]
      %v507 = vld [vmem:[#allocation2 + $0x159] sm:$0xff]
      %v508 = vld [vmem:[#allocation2 + $0x169] sm:$0xff]
      %v509 = vld [vmem:[#allocation2 + $0x171] sm:$0xff]
      %v510 = vld [vmem:[#allocation2 + $0x2] sm:$0xff]
      %v511 = vld [vmem:[#allocation2 + $0xa] sm:$0xff]
      %v512 = vld [vmem:[#allocation2 + $0x1a] sm:$0xff]
      %v513 = vld [vmem:[#allocation2 + $0x22] sm:$0xff]
      %v514 = vld [vmem:[#allocation2 + $0x32] sm:$0xff]
      %v515 = vld [vmem:[#allocation2 + $0x3a] sm:$0xff]
      %v516 = vld [vmem:[#allocation2 + $0x4a] sm:$0xff]
      %v517 = vld [vmem:[#allocation2 + $0x52] sm:$0xff]
      %v518 = vld [vmem:[#allocation2 + $0x62] sm:$0xff]
      %v519 = vld [vmem:[#allocation2 + $0x6a] sm:$0xff]
      %v520 = vld [vmem:[#allocation2 + $0x7a] sm:$0xff]
      %v521 = vld [vmem:[#allocation2 + $0x82] sm:$0xff]
      %v522 = vld [vmem:[#allocation2 + $0x92] sm:$0xff]
      %v523 = vld [vmem:[#allocation2 + $0x9a] sm:$0xff]
      %v524 = vld [vmem:[#allocation2 + $0xaa] sm:$0xff]
      %v525 = vld [vmem:[#allocation2 + $0xb2] sm:$0xff]
      %v526 = vld [vmem:[#allocation2 + $0xc2] sm:$0xff]
      %v527 = vld [vmem:[#allocation2 + $0xca] sm:$0xff]
      %v528 = vld [vmem:[#allocation2 + $0xda] sm:$0xff]
      %v529 = vld [vmem:[#allocation2 + $0xe2] sm:$0xff]
      %v530 = vld [vmem:[#allocation2 + $0xf2] sm:$0xff]
      %v531 = vld [vmem:[#allocation2 + $0xfa] sm:$0xff]
      %v532 = vld [vmem:[#allocation2 + $0x10a] sm:$0xff]
      %v533 = vld [vmem:[#allocation2 + $0x112] sm:$0xff]
      %v534 = vld [vmem:[#allocation2 + $0x122] sm:$0xff]
      %v535 = vld [vmem:[#allocation2 + $0x12a] sm:$0xff]
      %v536 = vld [vmem:[#allocation2 + $0x13a] sm:$0xff]
      %v537 = vld [vmem:[#allocation2 + $0x142] sm:$0xff]
      %v538 = vld [vmem:[#allocation2 + $0x152] sm:$0xff]
      %v539 = vld [vmem:[#allocation2 + $0x15a] sm:$0xff]
      %v540 = vld [vmem:[#allocation2 + $0x16a] sm:$0xff]
      %v541 = vld [vmem:[#allocation2 + $0x172] sm:$0xff]
      %v542 = vld [vmem:[%s412] sm:$0xff]
      %v543 = vld [vmem:[%s412 + $0x8] sm:$0xff]
      %v544 = vld [vmem:[%s412 + $0x18] sm:$0xff]
      %v545 = vld [vmem:[%s412 + $0x20] sm:$0xff]
      %v546 = vld [vmem:[%s412 + $0x30] sm:$0xff]
      %v547 = vld [vmem:[%s412 + $0x38] sm:$0xff]
      %v548 = vld [vmem:[%s412 + $0x48] sm:$0xff]
      %v549 = vld [vmem:[%s412 + $0x50] sm:$0xff]
      %v550 = vld [vmem:[%s412 + $0x60] sm:$0xff]
      %v551 = vld [vmem:[%s412 + $0x68] sm:$0xff]
      %v552 = vld [vmem:[%s412 + $0x78] sm:$0xff]
      %v553 = vld [vmem:[%s412 + $0x80] sm:$0xff]
      %v554 = vld [vmem:[%s412 + $0x90] sm:$0xff]
      %v555 = vld [vmem:[%s412 + $0x98] sm:$0xff]
      %v556 = vld [vmem:[%s412 + $0xa8] sm:$0xff]
      %v557 = vld [vmem:[%s412 + $0xb0] sm:$0xff]
      %v558 = vld [vmem:[%s412 + $0xc0] sm:$0xff]
      %v559 = vld [vmem:[%s412 + $0xc8] sm:$0xff]
      %v560 = vld [vmem:[%s412 + $0xd8] sm:$0xff]
      %v561 = vld [vmem:[%s412 + $0xe0] sm:$0xff]
      %v562 = vld [vmem:[%s412 + $0xf0] sm:$0xff]
      %v563 = vld [vmem:[%s412 + $0xf8] sm:$0xff]
      %v564 = vld [vmem:[%s412 + $0x108] sm:$0xff]
      %v565 = vld [vmem:[%s412 + $0x110] sm:$0xff]
      %v566 = vld [vmem:[%s412 + $0x120] sm:$0xff]
      %v567 = vld [vmem:[%s412 + $0x128] sm:$0xff]
      %v568 = vld [vmem:[%s412 + $0x138] sm:$0xff]
      %v569 = vld [vmem:[%s412 + $0x140] sm:$0xff]
      %v570 = vld [vmem:[%s412 + $0x150] sm:$0xff]
      %v571 = vld [vmem:[%s412 + $0x158] sm:$0xff]
      %v572 = vld [vmem:[%s412 + $0x168] sm:$0xff]
      %v573 = vld [vmem:[%s412 + $0x170] sm:$0xff]
      %v574 = vld [vmem:[%s412 + $0x1] sm:$0xff]
      %v575 = vld [vmem:[%s412 + $0x9] sm:$0xff]
      %v576 = vld [vmem:[%s412 + $0x19] sm:$0xff]
      %v577 = vld [vmem:[%s412 + $0x21] sm:$0xff]
      %v578 = vld [vmem:[%s412 + $0x31] sm:$0xff]
      %v579 = vld [vmem:[%s412 + $0x39] sm:$0xff]
      %v580 = vld [vmem:[%s412 + $0x49] sm:$0xff]
      %v581 = vld [vmem:[%s412 + $0x51] sm:$0xff]
      %v582 = vld [vmem:[%s412 + $0x61] sm:$0xff]
      %v583 = vld [vmem:[%s412 + $0x69] sm:$0xff]
      %v584 = vld [vmem:[%s412 + $0x79] sm:$0xff]
      %v585 = vld [vmem:[%s412 + $0x81] sm:$0xff]
      %v586 = vld [vmem:[%s412 + $0x91] sm:$0xff]
      %v587 = vld [vmem:[%s412 + $0x99] sm:$0xff]
      %v588 = vld [vmem:[%s412 + $0xa9] sm:$0xff]
      %v589 = vld [vmem:[%s412 + $0xb1] sm:$0xff]
      %v590 = vld [vmem:[%s412 + $0xc1] sm:$0xff]
      %v591 = vld [vmem:[%s412 + $0xc9] sm:$0xff]
      %v592 = vld [vmem:[%s412 + $0xd9] sm:$0xff]
      %v593 = vld [vmem:[%s412 + $0xe1] sm:$0xff]
      %v594 = vld [vmem:[%s412 + $0xf1] sm:$0xff]
      %v595 = vld [vmem:[%s412 + $0xf9] sm:$0xff]
      %v596 = vld [vmem:[%s412 + $0x109] sm:$0xff]
      %v597 = vld [vmem:[%s412 + $0x111] sm:$0xff]
      %v598 = vld [vmem:[%s412 + $0x121] sm:$0xff]
      %v599 = vld [vmem:[%s412 + $0x129] sm:$0xff]
      %v600 = vld [vmem:[%s412 + $0x139] sm:$0xff]
      %v601 = vld [vmem:[%s412 + $0x141] sm:$0xff]
      %v602 = vld [vmem:[%s412 + $0x151] sm:$0xff]
      %v603 = vld [vmem:[%s412 + $0x159] sm:$0xff]
      %v604 = vld [vmem:[%s412 + $0x169] sm:$0xff]
      %v605 = vld [vmem:[%s412 + $0x171] sm:$0xff]
      %v606 = vld [vmem:[%s412 + $0x2] sm:$0xff]
      %v607 = vld [vmem:[%s412 + $0xa] sm:$0xff]
      %v608 = vld [vmem:[%s412 + $0x1a] sm:$0xff]
      %v609 = vld [vmem:[%s412 + $0x22] sm:$0xff]
      %v610 = vld [vmem:[%s412 + $0x32] sm:$0xff]
      %v611 = vld [vmem:[%s412 + $0x3a] sm:$0xff]
      %v612 = vld [vmem:[%s412 + $0x4a] sm:$0xff]
      %v613 = vld [vmem:[%s412 + $0x52] sm:$0xff]
      %v614 = vld [vmem:[%s412 + $0x62] sm:$0xff]
      %v615 = vld [vmem:[%s412 + $0x6a] sm:$0xff]
      %v616 = vld [vmem:[%s412 + $0x7a] sm:$0xff]
      %v617 = vld [vmem:[%s412 + $0x82] sm:$0xff]
      %v618 = vld [vmem:[%s412 + $0x92] sm:$0xff]
      %v619 = vld [vmem:[%s412 + $0x9a] sm:$0xff]
      %v620 = vld [vmem:[%s412 + $0xaa] sm:$0xff]
      %v621 = vld [vmem:[%s412 + $0xb2] sm:$0xff]
      %v622 = vld [vmem:[%s412 + $0xc2] sm:$0xff]
      %v623 = vld [vmem:[%s412 + $0xca] sm:$0xff]
      %v624 = vld [vmem:[%s412 + $0xda] sm:$0xff]
      %v625 = vld [vmem:[%s412 + $0xe2] sm:$0xff]
      %v626 = vld [vmem:[%s412 + $0xf2] sm:$0xff]
      %v627 = vld [vmem:[%s412 + $0xfa] sm:$0xff]
      %v628 = vld [vmem:[%s412 + $0x10a] sm:$0xff]
      %v629 = vld [vmem:[%s412 + $0x112] sm:$0xff]
      %v630 = vld [vmem:[%s412 + $0x122] sm:$0xff]
      %v631 = vld [vmem:[%s412 + $0x12a] sm:$0xff]
      %v632 = vld [vmem:[%s412 + $0x13a] sm:$0xff]
      %v633 = vld [vmem:[%s412 + $0x142] sm:$0xff]
      %v634 = vld [vmem:[%s412 + $0x152] sm:$0xff]
      %v635 = vld [vmem:[%s412 + $0x15a] sm:$0xff]
      %v636 = vld [vmem:[%s412 + $0x16a] sm:$0xff]
      %v637 = vld [vmem:[%s412 + $0x172] sm:$0xff]
      %s638 = scalar_lea.vmem [#allocation2], 48
      %v639 = vld [vmem:[%s638] sm:$0xff]
      %v640 = vld [vmem:[%s638 + $0x8] sm:$0xff]
      %v641 = vld [vmem:[%s638 + $0x18] sm:$0xff]
      %v642 = vld [vmem:[%s638 + $0x20] sm:$0xff]
      %v643 = vld [vmem:[%s638 + $0x30] sm:$0xff]
      %v644 = vld [vmem:[%s638 + $0x38] sm:$0xff]
      %v645 = vld [vmem:[%s638 + $0x48] sm:$0xff]
      %v646 = vld [vmem:[%s638 + $0x50] sm:$0xff]
      %v647 = vld [vmem:[%s638 + $0x60] sm:$0xff]
      %v648 = vld [vmem:[%s638 + $0x68] sm:$0xff]
      %v649 = vld [vmem:[%s638 + $0x78] sm:$0xff]
      %v650 = vld [vmem:[%s638 + $0x80] sm:$0xff]
      %v651 = vld [vmem:[%s638 + $0x90] sm:$0xff]
      %v652 = vld [vmem:[%s638 + $0x98] sm:$0xff]
      %v653 = vld [vmem:[%s638 + $0xa8] sm:$0xff]
      %v654 = vld [vmem:[%s638 + $0xb0] sm:$0xff]
      %v655 = vld [vmem:[%s638 + $0xc0] sm:$0xff]
      %v656 = vld [vmem:[%s638 + $0xc8] sm:$0xff]
      %v657 = vld [vmem:[%s638 + $0xd8] sm:$0xff]
      %v658 = vld [vmem:[%s638 + $0xe0] sm:$0xff]
      %v659 = vld [vmem:[%s638 + $0xf0] sm:$0xff]
      %v660 = vld [vmem:[%s638 + $0xf8] sm:$0xff]
      %v661 = vld [vmem:[%s638 + $0x108] sm:$0xff]
      %v662 = vld [vmem:[%s638 + $0x110] sm:$0xff]
      %v663 = vld [vmem:[%s638 + $0x120] sm:$0xff]
      %v664 = vld [vmem:[%s638 + $0x128] sm:$0xff]
      %v665 = vld [vmem:[%s638 + $0x138] sm:$0xff]
      %v666 = vld [vmem:[%s638 + $0x140] sm:$0xff]
      %v667 = vld [vmem:[%s638 + $0x150] sm:$0xff]
      %v668 = vld [vmem:[%s638 + $0x158] sm:$0xff]
      %v669 = vld [vmem:[%s638 + $0x168] sm:$0xff]
      %v670 = vld [vmem:[%s638 + $0x170] sm:$0xff]
      %v671 = vld [vmem:[%s638 + $0x1] sm:$0xff]
      %v672 = vld [vmem:[%s638 + $0x9] sm:$0xff]
      %v673 = vld [vmem:[%s638 + $0x19] sm:$0xff]
      %v674 = vld [vmem:[%s638 + $0x21] sm:$0xff]
      %v675 = vld [vmem:[%s638 + $0x31] sm:$0xff]
      %v676 = vld [vmem:[%s638 + $0x39] sm:$0xff]
      %v677 = vld [vmem:[%s638 + $0x49] sm:$0xff]
      %v678 = vld [vmem:[%s638 + $0x51] sm:$0xff]
      %v679 = vld [vmem:[%s638 + $0x61] sm:$0xff]
      %v680 = vld [vmem:[%s638 + $0x69] sm:$0xff]
      %v681 = vld [vmem:[%s638 + $0x79] sm:$0xff]
      %v682 = vld [vmem:[%s638 + $0x81] sm:$0xff]
      %v683 = vld [vmem:[%s638 + $0x91] sm:$0xff]
      %v684 = vld [vmem:[%s638 + $0x99] sm:$0xff]
      %v685 = vld [vmem:[%s638 + $0xa9] sm:$0xff]
      %v686 = vld [vmem:[%s638 + $0xb1] sm:$0xff]
      %v687 = vld [vmem:[%s638 + $0xc1] sm:$0xff]
      %v688 = vld [vmem:[%s638 + $0xc9] sm:$0xff]
      %v689 = vld [vmem:[%s638 + $0xd9] sm:$0xff]
      %v690 = vld [vmem:[%s638 + $0xe1] sm:$0xff]
      %v691 = vld [vmem:[%s638 + $0xf1] sm:$0xff]
      %v692 = vld [vmem:[%s638 + $0xf9] sm:$0xff]
      %v693 = vld [vmem:[%s638 + $0x109] sm:$0xff]
      %v694 = vld [vmem:[%s638 + $0x111] sm:$0xff]
      %v695 = vld [vmem:[%s638 + $0x121] sm:$0xff]
      %v696 = vld [vmem:[%s638 + $0x129] sm:$0xff]
      %v697 = vld [vmem:[%s638 + $0x139] sm:$0xff]
      %v698 = vld [vmem:[%s638 + $0x141] sm:$0xff]
      %v699 = vld [vmem:[%s638 + $0x151] sm:$0xff]
      %v700 = vld [vmem:[%s638 + $0x159] sm:$0xff]
      %v701 = vld [vmem:[%s638 + $0x169] sm:$0xff]
      %v702 = vld [vmem:[%s638 + $0x171] sm:$0xff]
      %v703 = vld [vmem:[%s638 + $0x2] sm:$0xff]
      %v704 = vld [vmem:[%s638 + $0xa] sm:$0xff]
      %v705 = vld [vmem:[%s638 + $0x1a] sm:$0xff]
      %v706 = vld [vmem:[%s638 + $0x22] sm:$0xff]
      %v707 = vld [vmem:[%s638 + $0x32] sm:$0xff]
      %v708 = vld [vmem:[%s638 + $0x3a] sm:$0xff]
      %v709 = vld [vmem:[%s638 + $0x4a] sm:$0xff]
      %v710 = vld [vmem:[%s638 + $0x52] sm:$0xff]
      %v711 = vld [vmem:[%s638 + $0x62] sm:$0xff]
      %v712 = vld [vmem:[%s638 + $0x6a] sm:$0xff]
      %v713 = vld [vmem:[%s638 + $0x7a] sm:$0xff]
      %v714 = vld [vmem:[%s638 + $0x82] sm:$0xff]
      %v715 = vld [vmem:[%s638 + $0x92] sm:$0xff]
      %v716 = vld [vmem:[%s638 + $0x9a] sm:$0xff]
      %v717 = vld [vmem:[%s638 + $0xaa] sm:$0xff]
      %v718 = vld [vmem:[%s638 + $0xb2] sm:$0xff]
      %v719 = vld [vmem:[%s638 + $0xc2] sm:$0xff]
      %v720 = vld [vmem:[%s638 + $0xca] sm:$0xff]
      %v721 = vld [vmem:[%s638 + $0xda] sm:$0xff]
      %v722 = vld [vmem:[%s638 + $0xe2] sm:$0xff]
      %v723 = vld [vmem:[%s638 + $0xf2] sm:$0xff]
      %v724 = vld [vmem:[%s638 + $0xfa] sm:$0xff]
      %v725 = vld [vmem:[%s638 + $0x10a] sm:$0xff]
      %v726 = vld [vmem:[%s638 + $0x112] sm:$0xff]
      %v727 = vld [vmem:[%s638 + $0x122] sm:$0xff]
      %v728 = vld [vmem:[%s638 + $0x12a] sm:$0xff]
      %v729 = vld [vmem:[%s638 + $0x13a] sm:$0xff]
      %v730 = vld [vmem:[%s638 + $0x142] sm:$0xff]
      %v731 = vld [vmem:[%s638 + $0x152] sm:$0xff]
      %v732 = vld [vmem:[%s638 + $0x15a] sm:$0xff]
      %v733 = vld [vmem:[%s638 + $0x16a] sm:$0xff]
      %v734 = vld [vmem:[%s638 + $0x172] sm:$0xff]
      %767 = vrot.lane.b32.xlu0 %v478, 8
      %v768 = vpop.permute.xlu0 %767
      %769 = vrot.lane.b32.xlu0 %v479, 8
      %v770 = vpop.permute.xlu0 %769
      %771 = vrot.lane.b32.xlu0 %v480, 8
      %v772 = vpop.permute.xlu0 %771
      %773 = vrot.lane.b32.xlu0 %v481, 8
      %v774 = vpop.permute.xlu0 %773
      %775 = vrot.lane.b32.xlu0 %v482, 8
      %v776 = vpop.permute.xlu0 %775
      %777 = vrot.lane.b32.xlu0 %v483, 8
      %v778 = vpop.permute.xlu0 %777
      %779 = vrot.lane.b32.xlu0 %v484, 8
      %v780 = vpop.permute.xlu0 %779
      %781 = vrot.lane.b32.xlu0 %v485, 8
      %v782 = vpop.permute.xlu0 %781
      %783 = vrot.lane.b32.xlu0 %v486, 8
      %v784 = vpop.permute.xlu0 %783
      %785 = vrot.lane.b32.xlu0 %v487, 8
      %v786 = vpop.permute.xlu0 %785
      %787 = vrot.lane.b32.xlu0 %v488, 8
      %v788 = vpop.permute.xlu0 %787
      %789 = vrot.lane.b32.xlu0 %v489, 8
      %v790 = vpop.permute.xlu0 %789
      %791 = vrot.lane.b32.xlu0 %v490, 8
      %v792 = vpop.permute.xlu0 %791
      %793 = vrot.lane.b32.xlu0 %v491, 8
      %v794 = vpop.permute.xlu0 %793
      %795 = vrot.lane.b32.xlu0 %v492, 8
      %v796 = vpop.permute.xlu0 %795
      %797 = vrot.lane.b32.xlu0 %v493, 8
      %v798 = vpop.permute.xlu0 %797
      %799 = vrot.lane.b32.xlu0 %v494, 8
      %v800 = vpop.permute.xlu0 %799
      %801 = vrot.lane.b32.xlu0 %v495, 8
      %v802 = vpop.permute.xlu0 %801
      %803 = vrot.lane.b32.xlu0 %v496, 8
      %v804 = vpop.permute.xlu0 %803
      %805 = vrot.lane.b32.xlu0 %v497, 8
      %v806 = vpop.permute.xlu0 %805
      %807 = vrot.lane.b32.xlu0 %v498, 8
      %v808 = vpop.permute.xlu0 %807
      %809 = vrot.lane.b32.xlu0 %v499, 8
      %v810 = vpop.permute.xlu0 %809
      %811 = vrot.lane.b32.xlu0 %v500, 8
      %v812 = vpop.permute.xlu0 %811
      %813 = vrot.lane.b32.xlu0 %v501, 8
      %v814 = vpop.permute.xlu0 %813
      %815 = vrot.lane.b32.xlu0 %v502, 8
      %v816 = vpop.permute.xlu0 %815
      %817 = vrot.lane.b32.xlu0 %v503, 8
      %v818 = vpop.permute.xlu0 %817
      %819 = vrot.lane.b32.xlu0 %v504, 8
      %v820 = vpop.permute.xlu0 %819
      %821 = vrot.lane.b32.xlu0 %v505, 8
      %v822 = vpop.permute.xlu0 %821
      %823 = vrot.lane.b32.xlu0 %v506, 8
      %v824 = vpop.permute.xlu0 %823
      %825 = vrot.lane.b32.xlu0 %v507, 8
      %v826 = vpop.permute.xlu0 %825
      %827 = vrot.lane.b32.xlu0 %v508, 8
      %v828 = vpop.permute.xlu0 %827
      %829 = vrot.lane.b32.xlu0 %v509, 8
      %v830 = vpop.permute.xlu0 %829
      %895 = vrot.lane.b32.xlu0 %v510, 16
      %v896 = vpop.permute.xlu0 %895
      %897 = vrot.lane.b32.xlu0 %v511, 16
      %v898 = vpop.permute.xlu0 %897
      %899 = vrot.lane.b32.xlu0 %v512, 16
      %v900 = vpop.permute.xlu0 %899
      %901 = vrot.lane.b32.xlu0 %v513, 16
      %v902 = vpop.permute.xlu0 %901
      %903 = vrot.lane.b32.xlu0 %v514, 16
      %v904 = vpop.permute.xlu0 %903
      %905 = vrot.lane.b32.xlu0 %v515, 16
      %v906 = vpop.permute.xlu0 %905
      %907 = vrot.lane.b32.xlu0 %v516, 16
      %v908 = vpop.permute.xlu0 %907
      %909 = vrot.lane.b32.xlu0 %v517, 16
      %v910 = vpop.permute.xlu0 %909
      %911 = vrot.lane.b32.xlu0 %v518, 16
      %v912 = vpop.permute.xlu0 %911
      %913 = vrot.lane.b32.xlu0 %v519, 16
      %v914 = vpop.permute.xlu0 %913
      %915 = vrot.lane.b32.xlu0 %v520, 16
      %v916 = vpop.permute.xlu0 %915
      %917 = vrot.lane.b32.xlu0 %v521, 16
      %v918 = vpop.permute.xlu0 %917
      %919 = vrot.lane.b32.xlu0 %v522, 16
      %v920 = vpop.permute.xlu0 %919
      %921 = vrot.lane.b32.xlu0 %v523, 16
      %v922 = vpop.permute.xlu0 %921
      %923 = vrot.lane.b32.xlu0 %v524, 16
      %v924 = vpop.permute.xlu0 %923
      %925 = vrot.lane.b32.xlu0 %v525, 16
      %v926 = vpop.permute.xlu0 %925
      %927 = vrot.lane.b32.xlu0 %v526, 16
      %v928 = vpop.permute.xlu0 %927
      %929 = vrot.lane.b32.xlu0 %v527, 16
      %v930 = vpop.permute.xlu0 %929
      %931 = vrot.lane.b32.xlu0 %v528, 16
      %v932 = vpop.permute.xlu0 %931
      %933 = vrot.lane.b32.xlu0 %v529, 16
      %v934 = vpop.permute.xlu0 %933
      %935 = vrot.lane.b32.xlu0 %v530, 16
      %v936 = vpop.permute.xlu0 %935
      %937 = vrot.lane.b32.xlu0 %v531, 16
      %v938 = vpop.permute.xlu0 %937
      %939 = vrot.lane.b32.xlu0 %v532, 16
      %v940 = vpop.permute.xlu0 %939
      %941 = vrot.lane.b32.xlu0 %v533, 16
      %v942 = vpop.permute.xlu0 %941
      %943 = vrot.lane.b32.xlu0 %v534, 16
      %v944 = vpop.permute.xlu0 %943
      %945 = vrot.lane.b32.xlu0 %v535, 16
      %v946 = vpop.permute.xlu0 %945
      %947 = vrot.lane.b32.xlu0 %v536, 16
      %v948 = vpop.permute.xlu0 %947
      %949 = vrot.lane.b32.xlu0 %v537, 16
      %v950 = vpop.permute.xlu0 %949
      %951 = vrot.lane.b32.xlu0 %v538, 16
      %v952 = vpop.permute.xlu0 %951
      %953 = vrot.lane.b32.xlu0 %v539, 16
      %v954 = vpop.permute.xlu0 %953
      %955 = vrot.lane.b32.xlu0 %v540, 16
      %v956 = vpop.permute.xlu0 %955
      %957 = vrot.lane.b32.xlu0 %v541, 16
      %v958 = vpop.permute.xlu0 %957
      %1023 = vrot.lane.b32.xlu0 %v542, 24
      %v1024 = vpop.permute.xlu0 %1023
      %1025 = vrot.lane.b32.xlu0 %v543, 24
      %v1026 = vpop.permute.xlu0 %1025
      %1027 = vrot.lane.b32.xlu0 %v544, 24
      %v1028 = vpop.permute.xlu0 %1027
      %1029 = vrot.lane.b32.xlu0 %v545, 24
      %v1030 = vpop.permute.xlu0 %1029
      %1031 = vrot.lane.b32.xlu0 %v546, 24
      %v1032 = vpop.permute.xlu0 %1031
      %1033 = vrot.lane.b32.xlu0 %v547, 24
      %v1034 = vpop.permute.xlu0 %1033
      %1035 = vrot.lane.b32.xlu0 %v548, 24
      %v1036 = vpop.permute.xlu0 %1035
      %1037 = vrot.lane.b32.xlu0 %v549, 24
      %v1038 = vpop.permute.xlu0 %1037
      %1039 = vrot.lane.b32.xlu0 %v550, 24
      %v1040 = vpop.permute.xlu0 %1039
      %1041 = vrot.lane.b32.xlu0 %v551, 24
      %v1042 = vpop.permute.xlu0 %1041
      %1043 = vrot.lane.b32.xlu0 %v552, 24
      %v1044 = vpop.permute.xlu0 %1043
      %1045 = vrot.lane.b32.xlu0 %v553, 24
      %v1046 = vpop.permute.xlu0 %1045
      %1047 = vrot.lane.b32.xlu0 %v554, 24
      %v1048 = vpop.permute.xlu0 %1047
      %1049 = vrot.lane.b32.xlu0 %v555, 24
      %v1050 = vpop.permute.xlu0 %1049
      %1051 = vrot.lane.b32.xlu0 %v556, 24
      %v1052 = vpop.permute.xlu0 %1051
      %1053 = vrot.lane.b32.xlu0 %v557, 24
      %v1054 = vpop.permute.xlu0 %1053
      %1055 = vrot.lane.b32.xlu0 %v558, 24
      %v1056 = vpop.permute.xlu0 %1055
      %1057 = vrot.lane.b32.xlu0 %v559, 24
      %v1058 = vpop.permute.xlu0 %1057
      %1059 = vrot.lane.b32.xlu0 %v560, 24
      %v1060 = vpop.permute.xlu0 %1059
      %1061 = vrot.lane.b32.xlu0 %v561, 24
      %v1062 = vpop.permute.xlu0 %1061
      %1063 = vrot.lane.b32.xlu0 %v562, 24
      %v1064 = vpop.permute.xlu0 %1063
      %1065 = vrot.lane.b32.xlu0 %v563, 24
      %v1066 = vpop.permute.xlu0 %1065
      %1067 = vrot.lane.b32.xlu0 %v564, 24
      %v1068 = vpop.permute.xlu0 %1067
      %1069 = vrot.lane.b32.xlu0 %v565, 24
      %v1070 = vpop.permute.xlu0 %1069
      %1071 = vrot.lane.b32.xlu0 %v566, 24
      %v1072 = vpop.permute.xlu0 %1071
      %1073 = vrot.lane.b32.xlu0 %v567, 24
      %v1074 = vpop.permute.xlu0 %1073
      %1075 = vrot.lane.b32.xlu0 %v568, 24
      %v1076 = vpop.permute.xlu0 %1075
      %1077 = vrot.lane.b32.xlu0 %v569, 24
      %v1078 = vpop.permute.xlu0 %1077
      %1079 = vrot.lane.b32.xlu0 %v570, 24
      %v1080 = vpop.permute.xlu0 %1079
      %1081 = vrot.lane.b32.xlu0 %v571, 24
      %v1082 = vpop.permute.xlu0 %1081
      %1083 = vrot.lane.b32.xlu0 %v572, 24
      %v1084 = vpop.permute.xlu0 %1083
      %1085 = vrot.lane.b32.xlu0 %v573, 24
      %v1086 = vpop.permute.xlu0 %1085
      %1151 = vrot.lane.b32.xlu0 %v574, 32
      %v1152 = vpop.permute.xlu0 %1151
      %1153 = vrot.lane.b32.xlu0 %v575, 32
      %v1154 = vpop.permute.xlu0 %1153
      %1155 = vrot.lane.b32.xlu0 %v576, 32
      %v1156 = vpop.permute.xlu0 %1155
      %1157 = vrot.lane.b32.xlu0 %v577, 32
      %v1158 = vpop.permute.xlu0 %1157
      %1159 = vrot.lane.b32.xlu0 %v578, 32
      %v1160 = vpop.permute.xlu0 %1159
      %1161 = vrot.lane.b32.xlu0 %v579, 32
      %v1162 = vpop.permute.xlu0 %1161
      %1163 = vrot.lane.b32.xlu0 %v580, 32
      %v1164 = vpop.permute.xlu0 %1163
      %1165 = vrot.lane.b32.xlu0 %v581, 32
      %v1166 = vpop.permute.xlu0 %1165
      %1167 = vrot.lane.b32.xlu0 %v582, 32
      %v1168 = vpop.permute.xlu0 %1167
      %1169 = vrot.lane.b32.xlu0 %v583, 32
      %v1170 = vpop.permute.xlu0 %1169
      %1171 = vrot.lane.b32.xlu0 %v584, 32
      %v1172 = vpop.permute.xlu0 %1171
      %1173 = vrot.lane.b32.xlu0 %v585, 32
      %v1174 = vpop.permute.xlu0 %1173
      %1175 = vrot.lane.b32.xlu0 %v586, 32
      %v1176 = vpop.permute.xlu0 %1175
      %1177 = vrot.lane.b32.xlu0 %v587, 32
      %v1178 = vpop.permute.xlu0 %1177
      %1179 = vrot.lane.b32.xlu0 %v588, 32
      %v1180 = vpop.permute.xlu0 %1179
      %1181 = vrot.lane.b32.xlu0 %v589, 32
      %v1182 = vpop.permute.xlu0 %1181
      %1183 = vrot.lane.b32.xlu0 %v590, 32
      %v1184 = vpop.permute.xlu0 %1183
      %1185 = vrot.lane.b32.xlu0 %v591, 32
      %v1186 = vpop.permute.xlu0 %1185
      %1187 = vrot.lane.b32.xlu0 %v592, 32
      %v1188 = vpop.permute.xlu0 %1187
      %1189 = vrot.lane.b32.xlu0 %v593, 32
      %v1190 = vpop.permute.xlu0 %1189
      %1191 = vrot.lane.b32.xlu0 %v594, 32
      %v1192 = vpop.permute.xlu0 %1191
      %1193 = vrot.lane.b32.xlu0 %v595, 32
      %v1194 = vpop.permute.xlu0 %1193
      %1195 = vrot.lane.b32.xlu0 %v596, 32
      %v1196 = vpop.permute.xlu0 %1195
      %1197 = vrot.lane.b32.xlu0 %v597, 32
      %v1198 = vpop.permute.xlu0 %1197
      %1199 = vrot.lane.b32.xlu0 %v598, 32
      %v1200 = vpop.permute.xlu0 %1199
      %1201 = vrot.lane.b32.xlu0 %v599, 32
      %v1202 = vpop.permute.xlu0 %1201
      %1203 = vrot.lane.b32.xlu0 %v600, 32
      %v1204 = vpop.permute.xlu0 %1203
      %1205 = vrot.lane.b32.xlu0 %v601, 32
      %v1206 = vpop.permute.xlu0 %1205
      %1207 = vrot.lane.b32.xlu0 %v602, 32
      %v1208 = vpop.permute.xlu0 %1207
      %1209 = vrot.lane.b32.xlu0 %v603, 32
      %v1210 = vpop.permute.xlu0 %1209
      %1211 = vrot.lane.b32.xlu0 %v604, 32
      %v1212 = vpop.permute.xlu0 %1211
      %1213 = vrot.lane.b32.xlu0 %v605, 32
      %v1214 = vpop.permute.xlu0 %1213
      %1279 = vrot.lane.b32.xlu0 %v606, 40
      %v1280 = vpop.permute.xlu0 %1279
      %1281 = vrot.lane.b32.xlu0 %v607, 40
      %v1282 = vpop.permute.xlu0 %1281
      %1283 = vrot.lane.b32.xlu0 %v608, 40
      %v1284 = vpop.permute.xlu0 %1283
      %1285 = vrot.lane.b32.xlu0 %v609, 40
      %v1286 = vpop.permute.xlu0 %1285
      %1287 = vrot.lane.b32.xlu0 %v610, 40
      %v1288 = vpop.permute.xlu0 %1287
      %1289 = vrot.lane.b32.xlu0 %v611, 40
      %v1290 = vpop.permute.xlu0 %1289
      %1291 = vrot.lane.b32.xlu0 %v612, 40
      %v1292 = vpop.permute.xlu0 %1291
      %1293 = vrot.lane.b32.xlu0 %v613, 40
      %v1294 = vpop.permute.xlu0 %1293
      %1295 = vrot.lane.b32.xlu0 %v614, 40
      %v1296 = vpop.permute.xlu0 %1295
      %1297 = vrot.lane.b32.xlu0 %v615, 40
      %v1298 = vpop.permute.xlu0 %1297
      %1299 = vrot.lane.b32.xlu0 %v616, 40
      %v1300 = vpop.permute.xlu0 %1299
      %1301 = vrot.lane.b32.xlu0 %v617, 40
      %v1302 = vpop.permute.xlu0 %1301
      %1303 = vrot.lane.b32.xlu0 %v618, 40
      %v1304 = vpop.permute.xlu0 %1303
      %1305 = vrot.lane.b32.xlu0 %v619, 40
      %v1306 = vpop.permute.xlu0 %1305
      %1307 = vrot.lane.b32.xlu0 %v620, 40
      %v1308 = vpop.permute.xlu0 %1307
      %1309 = vrot.lane.b32.xlu0 %v621, 40
      %v1310 = vpop.permute.xlu0 %1309
      %1311 = vrot.lane.b32.xlu0 %v622, 40
      %v1312 = vpop.permute.xlu0 %1311
      %1313 = vrot.lane.b32.xlu0 %v623, 40
      %v1314 = vpop.permute.xlu0 %1313
      %1315 = vrot.lane.b32.xlu0 %v624, 40
      %v1316 = vpop.permute.xlu0 %1315
      %1317 = vrot.lane.b32.xlu0 %v625, 40
      %v1318 = vpop.permute.xlu0 %1317
      %1319 = vrot.lane.b32.xlu0 %v626, 40
      %v1320 = vpop.permute.xlu0 %1319
      %1321 = vrot.lane.b32.xlu0 %v627, 40
      %v1322 = vpop.permute.xlu0 %1321
      %1323 = vrot.lane.b32.xlu0 %v628, 40
      %v1324 = vpop.permute.xlu0 %1323
      %1325 = vrot.lane.b32.xlu0 %v629, 40
      %v1326 = vpop.permute.xlu0 %1325
      %1327 = vrot.lane.b32.xlu0 %v630, 40
      %v1328 = vpop.permute.xlu0 %1327
      %1329 = vrot.lane.b32.xlu0 %v631, 40
      %v1330 = vpop.permute.xlu0 %1329
      %1331 = vrot.lane.b32.xlu0 %v632, 40
      %v1332 = vpop.permute.xlu0 %1331
      %1333 = vrot.lane.b32.xlu0 %v633, 40
      %v1334 = vpop.permute.xlu0 %1333
      %1335 = vrot.lane.b32.xlu0 %v634, 40
      %v1336 = vpop.permute.xlu0 %1335
      %1337 = vrot.lane.b32.xlu0 %v635, 40
      %v1338 = vpop.permute.xlu0 %1337
      %1339 = vrot.lane.b32.xlu0 %v636, 40
      %v1340 = vpop.permute.xlu0 %1339
      %1341 = vrot.lane.b32.xlu0 %v637, 40
      %v1342 = vpop.permute.xlu0 %1341
      %1407 = vrot.lane.b32.xlu0 %v639, 48
      %v1408 = vpop.permute.xlu0 %1407
      %1409 = vrot.lane.b32.xlu0 %v640, 48
      %v1410 = vpop.permute.xlu0 %1409
      %1411 = vrot.lane.b32.xlu0 %v641, 48
      %v1412 = vpop.permute.xlu0 %1411
      %1413 = vrot.lane.b32.xlu0 %v642, 48
      %v1414 = vpop.permute.xlu0 %1413
      %1415 = vrot.lane.b32.xlu0 %v643, 48
      %v1416 = vpop.permute.xlu0 %1415
      %1417 = vrot.lane.b32.xlu0 %v644, 48
      %v1418 = vpop.permute.xlu0 %1417
      %1419 = vrot.lane.b32.xlu0 %v645, 48
      %v1420 = vpop.permute.xlu0 %1419
      %1421 = vrot.lane.b32.xlu0 %v646, 48
      %v1422 = vpop.permute.xlu0 %1421
      %1423 = vrot.lane.b32.xlu0 %v647, 48
      %v1424 = vpop.permute.xlu0 %1423
      %1425 = vrot.lane.b32.xlu0 %v648, 48
      %v1426 = vpop.permute.xlu0 %1425
      %1427 = vrot.lane.b32.xlu0 %v649, 48
      %v1428 = vpop.permute.xlu0 %1427
      %1429 = vrot.lane.b32.xlu0 %v650, 48
      %v1430 = vpop.permute.xlu0 %1429
      %1431 = vrot.lane.b32.xlu0 %v651, 48
      %v1432 = vpop.permute.xlu0 %1431
      %1433 = vrot.lane.b32.xlu0 %v652, 48
      %v1434 = vpop.permute.xlu0 %1433
      %1435 = vrot.lane.b32.xlu0 %v653, 48
      %v1436 = vpop.permute.xlu0 %1435
      %1437 = vrot.lane.b32.xlu0 %v654, 48
      %v1438 = vpop.permute.xlu0 %1437
      %1439 = vrot.lane.b32.xlu0 %v655, 48
      %v1440 = vpop.permute.xlu0 %1439
      %1441 = vrot.lane.b32.xlu0 %v656, 48
      %v1442 = vpop.permute.xlu0 %1441
      %1443 = vrot.lane.b32.xlu0 %v657, 48
      %v1444 = vpop.permute.xlu0 %1443
      %1445 = vrot.lane.b32.xlu0 %v658, 48
      %v1446 = vpop.permute.xlu0 %1445
      %1447 = vrot.lane.b32.xlu0 %v659, 48
      %v1448 = vpop.permute.xlu0 %1447
      %1449 = vrot.lane.b32.xlu0 %v660, 48
      %v1450 = vpop.permute.xlu0 %1449
      %1451 = vrot.lane.b32.xlu0 %v661, 48
      %v1452 = vpop.permute.xlu0 %1451
      %1453 = vrot.lane.b32.xlu0 %v662, 48
      %v1454 = vpop.permute.xlu0 %1453
      %1455 = vrot.lane.b32.xlu0 %v663, 48
      %v1456 = vpop.permute.xlu0 %1455
      %1457 = vrot.lane.b32.xlu0 %v664, 48
      %v1458 = vpop.permute.xlu0 %1457
      %1459 = vrot.lane.b32.xlu0 %v665, 48
      %v1460 = vpop.permute.xlu0 %1459
      %1461 = vrot.lane.b32.xlu0 %v666, 48
      %v1462 = vpop.permute.xlu0 %1461
      %1463 = vrot.lane.b32.xlu0 %v667, 48
      %v1464 = vpop.permute.xlu0 %1463
      %1465 = vrot.lane.b32.xlu0 %v668, 48
      %v1466 = vpop.permute.xlu0 %1465
      %1467 = vrot.lane.b32.xlu0 %v669, 48
      %v1468 = vpop.permute.xlu0 %1467
      %1469 = vrot.lane.b32.xlu0 %v670, 48
      %v1470 = vpop.permute.xlu0 %1469
      %1535 = vrot.lane.b32.xlu0 %v671, 56
      %v1536 = vpop.permute.xlu0 %1535
      %1537 = vrot.lane.b32.xlu0 %v672, 56
      %v1538 = vpop.permute.xlu0 %1537
      %1539 = vrot.lane.b32.xlu0 %v673, 56
      %v1540 = vpop.permute.xlu0 %1539
      %1541 = vrot.lane.b32.xlu0 %v674, 56
      %v1542 = vpop.permute.xlu0 %1541
      %1543 = vrot.lane.b32.xlu0 %v675, 56
      %v1544 = vpop.permute.xlu0 %1543
      %1545 = vrot.lane.b32.xlu0 %v676, 56
      %v1546 = vpop.permute.xlu0 %1545
      %1547 = vrot.lane.b32.xlu0 %v677, 56
      %v1548 = vpop.permute.xlu0 %1547
      %1549 = vrot.lane.b32.xlu0 %v678, 56
      %v1550 = vpop.permute.xlu0 %1549
      %1551 = vrot.lane.b32.xlu0 %v679, 56
      %v1552 = vpop.permute.xlu0 %1551
      %1553 = vrot.lane.b32.xlu0 %v680, 56
      %v1554 = vpop.permute.xlu0 %1553
      %1555 = vrot.lane.b32.xlu0 %v681, 56
      %v1556 = vpop.permute.xlu0 %1555
      %1557 = vrot.lane.b32.xlu0 %v682, 56
      %v1558 = vpop.permute.xlu0 %1557
      %1559 = vrot.lane.b32.xlu0 %v683, 56
      %v1560 = vpop.permute.xlu0 %1559
      %1561 = vrot.lane.b32.xlu0 %v684, 56
      %v1562 = vpop.permute.xlu0 %1561
      %1563 = vrot.lane.b32.xlu0 %v685, 56
      %v1564 = vpop.permute.xlu0 %1563
      %1565 = vrot.lane.b32.xlu0 %v686, 56
      %v1566 = vpop.permute.xlu0 %1565
      %1567 = vrot.lane.b32.xlu0 %v687, 56
      %v1568 = vpop.permute.xlu0 %1567
      %1569 = vrot.lane.b32.xlu0 %v688, 56
      %v1570 = vpop.permute.xlu0 %1569
      %1571 = vrot.lane.b32.xlu0 %v689, 56
      %v1572 = vpop.permute.xlu0 %1571
      %1573 = vrot.lane.b32.xlu0 %v690, 56
      %v1574 = vpop.permute.xlu0 %1573
      %1575 = vrot.lane.b32.xlu0 %v691, 56
      %v1576 = vpop.permute.xlu0 %1575
      %1577 = vrot.lane.b32.xlu0 %v692, 56
      %v1578 = vpop.permute.xlu0 %1577
      %1579 = vrot.lane.b32.xlu0 %v693, 56
      %v1580 = vpop.permute.xlu0 %1579
      %1581 = vrot.lane.b32.xlu0 %v694, 56
      %v1582 = vpop.permute.xlu0 %1581
      %1583 = vrot.lane.b32.xlu0 %v695, 56
      %v1584 = vpop.permute.xlu0 %1583
      %1585 = vrot.lane.b32.xlu0 %v696, 56
      %v1586 = vpop.permute.xlu0 %1585
      %1587 = vrot.lane.b32.xlu0 %v697, 56
      %v1588 = vpop.permute.xlu0 %1587
      %1589 = vrot.lane.b32.xlu0 %v698, 56
      %v1590 = vpop.permute.xlu0 %1589
      %1591 = vrot.lane.b32.xlu0 %v699, 56
      %v1592 = vpop.permute.xlu0 %1591
      %1593 = vrot.lane.b32.xlu0 %v700, 56
      %v1594 = vpop.permute.xlu0 %1593
      %1595 = vrot.lane.b32.xlu0 %v701, 56
      %v1596 = vpop.permute.xlu0 %1595
      %1597 = vrot.lane.b32.xlu0 %v702, 56
      %v1598 = vpop.permute.xlu0 %1597
      %1663 = vrot.lane.b32.xlu0 %v703, 64
      %v1664 = vpop.permute.xlu0 %1663
      %1665 = vrot.lane.b32.xlu0 %v704, 64
      %v1666 = vpop.permute.xlu0 %1665
      %1667 = vrot.lane.b32.xlu0 %v705, 64
      %v1668 = vpop.permute.xlu0 %1667
      %1669 = vrot.lane.b32.xlu0 %v706, 64
      %v1670 = vpop.permute.xlu0 %1669
      %1671 = vrot.lane.b32.xlu0 %v707, 64
      %v1672 = vpop.permute.xlu0 %1671
      %1673 = vrot.lane.b32.xlu0 %v708, 64
      %v1674 = vpop.permute.xlu0 %1673
      %1675 = vrot.lane.b32.xlu0 %v709, 64
      %v1676 = vpop.permute.xlu0 %1675
      %1677 = vrot.lane.b32.xlu0 %v710, 64
      %v1678 = vpop.permute.xlu0 %1677
      %1679 = vrot.lane.b32.xlu0 %v711, 64
      %v1680 = vpop.permute.xlu0 %1679
      %1681 = vrot.lane.b32.xlu0 %v712, 64
      %v1682 = vpop.permute.xlu0 %1681
      %1683 = vrot.lane.b32.xlu0 %v713, 64
      %v1684 = vpop.permute.xlu0 %1683
      %1685 = vrot.lane.b32.xlu0 %v714, 64
      %v1686 = vpop.permute.xlu0 %1685
      %1687 = vrot.lane.b32.xlu0 %v715, 64
      %v1688 = vpop.permute.xlu0 %1687
      %1689 = vrot.lane.b32.xlu0 %v716, 64
      %v1690 = vpop.permute.xlu0 %1689
      %1691 = vrot.lane.b32.xlu0 %v717, 64
      %v1692 = vpop.permute.xlu0 %1691
      %1693 = vrot.lane.b32.xlu0 %v718, 64
      %v1694 = vpop.permute.xlu0 %1693
      %1695 = vrot.lane.b32.xlu0 %v719, 64
      %v1696 = vpop.permute.xlu0 %1695
      %1697 = vrot.lane.b32.xlu0 %v720, 64
      %v1698 = vpop.permute.xlu0 %1697
      %1699 = vrot.lane.b32.xlu0 %v721, 64
      %v1700 = vpop.permute.xlu0 %1699
      %1701 = vrot.lane.b32.xlu0 %v722, 64
      %v1702 = vpop.permute.xlu0 %1701
      %1703 = vrot.lane.b32.xlu0 %v723, 64
      %v1704 = vpop.permute.xlu0 %1703
      %1705 = vrot.lane.b32.xlu0 %v724, 64
      %v1706 = vpop.permute.xlu0 %1705
      %1707 = vrot.lane.b32.xlu0 %v725, 64
      %v1708 = vpop.permute.xlu0 %1707
      %1709 = vrot.lane.b32.xlu0 %v726, 64
      %v1710 = vpop.permute.xlu0 %1709
      %1711 = vrot.lane.b32.xlu0 %v727, 64
      %v1712 = vpop.permute.xlu0 %1711
      %1713 = vrot.lane.b32.xlu0 %v728, 64
      %v1714 = vpop.permute.xlu0 %1713
      %1715 = vrot.lane.b32.xlu0 %v729, 64
      %v1716 = vpop.permute.xlu0 %1715
      %1717 = vrot.lane.b32.xlu0 %v730, 64
      %v1718 = vpop.permute.xlu0 %1717
      %1719 = vrot.lane.b32.xlu0 %v731, 64
      %v1720 = vpop.permute.xlu0 %1719
      %1721 = vrot.lane.b32.xlu0 %v732, 64
      %v1722 = vpop.permute.xlu0 %1721
      %1723 = vrot.lane.b32.xlu0 %v733, 64
      %v1724 = vpop.permute.xlu0 %1723
      %1725 = vrot.lane.b32.xlu0 %v734, 64
      %v1726 = vpop.permute.xlu0 %1725
      %v1759 = vsel %vm413, %v446, %v768
      %v1760 = vsel %vm413, %v447, %v770
      %v1761 = vsel %vm413, %v448, %v772
      %v1762 = vsel %vm413, %v449, %v774
      %v1763 = vsel %vm413, %v450, %v776
      %v1764 = vsel %vm413, %v451, %v778
      %v1765 = vsel %vm413, %v452, %v780
      %v1766 = vsel %vm413, %v453, %v782
      %v1767 = vsel %vm413, %v454, %v784
      %v1768 = vsel %vm413, %v455, %v786
      %v1769 = vsel %vm413, %v456, %v788
      %v1770 = vsel %vm413, %v457, %v790
      %v1771 = vsel %vm413, %v458, %v792
      %v1772 = vsel %vm413, %v459, %v794
      %v1773 = vsel %vm413, %v460, %v796
      %v1774 = vsel %vm413, %v461, %v798
      %v1775 = vsel %vm413, %v462, %v800
      %v1776 = vsel %vm413, %v463, %v802
      %v1777 = vsel %vm413, %v464, %v804
      %v1778 = vsel %vm413, %v465, %v806
      %v1779 = vsel %vm413, %v466, %v808
      %v1780 = vsel %vm413, %v467, %v810
      %v1781 = vsel %vm413, %v468, %v812
      %v1782 = vsel %vm413, %v469, %v814
      %v1783 = vsel %vm413, %v470, %v816
      %v1784 = vsel %vm413, %v471, %v818
      %v1785 = vsel %vm413, %v472, %v820
      %v1786 = vsel %vm413, %v473, %v822
      %v1787 = vsel %vm413, %v474, %v824
      %v1788 = vsel %vm413, %v475, %v826
      %v1789 = vsel %vm413, %v476, %v828
      %v1790 = vsel %vm413, %v477, %v830
      %vm1791 = vcmask 130048
      %v1792 = vsel %vm1791, %v1759, %v896
      %v1793 = vsel %vm1791, %v1760, %v898
      %v1794 = vsel %vm1791, %v1761, %v900
      %v1795 = vsel %vm1791, %v1762, %v902
      %v1796 = vsel %vm1791, %v1763, %v904
      %v1797 = vsel %vm1791, %v1764, %v906
      %v1798 = vsel %vm1791, %v1765, %v908
      %v1799 = vsel %vm1791, %v1766, %v910
      %v1800 = vsel %vm1791, %v1767, %v912
      %v1801 = vsel %vm1791, %v1768, %v914
      %v1802 = vsel %vm1791, %v1769, %v916
      %v1803 = vsel %vm1791, %v1770, %v918
      %v1804 = vsel %vm1791, %v1771, %v920
      %v1805 = vsel %vm1791, %v1772, %v922
      %v1806 = vsel %vm1791, %v1773, %v924
      %v1807 = vsel %vm1791, %v1774, %v926
      %v1808 = vsel %vm1791, %v1775, %v928
      %v1809 = vsel %vm1791, %v1776, %v930
      %v1810 = vsel %vm1791, %v1777, %v932
      %v1811 = vsel %vm1791, %v1778, %v934
      %v1812 = vsel %vm1791, %v1779, %v936
      %v1813 = vsel %vm1791, %v1780, %v938
      %v1814 = vsel %vm1791, %v1781, %v940
      %v1815 = vsel %vm1791, %v1782, %v942
      %v1816 = vsel %vm1791, %v1783, %v944
      %v1817 = vsel %vm1791, %v1784, %v946
      %v1818 = vsel %vm1791, %v1785, %v948
      %v1819 = vsel %vm1791, %v1786, %v950
      %v1820 = vsel %vm1791, %v1787, %v952
      %v1821 = vsel %vm1791, %v1788, %v954
      %v1822 = vsel %vm1791, %v1789, %v956
      %v1823 = vsel %vm1791, %v1790, %v958
      %v1824 = vsel %vm334, %v1792, %v1024
      %v1825 = vsel %vm334, %v1793, %v1026
      %v1826 = vsel %vm334, %v1794, %v1028
      %v1827 = vsel %vm334, %v1795, %v1030
      %v1828 = vsel %vm334, %v1796, %v1032
      %v1829 = vsel %vm334, %v1797, %v1034
      %v1830 = vsel %vm334, %v1798, %v1036
      %v1831 = vsel %vm334, %v1799, %v1038
      %v1832 = vsel %vm334, %v1800, %v1040
      %v1833 = vsel %vm334, %v1801, %v1042
      %v1834 = vsel %vm334, %v1802, %v1044
      %v1835 = vsel %vm334, %v1803, %v1046
      %v1836 = vsel %vm334, %v1804, %v1048
      %v1837 = vsel %vm334, %v1805, %v1050
      %v1838 = vsel %vm334, %v1806, %v1052
      %v1839 = vsel %vm334, %v1807, %v1054
      %v1840 = vsel %vm334, %v1808, %v1056
      %v1841 = vsel %vm334, %v1809, %v1058
      %v1842 = vsel %vm334, %v1810, %v1060
      %v1843 = vsel %vm334, %v1811, %v1062
      %v1844 = vsel %vm334, %v1812, %v1064
      %v1845 = vsel %vm334, %v1813, %v1066
      %v1846 = vsel %vm334, %v1814, %v1068
      %v1847 = vsel %vm334, %v1815, %v1070
      %v1848 = vsel %vm334, %v1816, %v1072
      %v1849 = vsel %vm334, %v1817, %v1074
      %v1850 = vsel %vm334, %v1818, %v1076
      %v1851 = vsel %vm334, %v1819, %v1078
      %v1852 = vsel %vm334, %v1820, %v1080
      %v1853 = vsel %vm334, %v1821, %v1082
      %v1854 = vsel %vm334, %v1822, %v1084
      %v1855 = vsel %vm334, %v1823, %v1086
      %vm1856 = vcmask 261120
      %v1857 = vsel %vm1856, %v1824, %v1152
      %v1858 = vsel %vm1856, %v1825, %v1154
      %v1859 = vsel %vm1856, %v1826, %v1156
      %v1860 = vsel %vm1856, %v1827, %v1158
      %v1861 = vsel %vm1856, %v1828, %v1160
      %v1862 = vsel %vm1856, %v1829, %v1162
      %v1863 = vsel %vm1856, %v1830, %v1164
      %v1864 = vsel %vm1856, %v1831, %v1166
      %v1865 = vsel %vm1856, %v1832, %v1168
      %v1866 = vsel %vm1856, %v1833, %v1170
      %v1867 = vsel %vm1856, %v1834, %v1172
      %v1868 = vsel %vm1856, %v1835, %v1174
      %v1869 = vsel %vm1856, %v1836, %v1176
      %v1870 = vsel %vm1856, %v1837, %v1178
      %v1871 = vsel %vm1856, %v1838, %v1180
      %v1872 = vsel %vm1856, %v1839, %v1182
      %v1873 = vsel %vm1856, %v1840, %v1184
      %v1874 = vsel %vm1856, %v1841, %v1186
      %v1875 = vsel %vm1856, %v1842, %v1188
      %v1876 = vsel %vm1856, %v1843, %v1190
      %v1877 = vsel %vm1856, %v1844, %v1192
      %v1878 = vsel %vm1856, %v1845, %v1194
      %v1879 = vsel %vm1856, %v1846, %v1196
      %v1880 = vsel %vm1856, %v1847, %v1198
      %v1881 = vsel %vm1856, %v1848, %v1200
      %v1882 = vsel %vm1856, %v1849, %v1202
      %v1883 = vsel %vm1856, %v1850, %v1204
      %v1884 = vsel %vm1856, %v1851, %v1206
      %v1885 = vsel %vm1856, %v1852, %v1208
      %v1886 = vsel %vm1856, %v1853, %v1210
      %v1887 = vsel %vm1856, %v1854, %v1212
      %v1888 = vsel %vm1856, %v1855, %v1214
      %vm1889 = vcmask 326656
      %v1890 = vsel %vm1889, %v1857, %v1280
      %v1891 = vsel %vm1889, %v1858, %v1282
      %v1892 = vsel %vm1889, %v1859, %v1284
      %v1893 = vsel %vm1889, %v1860, %v1286
      %v1894 = vsel %vm1889, %v1861, %v1288
      %v1895 = vsel %vm1889, %v1862, %v1290
      %v1896 = vsel %vm1889, %v1863, %v1292
      %v1897 = vsel %vm1889, %v1864, %v1294
      %v1898 = vsel %vm1889, %v1865, %v1296
      %v1899 = vsel %vm1889, %v1866, %v1298
      %v1900 = vsel %vm1889, %v1867, %v1300
      %v1901 = vsel %vm1889, %v1868, %v1302
      %v1902 = vsel %vm1889, %v1869, %v1304
      %v1903 = vsel %vm1889, %v1870, %v1306
      %v1904 = vsel %vm1889, %v1871, %v1308
      %v1905 = vsel %vm1889, %v1872, %v1310
      %v1906 = vsel %vm1889, %v1873, %v1312
      %v1907 = vsel %vm1889, %v1874, %v1314
      %v1908 = vsel %vm1889, %v1875, %v1316
      %v1909 = vsel %vm1889, %v1876, %v1318
      %v1910 = vsel %vm1889, %v1877, %v1320
      %v1911 = vsel %vm1889, %v1878, %v1322
      %v1912 = vsel %vm1889, %v1879, %v1324
      %v1913 = vsel %vm1889, %v1880, %v1326
      %v1914 = vsel %vm1889, %v1881, %v1328
      %v1915 = vsel %vm1889, %v1882, %v1330
      %v1916 = vsel %vm1889, %v1883, %v1332
      %v1917 = vsel %vm1889, %v1884, %v1334
      %v1918 = vsel %vm1889, %v1885, %v1336
      %v1919 = vsel %vm1889, %v1886, %v1338
      %v1920 = vsel %vm1889, %v1887, %v1340
      %v1921 = vsel %vm1889, %v1888, %v1342
      %vm1922 = vcmask 392192
      %v1923 = vsel %vm1922, %v1890, %v1408
      %v1924 = vsel %vm1922, %v1891, %v1410
      %v1925 = vsel %vm1922, %v1892, %v1412
      %v1926 = vsel %vm1922, %v1893, %v1414
      %v1927 = vsel %vm1922, %v1894, %v1416
      %v1928 = vsel %vm1922, %v1895, %v1418
      %v1929 = vsel %vm1922, %v1896, %v1420
      %v1930 = vsel %vm1922, %v1897, %v1422
      %v1931 = vsel %vm1922, %v1898, %v1424
      %v1932 = vsel %vm1922, %v1899, %v1426
      %v1933 = vsel %vm1922, %v1900, %v1428
      %v1934 = vsel %vm1922, %v1901, %v1430
      %v1935 = vsel %vm1922, %v1902, %v1432
      %v1936 = vsel %vm1922, %v1903, %v1434
      %v1937 = vsel %vm1922, %v1904, %v1436
      %v1938 = vsel %vm1922, %v1905, %v1438
      %v1939 = vsel %vm1922, %v1906, %v1440
      %v1940 = vsel %vm1922, %v1907, %v1442
      %v1941 = vsel %vm1922, %v1908, %v1444
      %v1942 = vsel %vm1922, %v1909, %v1446
      %v1943 = vsel %vm1922, %v1910, %v1448
      %v1944 = vsel %vm1922, %v1911, %v1450
      %v1945 = vsel %vm1922, %v1912, %v1452
      %v1946 = vsel %vm1922, %v1913, %v1454
      %v1947 = vsel %vm1922, %v1914, %v1456
      %v1948 = vsel %vm1922, %v1915, %v1458
      %v1949 = vsel %vm1922, %v1916, %v1460
      %v1950 = vsel %vm1922, %v1917, %v1462
      %v1951 = vsel %vm1922, %v1918, %v1464
      %v1952 = vsel %vm1922, %v1919, %v1466
      %v1953 = vsel %vm1922, %v1920, %v1468
      %v1954 = vsel %vm1922, %v1921, %v1470
      %vm1955 = vcmask 457728
      %v1956 = vsel %vm1955, %v1923, %v1536
      %v1957 = vsel %vm1955, %v1924, %v1538
      %v1958 = vsel %vm1955, %v1925, %v1540
      %v1959 = vsel %vm1955, %v1926, %v1542
      %v1960 = vsel %vm1955, %v1927, %v1544
      %v1961 = vsel %vm1955, %v1928, %v1546
      %v1962 = vsel %vm1955, %v1929, %v1548
      %v1963 = vsel %vm1955, %v1930, %v1550
      %v1964 = vsel %vm1955, %v1931, %v1552
      %v1965 = vsel %vm1955, %v1932, %v1554
      %v1966 = vsel %vm1955, %v1933, %v1556
      %v1967 = vsel %vm1955, %v1934, %v1558
      %v1968 = vsel %vm1955, %v1935, %v1560
      %v1969 = vsel %vm1955, %v1936, %v1562
      %v1970 = vsel %vm1955, %v1937, %v1564
      %v1971 = vsel %vm1955, %v1938, %v1566
      %v1972 = vsel %vm1955, %v1939, %v1568
      %v1973 = vsel %vm1955, %v1940, %v1570
      %v1974 = vsel %vm1955, %v1941, %v1572
      %v1975 = vsel %vm1955, %v1942, %v1574
      %v1976 = vsel %vm1955, %v1943, %v1576
      %v1977 = vsel %vm1955, %v1944, %v1578
      %v1978 = vsel %vm1955, %v1945, %v1580
      %v1979 = vsel %vm1955, %v1946, %v1582
      %v1980 = vsel %vm1955, %v1947, %v1584
      %v1981 = vsel %vm1955, %v1948, %v1586
      %v1982 = vsel %vm1955, %v1949, %v1588
      %v1983 = vsel %vm1955, %v1950, %v1590
      %v1984 = vsel %vm1955, %v1951, %v1592
      %v1985 = vsel %vm1955, %v1952, %v1594
      %v1986 = vsel %vm1955, %v1953, %v1596
      %v1987 = vsel %vm1955, %v1954, %v1598
      %vm1988 = vcmask 523264
      %v1989 = vsel %vm1988, %v1956, %v1664
      %v1990 = vsel %vm1988, %v1957, %v1666
      %v1991 = vsel %vm1988, %v1958, %v1668
      %v1992 = vsel %vm1988, %v1959, %v1670
      %v1993 = vsel %vm1988, %v1960, %v1672
      %v1994 = vsel %vm1988, %v1961, %v1674
      %v1995 = vsel %vm1988, %v1962, %v1676
      %v1996 = vsel %vm1988, %v1963, %v1678
      %v1997 = vsel %vm1988, %v1964, %v1680
      %v1998 = vsel %vm1988, %v1965, %v1682
      %v1999 = vsel %vm1988, %v1966, %v1684
      %v2000 = vsel %vm1988, %v1967, %v1686
      %v2001 = vsel %vm1988, %v1968, %v1688
      %v2002 = vsel %vm1988, %v1969, %v1690
      %v2003 = vsel %vm1988, %v1970, %v1692
      %v2004 = vsel %vm1988, %v1971, %v1694
      %v2005 = vsel %vm1988, %v1972, %v1696
      %v2006 = vsel %vm1988, %v1973, %v1698
      %v2007 = vsel %vm1988, %v1974, %v1700
      %v2008 = vsel %vm1988, %v1975, %v1702
      %v2009 = vsel %vm1988, %v1976, %v1704
      %v2010 = vsel %vm1988, %v1977, %v1706
      %v2011 = vsel %vm1988, %v1978, %v1708
      %v2012 = vsel %vm1988, %v1979, %v1710
      %v2013 = vsel %vm1988, %v1980, %v1712
      %v2014 = vsel %vm1988, %v1981, %v1714
      %v2015 = vsel %vm1988, %v1982, %v1716
      %v2016 = vsel %vm1988, %v1983, %v1718
      %v2017 = vsel %vm1988, %v1984, %v1720
      %v2018 = vsel %vm1988, %v1985, %v1722
      %v2019 = vsel %vm1988, %v1986, %v1724
      %v2020 = vsel %vm1988, %v1987, %v1726
      %vm2021 = vcmask 588800
      %2022 = vst.msk [vmem:[#allocation3] sm:$0xff] %vm2021, %v1989
      %2023 = vst.msk [vmem:[#allocation3 + $0x10] sm:$0xff] %vm2021, %v1990
      %2024 = vst.msk [vmem:[#allocation3 + $0x20] sm:$0xff] %vm2021, %v1991
      %2025 = vst.msk [vmem:[#allocation3 + $0x30] sm:$0xff] %vm2021, %v1992
      %2026 = vst.msk [vmem:[#allocation3 + $0x40] sm:$0xff] %vm2021, %v1993
      %2027 = vst.msk [vmem:[#allocation3 + $0x50] sm:$0xff] %vm2021, %v1994
      %2028 = vst.msk [vmem:[#allocation3 + $0x60] sm:$0xff] %vm2021, %v1995
      %2029 = vst.msk [vmem:[#allocation3 + $0x70] sm:$0xff] %vm2021, %v1996
      %2030 = vst.msk [vmem:[#allocation3 + $0x80] sm:$0xff] %vm2021, %v1997
      %2031 = vst.msk [vmem:[#allocation3 + $0x90] sm:$0xff] %vm2021, %v1998
      %2032 = vst.msk [vmem:[#allocation3 + $0xa0] sm:$0xff] %vm2021, %v1999
      %2033 = vst.msk [vmem:[#allocation3 + $0xb0] sm:$0xff] %vm2021, %v2000
      %2034 = vst.msk [vmem:[#allocation3 + $0xc0] sm:$0xff] %vm2021, %v2001
      %2035 = vst.msk [vmem:[#allocation3 + $0xd0] sm:$0xff] %vm2021, %v2002
      %2036 = vst.msk [vmem:[#allocation3 + $0xe0] sm:$0xff] %vm2021, %v2003
      %2037 = vst.msk [vmem:[#allocation3 + $0xf0] sm:$0xff] %vm2021, %v2004
      %2038 = vst.msk [vmem:[#allocation3 + $0x100] sm:$0xff] %vm2021, %v2005
      %2039 = vst.msk [vmem:[#allocation3 + $0x110] sm:$0xff] %vm2021, %v2006
      %2040 = vst.msk [vmem:[#allocation3 + $0x120] sm:$0xff] %vm2021, %v2007
      %2041 = vst.msk [vmem:[#allocation3 + $0x130] sm:$0xff] %vm2021, %v2008
      %2042 = vst.msk [vmem:[#allocation3 + $0x140] sm:$0xff] %vm2021, %v2009
      %2043 = vst.msk [vmem:[#allocation3 + $0x150] sm:$0xff] %vm2021, %v2010
      %2044 = vst.msk [vmem:[#allocation3 + $0x160] sm:$0xff] %vm2021, %v2011
      %2045 = vst.msk [vmem:[#allocation3 + $0x170] sm:$0xff] %vm2021, %v2012
      %2046 = vst.msk [vmem:[#allocation3 + $0x180] sm:$0xff] %vm2021, %v2013
      %2047 = vst.msk [vmem:[#allocation3 + $0x190] sm:$0xff] %vm2021, %v2014
      %2048 = vst.msk [vmem:[#allocation3 + $0x1a0] sm:$0xff] %vm2021, %v2015
      %2049 = vst.msk [vmem:[#allocation3 + $0x1b0] sm:$0xff] %vm2021, %v2016
      %2050 = vst.msk [vmem:[#allocation3 + $0x1c0] sm:$0xff] %vm2021, %v2017
      %2051 = vst.msk [vmem:[#allocation3 + $0x1d0] sm:$0xff] %vm2021, %v2018
      %2052 = vst.msk [vmem:[#allocation3 + $0x1e0] sm:$0xff] %vm2021, %v2019
      %2053 = vst.msk [vmem:[#allocation3 + $0x1f0] sm:$0xff] %vm2021, %v2020
      %v2054 = vld [vmem:[%s7] sm:$0xff]
      %v2056 = vsel %vm413, %v380, 0
      %v2059 = vsel %vm413, %v381, 0
      %v2062 = vsel %vm413, %v382, 0
      %v2065 = vsel %vm413, %v383, 0
      %v2068 = vsel %vm413, %v384, 0
      %v2071 = vsel %vm413, %v385, 0
      %v2074 = vsel %vm413, %v386, 0
      %v2077 = vsel %vm413, %v387, 0
      %v2080 = vsel %vm413, %v388, 0
      %v2083 = vsel %vm413, %v389, 0
      %v2086 = vsel %vm413, %v390, 0
      %v2089 = vsel %vm413, %v391, 0
      %v2092 = vsel %vm413, %v392, 0
      %v2095 = vsel %vm413, %v393, 0
      %v2098 = vsel %vm413, %v394, 0
      %v2101 = vsel %vm413, %v395, 0
      %v2104 = vsel %vm413, %v396, 0
      %v2107 = vsel %vm413, %v397, 0
      %v2110 = vsel %vm413, %v398, 0
      %v2113 = vsel %vm413, %v399, 0
      %v2116 = vsel %vm413, %v400, 0
      %v2119 = vsel %vm413, %v401, 0
      %v2122 = vsel %vm413, %v402, 0
      %v2125 = vsel %vm413, %v403, 0
      %v2128 = vsel %vm413, %v404, 0
      %v2131 = vsel %vm413, %v405, 0
      %v2134 = vsel %vm413, %v406, 0
      %v2137 = vsel %vm413, %v407, 0
      %v2140 = vsel %vm413, %v408, 0
      %v2143 = vsel %vm413, %v409, 0
      %v2146 = vsel %vm413, %v410, 0
      %v2149 = vsel %vm413, %v411, 0
      %2151 = vmatprep.subr.mxu0 0.0
      %2152 = vmatpush1.msra.mxu0 %v2054
      %2153 = vmatprep.subr.mxu0 0.0
      %2154 = vmatpush1.msra.mxu0 0.0
      %2155 = vmatprep.subr.mxu0 0.0
      %2156 = vmatpush1.msra.mxu0 0.0
      %2157 = vmatprep.subr.mxu0 0.0
      %2158 = vmatpush1.msra.mxu0 0.0
      %2159 = vmatprep.subr.mxu0 0.0
      %2160 = vmatpush1.msra.mxu0 0.0
      %2161 = vmatprep.subr.mxu0 0.0
      %2162 = vmatpush1.msra.mxu0 0.0
      %2163 = vmatprep.subr.mxu0 0.0
      %2164 = vmatpush1.msra.mxu0 0.0
      %2165 = vmatprep.subr.mxu0 0.0
      %2166 = vmatpush1.msra.mxu0 0.0
      %2167 = vmatprep.subr.mxu0 0.0
      %2168 = vmatpush1.msra.mxu0 0.0
      %2169 = vmatprep.subr.mxu0 0.0
      %2170 = vmatpush1.msra.mxu0 0.0
      %2171 = vmatprep.subr.mxu0 0.0
      %2172 = vmatpush1.msra.mxu0 0.0
      %2173 = vmatprep.subr.mxu0 0.0
      %2174 = vmatpush1.msra.mxu0 0.0
      %2175 = vmatprep.subr.mxu0 0.0
      %2176 = vmatpush1.msra.mxu0 0.0
      %2177 = vmatprep.subr.mxu0 0.0
      %2178 = vmatpush1.msra.mxu0 0.0
      %2179 = vmatprep.subr.mxu0 0.0
      %2180 = vmatpush1.msra.mxu0 0.0
      %2181 = vmatprep.subr.mxu0 0.0
      %2182 = vmatpush1.msra.mxu0 0.0
      %2183 = vmatprep.subr.mxu0 0.0
      %2184 = vmatpush1.msra.mxu0 0.0
      %2185 = vmatprep.subr.mxu0 0.0
      %2186 = vmatpush1.msra.mxu0 0.0
      %2187 = vmatprep.subr.mxu0 0.0
      %2188 = vmatpush1.msra.mxu0 0.0
      %2189 = vmatprep.subr.mxu0 0.0
      %2190 = vmatpush1.msra.mxu0 0.0
      %2191 = vmatprep.subr.mxu0 0.0
      %2192 = vmatpush1.msra.mxu0 0.0
      %2193 = vmatprep.subr.mxu0 0.0
      %2194 = vmatpush1.msra.mxu0 0.0
      %2195 = vmatprep.subr.mxu0 0.0
      %2196 = vmatpush1.msra.mxu0 0.0
      %2197 = vmatprep.subr.mxu0 0.0
      %2198 = vmatpush1.msra.mxu0 0.0
      %2199 = vmatprep.subr.mxu0 0.0
      %2200 = vmatpush1.msra.mxu0 0.0
      %2201 = vmatprep.subr.mxu0 0.0
      %2202 = vmatpush1.msra.mxu0 0.0
      %2203 = vmatprep.subr.mxu0 0.0
      %2204 = vmatpush1.msra.mxu0 0.0
      %2205 = vmatprep.subr.mxu0 0.0
      %2206 = vmatpush1.msra.mxu0 0.0
      %2207 = vmatprep.subr.mxu0 0.0
      %2208 = vmatpush1.msra.mxu0 0.0
      %2209 = vmatprep.subr.mxu0 0.0
      %2210 = vmatpush1.msra.mxu0 0.0
      %2211 = vmatprep.subr.mxu0 0.0
      %2212 = vmatpush1.msra.mxu0 0.0
      %2213 = vmatprep.subr.mxu0 0.0
      %2214 = vmatpush1.msra.mxu0 0.0
      %2215 = vmatprep.mubr.f32.mxu0 0.0
      %2216 = vmatmul.mubr.f32.gmra.mrb[0].mxu0 %v2056
      %v2217 = vpop.f32.mrb[0].mxu0
      %v2218 = vadd.f32 0.0, %v2217
      %v2219 = vpop.f32.mrb[0].mxu0
      %2220 = vmatprep.mubr.f32.mxu0 0.0
      %2221 = vmatmul.mubr.f32.gmra.mrb[0].mxu0 %v2059
      %v2222 = vpop.f32.mrb[0].mxu0
      %v2223 = vadd.f32 0.0, %v2222
      %v2224 = vpop.f32.mrb[0].mxu0
      %2225 = vmatprep.mubr.f32.mxu0 0.0
      %2226 = vmatmul.mubr.f32.gmra.mrb[0].mxu0 %v2062
      %v2227 = vpop.f32.mrb[0].mxu0
      %v2228 = vadd.f32 0.0, %v2227
      %v2229 = vpop.f32.mrb[0].mxu0
      %2230 = vmatprep.mubr.f32.mxu0 0.0
      %2231 = vmatmul.mubr.f32.gmra.mrb[0].mxu0 %v2065
      %v2232 = vpop.f32.mrb[0].mxu0
      %v2233 = vadd.f32 0.0, %v2232
      %v2234 = vpop.f32.mrb[0].mxu0
      %2235 = vmatprep.mubr.f32.mxu0 0.0
      %2236 = vmatmul.mubr.f32.gmra.mrb[0].mxu0 %v2068
      %v2237 = vpop.f32.mrb[0].mxu0
      %v2238 = vadd.f32 0.0, %v2237
      %v2239 = vpop.f32.mrb[0].mxu0
      %2240 = vmatprep.mubr.f32.mxu0 0.0
      %2241 = vmatmul.mubr.f32.gmra.mrb[0].mxu0 %v2071
      %v2242 = vpop.f32.mrb[0].mxu0
      %v2243 = vadd.f32 0.0, %v2242
      %v2244 = vpop.f32.mrb[0].mxu0
      %2245 = vmatprep.mubr.f32.mxu0 0.0
      %2246 = vmatmul.mubr.f32.gmra.mrb[0].mxu0 %v2074
      %v2247 = vpop.f32.mrb[0].mxu0
      %v2248 = vadd.f32 0.0, %v2247
      %v2249 = vpop.f32.mrb[0].mxu0
      %2250 = vmatprep.mubr.f32.mxu0 0.0
      %2251 = vmatmul.mubr.f32.gmra.mrb[0].mxu0 %v2077
      %v2252 = vpop.f32.mrb[0].mxu0
      %v2253 = vadd.f32 0.0, %v2252
      %v2254 = vpop.f32.mrb[0].mxu0
      %2255 = vmatprep.mubr.f32.mxu0 0.0
      %2256 = vmatmul.mubr.f32.gmra.mrb[0].mxu0 %v2080
      %v2257 = vpop.f32.mrb[0].mxu0
      %v2258 = vadd.f32 0.0, %v2257
      %v2259 = vpop.f32.mrb[0].mxu0
      %2260 = vmatprep.mubr.f32.mxu0 0.0
      %2261 = vmatmul.mubr.f32.gmra.mrb[0].mxu0 %v2083
      %v2262 = vpop.f32.mrb[0].mxu0
      %v2263 = vadd.f32 0.0, %v2262
      %v2264 = vpop.f32.mrb[0].mxu0
      %2265 = vmatprep.mubr.f32.mxu0 0.0
      %2266 = vmatmul.mubr.f32.gmra.mrb[0].mxu0 %v2086
      %v2267 = vpop.f32.mrb[0].mxu0
      %v2268 = vadd.f32 0.0, %v2267
      %v2269 = vpop.f32.mrb[0].mxu0
      %2270 = vmatprep.mubr.f32.mxu0 0.0
      %2271 = vmatmul.mubr.f32.gmra.mrb[0].mxu0 %v2089
      %v2272 = vpop.f32.mrb[0].mxu0
      %v2273 = vadd.f32 0.0, %v2272
      %v2274 = vpop.f32.mrb[0].mxu0
      %2275 = vmatprep.mubr.f32.mxu0 0.0
      %2276 = vmatmul.mubr.f32.gmra.mrb[0].mxu0 %v2092
      %v2277 = vpop.f32.mrb[0].mxu0
      %v2278 = vadd.f32 0.0, %v2277
      %v2279 = vpop.f32.mrb[0].mxu0
      %2280 = vmatprep.mubr.f32.mxu0 0.0
      %2281 = vmatmul.mubr.f32.gmra.mrb[0].mxu0 %v2095
      %v2282 = vpop.f32.mrb[0].mxu0
      %v2283 = vadd.f32 0.0, %v2282
      %v2284 = vpop.f32.mrb[0].mxu0
      %2285 = vmatprep.mubr.f32.mxu0 0.0
      %2286 = vmatmul.mubr.f32.gmra.mrb[0].mxu0 %v2098
      %v2287 = vpop.f32.mrb[0].mxu0
      %v2288 = vadd.f32 0.0, %v2287
      %v2289 = vpop.f32.mrb[0].mxu0
      %2290 = vmatprep.mubr.f32.mxu0 0.0
      %2291 = vmatmul.mubr.f32.gmra.mrb[0].mxu0 %v2101
      %v2292 = vpop.f32.mrb[0].mxu0
      %v2293 = vadd.f32 0.0, %v2292
      %v2294 = vpop.f32.mrb[0].mxu0
      %2295 = vmatprep.mubr.f32.mxu0 0.0
      %2296 = vmatmul.mubr.f32.gmra.mrb[0].mxu0 %v2104
      %v2297 = vpop.f32.mrb[0].mxu0
      %v2298 = vadd.f32 0.0, %v2297
      %v2299 = vpop.f32.mrb[0].mxu0
      %2300 = vmatprep.mubr.f32.mxu0 0.0
      %2301 = vmatmul.mubr.f32.gmra.mrb[0].mxu0 %v2107
      %v2302 = vpop.f32.mrb[0].mxu0
      %v2303 = vadd.f32 0.0, %v2302
      %v2304 = vpop.f32.mrb[0].mxu0
      %2305 = vmatprep.mubr.f32.mxu0 0.0
      %2306 = vmatmul.mubr.f32.gmra.mrb[0].mxu0 %v2110
      %v2307 = vpop.f32.mrb[0].mxu0
      %v2308 = vadd.f32 0.0, %v2307
      %v2309 = vpop.f32.mrb[0].mxu0
      %2310 = vmatprep.mubr.f32.mxu0 0.0
      %2311 = vmatmul.mubr.f32.gmra.mrb[0].mxu0 %v2113
      %v2312 = vpop.f32.mrb[0].mxu0
      %v2313 = vadd.f32 0.0, %v2312
      %v2314 = vpop.f32.mrb[0].mxu0
      %2315 = vmatprep.mubr.f32.mxu0 0.0
      %2316 = vmatmul.mubr.f32.gmra.mrb[0].mxu0 %v2116
      %v2317 = vpop.f32.mrb[0].mxu0
      %v2318 = vadd.f32 0.0, %v2317
      %v2319 = vpop.f32.mrb[0].mxu0
      %2320 = vmatprep.mubr.f32.mxu0 0.0
      %2321 = vmatmul.mubr.f32.gmra.mrb[0].mxu0 %v2119
      %v2322 = vpop.f32.mrb[0].mxu0
      %v2323 = vadd.f32 0.0, %v2322
      %v2324 = vpop.f32.mrb[0].mxu0
      %2325 = vmatprep.mubr.f32.mxu0 0.0
      %2326 = vmatmul.mubr.f32.gmra.mrb[0].mxu0 %v2122
      %v2327 = vpop.f32.mrb[0].mxu0
      %v2328 = vadd.f32 0.0, %v2327
      %v2329 = vpop.f32.mrb[0].mxu0
      %2330 = vmatprep.mubr.f32.mxu0 0.0
      %2331 = vmatmul.mubr.f32.gmra.mrb[0].mxu0 %v2125
      %v2332 = vpop.f32.mrb[0].mxu0
      %v2333 = vadd.f32 0.0, %v2332
      %v2334 = vpop.f32.mrb[0].mxu0
      %2335 = vmatprep.mubr.f32.mxu0 0.0
      %2336 = vmatmul.mubr.f32.gmra.mrb[0].mxu0 %v2128
      %v2337 = vpop.f32.mrb[0].mxu0
      %v2338 = vadd.f32 0.0, %v2337
      %v2339 = vpop.f32.mrb[0].mxu0
      %2340 = vmatprep.mubr.f32.mxu0 0.0
      %2341 = vmatmul.mubr.f32.gmra.mrb[0].mxu0 %v2131
      %v2342 = vpop.f32.mrb[0].mxu0
      %v2343 = vadd.f32 0.0, %v2342
      %v2344 = vpop.f32.mrb[0].mxu0
      %2345 = vmatprep.mubr.f32.mxu0 0.0
      %2346 = vmatmul.mubr.f32.gmra.mrb[0].mxu0 %v2134
      %v2347 = vpop.f32.mrb[0].mxu0
      %v2348 = vadd.f32 0.0, %v2347
      %v2349 = vpop.f32.mrb[0].mxu0
      %2350 = vmatprep.mubr.f32.mxu0 0.0
      %2351 = vmatmul.mubr.f32.gmra.mrb[0].mxu0 %v2137
      %v2352 = vpop.f32.mrb[0].mxu0
      %v2353 = vadd.f32 0.0, %v2352
      %v2354 = vpop.f32.mrb[0].mxu0
      %2355 = vmatprep.mubr.f32.mxu0 0.0
      %2356 = vmatmul.mubr.f32.gmra.mrb[0].mxu0 %v2140
      %v2357 = vpop.f32.mrb[0].mxu0
      %v2358 = vadd.f32 0.0, %v2357
      %v2359 = vpop.f32.mrb[0].mxu0
      %2360 = vmatprep.mubr.f32.mxu0 0.0
      %2361 = vmatmul.mubr.f32.gmra.mrb[0].mxu0 %v2143
      %v2362 = vpop.f32.mrb[0].mxu0
      %v2363 = vadd.f32 0.0, %v2362
      %v2364 = vpop.f32.mrb[0].mxu0
      %2365 = vmatprep.mubr.f32.mxu0 0.0
      %2366 = vmatmul.mubr.f32.gmra.mrb[0].mxu0 %v2146
      %v2367 = vpop.f32.mrb[0].mxu0
      %v2368 = vadd.f32 0.0, %v2367
      %v2369 = vpop.f32.mrb[0].mxu0
      %2370 = vmatprep.mubr.f32.mxu0 0.0
      %2371 = vmatmul.mubr.f32.gmra.mrb[0].mxu0 %v2149
      %v2372 = vpop.f32.mrb[0].mxu0
      %v2373 = vadd.f32 0.0, %v2372
      %v2374 = vpop.f32.mrb[0].mxu0
      %2375 = vdwg.mxu0
      %v2376 = vld [vmem:[%s8] sm:$0x1]
      %v2378 = vlaneseq
      %v2379 = vshrl.u32 %v2378, 7
      %v2380 = vsub.s32 0, %v2379
      %v2381 = vrot.slane %v2376, %v2380
      %v2383 = vadd.f32 %v2218, %v2381
      %v2384 = vadd.f32 %v2223, %v2381
      %v2385 = vadd.f32 %v2228, %v2381
      %v2386 = vadd.f32 %v2233, %v2381
      %v2387 = vadd.f32 %v2238, %v2381
      %v2388 = vadd.f32 %v2243, %v2381
      %v2389 = vadd.f32 %v2248, %v2381
      %v2390 = vadd.f32 %v2253, %v2381
      %v2391 = vadd.f32 %v2258, %v2381
      %v2392 = vadd.f32 %v2263, %v2381
      %v2393 = vadd.f32 %v2268, %v2381
      %v2394 = vadd.f32 %v2273, %v2381
      %v2395 = vadd.f32 %v2278, %v2381
      %v2396 = vadd.f32 %v2283, %v2381
      %v2397 = vadd.f32 %v2288, %v2381
      %v2398 = vadd.f32 %v2293, %v2381
      %v2399 = vadd.f32 %v2298, %v2381
      %v2400 = vadd.f32 %v2303, %v2381
      %v2401 = vadd.f32 %v2308, %v2381
      %v2402 = vadd.f32 %v2313, %v2381
      %v2403 = vadd.f32 %v2318, %v2381
      %v2404 = vadd.f32 %v2323, %v2381
      %v2405 = vadd.f32 %v2328, %v2381
      %v2406 = vadd.f32 %v2333, %v2381
      %v2407 = vadd.f32 %v2338, %v2381
      %v2408 = vadd.f32 %v2343, %v2381
      %v2409 = vadd.f32 %v2348, %v2381
      %v2410 = vadd.f32 %v2353, %v2381
      %v2411 = vadd.f32 %v2358, %v2381
      %v2412 = vadd.f32 %v2363, %v2381
      %v2413 = vadd.f32 %v2368, %v2381
      %v2414 = vadd.f32 %v2373, %v2381
      %2415 = vst.msk [vmem:[#allocation4] sm:$0xff] %vm413, %v2383
      %2416 = vst.msk [vmem:[#allocation4 + $0x8] sm:$0xff] %vm413, %v2384
      %2417 = vst.msk [vmem:[#allocation4 + $0x10] sm:$0xff] %vm413, %v2385
      %2418 = vst.msk [vmem:[#allocation4 + $0x18] sm:$0xff] %vm413, %v2386
      %2419 = vst.msk [vmem:[#allocation4 + $0x20] sm:$0xff] %vm413, %v2387
      %2420 = vst.msk [vmem:[#allocation4 + $0x28] sm:$0xff] %vm413, %v2388
      %2421 = vst.msk [vmem:[#allocation4 + $0x30] sm:$0xff] %vm413, %v2389
      %2422 = vst.msk [vmem:[#allocation4 + $0x38] sm:$0xff] %vm413, %v2390
      %2423 = vst.msk [vmem:[#allocation4 + $0x40] sm:$0xff] %vm413, %v2391
      %2424 = vst.msk [vmem:[#allocation4 + $0x48] sm:$0xff] %vm413, %v2392
      %2425 = vst.msk [vmem:[#allocation4 + $0x50] sm:$0xff] %vm413, %v2393
      %2426 = vst.msk [vmem:[#allocation4 + $0x58] sm:$0xff] %vm413, %v2394
      %2427 = vst.msk [vmem:[#allocation4 + $0x60] sm:$0xff] %vm413, %v2395
      %2428 = vst.msk [vmem:[#allocation4 + $0x68] sm:$0xff] %vm413, %v2396
      %2429 = vst.msk [vmem:[#allocation4 + $0x70] sm:$0xff] %vm413, %v2397
      %2430 = vst.msk [vmem:[#allocation4 + $0x78] sm:$0xff] %vm413, %v2398
      %2431 = vst.msk [vmem:[#allocation4 + $0x80] sm:$0xff] %vm413, %v2399
      %2432 = vst.msk [vmem:[#allocation4 + $0x88] sm:$0xff] %vm413, %v2400
      %2433 = vst.msk [vmem:[#allocation4 + $0x90] sm:$0xff] %vm413, %v2401
      %2434 = vst.msk [vmem:[#allocation4 + $0x98] sm:$0xff] %vm413, %v2402
      %2435 = vst.msk [vmem:[#allocation4 + $0xa0] sm:$0xff] %vm413, %v2403
      %2436 = vst.msk [vmem:[#allocation4 + $0xa8] sm:$0xff] %vm413, %v2404
      %2437 = vst.msk [vmem:[#allocation4 + $0xb0] sm:$0xff] %vm413, %v2405
      %2438 = vst.msk [vmem:[#allocation4 + $0xb8] sm:$0xff] %vm413, %v2406
      %2439 = vst.msk [vmem:[#allocation4 + $0xc0] sm:$0xff] %vm413, %v2407
      %2440 = vst.msk [vmem:[#allocation4 + $0xc8] sm:$0xff] %vm413, %v2408
      %2441 = vst.msk [vmem:[#allocation4 + $0xd0] sm:$0xff] %vm413, %v2409
      %2442 = vst.msk [vmem:[#allocation4 + $0xd8] sm:$0xff] %vm413, %v2410
      %2443 = vst.msk [vmem:[#allocation4 + $0xe0] sm:$0xff] %vm413, %v2411
      %2444 = vst.msk [vmem:[#allocation4 + $0xe8] sm:$0xff] %vm413, %v2412
      %2445 = vst.msk [vmem:[#allocation4 + $0xf0] sm:$0xff] %vm413, %v2413
      %2446 = vst.msk [vmem:[#allocation4 + $0xf8] sm:$0xff] %vm413, %v2414
      %v2447 = vld [vmem:[#allocation3] sm:$0xff]
      %v2448 = vld [vmem:[#allocation3 + $0x10] sm:$0xff]
      %v2449 = vld [vmem:[#allocation3 + $0x20] sm:$0xff]
      %v2450 = vld [vmem:[#allocation3 + $0x30] sm:$0xff]
      %v2451 = vld [vmem:[#allocation3 + $0x40] sm:$0xff]
      %v2452 = vld [vmem:[#allocation3 + $0x50] sm:$0xff]
      %v2453 = vld [vmem:[#allocation3 + $0x60] sm:$0xff]
      %v2454 = vld [vmem:[#allocation3 + $0x70] sm:$0xff]
      %v2455 = vld [vmem:[#allocation3 + $0x80] sm:$0xff]
      %v2456 = vld [vmem:[#allocation3 + $0x90] sm:$0xff]
      %v2457 = vld [vmem:[#allocation3 + $0xa0] sm:$0xff]
      %v2458 = vld [vmem:[#allocation3 + $0xb0] sm:$0xff]
      %v2459 = vld [vmem:[#allocation3 + $0xc0] sm:$0xff]
      %v2460 = vld [vmem:[#allocation3 + $0xd0] sm:$0xff]
      %v2461 = vld [vmem:[#allocation3 + $0xe0] sm:$0xff]
      %v2462 = vld [vmem:[#allocation3 + $0xf0] sm:$0xff]
      %v2463 = vld [vmem:[#allocation3 + $0x100] sm:$0xff]
      %v2464 = vld [vmem:[#allocation3 + $0x110] sm:$0xff]
      %v2465 = vld [vmem:[#allocation3 + $0x120] sm:$0xff]
      %v2466 = vld [vmem:[#allocation3 + $0x130] sm:$0xff]
      %v2467 = vld [vmem:[#allocation3 + $0x140] sm:$0xff]
      %v2468 = vld [vmem:[#allocation3 + $0x150] sm:$0xff]
      %v2469 = vld [vmem:[#allocation3 + $0x160] sm:$0xff]
      %v2470 = vld [vmem:[#allocation3 + $0x170] sm:$0xff]
      %v2471 = vld [vmem:[#allocation3 + $0x180] sm:$0xff]
      %v2472 = vld [vmem:[#allocation3 + $0x190] sm:$0xff]
      %v2473 = vld [vmem:[#allocation3 + $0x1a0] sm:$0xff]
      %v2474 = vld [vmem:[#allocation3 + $0x1b0] sm:$0xff]
      %v2475 = vld [vmem:[#allocation3 + $0x1c0] sm:$0xff]
      %v2476 = vld [vmem:[#allocation3 + $0x1d0] sm:$0xff]
      %v2477 = vld [vmem:[#allocation3 + $0x1e0] sm:$0xff]
      %v2478 = vld [vmem:[#allocation3 + $0x1f0] sm:$0xff]
      %v2479 = vld [vmem:[%s1] sm:$0xff]
      %v2480 = vld [vmem:[%s1 + $0x8] sm:$0xff]
      %v2481 = vld [vmem:[%s1 + $0x10] sm:$0xff]
      %v2482 = vld [vmem:[%s1 + $0x18] sm:$0xff]
      %v2483 = vld [vmem:[%s1 + $0x20] sm:$0xff]
      %v2484 = vld [vmem:[%s1 + $0x28] sm:$0xff]
      %v2485 = vld [vmem:[%s1 + $0x30] sm:$0xff]
      %v2486 = vld [vmem:[%s1 + $0x38] sm:$0xff]
      %v2487 = vld [vmem:[%s1 + $0x40] sm:$0xff]
      %v2488 = vld [vmem:[%s2] sm:$0x1]
      %v2490 = vlaneseq
      %v2491 = vshrl.u32 %v2490, 7
      %v2492 = vsub.s32 0, %v2491
      %v2493 = vrot.slane %v2488, %v2492
      %v2496 = vsel %vm2021, %v2447, 0
      %v2499 = vsel %vm2021, %v2448, 0
      %v2502 = vsel %vm2021, %v2449, 0
      %v2505 = vsel %vm2021, %v2450, 0
      %v2508 = vsel %vm2021, %v2451, 0
      %v2511 = vsel %vm2021, %v2452, 0
      %v2514 = vsel %vm2021, %v2453, 0
      %v2517 = vsel %vm2021, %v2454, 0
      %v2520 = vsel %vm2021, %v2455, 0
      %v2523 = vsel %vm2021, %v2456, 0
      %v2526 = vsel %vm2021, %v2457, 0
      %v2529 = vsel %vm2021, %v2458, 0
      %v2532 = vsel %vm2021, %v2459, 0
      %v2535 = vsel %vm2021, %v2460, 0
      %v2538 = vsel %vm2021, %v2461, 0
      %v2541 = vsel %vm2021, %v2462, 0
      %v2544 = vsel %vm2021, %v2463, 0
      %v2547 = vsel %vm2021, %v2464, 0
      %v2550 = vsel %vm2021, %v2465, 0
      %v2553 = vsel %vm2021, %v2466, 0
      %v2556 = vsel %vm2021, %v2467, 0
      %v2559 = vsel %vm2021, %v2468, 0
      %v2562 = vsel %vm2021, %v2469, 0
      %v2565 = vsel %vm2021, %v2470, 0
      %v2568 = vsel %vm2021, %v2471, 0
      %v2571 = vsel %vm2021, %v2472, 0
      %v2574 = vsel %vm2021, %v2473, 0
      %v2577 = vsel %vm2021, %v2474, 0
      %v2580 = vsel %vm2021, %v2475, 0
      %v2583 = vsel %vm2021, %v2476, 0
      %v2586 = vsel %vm2021, %v2477, 0
      %v2589 = vsel %vm2021, %v2478, 0
      %2591 = vmatprep.subr.mxu0 0.0
      %2592 = vmatpush1.msra.mxu0 %v2479
      %2593 = vmatprep.subr.mxu0 0.0
      %2594 = vmatpush1.msra.mxu0 %v2480
      %2595 = vmatprep.subr.mxu0 0.0
      %2596 = vmatpush1.msra.mxu0 %v2481
      %2597 = vmatprep.subr.mxu0 0.0
      %2598 = vmatpush1.msra.mxu0 %v2482
      %2599 = vmatprep.subr.mxu0 0.0
      %2600 = vmatpush1.msra.mxu0 %v2483
      %2601 = vmatprep.subr.mxu0 0.0
      %2602 = vmatpush1.msra.mxu0 %v2484
      %2603 = vmatprep.subr.mxu0 0.0
      %2604 = vmatpush1.msra.mxu0 %v2485
      %2605 = vmatprep.subr.mxu0 0.0
      %2606 = vmatpush1.msra.mxu0 %v2486
      %2607 = vmatprep.subr.mxu0 0.0
      %2608 = vmatpush1.msra.mxu0 %v2487
      %2609 = vmatprep.subr.mxu0 0.0
      %2610 = vmatpush1.msra.mxu0 0.0
      %2611 = vmatprep.subr.mxu0 0.0
      %2612 = vmatpush1.msra.mxu0 0.0
      %2613 = vmatprep.subr.mxu0 0.0
      %2614 = vmatpush1.msra.mxu0 0.0
      %2615 = vmatprep.subr.mxu0 0.0
      %2616 = vmatpush1.msra.mxu0 0.0
      %2617 = vmatprep.subr.mxu0 0.0
      %2618 = vmatpush1.msra.mxu0 0.0
      %2619 = vmatprep.subr.mxu0 0.0
      %2620 = vmatpush1.msra.mxu0 0.0
      %2621 = vmatprep.subr.mxu0 0.0
      %2622 = vmatpush1.msra.mxu0 0.0
      %2623 = vmatprep.subr.mxu0 0.0
      %2624 = vmatpush1.msra.mxu0 0.0
      %2625 = vmatprep.subr.mxu0 0.0
      %2626 = vmatpush1.msra.mxu0 0.0
      %2627 = vmatprep.subr.mxu0 0.0
      %2628 = vmatpush1.msra.mxu0 0.0
      %2629 = vmatprep.subr.mxu0 0.0
      %2630 = vmatpush1.msra.mxu0 0.0
      %2631 = vmatprep.subr.mxu0 0.0
      %2632 = vmatpush1.msra.mxu0 0.0
      %2633 = vmatprep.subr.mxu0 0.0
      %2634 = vmatpush1.msra.mxu0 0.0
      %2635 = vmatprep.subr.mxu0 0.0
      %2636 = vmatpush1.msra.mxu0 0.0
      %2637 = vmatprep.subr.mxu0 0.0
      %2638 = vmatpush1.msra.mxu0 0.0
      %2639 = vmatprep.subr.mxu0 0.0
      %2640 = vmatpush1.msra.mxu0 0.0
      %2641 = vmatprep.subr.mxu0 0.0
      %2642 = vmatpush1.msra.mxu0 0.0
      %2643 = vmatprep.subr.mxu0 0.0
      %2644 = vmatpush1.msra.mxu0 0.0
      %2645 = vmatprep.subr.mxu0 0.0
      %2646 = vmatpush1.msra.mxu0 0.0
      %2647 = vmatprep.subr.mxu0 0.0
      %2648 = vmatpush1.msra.mxu0 0.0
      %2649 = vmatprep.subr.mxu0 0.0
      %2650 = vmatpush1.msra.mxu0 0.0
      %2651 = vmatprep.subr.mxu0 0.0
      %2652 = vmatpush1.msra.mxu0 0.0
      %2653 = vmatprep.subr.mxu0 0.0
      %2654 = vmatpush1.msra.mxu0 0.0
      %2655 = vmatprep.mubr.f32.mxu0 0.0
      %2656 = vmatmul.mubr.f32.gmra.mrb[0].mxu0 %v2496
      %v2657 = vpop.f32.mrb[0].mxu0
      %v2658 = vadd.f32 %v2493, %v2657
      %v2659 = vpop.f32.mrb[0].mxu0
      %2660 = vmatprep.mubr.f32.mxu0 0.0
      %2661 = vmatmul.mubr.f32.gmra.mrb[0].mxu0 %v2499
      %v2662 = vpop.f32.mrb[0].mxu0
      %v2663 = vadd.f32 %v2493, %v2662
      %v2664 = vpop.f32.mrb[0].mxu0
      %2665 = vmatprep.mubr.f32.mxu0 0.0
      %2666 = vmatmul.mubr.f32.gmra.mrb[0].mxu0 %v2502
      %v2667 = vpop.f32.mrb[0].mxu0
      %v2668 = vadd.f32 %v2493, %v2667
      %v2669 = vpop.f32.mrb[0].mxu0
      %2670 = vmatprep.mubr.f32.mxu0 0.0
      %2671 = vmatmul.mubr.f32.gmra.mrb[0].mxu0 %v2505
      %v2672 = vpop.f32.mrb[0].mxu0
      %v2673 = vadd.f32 %v2493, %v2672
      %v2674 = vpop.f32.mrb[0].mxu0
      %2675 = vmatprep.mubr.f32.mxu0 0.0
      %2676 = vmatmul.mubr.f32.gmra.mrb[0].mxu0 %v2508
      %v2677 = vpop.f32.mrb[0].mxu0
      %v2678 = vadd.f32 %v2493, %v2677
      %v2679 = vpop.f32.mrb[0].mxu0
      %2680 = vmatprep.mubr.f32.mxu0 0.0
      %2681 = vmatmul.mubr.f32.gmra.mrb[0].mxu0 %v2511
      %v2682 = vpop.f32.mrb[0].mxu0
      %v2683 = vadd.f32 %v2493, %v2682
      %v2684 = vpop.f32.mrb[0].mxu0
      %2685 = vmatprep.mubr.f32.mxu0 0.0
      %2686 = vmatmul.mubr.f32.gmra.mrb[0].mxu0 %v2514
      %v2687 = vpop.f32.mrb[0].mxu0
      %v2688 = vadd.f32 %v2493, %v2687
      %v2689 = vpop.f32.mrb[0].mxu0
      %2690 = vmatprep.mubr.f32.mxu0 0.0
      %2691 = vmatmul.mubr.f32.gmra.mrb[0].mxu0 %v2517
      %v2692 = vpop.f32.mrb[0].mxu0
      %v2693 = vadd.f32 %v2493, %v2692
      %v2694 = vpop.f32.mrb[0].mxu0
      %2695 = vmatprep.mubr.f32.mxu0 0.0
      %2696 = vmatmul.mubr.f32.gmra.mrb[0].mxu0 %v2520
      %v2697 = vpop.f32.mrb[0].mxu0
      %v2698 = vadd.f32 %v2493, %v2697
      %v2699 = vpop.f32.mrb[0].mxu0
      %2700 = vmatprep.mubr.f32.mxu0 0.0
      %2701 = vmatmul.mubr.f32.gmra.mrb[0].mxu0 %v2523
      %v2702 = vpop.f32.mrb[0].mxu0
      %v2703 = vadd.f32 %v2493, %v2702
      %v2704 = vpop.f32.mrb[0].mxu0
      %2705 = vmatprep.mubr.f32.mxu0 0.0
      %2706 = vmatmul.mubr.f32.gmra.mrb[0].mxu0 %v2526
      %v2707 = vpop.f32.mrb[0].mxu0
      %v2708 = vadd.f32 %v2493, %v2707
      %v2709 = vpop.f32.mrb[0].mxu0
      %2710 = vmatprep.mubr.f32.mxu0 0.0
      %2711 = vmatmul.mubr.f32.gmra.mrb[0].mxu0 %v2529
      %v2712 = vpop.f32.mrb[0].mxu0
      %v2713 = vadd.f32 %v2493, %v2712
      %v2714 = vpop.f32.mrb[0].mxu0
      %2715 = vmatprep.mubr.f32.mxu0 0.0
      %2716 = vmatmul.mubr.f32.gmra.mrb[0].mxu0 %v2532
      %v2717 = vpop.f32.mrb[0].mxu0
      %v2718 = vadd.f32 %v2493, %v2717
      %v2719 = vpop.f32.mrb[0].mxu0
      %2720 = vmatprep.mubr.f32.mxu0 0.0
      %2721 = vmatmul.mubr.f32.gmra.mrb[0].mxu0 %v2535
      %v2722 = vpop.f32.mrb[0].mxu0
      %v2723 = vadd.f32 %v2493, %v2722
      %v2724 = vpop.f32.mrb[0].mxu0
      %2725 = vmatprep.mubr.f32.mxu0 0.0
      %2726 = vmatmul.mubr.f32.gmra.mrb[0].mxu0 %v2538
      %v2727 = vpop.f32.mrb[0].mxu0
      %v2728 = vadd.f32 %v2493, %v2727
      %v2729 = vpop.f32.mrb[0].mxu0
      %2730 = vmatprep.mubr.f32.mxu0 0.0
      %2731 = vmatmul.mubr.f32.gmra.mrb[0].mxu0 %v2541
      %v2732 = vpop.f32.mrb[0].mxu0
      %v2733 = vadd.f32 %v2493, %v2732
      %v2734 = vpop.f32.mrb[0].mxu0
      %2735 = vmatprep.mubr.f32.mxu0 0.0
      %2736 = vmatmul.mubr.f32.gmra.mrb[0].mxu0 %v2544
      %v2737 = vpop.f32.mrb[0].mxu0
      %v2738 = vadd.f32 %v2493, %v2737
      %v2739 = vpop.f32.mrb[0].mxu0
      %2740 = vmatprep.mubr.f32.mxu0 0.0
      %2741 = vmatmul.mubr.f32.gmra.mrb[0].mxu0 %v2547
      %v2742 = vpop.f32.mrb[0].mxu0
      %v2743 = vadd.f32 %v2493, %v2742
      %v2744 = vpop.f32.mrb[0].mxu0
      %2745 = vmatprep.mubr.f32.mxu0 0.0
      %2746 = vmatmul.mubr.f32.gmra.mrb[0].mxu0 %v2550
      %v2747 = vpop.f32.mrb[0].mxu0
      %v2748 = vadd.f32 %v2493, %v2747
      %v2749 = vpop.f32.mrb[0].mxu0
      %2750 = vmatprep.mubr.f32.mxu0 0.0
      %2751 = vmatmul.mubr.f32.gmra.mrb[0].mxu0 %v2553
      %v2752 = vpop.f32.mrb[0].mxu0
      %v2753 = vadd.f32 %v2493, %v2752
      %v2754 = vpop.f32.mrb[0].mxu0
      %2755 = vmatprep.mubr.f32.mxu0 0.0
      %2756 = vmatmul.mubr.f32.gmra.mrb[0].mxu0 %v2556
      %v2757 = vpop.f32.mrb[0].mxu0
      %v2758 = vadd.f32 %v2493, %v2757
      %v2759 = vpop.f32.mrb[0].mxu0
      %2760 = vmatprep.mubr.f32.mxu0 0.0
      %2761 = vmatmul.mubr.f32.gmra.mrb[0].mxu0 %v2559
      %v2762 = vpop.f32.mrb[0].mxu0
      %v2763 = vadd.f32 %v2493, %v2762
      %v2764 = vpop.f32.mrb[0].mxu0
      %2765 = vmatprep.mubr.f32.mxu0 0.0
      %2766 = vmatmul.mubr.f32.gmra.mrb[0].mxu0 %v2562
      %v2767 = vpop.f32.mrb[0].mxu0
      %v2768 = vadd.f32 %v2493, %v2767
      %v2769 = vpop.f32.mrb[0].mxu0
      %2770 = vmatprep.mubr.f32.mxu0 0.0
      %2771 = vmatmul.mubr.f32.gmra.mrb[0].mxu0 %v2565
      %v2772 = vpop.f32.mrb[0].mxu0
      %v2773 = vadd.f32 %v2493, %v2772
      %v2774 = vpop.f32.mrb[0].mxu0
      %2775 = vmatprep.mubr.f32.mxu0 0.0
      %2776 = vmatmul.mubr.f32.gmra.mrb[0].mxu0 %v2568
      %v2777 = vpop.f32.mrb[0].mxu0
      %v2778 = vadd.f32 %v2493, %v2777
      %v2779 = vpop.f32.mrb[0].mxu0
      %2780 = vmatprep.mubr.f32.mxu0 0.0
      %2781 = vmatmul.mubr.f32.gmra.mrb[0].mxu0 %v2571
      %v2782 = vpop.f32.mrb[0].mxu0
      %v2783 = vadd.f32 %v2493, %v2782
      %v2784 = vpop.f32.mrb[0].mxu0
      %2785 = vmatprep.mubr.f32.mxu0 0.0
      %2786 = vmatmul.mubr.f32.gmra.mrb[0].mxu0 %v2574
      %v2787 = vpop.f32.mrb[0].mxu0
      %v2788 = vadd.f32 %v2493, %v2787
      %v2789 = vpop.f32.mrb[0].mxu0
      %2790 = vmatprep.mubr.f32.mxu0 0.0
      %2791 = vmatmul.mubr.f32.gmra.mrb[0].mxu0 %v2577
      %v2792 = vpop.f32.mrb[0].mxu0
      %v2793 = vadd.f32 %v2493, %v2792
      %v2794 = vpop.f32.mrb[0].mxu0
      %2795 = vmatprep.mubr.f32.mxu0 0.0
      %2796 = vmatmul.mubr.f32.gmra.mrb[0].mxu0 %v2580
      %v2797 = vpop.f32.mrb[0].mxu0
      %v2798 = vadd.f32 %v2493, %v2797
      %v2799 = vpop.f32.mrb[0].mxu0
      %2800 = vmatprep.mubr.f32.mxu0 0.0
      %2801 = vmatmul.mubr.f32.gmra.mrb[0].mxu0 %v2583
      %v2802 = vpop.f32.mrb[0].mxu0
      %v2803 = vadd.f32 %v2493, %v2802
      %v2804 = vpop.f32.mrb[0].mxu0
      %2805 = vmatprep.mubr.f32.mxu0 0.0
      %2806 = vmatmul.mubr.f32.gmra.mrb[0].mxu0 %v2586
      %v2807 = vpop.f32.mrb[0].mxu0
      %v2808 = vadd.f32 %v2493, %v2807
      %v2809 = vpop.f32.mrb[0].mxu0
      %2810 = vmatprep.mubr.f32.mxu0 0.0
      %2811 = vmatmul.mubr.f32.gmra.mrb[0].mxu0 %v2589
      %v2812 = vpop.f32.mrb[0].mxu0
      %v2813 = vadd.f32 %v2493, %v2812
      %v2814 = vpop.f32.mrb[0].mxu0
      %2815 = vdwg.mxu0
      %v2816 = vmul.f32 %v2658, 0.1
      %v2817 = vmul.f32 %v2663, 0.1
      %v2818 = vmul.f32 %v2668, 0.1
      %v2819 = vmul.f32 %v2673, 0.1
      %v2820 = vmul.f32 %v2678, 0.1
      %v2821 = vmul.f32 %v2683, 0.1
      %v2822 = vmul.f32 %v2688, 0.1
      %v2823 = vmul.f32 %v2693, 0.1
      %v2824 = vmul.f32 %v2698, 0.1
      %v2825 = vmul.f32 %v2703, 0.1
      %v2826 = vmul.f32 %v2708, 0.1
      %v2827 = vmul.f32 %v2713, 0.1
      %v2828 = vmul.f32 %v2718, 0.1
      %v2829 = vmul.f32 %v2723, 0.1
      %v2830 = vmul.f32 %v2728, 0.1
      %v2831 = vmul.f32 %v2733, 0.1
      %v2832 = vmul.f32 %v2738, 0.1
      %v2833 = vmul.f32 %v2743, 0.1
      %v2834 = vmul.f32 %v2748, 0.1
      %v2835 = vmul.f32 %v2753, 0.1
      %v2836 = vmul.f32 %v2758, 0.1
      %v2837 = vmul.f32 %v2763, 0.1
      %v2838 = vmul.f32 %v2768, 0.1
      %v2839 = vmul.f32 %v2773, 0.1
      %v2840 = vmul.f32 %v2778, 0.1
      %v2841 = vmul.f32 %v2783, 0.1
      %v2842 = vmul.f32 %v2788, 0.1
      %v2843 = vmul.f32 %v2793, 0.1
      %v2844 = vmul.f32 %v2798, 0.1
      %v2845 = vmul.f32 %v2803, 0.1
      %v2846 = vmul.f32 %v2808, 0.1
      %v2847 = vmul.f32 %v2813, 0.1
      %v2848 = vmax.f32 %v2658, %v2816
      %v2849 = vmax.f32 %v2663, %v2817
      %v2850 = vmax.f32 %v2668, %v2818
      %v2851 = vmax.f32 %v2673, %v2819
      %v2852 = vmax.f32 %v2678, %v2820
      %v2853 = vmax.f32 %v2683, %v2821
      %v2854 = vmax.f32 %v2688, %v2822
      %v2855 = vmax.f32 %v2693, %v2823
      %v2856 = vmax.f32 %v2698, %v2824
      %v2857 = vmax.f32 %v2703, %v2825
      %v2858 = vmax.f32 %v2708, %v2826
      %v2859 = vmax.f32 %v2713, %v2827
      %v2860 = vmax.f32 %v2718, %v2828
      %v2861 = vmax.f32 %v2723, %v2829
      %v2862 = vmax.f32 %v2728, %v2830
      %v2863 = vmax.f32 %v2733, %v2831
      %v2864 = vmax.f32 %v2738, %v2832
      %v2865 = vmax.f32 %v2743, %v2833
      %v2866 = vmax.f32 %v2748, %v2834
      %v2867 = vmax.f32 %v2753, %v2835
      %v2868 = vmax.f32 %v2758, %v2836
      %v2869 = vmax.f32 %v2763, %v2837
      %v2870 = vmax.f32 %v2768, %v2838
      %v2871 = vmax.f32 %v2773, %v2839
      %v2872 = vmax.f32 %v2778, %v2840
      %v2873 = vmax.f32 %v2783, %v2841
      %v2874 = vmax.f32 %v2788, %v2842
      %v2875 = vmax.f32 %v2793, %v2843
      %v2876 = vmax.f32 %v2798, %v2844
      %v2877 = vmax.f32 %v2803, %v2845
      %v2878 = vmax.f32 %v2808, %v2846
      %v2879 = vmax.f32 %v2813, %v2847
      %v2880 = vld [vmem:[#allocation4] sm:$0xff]
      %v2881 = vld [vmem:[#allocation4 + $0x8] sm:$0xff]
      %v2882 = vld [vmem:[#allocation4 + $0x10] sm:$0xff]
      %v2883 = vld [vmem:[#allocation4 + $0x18] sm:$0xff]
      %v2884 = vld [vmem:[#allocation4 + $0x20] sm:$0xff]
      %v2885 = vld [vmem:[#allocation4 + $0x28] sm:$0xff]
      %v2886 = vld [vmem:[#allocation4 + $0x30] sm:$0xff]
      %v2887 = vld [vmem:[#allocation4 + $0x38] sm:$0xff]
      %v2888 = vld [vmem:[#allocation4 + $0x40] sm:$0xff]
      %v2889 = vld [vmem:[#allocation4 + $0x48] sm:$0xff]
      %v2890 = vld [vmem:[#allocation4 + $0x50] sm:$0xff]
      %v2891 = vld [vmem:[#allocation4 + $0x58] sm:$0xff]
      %v2892 = vld [vmem:[#allocation4 + $0x60] sm:$0xff]
      %v2893 = vld [vmem:[#allocation4 + $0x68] sm:$0xff]
      %v2894 = vld [vmem:[#allocation4 + $0x70] sm:$0xff]
      %v2895 = vld [vmem:[#allocation4 + $0x78] sm:$0xff]
      %v2896 = vld [vmem:[#allocation4 + $0x80] sm:$0xff]
      %v2897 = vld [vmem:[#allocation4 + $0x88] sm:$0xff]
      %v2898 = vld [vmem:[#allocation4 + $0x90] sm:$0xff]
      %v2899 = vld [vmem:[#allocation4 + $0x98] sm:$0xff]
      %v2900 = vld [vmem:[#allocation4 + $0xa0] sm:$0xff]
      %v2901 = vld [vmem:[#allocation4 + $0xa8] sm:$0xff]
      %v2902 = vld [vmem:[#allocation4 + $0xb0] sm:$0xff]
      %v2903 = vld [vmem:[#allocation4 + $0xb8] sm:$0xff]
      %v2904 = vld [vmem:[#allocation4 + $0xc0] sm:$0xff]
      %v2905 = vld [vmem:[#allocation4 + $0xc8] sm:$0xff]
      %v2906 = vld [vmem:[#allocation4 + $0xd0] sm:$0xff]
      %v2907 = vld [vmem:[#allocation4 + $0xd8] sm:$0xff]
      %v2908 = vld [vmem:[#allocation4 + $0xe0] sm:$0xff]
      %v2909 = vld [vmem:[#allocation4 + $0xe8] sm:$0xff]
      %v2910 = vld [vmem:[#allocation4 + $0xf0] sm:$0xff]
      %v2911 = vld [vmem:[#allocation4 + $0xf8] sm:$0xff]
      %v2912 = vld [vmem:[%s7 + $0x8] sm:$0xff]
      %v2914 = vsel %vm413, %v2848, 0
      %v2917 = vsel %vm413, %v2849, 0
      %v2920 = vsel %vm413, %v2850, 0
      %v2923 = vsel %vm413, %v2851, 0
      %v2926 = vsel %vm413, %v2852, 0
      %v2929 = vsel %vm413, %v2853, 0
      %v2932 = vsel %vm413, %v2854, 0
      %v2935 = vsel %vm413, %v2855, 0
      %v2938 = vsel %vm413, %v2856, 0
      %v2941 = vsel %vm413, %v2857, 0
      %v2944 = vsel %vm413, %v2858, 0
      %v2947 = vsel %vm413, %v2859, 0
      %v2950 = vsel %vm413, %v2860, 0
      %v2953 = vsel %vm413, %v2861, 0
      %v2956 = vsel %vm413, %v2862, 0
      %v2959 = vsel %vm413, %v2863, 0
      %v2962 = vsel %vm413, %v2864, 0
      %v2965 = vsel %vm413, %v2865, 0
      %v2968 = vsel %vm413, %v2866, 0
      %v2971 = vsel %vm413, %v2867, 0
      %v2974 = vsel %vm413, %v2868, 0
      %v2977 = vsel %vm413, %v2869, 0
      %v2980 = vsel %vm413, %v2870, 0
      %v2983 = vsel %vm413, %v2871, 0
      %v2986 = vsel %vm413, %v2872, 0
      %v2989 = vsel %vm413, %v2873, 0
      %v2992 = vsel %vm413, %v2874, 0
      %v2995 = vsel %vm413, %v2875, 0
      %v2998 = vsel %vm413, %v2876, 0
      %v3001 = vsel %vm413, %v2877, 0
      %v3004 = vsel %vm413, %v2878, 0
      %v3007 = vsel %vm413, %v2879, 0
      %3009 = vmatprep.subr.mxu0 0.0
      %3010 = vmatpush1.msra.mxu0 %v2912
      %3011 = vmatprep.subr.mxu0 0.0
      %3012 = vmatpush1.msra.mxu0 0.0
      %3013 = vmatprep.subr.mxu0 0.0
      %3014 = vmatpush1.msra.mxu0 0.0
      %3015 = vmatprep.subr.mxu0 0.0
      %3016 = vmatpush1.msra.mxu0 0.0
      %3017 = vmatprep.subr.mxu0 0.0
      %3018 = vmatpush1.msra.mxu0 0.0
      %3019 = vmatprep.subr.mxu0 0.0
      %3020 = vmatpush1.msra.mxu0 0.0
      %3021 = vmatprep.subr.mxu0 0.0
      %3022 = vmatpush1.msra.mxu0 0.0
      %3023 = vmatprep.subr.mxu0 0.0
      %3024 = vmatpush1.msra.mxu0 0.0
      %3025 = vmatprep.subr.mxu0 0.0
      %3026 = vmatpush1.msra.mxu0 0.0
      %3027 = vmatprep.subr.mxu0 0.0
      %3028 = vmatpush1.msra.mxu0 0.0
      %3029 = vmatprep.subr.mxu0 0.0
      %3030 = vmatpush1.msra.mxu0 0.0
      %3031 = vmatprep.subr.mxu0 0.0
      %3032 = vmatpush1.msra.mxu0 0.0
      %3033 = vmatprep.subr.mxu0 0.0
      %3034 = vmatpush1.msra.mxu0 0.0
      %3035 = vmatprep.subr.mxu0 0.0
      %3036 = vmatpush1.msra.mxu0 0.0
      %3037 = vmatprep.subr.mxu0 0.0
      %3038 = vmatpush1.msra.mxu0 0.0
      %3039 = vmatprep.subr.mxu0 0.0
      %3040 = vmatpush1.msra.mxu0 0.0
      %3041 = vmatprep.subr.mxu0 0.0
      %3042 = vmatpush1.msra.mxu0 0.0
      %3043 = vmatprep.subr.mxu0 0.0
      %3044 = vmatpush1.msra.mxu0 0.0
      %3045 = vmatprep.subr.mxu0 0.0
      %3046 = vmatpush1.msra.mxu0 0.0
      %3047 = vmatprep.subr.mxu0 0.0
      %3048 = vmatpush1.msra.mxu0 0.0
      %3049 = vmatprep.subr.mxu0 0.0
      %3050 = vmatpush1.msra.mxu0 0.0
      %3051 = vmatprep.subr.mxu0 0.0
      %3052 = vmatpush1.msra.mxu0 0.0
      %3053 = vmatprep.subr.mxu0 0.0
      %3054 = vmatpush1.msra.mxu0 0.0
      %3055 = vmatprep.subr.mxu0 0.0
      %3056 = vmatpush1.msra.mxu0 0.0
      %3057 = vmatprep.subr.mxu0 0.0
      %3058 = vmatpush1.msra.mxu0 0.0
      %3059 = vmatprep.subr.mxu0 0.0
      %3060 = vmatpush1.msra.mxu0 0.0
      %3061 = vmatprep.subr.mxu0 0.0
      %3062 = vmatpush1.msra.mxu0 0.0
      %3063 = vmatprep.subr.mxu0 0.0
      %3064 = vmatpush1.msra.mxu0 0.0
      %3065 = vmatprep.subr.mxu0 0.0
      %3066 = vmatpush1.msra.mxu0 0.0
      %3067 = vmatprep.subr.mxu0 0.0
      %3068 = vmatpush1.msra.mxu0 0.0
      %3069 = vmatprep.subr.mxu0 0.0
      %3070 = vmatpush1.msra.mxu0 0.0
      %3071 = vmatprep.subr.mxu0 0.0
      %3072 = vmatpush1.msra.mxu0 0.0
      %3073 = vmatprep.mubr.f32.mxu0 0.0
      %3074 = vmatmul.mubr.f32.gmra.mrb[0].mxu0 %v2914
      %v3075 = vpop.f32.mrb[0].mxu0
      %v3076 = vadd.f32 0.0, %v3075
      %v3077 = vpop.f32.mrb[0].mxu0
      %3078 = vmatprep.mubr.f32.mxu0 0.0
      %3079 = vmatmul.mubr.f32.gmra.mrb[0].mxu0 %v2917
      %v3080 = vpop.f32.mrb[0].mxu0
      %v3081 = vadd.f32 0.0, %v3080
      %v3082 = vpop.f32.mrb[0].mxu0
      %3083 = vmatprep.mubr.f32.mxu0 0.0
      %3084 = vmatmul.mubr.f32.gmra.mrb[0].mxu0 %v2920
      %v3085 = vpop.f32.mrb[0].mxu0
      %v3086 = vadd.f32 0.0, %v3085
      %v3087 = vpop.f32.mrb[0].mxu0
      %3088 = vmatprep.mubr.f32.mxu0 0.0
      %3089 = vmatmul.mubr.f32.gmra.mrb[0].mxu0 %v2923
      %v3090 = vpop.f32.mrb[0].mxu0
      %v3091 = vadd.f32 0.0, %v3090
      %v3092 = vpop.f32.mrb[0].mxu0
      %3093 = vmatprep.mubr.f32.mxu0 0.0
      %3094 = vmatmul.mubr.f32.gmra.mrb[0].mxu0 %v2926
      %v3095 = vpop.f32.mrb[0].mxu0
      %v3096 = vadd.f32 0.0, %v3095
      %v3097 = vpop.f32.mrb[0].mxu0
      %3098 = vmatprep.mubr.f32.mxu0 0.0
      %3099 = vmatmul.mubr.f32.gmra.mrb[0].mxu0 %v2929
      %v3100 = vpop.f32.mrb[0].mxu0
      %v3101 = vadd.f32 0.0, %v3100
      %v3102 = vpop.f32.mrb[0].mxu0
      %3103 = vmatprep.mubr.f32.mxu0 0.0
      %3104 = vmatmul.mubr.f32.gmra.mrb[0].mxu0 %v2932
      %v3105 = vpop.f32.mrb[0].mxu0
      %v3106 = vadd.f32 0.0, %v3105
      %v3107 = vpop.f32.mrb[0].mxu0
      %3108 = vmatprep.mubr.f32.mxu0 0.0
      %3109 = vmatmul.mubr.f32.gmra.mrb[0].mxu0 %v2935
      %v3110 = vpop.f32.mrb[0].mxu0
      %v3111 = vadd.f32 0.0, %v3110
      %v3112 = vpop.f32.mrb[0].mxu0
      %3113 = vmatprep.mubr.f32.mxu0 0.0
      %3114 = vmatmul.mubr.f32.gmra.mrb[0].mxu0 %v2938
      %v3115 = vpop.f32.mrb[0].mxu0
      %v3116 = vadd.f32 0.0, %v3115
      %v3117 = vpop.f32.mrb[0].mxu0
      %3118 = vmatprep.mubr.f32.mxu0 0.0
      %3119 = vmatmul.mubr.f32.gmra.mrb[0].mxu0 %v2941
      %v3120 = vpop.f32.mrb[0].mxu0
      %v3121 = vadd.f32 0.0, %v3120
      %v3122 = vpop.f32.mrb[0].mxu0
      %3123 = vmatprep.mubr.f32.mxu0 0.0
      %3124 = vmatmul.mubr.f32.gmra.mrb[0].mxu0 %v2944
      %v3125 = vpop.f32.mrb[0].mxu0
      %v3126 = vadd.f32 0.0, %v3125
      %v3127 = vpop.f32.mrb[0].mxu0
      %3128 = vmatprep.mubr.f32.mxu0 0.0
      %3129 = vmatmul.mubr.f32.gmra.mrb[0].mxu0 %v2947
      %v3130 = vpop.f32.mrb[0].mxu0
      %v3131 = vadd.f32 0.0, %v3130
      %v3132 = vpop.f32.mrb[0].mxu0
      %3133 = vmatprep.mubr.f32.mxu0 0.0
      %3134 = vmatmul.mubr.f32.gmra.mrb[0].mxu0 %v2950
      %v3135 = vpop.f32.mrb[0].mxu0
      %v3136 = vadd.f32 0.0, %v3135
      %v3137 = vpop.f32.mrb[0].mxu0
      %3138 = vmatprep.mubr.f32.mxu0 0.0
      %3139 = vmatmul.mubr.f32.gmra.mrb[0].mxu0 %v2953
      %v3140 = vpop.f32.mrb[0].mxu0
      %v3141 = vadd.f32 0.0, %v3140
      %v3142 = vpop.f32.mrb[0].mxu0
      %3143 = vmatprep.mubr.f32.mxu0 0.0
      %3144 = vmatmul.mubr.f32.gmra.mrb[0].mxu0 %v2956
      %v3145 = vpop.f32.mrb[0].mxu0
      %v3146 = vadd.f32 0.0, %v3145
      %v3147 = vpop.f32.mrb[0].mxu0
      %3148 = vmatprep.mubr.f32.mxu0 0.0
      %3149 = vmatmul.mubr.f32.gmra.mrb[0].mxu0 %v2959
      %v3150 = vpop.f32.mrb[0].mxu0
      %v3151 = vadd.f32 0.0, %v3150
      %v3152 = vpop.f32.mrb[0].mxu0
      %3153 = vmatprep.mubr.f32.mxu0 0.0
      %3154 = vmatmul.mubr.f32.gmra.mrb[0].mxu0 %v2962
      %v3155 = vpop.f32.mrb[0].mxu0
      %v3156 = vadd.f32 0.0, %v3155
      %v3157 = vpop.f32.mrb[0].mxu0
      %3158 = vmatprep.mubr.f32.mxu0 0.0
      %3159 = vmatmul.mubr.f32.gmra.mrb[0].mxu0 %v2965
      %v3160 = vpop.f32.mrb[0].mxu0
      %v3161 = vadd.f32 0.0, %v3160
      %v3162 = vpop.f32.mrb[0].mxu0
      %3163 = vmatprep.mubr.f32.mxu0 0.0
      %3164 = vmatmul.mubr.f32.gmra.mrb[0].mxu0 %v2968
      %v3165 = vpop.f32.mrb[0].mxu0
      %v3166 = vadd.f32 0.0, %v3165
      %v3167 = vpop.f32.mrb[0].mxu0
      %3168 = vmatprep.mubr.f32.mxu0 0.0
      %3169 = vmatmul.mubr.f32.gmra.mrb[0].mxu0 %v2971
      %v3170 = vpop.f32.mrb[0].mxu0
      %v3171 = vadd.f32 0.0, %v3170
      %v3172 = vpop.f32.mrb[0].mxu0
      %3173 = vmatprep.mubr.f32.mxu0 0.0
      %3174 = vmatmul.mubr.f32.gmra.mrb[0].mxu0 %v2974
      %v3175 = vpop.f32.mrb[0].mxu0
      %v3176 = vadd.f32 0.0, %v3175
      %v3177 = vpop.f32.mrb[0].mxu0
      %3178 = vmatprep.mubr.f32.mxu0 0.0
      %3179 = vmatmul.mubr.f32.gmra.mrb[0].mxu0 %v2977
      %v3180 = vpop.f32.mrb[0].mxu0
      %v3181 = vadd.f32 0.0, %v3180
      %v3182 = vpop.f32.mrb[0].mxu0
      %3183 = vmatprep.mubr.f32.mxu0 0.0
      %3184 = vmatmul.mubr.f32.gmra.mrb[0].mxu0 %v2980
      %v3185 = vpop.f32.mrb[0].mxu0
      %v3186 = vadd.f32 0.0, %v3185
      %v3187 = vpop.f32.mrb[0].mxu0
      %3188 = vmatprep.mubr.f32.mxu0 0.0
      %3189 = vmatmul.mubr.f32.gmra.mrb[0].mxu0 %v2983
      %v3190 = vpop.f32.mrb[0].mxu0
      %v3191 = vadd.f32 0.0, %v3190
      %v3192 = vpop.f32.mrb[0].mxu0
      %3193 = vmatprep.mubr.f32.mxu0 0.0
      %3194 = vmatmul.mubr.f32.gmra.mrb[0].mxu0 %v2986
      %v3195 = vpop.f32.mrb[0].mxu0
      %v3196 = vadd.f32 0.0, %v3195
      %v3197 = vpop.f32.mrb[0].mxu0
      %3198 = vmatprep.mubr.f32.mxu0 0.0
      %3199 = vmatmul.mubr.f32.gmra.mrb[0].mxu0 %v2989
      %v3200 = vpop.f32.mrb[0].mxu0
      %v3201 = vadd.f32 0.0, %v3200
      %v3202 = vpop.f32.mrb[0].mxu0
      %3203 = vmatprep.mubr.f32.mxu0 0.0
      %3204 = vmatmul.mubr.f32.gmra.mrb[0].mxu0 %v2992
      %v3205 = vpop.f32.mrb[0].mxu0
      %v3206 = vadd.f32 0.0, %v3205
      %v3207 = vpop.f32.mrb[0].mxu0
      %3208 = vmatprep.mubr.f32.mxu0 0.0
      %3209 = vmatmul.mubr.f32.gmra.mrb[0].mxu0 %v2995
      %v3210 = vpop.f32.mrb[0].mxu0
      %v3211 = vadd.f32 0.0, %v3210
      %v3212 = vpop.f32.mrb[0].mxu0
      %3213 = vmatprep.mubr.f32.mxu0 0.0
      %3214 = vmatmul.mubr.f32.gmra.mrb[0].mxu0 %v2998
      %v3215 = vpop.f32.mrb[0].mxu0
      %v3216 = vadd.f32 0.0, %v3215
      %v3217 = vpop.f32.mrb[0].mxu0
      %3218 = vmatprep.mubr.f32.mxu0 0.0
      %3219 = vmatmul.mubr.f32.gmra.mrb[0].mxu0 %v3001
      %v3220 = vpop.f32.mrb[0].mxu0
      %v3221 = vadd.f32 0.0, %v3220
      %v3222 = vpop.f32.mrb[0].mxu0
      %3223 = vmatprep.mubr.f32.mxu0 0.0
      %3224 = vmatmul.mubr.f32.gmra.mrb[0].mxu0 %v3004
      %v3225 = vpop.f32.mrb[0].mxu0
      %v3226 = vadd.f32 0.0, %v3225
      %v3227 = vpop.f32.mrb[0].mxu0
      %3228 = vmatprep.mubr.f32.mxu0 0.0
      %3229 = vmatmul.mubr.f32.gmra.mrb[0].mxu0 %v3007
      %v3230 = vpop.f32.mrb[0].mxu0
      %v3231 = vadd.f32 0.0, %v3230
      %v3232 = vpop.f32.mrb[0].mxu0
      %3233 = vdwg.mxu0
      %v3234 = vadd.f32 %v2880, %v3076
      %v3235 = vadd.f32 %v2881, %v3081
      %v3236 = vadd.f32 %v2882, %v3086
      %v3237 = vadd.f32 %v2883, %v3091
      %v3238 = vadd.f32 %v2884, %v3096
      %v3239 = vadd.f32 %v2885, %v3101
      %v3240 = vadd.f32 %v2886, %v3106
      %v3241 = vadd.f32 %v2887, %v3111
      %v3242 = vadd.f32 %v2888, %v3116
      %v3243 = vadd.f32 %v2889, %v3121
      %v3244 = vadd.f32 %v2890, %v3126
      %v3245 = vadd.f32 %v2891, %v3131
      %v3246 = vadd.f32 %v2892, %v3136
      %v3247 = vadd.f32 %v2893, %v3141
      %v3248 = vadd.f32 %v2894, %v3146
      %v3249 = vadd.f32 %v2895, %v3151
      %v3250 = vadd.f32 %v2896, %v3156
      %v3251 = vadd.f32 %v2897, %v3161
      %v3252 = vadd.f32 %v2898, %v3166
      %v3253 = vadd.f32 %v2899, %v3171
      %v3254 = vadd.f32 %v2900, %v3176
      %v3255 = vadd.f32 %v2901, %v3181
      %v3256 = vadd.f32 %v2902, %v3186
      %v3257 = vadd.f32 %v2903, %v3191
      %v3258 = vadd.f32 %v2904, %v3196
      %v3259 = vadd.f32 %v2905, %v3201
      %v3260 = vadd.f32 %v2906, %v3206
      %v3261 = vadd.f32 %v2907, %v3211
      %v3262 = vadd.f32 %v2908, %v3216
      %v3263 = vadd.f32 %v2909, %v3221
      %v3264 = vadd.f32 %v2910, %v3226
      %v3265 = vadd.f32 %v2911, %v3231
      %3266 = vst.msk [vmem:[#allocation4] sm:$0xff] %vm413, %v3234
      %3267 = vst.msk [vmem:[#allocation4 + $0x8] sm:$0xff] %vm413, %v3235
      %3268 = vst.msk [vmem:[#allocation4 + $0x10] sm:$0xff] %vm413, %v3236
      %3269 = vst.msk [vmem:[#allocation4 + $0x18] sm:$0xff] %vm413, %v3237
      %3270 = vst.msk [vmem:[#allocation4 + $0x20] sm:$0xff] %vm413, %v3238
      %3271 = vst.msk [vmem:[#allocation4 + $0x28] sm:$0xff] %vm413, %v3239
      %3272 = vst.msk [vmem:[#allocation4 + $0x30] sm:$0xff] %vm413, %v3240
      %3273 = vst.msk [vmem:[#allocation4 + $0x38] sm:$0xff] %vm413, %v3241
      %3274 = vst.msk [vmem:[#allocation4 + $0x40] sm:$0xff] %vm413, %v3242
      %3275 = vst.msk [vmem:[#allocation4 + $0x48] sm:$0xff] %vm413, %v3243
      %3276 = vst.msk [vmem:[#allocation4 + $0x50] sm:$0xff] %vm413, %v3244
      %3277 = vst.msk [vmem:[#allocation4 + $0x58] sm:$0xff] %vm413, %v3245
      %3278 = vst.msk [vmem:[#allocation4 + $0x60] sm:$0xff] %vm413, %v3246
      %3279 = vst.msk [vmem:[#allocation4 + $0x68] sm:$0xff] %vm413, %v3247
      %3280 = vst.msk [vmem:[#allocation4 + $0x70] sm:$0xff] %vm413, %v3248
      %3281 = vst.msk [vmem:[#allocation4 + $0x78] sm:$0xff] %vm413, %v3249
      %3282 = vst.msk [vmem:[#allocation4 + $0x80] sm:$0xff] %vm413, %v3250
      %3283 = vst.msk [vmem:[#allocation4 + $0x88] sm:$0xff] %vm413, %v3251
      %3284 = vst.msk [vmem:[#allocation4 + $0x90] sm:$0xff] %vm413, %v3252
      %3285 = vst.msk [vmem:[#allocation4 + $0x98] sm:$0xff] %vm413, %v3253
      %3286 = vst.msk [vmem:[#allocation4 + $0xa0] sm:$0xff] %vm413, %v3254
      %3287 = vst.msk [vmem:[#allocation4 + $0xa8] sm:$0xff] %vm413, %v3255
      %3288 = vst.msk [vmem:[#allocation4 + $0xb0] sm:$0xff] %vm413, %v3256
      %3289 = vst.msk [vmem:[#allocation4 + $0xb8] sm:$0xff] %vm413, %v3257
      %3290 = vst.msk [vmem:[#allocation4 + $0xc0] sm:$0xff] %vm413, %v3258
      %3291 = vst.msk [vmem:[#allocation4 + $0xc8] sm:$0xff] %vm413, %v3259
      %3292 = vst.msk [vmem:[#allocation4 + $0xd0] sm:$0xff] %vm413, %v3260
      %3293 = vst.msk [vmem:[#allocation4 + $0xd8] sm:$0xff] %vm413, %v3261
      %3294 = vst.msk [vmem:[#allocation4 + $0xe0] sm:$0xff] %vm413, %v3262
      %3295 = vst.msk [vmem:[#allocation4 + $0xe8] sm:$0xff] %vm413, %v3263
      %3296 = vst.msk [vmem:[#allocation4 + $0xf0] sm:$0xff] %vm413, %v3264
      %3297 = vst.msk [vmem:[#allocation4 + $0xf8] sm:$0xff] %vm413, %v3265
      %3298 = vrot.lane.b32.xlu0 %v2848, 8
      %v3299 = vpop.permute.xlu0 %3298
      %3300 = vrot.lane.b32.xlu0 %v2849, 8
      %v3301 = vpop.permute.xlu0 %3300
      %3302 = vrot.lane.b32.xlu0 %v2850, 8
      %v3303 = vpop.permute.xlu0 %3302
      %3304 = vrot.lane.b32.xlu0 %v2851, 8
      %v3305 = vpop.permute.xlu0 %3304
      %3306 = vrot.lane.b32.xlu0 %v2852, 8
      %v3307 = vpop.permute.xlu0 %3306
      %3308 = vrot.lane.b32.xlu0 %v2853, 8
      %v3309 = vpop.permute.xlu0 %3308
      %3310 = vrot.lane.b32.xlu0 %v2854, 8
      %v3311 = vpop.permute.xlu0 %3310
      %3312 = vrot.lane.b32.xlu0 %v2855, 8
      %v3313 = vpop.permute.xlu0 %3312
      %3314 = vrot.lane.b32.xlu0 %v2856, 8
      %v3315 = vpop.permute.xlu0 %3314
      %3316 = vrot.lane.b32.xlu0 %v2857, 8
      %v3317 = vpop.permute.xlu0 %3316
      %3318 = vrot.lane.b32.xlu0 %v2858, 8
      %v3319 = vpop.permute.xlu0 %3318
      %3320 = vrot.lane.b32.xlu0 %v2859, 8
      %v3321 = vpop.permute.xlu0 %3320
      %3322 = vrot.lane.b32.xlu0 %v2860, 8
      %v3323 = vpop.permute.xlu0 %3322
      %3324 = vrot.lane.b32.xlu0 %v2861, 8
      %v3325 = vpop.permute.xlu0 %3324
      %3326 = vrot.lane.b32.xlu0 %v2862, 8
      %v3327 = vpop.permute.xlu0 %3326
      %3328 = vrot.lane.b32.xlu0 %v2863, 8
      %v3329 = vpop.permute.xlu0 %3328
      %3330 = vrot.lane.b32.xlu0 %v2864, 8
      %v3331 = vpop.permute.xlu0 %3330
      %3332 = vrot.lane.b32.xlu0 %v2865, 8
      %v3333 = vpop.permute.xlu0 %3332
      %3334 = vrot.lane.b32.xlu0 %v2866, 8
      %v3335 = vpop.permute.xlu0 %3334
      %3336 = vrot.lane.b32.xlu0 %v2867, 8
      %v3337 = vpop.permute.xlu0 %3336
      %3338 = vrot.lane.b32.xlu0 %v2868, 8
      %v3339 = vpop.permute.xlu0 %3338
      %3340 = vrot.lane.b32.xlu0 %v2869, 8
      %v3341 = vpop.permute.xlu0 %3340
      %3342 = vrot.lane.b32.xlu0 %v2870, 8
      %v3343 = vpop.permute.xlu0 %3342
      %3344 = vrot.lane.b32.xlu0 %v2871, 8
      %v3345 = vpop.permute.xlu0 %3344
      %3346 = vrot.lane.b32.xlu0 %v2872, 8
      %v3347 = vpop.permute.xlu0 %3346
      %3348 = vrot.lane.b32.xlu0 %v2873, 8
      %v3349 = vpop.permute.xlu0 %3348
      %3350 = vrot.lane.b32.xlu0 %v2874, 8
      %v3351 = vpop.permute.xlu0 %3350
      %3352 = vrot.lane.b32.xlu0 %v2875, 8
      %v3353 = vpop.permute.xlu0 %3352
      %3354 = vrot.lane.b32.xlu0 %v2876, 8
      %v3355 = vpop.permute.xlu0 %3354
      %3356 = vrot.lane.b32.xlu0 %v2877, 8
      %v3357 = vpop.permute.xlu0 %3356
      %3358 = vrot.lane.b32.xlu0 %v2878, 8
      %v3359 = vpop.permute.xlu0 %3358
      %3360 = vrot.lane.b32.xlu0 %v2879, 8
      %v3361 = vpop.permute.xlu0 %3360
      %vm3394 = vcmask 130112
      %3395 = vst.msk [vmem:[%s412 + $0x1] sm:$0xff] %vm3394, %v3299
      %3396 = vst.msk [vmem:[%s412 + $0x9] sm:$0xff] %vm3394, %v3301
      %3397 = vst.msk [vmem:[%s412 + $0x19] sm:$0xff] %vm3394, %v3303
      %3398 = vst.msk [vmem:[%s412 + $0x21] sm:$0xff] %vm3394, %v3305
      %3399 = vst.msk [vmem:[%s412 + $0x31] sm:$0xff] %vm3394, %v3307
      %3400 = vst.msk [vmem:[%s412 + $0x39] sm:$0xff] %vm3394, %v3309
      %3401 = vst.msk [vmem:[%s412 + $0x49] sm:$0xff] %vm3394, %v3311
      %3402 = vst.msk [vmem:[%s412 + $0x51] sm:$0xff] %vm3394, %v3313
      %3403 = vst.msk [vmem:[%s412 + $0x61] sm:$0xff] %vm3394, %v3315
      %3404 = vst.msk [vmem:[%s412 + $0x69] sm:$0xff] %vm3394, %v3317
      %3405 = vst.msk [vmem:[%s412 + $0x79] sm:$0xff] %vm3394, %v3319
      %3406 = vst.msk [vmem:[%s412 + $0x81] sm:$0xff] %vm3394, %v3321
      %3407 = vst.msk [vmem:[%s412 + $0x91] sm:$0xff] %vm3394, %v3323
      %3408 = vst.msk [vmem:[%s412 + $0x99] sm:$0xff] %vm3394, %v3325
      %3409 = vst.msk [vmem:[%s412 + $0xa9] sm:$0xff] %vm3394, %v3327
      %3410 = vst.msk [vmem:[%s412 + $0xb1] sm:$0xff] %vm3394, %v3329
      %3411 = vst.msk [vmem:[%s412 + $0xc1] sm:$0xff] %vm3394, %v3331
      %3412 = vst.msk [vmem:[%s412 + $0xc9] sm:$0xff] %vm3394, %v3333
      %3413 = vst.msk [vmem:[%s412 + $0xd9] sm:$0xff] %vm3394, %v3335
      %3414 = vst.msk [vmem:[%s412 + $0xe1] sm:$0xff] %vm3394, %v3337
      %3415 = vst.msk [vmem:[%s412 + $0xf1] sm:$0xff] %vm3394, %v3339
      %3416 = vst.msk [vmem:[%s412 + $0xf9] sm:$0xff] %vm3394, %v3341
      %3417 = vst.msk [vmem:[%s412 + $0x109] sm:$0xff] %vm3394, %v3343
      %3418 = vst.msk [vmem:[%s412 + $0x111] sm:$0xff] %vm3394, %v3345
      %3419 = vst.msk [vmem:[%s412 + $0x121] sm:$0xff] %vm3394, %v3347
      %3420 = vst.msk [vmem:[%s412 + $0x129] sm:$0xff] %vm3394, %v3349
      %3421 = vst.msk [vmem:[%s412 + $0x139] sm:$0xff] %vm3394, %v3351
      %3422 = vst.msk [vmem:[%s412 + $0x141] sm:$0xff] %vm3394, %v3353
      %3423 = vst.msk [vmem:[%s412 + $0x151] sm:$0xff] %vm3394, %v3355
      %3424 = vst.msk [vmem:[%s412 + $0x159] sm:$0xff] %vm3394, %v3357
      %3425 = vst.msk [vmem:[%s412 + $0x169] sm:$0xff] %vm3394, %v3359
      %3426 = vst.msk [vmem:[%s412 + $0x171] sm:$0xff] %vm3394, %v3361
      %v3427 = vld [vmem:[#allocation2] sm:$0xff]
      %v3428 = vld [vmem:[#allocation2 + $0x8] sm:$0xff]
      %v3429 = vld [vmem:[#allocation2 + $0x18] sm:$0xff]
      %v3430 = vld [vmem:[#allocation2 + $0x20] sm:$0xff]
      %v3431 = vld [vmem:[#allocation2 + $0x30] sm:$0xff]
      %v3432 = vld [vmem:[#allocation2 + $0x38] sm:$0xff]
      %v3433 = vld [vmem:[#allocation2 + $0x48] sm:$0xff]
      %v3434 = vld [vmem:[#allocation2 + $0x50] sm:$0xff]
      %v3435 = vld [vmem:[#allocation2 + $0x60] sm:$0xff]
      %v3436 = vld [vmem:[#allocation2 + $0x68] sm:$0xff]
      %v3437 = vld [vmem:[#allocation2 + $0x78] sm:$0xff]
      %v3438 = vld [vmem:[#allocation2 + $0x80] sm:$0xff]
      %v3439 = vld [vmem:[#allocation2 + $0x90] sm:$0xff]
      %v3440 = vld [vmem:[#allocation2 + $0x98] sm:$0xff]
      %v3441 = vld [vmem:[#allocation2 + $0xa8] sm:$0xff]
      %v3442 = vld [vmem:[#allocation2 + $0xb0] sm:$0xff]
      %v3443 = vld [vmem:[#allocation2 + $0xc0] sm:$0xff]
      %v3444 = vld [vmem:[#allocation2 + $0xc8] sm:$0xff]
      %v3445 = vld [vmem:[#allocation2 + $0xd8] sm:$0xff]
      %v3446 = vld [vmem:[#allocation2 + $0xe0] sm:$0xff]
      %v3447 = vld [vmem:[#allocation2 + $0xf0] sm:$0xff]
      %v3448 = vld [vmem:[#allocation2 + $0xf8] sm:$0xff]
      %v3449 = vld [vmem:[#allocation2 + $0x108] sm:$0xff]
      %v3450 = vld [vmem:[#allocation2 + $0x110] sm:$0xff]
      %v3451 = vld [vmem:[#allocation2 + $0x120] sm:$0xff]
      %v3452 = vld [vmem:[#allocation2 + $0x128] sm:$0xff]
      %v3453 = vld [vmem:[#allocation2 + $0x138] sm:$0xff]
      %v3454 = vld [vmem:[#allocation2 + $0x140] sm:$0xff]
      %v3455 = vld [vmem:[#allocation2 + $0x150] sm:$0xff]
      %v3456 = vld [vmem:[#allocation2 + $0x158] sm:$0xff]
      %v3457 = vld [vmem:[#allocation2 + $0x168] sm:$0xff]
      %v3458 = vld [vmem:[#allocation2 + $0x170] sm:$0xff]
      %v3459 = vld [vmem:[#allocation2 + $0x1] sm:$0xff]
      %v3460 = vld [vmem:[#allocation2 + $0x9] sm:$0xff]
      %v3461 = vld [vmem:[#allocation2 + $0x19] sm:$0xff]
      %v3462 = vld [vmem:[#allocation2 + $0x21] sm:$0xff]
      %v3463 = vld [vmem:[#allocation2 + $0x31] sm:$0xff]
      %v3464 = vld [vmem:[#allocation2 + $0x39] sm:$0xff]
      %v3465 = vld [vmem:[#allocation2 + $0x49] sm:$0xff]
      %v3466 = vld [vmem:[#allocation2 + $0x51] sm:$0xff]
      %v3467 = vld [vmem:[#allocation2 + $0x61] sm:$0xff]
      %v3468 = vld [vmem:[#allocation2 + $0x69] sm:$0xff]
      %v3469 = vld [vmem:[#allocation2 + $0x79] sm:$0xff]
      %v3470 = vld [vmem:[#allocation2 + $0x81] sm:$0xff]
      %v3471 = vld [vmem:[#allocation2 + $0x91] sm:$0xff]
      %v3472 = vld [vmem:[#allocation2 + $0x99] sm:$0xff]
      %v3473 = vld [vmem:[#allocation2 + $0xa9] sm:$0xff]
      %v3474 = vld [vmem:[#allocation2 + $0xb1] sm:$0xff]
      %v3475 = vld [vmem:[#allocation2 + $0xc1] sm:$0xff]
      %v3476 = vld [vmem:[#allocation2 + $0xc9] sm:$0xff]
      %v3477 = vld [vmem:[#allocation2 + $0xd9] sm:$0xff]
      %v3478 = vld [vmem:[#allocation2 + $0xe1] sm:$0xff]
      %v3479 = vld [vmem:[#allocation2 + $0xf1] sm:$0xff]
      %v3480 = vld [vmem:[#allocation2 + $0xf9] sm:$0xff]
      %v3481 = vld [vmem:[#allocation2 + $0x109] sm:$0xff]
      %v3482 = vld [vmem:[#allocation2 + $0x111] sm:$0xff]
      %v3483 = vld [vmem:[#allocation2 + $0x121] sm:$0xff]
      %v3484 = vld [vmem:[#allocation2 + $0x129] sm:$0xff]
      %v3485 = vld [vmem:[#allocation2 + $0x139] sm:$0xff]
      %v3486 = vld [vmem:[#allocation2 + $0x141] sm:$0xff]
      %v3487 = vld [vmem:[#allocation2 + $0x151] sm:$0xff]
      %v3488 = vld [vmem:[#allocation2 + $0x159] sm:$0xff]
      %v3489 = vld [vmem:[#allocation2 + $0x169] sm:$0xff]
      %v3490 = vld [vmem:[#allocation2 + $0x171] sm:$0xff]
      %v3491 = vld [vmem:[#allocation2 + $0x2] sm:$0xff]
      %v3492 = vld [vmem:[#allocation2 + $0xa] sm:$0xff]
      %v3493 = vld [vmem:[#allocation2 + $0x1a] sm:$0xff]
      %v3494 = vld [vmem:[#allocation2 + $0x22] sm:$0xff]
      %v3495 = vld [vmem:[#allocation2 + $0x32] sm:$0xff]
      %v3496 = vld [vmem:[#allocation2 + $0x3a] sm:$0xff]
      %v3497 = vld [vmem:[#allocation2 + $0x4a] sm:$0xff]
      %v3498 = vld [vmem:[#allocation2 + $0x52] sm:$0xff]
      %v3499 = vld [vmem:[#allocation2 + $0x62] sm:$0xff]
      %v3500 = vld [vmem:[#allocation2 + $0x6a] sm:$0xff]
      %v3501 = vld [vmem:[#allocation2 + $0x7a] sm:$0xff]
      %v3502 = vld [vmem:[#allocation2 + $0x82] sm:$0xff]
      %v3503 = vld [vmem:[#allocation2 + $0x92] sm:$0xff]
      %v3504 = vld [vmem:[#allocation2 + $0x9a] sm:$0xff]
      %v3505 = vld [vmem:[#allocation2 + $0xaa] sm:$0xff]
      %v3506 = vld [vmem:[#allocation2 + $0xb2] sm:$0xff]
      %v3507 = vld [vmem:[#allocation2 + $0xc2] sm:$0xff]
      %v3508 = vld [vmem:[#allocation2 + $0xca] sm:$0xff]
      %v3509 = vld [vmem:[#allocation2 + $0xda] sm:$0xff]
      %v3510 = vld [vmem:[#allocation2 + $0xe2] sm:$0xff]
      %v3511 = vld [vmem:[#allocation2 + $0xf2] sm:$0xff]
      %v3512 = vld [vmem:[#allocation2 + $0xfa] sm:$0xff]
      %v3513 = vld [vmem:[#allocation2 + $0x10a] sm:$0xff]
      %v3514 = vld [vmem:[#allocation2 + $0x112] sm:$0xff]
      %v3515 = vld [vmem:[#allocation2 + $0x122] sm:$0xff]
      %v3516 = vld [vmem:[#allocation2 + $0x12a] sm:$0xff]
      %v3517 = vld [vmem:[#allocation2 + $0x13a] sm:$0xff]
      %v3518 = vld [vmem:[#allocation2 + $0x142] sm:$0xff]
      %v3519 = vld [vmem:[#allocation2 + $0x152] sm:$0xff]
      %v3520 = vld [vmem:[#allocation2 + $0x15a] sm:$0xff]
      %v3521 = vld [vmem:[#allocation2 + $0x16a] sm:$0xff]
      %v3522 = vld [vmem:[#allocation2 + $0x172] sm:$0xff]
      %v3523 = vld [vmem:[%s412] sm:$0xff]
      %v3524 = vld [vmem:[%s412 + $0x8] sm:$0xff]
      %v3525 = vld [vmem:[%s412 + $0x18] sm:$0xff]
      %v3526 = vld [vmem:[%s412 + $0x20] sm:$0xff]
      %v3527 = vld [vmem:[%s412 + $0x30] sm:$0xff]
      %v3528 = vld [vmem:[%s412 + $0x38] sm:$0xff]
      %v3529 = vld [vmem:[%s412 + $0x48] sm:$0xff]
      %v3530 = vld [vmem:[%s412 + $0x50] sm:$0xff]
      %v3531 = vld [vmem:[%s412 + $0x60] sm:$0xff]
      %v3532 = vld [vmem:[%s412 + $0x68] sm:$0xff]
      %v3533 = vld [vmem:[%s412 + $0x78] sm:$0xff]
      %v3534 = vld [vmem:[%s412 + $0x80] sm:$0xff]
      %v3535 = vld [vmem:[%s412 + $0x90] sm:$0xff]
      %v3536 = vld [vmem:[%s412 + $0x98] sm:$0xff]
      %v3537 = vld [vmem:[%s412 + $0xa8] sm:$0xff]
      %v3538 = vld [vmem:[%s412 + $0xb0] sm:$0xff]
      %v3539 = vld [vmem:[%s412 + $0xc0] sm:$0xff]
      %v3540 = vld [vmem:[%s412 + $0xc8] sm:$0xff]
      %v3541 = vld [vmem:[%s412 + $0xd8] sm:$0xff]
      %v3542 = vld [vmem:[%s412 + $0xe0] sm:$0xff]
      %v3543 = vld [vmem:[%s412 + $0xf0] sm:$0xff]
      %v3544 = vld [vmem:[%s412 + $0xf8] sm:$0xff]
      %v3545 = vld [vmem:[%s412 + $0x108] sm:$0xff]
      %v3546 = vld [vmem:[%s412 + $0x110] sm:$0xff]
      %v3547 = vld [vmem:[%s412 + $0x120] sm:$0xff]
      %v3548 = vld [vmem:[%s412 + $0x128] sm:$0xff]
      %v3549 = vld [vmem:[%s412 + $0x138] sm:$0xff]
      %v3550 = vld [vmem:[%s412 + $0x140] sm:$0xff]
      %v3551 = vld [vmem:[%s412 + $0x150] sm:$0xff]
      %v3552 = vld [vmem:[%s412 + $0x158] sm:$0xff]
      %v3553 = vld [vmem:[%s412 + $0x168] sm:$0xff]
      %v3554 = vld [vmem:[%s412 + $0x170] sm:$0xff]
      %v3555 = vld [vmem:[%s412 + $0x1] sm:$0xff]
      %v3556 = vld [vmem:[%s412 + $0x9] sm:$0xff]
      %v3557 = vld [vmem:[%s412 + $0x19] sm:$0xff]
      %v3558 = vld [vmem:[%s412 + $0x21] sm:$0xff]
      %v3559 = vld [vmem:[%s412 + $0x31] sm:$0xff]
      %v3560 = vld [vmem:[%s412 + $0x39] sm:$0xff]
      %v3561 = vld [vmem:[%s412 + $0x49] sm:$0xff]
      %v3562 = vld [vmem:[%s412 + $0x51] sm:$0xff]
      %v3563 = vld [vmem:[%s412 + $0x61] sm:$0xff]
      %v3564 = vld [vmem:[%s412 + $0x69] sm:$0xff]
      %v3565 = vld [vmem:[%s412 + $0x79] sm:$0xff]
      %v3566 = vld [vmem:[%s412 + $0x81] sm:$0xff]
      %v3567 = vld [vmem:[%s412 + $0x91] sm:$0xff]
      %v3568 = vld [vmem:[%s412 + $0x99] sm:$0xff]
      %v3569 = vld [vmem:[%s412 + $0xa9] sm:$0xff]
      %v3570 = vld [vmem:[%s412 + $0xb1] sm:$0xff]
      %v3571 = vld [vmem:[%s412 + $0xc1] sm:$0xff]
      %v3572 = vld [vmem:[%s412 + $0xc9] sm:$0xff]
      %v3573 = vld [vmem:[%s412 + $0xd9] sm:$0xff]
      %v3574 = vld [vmem:[%s412 + $0xe1] sm:$0xff]
      %v3575 = vld [vmem:[%s412 + $0xf1] sm:$0xff]
      %v3576 = vld [vmem:[%s412 + $0xf9] sm:$0xff]
      %v3577 = vld [vmem:[%s412 + $0x109] sm:$0xff]
      %v3578 = vld [vmem:[%s412 + $0x111] sm:$0xff]
      %v3579 = vld [vmem:[%s412 + $0x121] sm:$0xff]
      %v3580 = vld [vmem:[%s412 + $0x129] sm:$0xff]
      %v3581 = vld [vmem:[%s412 + $0x139] sm:$0xff]
      %v3582 = vld [vmem:[%s412 + $0x141] sm:$0xff]
      %v3583 = vld [vmem:[%s412 + $0x151] sm:$0xff]
      %v3584 = vld [vmem:[%s412 + $0x159] sm:$0xff]
      %v3585 = vld [vmem:[%s412 + $0x169] sm:$0xff]
      %v3586 = vld [vmem:[%s412 + $0x171] sm:$0xff]
      %v3587 = vld [vmem:[%s412 + $0x2] sm:$0xff]
      %v3588 = vld [vmem:[%s412 + $0xa] sm:$0xff]
      %v3589 = vld [vmem:[%s412 + $0x1a] sm:$0xff]
      %v3590 = vld [vmem:[%s412 + $0x22] sm:$0xff]
      %v3591 = vld [vmem:[%s412 + $0x32] sm:$0xff]
      %v3592 = vld [vmem:[%s412 + $0x3a] sm:$0xff]
      %v3593 = vld [vmem:[%s412 + $0x4a] sm:$0xff]
      %v3594 = vld [vmem:[%s412 + $0x52] sm:$0xff]
      %v3595 = vld [vmem:[%s412 + $0x62] sm:$0xff]
      %v3596 = vld [vmem:[%s412 + $0x6a] sm:$0xff]
      %v3597 = vld [vmem:[%s412 + $0x7a] sm:$0xff]
      %v3598 = vld [vmem:[%s412 + $0x82] sm:$0xff]
      %v3599 = vld [vmem:[%s412 + $0x92] sm:$0xff]
      %v3600 = vld [vmem:[%s412 + $0x9a] sm:$0xff]
      %v3601 = vld [vmem:[%s412 + $0xaa] sm:$0xff]
      %v3602 = vld [vmem:[%s412 + $0xb2] sm:$0xff]
      %v3603 = vld [vmem:[%s412 + $0xc2] sm:$0xff]
      %v3604 = vld [vmem:[%s412 + $0xca] sm:$0xff]
      %v3605 = vld [vmem:[%s412 + $0xda] sm:$0xff]
      %v3606 = vld [vmem:[%s412 + $0xe2] sm:$0xff]
      %v3607 = vld [vmem:[%s412 + $0xf2] sm:$0xff]
      %v3608 = vld [vmem:[%s412 + $0xfa] sm:$0xff]
      %v3609 = vld [vmem:[%s412 + $0x10a] sm:$0xff]
      %v3610 = vld [vmem:[%s412 + $0x112] sm:$0xff]
      %v3611 = vld [vmem:[%s412 + $0x122] sm:$0xff]
      %v3612 = vld [vmem:[%s412 + $0x12a] sm:$0xff]
      %v3613 = vld [vmem:[%s412 + $0x13a] sm:$0xff]
      %v3614 = vld [vmem:[%s412 + $0x142] sm:$0xff]
      %v3615 = vld [vmem:[%s412 + $0x152] sm:$0xff]
      %v3616 = vld [vmem:[%s412 + $0x15a] sm:$0xff]
      %v3617 = vld [vmem:[%s412 + $0x16a] sm:$0xff]
      %v3618 = vld [vmem:[%s412 + $0x172] sm:$0xff]
      %v3619 = vld [vmem:[%s638] sm:$0xff]
      %v3620 = vld [vmem:[%s638 + $0x8] sm:$0xff]
      %v3621 = vld [vmem:[%s638 + $0x18] sm:$0xff]
      %v3622 = vld [vmem:[%s638 + $0x20] sm:$0xff]
      %v3623 = vld [vmem:[%s638 + $0x30] sm:$0xff]
      %v3624 = vld [vmem:[%s638 + $0x38] sm:$0xff]
      %v3625 = vld [vmem:[%s638 + $0x48] sm:$0xff]
      %v3626 = vld [vmem:[%s638 + $0x50] sm:$0xff]
      %v3627 = vld [vmem:[%s638 + $0x60] sm:$0xff]
      %v3628 = vld [vmem:[%s638 + $0x68] sm:$0xff]
      %v3629 = vld [vmem:[%s638 + $0x78] sm:$0xff]
      %v3630 = vld [vmem:[%s638 + $0x80] sm:$0xff]
      %v3631 = vld [vmem:[%s638 + $0x90] sm:$0xff]
      %v3632 = vld [vmem:[%s638 + $0x98] sm:$0xff]
      %v3633 = vld [vmem:[%s638 + $0xa8] sm:$0xff]
      %v3634 = vld [vmem:[%s638 + $0xb0] sm:$0xff]
      %v3635 = vld [vmem:[%s638 + $0xc0] sm:$0xff]
      %v3636 = vld [vmem:[%s638 + $0xc8] sm:$0xff]
      %v3637 = vld [vmem:[%s638 + $0xd8] sm:$0xff]
      %v3638 = vld [vmem:[%s638 + $0xe0] sm:$0xff]
      %v3639 = vld [vmem:[%s638 + $0xf0] sm:$0xff]
      %v3640 = vld [vmem:[%s638 + $0xf8] sm:$0xff]
      %v3641 = vld [vmem:[%s638 + $0x108] sm:$0xff]
      %v3642 = vld [vmem:[%s638 + $0x110] sm:$0xff]
      %v3643 = vld [vmem:[%s638 + $0x120] sm:$0xff]
      %v3644 = vld [vmem:[%s638 + $0x128] sm:$0xff]
      %v3645 = vld [vmem:[%s638 + $0x138] sm:$0xff]
      %v3646 = vld [vmem:[%s638 + $0x140] sm:$0xff]
      %v3647 = vld [vmem:[%s638 + $0x150] sm:$0xff]
      %v3648 = vld [vmem:[%s638 + $0x158] sm:$0xff]
      %v3649 = vld [vmem:[%s638 + $0x168] sm:$0xff]
      %v3650 = vld [vmem:[%s638 + $0x170] sm:$0xff]
      %v3651 = vld [vmem:[%s638 + $0x1] sm:$0xff]
      %v3652 = vld [vmem:[%s638 + $0x9] sm:$0xff]
      %v3653 = vld [vmem:[%s638 + $0x19] sm:$0xff]
      %v3654 = vld [vmem:[%s638 + $0x21] sm:$0xff]
      %v3655 = vld [vmem:[%s638 + $0x31] sm:$0xff]
      %v3656 = vld [vmem:[%s638 + $0x39] sm:$0xff]
      %v3657 = vld [vmem:[%s638 + $0x49] sm:$0xff]
      %v3658 = vld [vmem:[%s638 + $0x51] sm:$0xff]
      %v3659 = vld [vmem:[%s638 + $0x61] sm:$0xff]
      %v3660 = vld [vmem:[%s638 + $0x69] sm:$0xff]
      %v3661 = vld [vmem:[%s638 + $0x79] sm:$0xff]
      %v3662 = vld [vmem:[%s638 + $0x81] sm:$0xff]
      %v3663 = vld [vmem:[%s638 + $0x91] sm:$0xff]
      %v3664 = vld [vmem:[%s638 + $0x99] sm:$0xff]
      %v3665 = vld [vmem:[%s638 + $0xa9] sm:$0xff]
      %v3666 = vld [vmem:[%s638 + $0xb1] sm:$0xff]
      %v3667 = vld [vmem:[%s638 + $0xc1] sm:$0xff]
      %v3668 = vld [vmem:[%s638 + $0xc9] sm:$0xff]
      %v3669 = vld [vmem:[%s638 + $0xd9] sm:$0xff]
      %v3670 = vld [vmem:[%s638 + $0xe1] sm:$0xff]
      %v3671 = vld [vmem:[%s638 + $0xf1] sm:$0xff]
      %v3672 = vld [vmem:[%s638 + $0xf9] sm:$0xff]
      %v3673 = vld [vmem:[%s638 + $0x109] sm:$0xff]
      %v3674 = vld [vmem:[%s638 + $0x111] sm:$0xff]
      %v3675 = vld [vmem:[%s638 + $0x121] sm:$0xff]
      %v3676 = vld [vmem:[%s638 + $0x129] sm:$0xff]
      %v3677 = vld [vmem:[%s638 + $0x139] sm:$0xff]
      %v3678 = vld [vmem:[%s638 + $0x141] sm:$0xff]
      %v3679 = vld [vmem:[%s638 + $0x151] sm:$0xff]
      %v3680 = vld [vmem:[%s638 + $0x159] sm:$0xff]
      %v3681 = vld [vmem:[%s638 + $0x169] sm:$0xff]
      %v3682 = vld [vmem:[%s638 + $0x171] sm:$0xff]
      %v3683 = vld [vmem:[%s638 + $0x2] sm:$0xff]
      %v3684 = vld [vmem:[%s638 + $0xa] sm:$0xff]
      %v3685 = vld [vmem:[%s638 + $0x1a] sm:$0xff]
      %v3686 = vld [vmem:[%s638 + $0x22] sm:$0xff]
      %v3687 = vld [vmem:[%s638 + $0x32] sm:$0xff]
      %v3688 = vld [vmem:[%s638 + $0x3a] sm:$0xff]
      %v3689 = vld [vmem:[%s638 + $0x4a] sm:$0xff]
      %v3690 = vld [vmem:[%s638 + $0x52] sm:$0xff]
      %v3691 = vld [vmem:[%s638 + $0x62] sm:$0xff]
      %v3692 = vld [vmem:[%s638 + $0x6a] sm:$0xff]
      %v3693 = vld [vmem:[%s638 + $0x7a] sm:$0xff]
      %v3694 = vld [vmem:[%s638 + $0x82] sm:$0xff]
      %v3695 = vld [vmem:[%s638 + $0x92] sm:$0xff]
      %v3696 = vld [vmem:[%s638 + $0x9a] sm:$0xff]
      %v3697 = vld [vmem:[%s638 + $0xaa] sm:$0xff]
      %v3698 = vld [vmem:[%s638 + $0xb2] sm:$0xff]
      %v3699 = vld [vmem:[%s638 + $0xc2] sm:$0xff]
      %v3700 = vld [vmem:[%s638 + $0xca] sm:$0xff]
      %v3701 = vld [vmem:[%s638 + $0xda] sm:$0xff]
      %v3702 = vld [vmem:[%s638 + $0xe2] sm:$0xff]
      %v3703 = vld [vmem:[%s638 + $0xf2] sm:$0xff]
      %v3704 = vld [vmem:[%s638 + $0xfa] sm:$0xff]
      %v3705 = vld [vmem:[%s638 + $0x10a] sm:$0xff]
      %v3706 = vld [vmem:[%s638 + $0x112] sm:$0xff]
      %v3707 = vld [vmem:[%s638 + $0x122] sm:$0xff]
      %v3708 = vld [vmem:[%s638 + $0x12a] sm:$0xff]
      %v3709 = vld [vmem:[%s638 + $0x13a] sm:$0xff]
      %v3710 = vld [vmem:[%s638 + $0x142] sm:$0xff]
      %v3711 = vld [vmem:[%s638 + $0x152] sm:$0xff]
      %v3712 = vld [vmem:[%s638 + $0x15a] sm:$0xff]
      %v3713 = vld [vmem:[%s638 + $0x16a] sm:$0xff]
      %v3714 = vld [vmem:[%s638 + $0x172] sm:$0xff]
      %3747 = vrot.lane.b32.xlu0 %v3427, 120
      %v3748 = vpop.permute.xlu0 %3747
      %3749 = vrot.lane.b32.xlu0 %v3428, 120
      %v3750 = vpop.permute.xlu0 %3749
      %3751 = vrot.lane.b32.xlu0 %v3429, 120
      %v3752 = vpop.permute.xlu0 %3751
      %3753 = vrot.lane.b32.xlu0 %v3430, 120
      %v3754 = vpop.permute.xlu0 %3753
      %3755 = vrot.lane.b32.xlu0 %v3431, 120
      %v3756 = vpop.permute.xlu0 %3755
      %3757 = vrot.lane.b32.xlu0 %v3432, 120
      %v3758 = vpop.permute.xlu0 %3757
      %3759 = vrot.lane.b32.xlu0 %v3433, 120
      %v3760 = vpop.permute.xlu0 %3759
      %3761 = vrot.lane.b32.xlu0 %v3434, 120
      %v3762 = vpop.permute.xlu0 %3761
      %3763 = vrot.lane.b32.xlu0 %v3435, 120
      %v3764 = vpop.permute.xlu0 %3763
      %3765 = vrot.lane.b32.xlu0 %v3436, 120
      %v3766 = vpop.permute.xlu0 %3765
      %3767 = vrot.lane.b32.xlu0 %v3437, 120
      %v3768 = vpop.permute.xlu0 %3767
      %3769 = vrot.lane.b32.xlu0 %v3438, 120
      %v3770 = vpop.permute.xlu0 %3769
      %3771 = vrot.lane.b32.xlu0 %v3439, 120
      %v3772 = vpop.permute.xlu0 %3771
      %3773 = vrot.lane.b32.xlu0 %v3440, 120
      %v3774 = vpop.permute.xlu0 %3773
      %3775 = vrot.lane.b32.xlu0 %v3441, 120
      %v3776 = vpop.permute.xlu0 %3775
      %3777 = vrot.lane.b32.xlu0 %v3442, 120
      %v3778 = vpop.permute.xlu0 %3777
      %3779 = vrot.lane.b32.xlu0 %v3443, 120
      %v3780 = vpop.permute.xlu0 %3779
      %3781 = vrot.lane.b32.xlu0 %v3444, 120
      %v3782 = vpop.permute.xlu0 %3781
      %3783 = vrot.lane.b32.xlu0 %v3445, 120
      %v3784 = vpop.permute.xlu0 %3783
      %3785 = vrot.lane.b32.xlu0 %v3446, 120
      %v3786 = vpop.permute.xlu0 %3785
      %3787 = vrot.lane.b32.xlu0 %v3447, 120
      %v3788 = vpop.permute.xlu0 %3787
      %3789 = vrot.lane.b32.xlu0 %v3448, 120
      %v3790 = vpop.permute.xlu0 %3789
      %3791 = vrot.lane.b32.xlu0 %v3449, 120
      %v3792 = vpop.permute.xlu0 %3791
      %3793 = vrot.lane.b32.xlu0 %v3450, 120
      %v3794 = vpop.permute.xlu0 %3793
      %3795 = vrot.lane.b32.xlu0 %v3451, 120
      %v3796 = vpop.permute.xlu0 %3795
      %3797 = vrot.lane.b32.xlu0 %v3452, 120
      %v3798 = vpop.permute.xlu0 %3797
      %3799 = vrot.lane.b32.xlu0 %v3453, 120
      %v3800 = vpop.permute.xlu0 %3799
      %3801 = vrot.lane.b32.xlu0 %v3454, 120
      %v3802 = vpop.permute.xlu0 %3801
      %3803 = vrot.lane.b32.xlu0 %v3455, 120
      %v3804 = vpop.permute.xlu0 %3803
      %3805 = vrot.lane.b32.xlu0 %v3456, 120
      %v3806 = vpop.permute.xlu0 %3805
      %3807 = vrot.lane.b32.xlu0 %v3457, 120
      %v3808 = vpop.permute.xlu0 %3807
      %3809 = vrot.lane.b32.xlu0 %v3458, 120
      %v3810 = vpop.permute.xlu0 %3809
      %3875 = vrot.lane.b32.xlu0 %v3491, 8
      %v3876 = vpop.permute.xlu0 %3875
      %3877 = vrot.lane.b32.xlu0 %v3492, 8
      %v3878 = vpop.permute.xlu0 %3877
      %3879 = vrot.lane.b32.xlu0 %v3493, 8
      %v3880 = vpop.permute.xlu0 %3879
      %3881 = vrot.lane.b32.xlu0 %v3494, 8
      %v3882 = vpop.permute.xlu0 %3881
      %3883 = vrot.lane.b32.xlu0 %v3495, 8
      %v3884 = vpop.permute.xlu0 %3883
      %3885 = vrot.lane.b32.xlu0 %v3496, 8
      %v3886 = vpop.permute.xlu0 %3885
      %3887 = vrot.lane.b32.xlu0 %v3497, 8
      %v3888 = vpop.permute.xlu0 %3887
      %3889 = vrot.lane.b32.xlu0 %v3498, 8
      %v3890 = vpop.permute.xlu0 %3889
      %3891 = vrot.lane.b32.xlu0 %v3499, 8
      %v3892 = vpop.permute.xlu0 %3891
      %3893 = vrot.lane.b32.xlu0 %v3500, 8
      %v3894 = vpop.permute.xlu0 %3893
      %3895 = vrot.lane.b32.xlu0 %v3501, 8
      %v3896 = vpop.permute.xlu0 %3895
      %3897 = vrot.lane.b32.xlu0 %v3502, 8
      %v3898 = vpop.permute.xlu0 %3897
      %3899 = vrot.lane.b32.xlu0 %v3503, 8
      %v3900 = vpop.permute.xlu0 %3899
      %3901 = vrot.lane.b32.xlu0 %v3504, 8
      %v3902 = vpop.permute.xlu0 %3901
      %3903 = vrot.lane.b32.xlu0 %v3505, 8
      %v3904 = vpop.permute.xlu0 %3903
      %3905 = vrot.lane.b32.xlu0 %v3506, 8
      %v3906 = vpop.permute.xlu0 %3905
      %3907 = vrot.lane.b32.xlu0 %v3507, 8
      %v3908 = vpop.permute.xlu0 %3907
      %3909 = vrot.lane.b32.xlu0 %v3508, 8
      %v3910 = vpop.permute.xlu0 %3909
      %3911 = vrot.lane.b32.xlu0 %v3509, 8
      %v3912 = vpop.permute.xlu0 %3911
      %3913 = vrot.lane.b32.xlu0 %v3510, 8
      %v3914 = vpop.permute.xlu0 %3913
      %3915 = vrot.lane.b32.xlu0 %v3511, 8
      %v3916 = vpop.permute.xlu0 %3915
      %3917 = vrot.lane.b32.xlu0 %v3512, 8
      %v3918 = vpop.permute.xlu0 %3917
      %3919 = vrot.lane.b32.xlu0 %v3513, 8
      %v3920 = vpop.permute.xlu0 %3919
      %3921 = vrot.lane.b32.xlu0 %v3514, 8
      %v3922 = vpop.permute.xlu0 %3921
      %3923 = vrot.lane.b32.xlu0 %v3515, 8
      %v3924 = vpop.permute.xlu0 %3923
      %3925 = vrot.lane.b32.xlu0 %v3516, 8
      %v3926 = vpop.permute.xlu0 %3925
      %3927 = vrot.lane.b32.xlu0 %v3517, 8
      %v3928 = vpop.permute.xlu0 %3927
      %3929 = vrot.lane.b32.xlu0 %v3518, 8
      %v3930 = vpop.permute.xlu0 %3929
      %3931 = vrot.lane.b32.xlu0 %v3519, 8
      %v3932 = vpop.permute.xlu0 %3931
      %3933 = vrot.lane.b32.xlu0 %v3520, 8
      %v3934 = vpop.permute.xlu0 %3933
      %3935 = vrot.lane.b32.xlu0 %v3521, 8
      %v3936 = vpop.permute.xlu0 %3935
      %3937 = vrot.lane.b32.xlu0 %v3522, 8
      %v3938 = vpop.permute.xlu0 %3937
      %4003 = vrot.lane.b32.xlu0 %v3523, 16
      %v4004 = vpop.permute.xlu0 %4003
      %4005 = vrot.lane.b32.xlu0 %v3524, 16
      %v4006 = vpop.permute.xlu0 %4005
      %4007 = vrot.lane.b32.xlu0 %v3525, 16
      %v4008 = vpop.permute.xlu0 %4007
      %4009 = vrot.lane.b32.xlu0 %v3526, 16
      %v4010 = vpop.permute.xlu0 %4009
      %4011 = vrot.lane.b32.xlu0 %v3527, 16
      %v4012 = vpop.permute.xlu0 %4011
      %4013 = vrot.lane.b32.xlu0 %v3528, 16
      %v4014 = vpop.permute.xlu0 %4013
      %4015 = vrot.lane.b32.xlu0 %v3529, 16
      %v4016 = vpop.permute.xlu0 %4015
      %4017 = vrot.lane.b32.xlu0 %v3530, 16
      %v4018 = vpop.permute.xlu0 %4017
      %4019 = vrot.lane.b32.xlu0 %v3531, 16
      %v4020 = vpop.permute.xlu0 %4019
      %4021 = vrot.lane.b32.xlu0 %v3532, 16
      %v4022 = vpop.permute.xlu0 %4021
      %4023 = vrot.lane.b32.xlu0 %v3533, 16
      %v4024 = vpop.permute.xlu0 %4023
      %4025 = vrot.lane.b32.xlu0 %v3534, 16
      %v4026 = vpop.permute.xlu0 %4025
      %4027 = vrot.lane.b32.xlu0 %v3535, 16
      %v4028 = vpop.permute.xlu0 %4027
      %4029 = vrot.lane.b32.xlu0 %v3536, 16
      %v4030 = vpop.permute.xlu0 %4029
      %4031 = vrot.lane.b32.xlu0 %v3537, 16
      %v4032 = vpop.permute.xlu0 %4031
      %4033 = vrot.lane.b32.xlu0 %v3538, 16
      %v4034 = vpop.permute.xlu0 %4033
      %4035 = vrot.lane.b32.xlu0 %v3539, 16
      %v4036 = vpop.permute.xlu0 %4035
      %4037 = vrot.lane.b32.xlu0 %v3540, 16
      %v4038 = vpop.permute.xlu0 %4037
      %4039 = vrot.lane.b32.xlu0 %v3541, 16
      %v4040 = vpop.permute.xlu0 %4039
      %4041 = vrot.lane.b32.xlu0 %v3542, 16
      %v4042 = vpop.permute.xlu0 %4041
      %4043 = vrot.lane.b32.xlu0 %v3543, 16
      %v4044 = vpop.permute.xlu0 %4043
      %4045 = vrot.lane.b32.xlu0 %v3544, 16
      %v4046 = vpop.permute.xlu0 %4045
      %4047 = vrot.lane.b32.xlu0 %v3545, 16
      %v4048 = vpop.permute.xlu0 %4047
      %4049 = vrot.lane.b32.xlu0 %v3546, 16
      %v4050 = vpop.permute.xlu0 %4049
      %4051 = vrot.lane.b32.xlu0 %v3547, 16
      %v4052 = vpop.permute.xlu0 %4051
      %4053 = vrot.lane.b32.xlu0 %v3548, 16
      %v4054 = vpop.permute.xlu0 %4053
      %4055 = vrot.lane.b32.xlu0 %v3549, 16
      %v4056 = vpop.permute.xlu0 %4055
      %4057 = vrot.lane.b32.xlu0 %v3550, 16
      %v4058 = vpop.permute.xlu0 %4057
      %4059 = vrot.lane.b32.xlu0 %v3551, 16
      %v4060 = vpop.permute.xlu0 %4059
      %4061 = vrot.lane.b32.xlu0 %v3552, 16
      %v4062 = vpop.permute.xlu0 %4061
      %4063 = vrot.lane.b32.xlu0 %v3553, 16
      %v4064 = vpop.permute.xlu0 %4063
      %4065 = vrot.lane.b32.xlu0 %v3554, 16
      %v4066 = vpop.permute.xlu0 %4065
      %4131 = vrot.lane.b32.xlu0 %v3555, 24
      %v4132 = vpop.permute.xlu0 %4131
      %4133 = vrot.lane.b32.xlu0 %v3556, 24
      %v4134 = vpop.permute.xlu0 %4133
      %4135 = vrot.lane.b32.xlu0 %v3557, 24
      %v4136 = vpop.permute.xlu0 %4135
      %4137 = vrot.lane.b32.xlu0 %v3558, 24
      %v4138 = vpop.permute.xlu0 %4137
      %4139 = vrot.lane.b32.xlu0 %v3559, 24
      %v4140 = vpop.permute.xlu0 %4139
      %4141 = vrot.lane.b32.xlu0 %v3560, 24
      %v4142 = vpop.permute.xlu0 %4141
      %4143 = vrot.lane.b32.xlu0 %v3561, 24
      %v4144 = vpop.permute.xlu0 %4143
      %4145 = vrot.lane.b32.xlu0 %v3562, 24
      %v4146 = vpop.permute.xlu0 %4145
      %4147 = vrot.lane.b32.xlu0 %v3563, 24
      %v4148 = vpop.permute.xlu0 %4147
      %4149 = vrot.lane.b32.xlu0 %v3564, 24
      %v4150 = vpop.permute.xlu0 %4149
      %4151 = vrot.lane.b32.xlu0 %v3565, 24
      %v4152 = vpop.permute.xlu0 %4151
      %4153 = vrot.lane.b32.xlu0 %v3566, 24
      %v4154 = vpop.permute.xlu0 %4153
      %4155 = vrot.lane.b32.xlu0 %v3567, 24
      %v4156 = vpop.permute.xlu0 %4155
      %4157 = vrot.lane.b32.xlu0 %v3568, 24
      %v4158 = vpop.permute.xlu0 %4157
      %4159 = vrot.lane.b32.xlu0 %v3569, 24
      %v4160 = vpop.permute.xlu0 %4159
      %4161 = vrot.lane.b32.xlu0 %v3570, 24
      %v4162 = vpop.permute.xlu0 %4161
      %4163 = vrot.lane.b32.xlu0 %v3571, 24
      %v4164 = vpop.permute.xlu0 %4163
      %4165 = vrot.lane.b32.xlu0 %v3572, 24
      %v4166 = vpop.permute.xlu0 %4165
      %4167 = vrot.lane.b32.xlu0 %v3573, 24
      %v4168 = vpop.permute.xlu0 %4167
      %4169 = vrot.lane.b32.xlu0 %v3574, 24
      %v4170 = vpop.permute.xlu0 %4169
      %4171 = vrot.lane.b32.xlu0 %v3575, 24
      %v4172 = vpop.permute.xlu0 %4171
      %4173 = vrot.lane.b32.xlu0 %v3576, 24
      %v4174 = vpop.permute.xlu0 %4173
      %4175 = vrot.lane.b32.xlu0 %v3577, 24
      %v4176 = vpop.permute.xlu0 %4175
      %4177 = vrot.lane.b32.xlu0 %v3578, 24
      %v4178 = vpop.permute.xlu0 %4177
      %4179 = vrot.lane.b32.xlu0 %v3579, 24
      %v4180 = vpop.permute.xlu0 %4179
      %4181 = vrot.lane.b32.xlu0 %v3580, 24
      %v4182 = vpop.permute.xlu0 %4181
      %4183 = vrot.lane.b32.xlu0 %v3581, 24
      %v4184 = vpop.permute.xlu0 %4183
      %4185 = vrot.lane.b32.xlu0 %v3582, 24
      %v4186 = vpop.permute.xlu0 %4185
      %4187 = vrot.lane.b32.xlu0 %v3583, 24
      %v4188 = vpop.permute.xlu0 %4187
      %4189 = vrot.lane.b32.xlu0 %v3584, 24
      %v4190 = vpop.permute.xlu0 %4189
      %4191 = vrot.lane.b32.xlu0 %v3585, 24
      %v4192 = vpop.permute.xlu0 %4191
      %4193 = vrot.lane.b32.xlu0 %v3586, 24
      %v4194 = vpop.permute.xlu0 %4193
      %4259 = vrot.lane.b32.xlu0 %v3587, 32
      %v4260 = vpop.permute.xlu0 %4259
      %4261 = vrot.lane.b32.xlu0 %v3588, 32
      %v4262 = vpop.permute.xlu0 %4261
      %4263 = vrot.lane.b32.xlu0 %v3589, 32
      %v4264 = vpop.permute.xlu0 %4263
      %4265 = vrot.lane.b32.xlu0 %v3590, 32
      %v4266 = vpop.permute.xlu0 %4265
      %4267 = vrot.lane.b32.xlu0 %v3591, 32
      %v4268 = vpop.permute.xlu0 %4267
      %4269 = vrot.lane.b32.xlu0 %v3592, 32
      %v4270 = vpop.permute.xlu0 %4269
      %4271 = vrot.lane.b32.xlu0 %v3593, 32
      %v4272 = vpop.permute.xlu0 %4271
      %4273 = vrot.lane.b32.xlu0 %v3594, 32
      %v4274 = vpop.permute.xlu0 %4273
      %4275 = vrot.lane.b32.xlu0 %v3595, 32
      %v4276 = vpop.permute.xlu0 %4275
      %4277 = vrot.lane.b32.xlu0 %v3596, 32
      %v4278 = vpop.permute.xlu0 %4277
      %4279 = vrot.lane.b32.xlu0 %v3597, 32
      %v4280 = vpop.permute.xlu0 %4279
      %4281 = vrot.lane.b32.xlu0 %v3598, 32
      %v4282 = vpop.permute.xlu0 %4281
      %4283 = vrot.lane.b32.xlu0 %v3599, 32
      %v4284 = vpop.permute.xlu0 %4283
      %4285 = vrot.lane.b32.xlu0 %v3600, 32
      %v4286 = vpop.permute.xlu0 %4285
      %4287 = vrot.lane.b32.xlu0 %v3601, 32
      %v4288 = vpop.permute.xlu0 %4287
      %4289 = vrot.lane.b32.xlu0 %v3602, 32
      %v4290 = vpop.permute.xlu0 %4289
      %4291 = vrot.lane.b32.xlu0 %v3603, 32
      %v4292 = vpop.permute.xlu0 %4291
      %4293 = vrot.lane.b32.xlu0 %v3604, 32
      %v4294 = vpop.permute.xlu0 %4293
      %4295 = vrot.lane.b32.xlu0 %v3605, 32
      %v4296 = vpop.permute.xlu0 %4295
      %4297 = vrot.lane.b32.xlu0 %v3606, 32
      %v4298 = vpop.permute.xlu0 %4297
      %4299 = vrot.lane.b32.xlu0 %v3607, 32
      %v4300 = vpop.permute.xlu0 %4299
      %4301 = vrot.lane.b32.xlu0 %v3608, 32
      %v4302 = vpop.permute.xlu0 %4301
      %4303 = vrot.lane.b32.xlu0 %v3609, 32
      %v4304 = vpop.permute.xlu0 %4303
      %4305 = vrot.lane.b32.xlu0 %v3610, 32
      %v4306 = vpop.permute.xlu0 %4305
      %4307 = vrot.lane.b32.xlu0 %v3611, 32
      %v4308 = vpop.permute.xlu0 %4307
      %4309 = vrot.lane.b32.xlu0 %v3612, 32
      %v4310 = vpop.permute.xlu0 %4309
      %4311 = vrot.lane.b32.xlu0 %v3613, 32
      %v4312 = vpop.permute.xlu0 %4311
      %4313 = vrot.lane.b32.xlu0 %v3614, 32
      %v4314 = vpop.permute.xlu0 %4313
      %4315 = vrot.lane.b32.xlu0 %v3615, 32
      %v4316 = vpop.permute.xlu0 %4315
      %4317 = vrot.lane.b32.xlu0 %v3616, 32
      %v4318 = vpop.permute.xlu0 %4317
      %4319 = vrot.lane.b32.xlu0 %v3617, 32
      %v4320 = vpop.permute.xlu0 %4319
      %4321 = vrot.lane.b32.xlu0 %v3618, 32
      %v4322 = vpop.permute.xlu0 %4321
      %4387 = vrot.lane.b32.xlu0 %v3619, 40
      %v4388 = vpop.permute.xlu0 %4387
      %4389 = vrot.lane.b32.xlu0 %v3620, 40
      %v4390 = vpop.permute.xlu0 %4389
      %4391 = vrot.lane.b32.xlu0 %v3621, 40
      %v4392 = vpop.permute.xlu0 %4391
      %4393 = vrot.lane.b32.xlu0 %v3622, 40
      %v4394 = vpop.permute.xlu0 %4393
      %4395 = vrot.lane.b32.xlu0 %v3623, 40
      %v4396 = vpop.permute.xlu0 %4395
      %4397 = vrot.lane.b32.xlu0 %v3624, 40
      %v4398 = vpop.permute.xlu0 %4397
      %4399 = vrot.lane.b32.xlu0 %v3625, 40
      %v4400 = vpop.permute.xlu0 %4399
      %4401 = vrot.lane.b32.xlu0 %v3626, 40
      %v4402 = vpop.permute.xlu0 %4401
      %4403 = vrot.lane.b32.xlu0 %v3627, 40
      %v4404 = vpop.permute.xlu0 %4403
      %4405 = vrot.lane.b32.xlu0 %v3628, 40
      %v4406 = vpop.permute.xlu0 %4405
      %4407 = vrot.lane.b32.xlu0 %v3629, 40
      %v4408 = vpop.permute.xlu0 %4407
      %4409 = vrot.lane.b32.xlu0 %v3630, 40
      %v4410 = vpop.permute.xlu0 %4409
      %4411 = vrot.lane.b32.xlu0 %v3631, 40
      %v4412 = vpop.permute.xlu0 %4411
      %4413 = vrot.lane.b32.xlu0 %v3632, 40
      %v4414 = vpop.permute.xlu0 %4413
      %4415 = vrot.lane.b32.xlu0 %v3633, 40
      %v4416 = vpop.permute.xlu0 %4415
      %4417 = vrot.lane.b32.xlu0 %v3634, 40
      %v4418 = vpop.permute.xlu0 %4417
      %4419 = vrot.lane.b32.xlu0 %v3635, 40
      %v4420 = vpop.permute.xlu0 %4419
      %4421 = vrot.lane.b32.xlu0 %v3636, 40
      %v4422 = vpop.permute.xlu0 %4421
      %4423 = vrot.lane.b32.xlu0 %v3637, 40
      %v4424 = vpop.permute.xlu0 %4423
      %4425 = vrot.lane.b32.xlu0 %v3638, 40
      %v4426 = vpop.permute.xlu0 %4425
      %4427 = vrot.lane.b32.xlu0 %v3639, 40
      %v4428 = vpop.permute.xlu0 %4427
      %4429 = vrot.lane.b32.xlu0 %v3640, 40
      %v4430 = vpop.permute.xlu0 %4429
      %4431 = vrot.lane.b32.xlu0 %v3641, 40
      %v4432 = vpop.permute.xlu0 %4431
      %4433 = vrot.lane.b32.xlu0 %v3642, 40
      %v4434 = vpop.permute.xlu0 %4433
      %4435 = vrot.lane.b32.xlu0 %v3643, 40
      %v4436 = vpop.permute.xlu0 %4435
      %4437 = vrot.lane.b32.xlu0 %v3644, 40
      %v4438 = vpop.permute.xlu0 %4437
      %4439 = vrot.lane.b32.xlu0 %v3645, 40
      %v4440 = vpop.permute.xlu0 %4439
      %4441 = vrot.lane.b32.xlu0 %v3646, 40
      %v4442 = vpop.permute.xlu0 %4441
      %4443 = vrot.lane.b32.xlu0 %v3647, 40
      %v4444 = vpop.permute.xlu0 %4443
      %4445 = vrot.lane.b32.xlu0 %v3648, 40
      %v4446 = vpop.permute.xlu0 %4445
      %4447 = vrot.lane.b32.xlu0 %v3649, 40
      %v4448 = vpop.permute.xlu0 %4447
      %4449 = vrot.lane.b32.xlu0 %v3650, 40
      %v4450 = vpop.permute.xlu0 %4449
      %4515 = vrot.lane.b32.xlu0 %v3651, 48
      %v4516 = vpop.permute.xlu0 %4515
      %4517 = vrot.lane.b32.xlu0 %v3652, 48
      %v4518 = vpop.permute.xlu0 %4517
      %4519 = vrot.lane.b32.xlu0 %v3653, 48
      %v4520 = vpop.permute.xlu0 %4519
      %4521 = vrot.lane.b32.xlu0 %v3654, 48
      %v4522 = vpop.permute.xlu0 %4521
      %4523 = vrot.lane.b32.xlu0 %v3655, 48
      %v4524 = vpop.permute.xlu0 %4523
      %4525 = vrot.lane.b32.xlu0 %v3656, 48
      %v4526 = vpop.permute.xlu0 %4525
      %4527 = vrot.lane.b32.xlu0 %v3657, 48
      %v4528 = vpop.permute.xlu0 %4527
      %4529 = vrot.lane.b32.xlu0 %v3658, 48
      %v4530 = vpop.permute.xlu0 %4529
      %4531 = vrot.lane.b32.xlu0 %v3659, 48
      %v4532 = vpop.permute.xlu0 %4531
      %4533 = vrot.lane.b32.xlu0 %v3660, 48
      %v4534 = vpop.permute.xlu0 %4533
      %4535 = vrot.lane.b32.xlu0 %v3661, 48
      %v4536 = vpop.permute.xlu0 %4535
      %4537 = vrot.lane.b32.xlu0 %v3662, 48
      %v4538 = vpop.permute.xlu0 %4537
      %4539 = vrot.lane.b32.xlu0 %v3663, 48
      %v4540 = vpop.permute.xlu0 %4539
      %4541 = vrot.lane.b32.xlu0 %v3664, 48
      %v4542 = vpop.permute.xlu0 %4541
      %4543 = vrot.lane.b32.xlu0 %v3665, 48
      %v4544 = vpop.permute.xlu0 %4543
      %4545 = vrot.lane.b32.xlu0 %v3666, 48
      %v4546 = vpop.permute.xlu0 %4545
      %4547 = vrot.lane.b32.xlu0 %v3667, 48
      %v4548 = vpop.permute.xlu0 %4547
      %4549 = vrot.lane.b32.xlu0 %v3668, 48
      %v4550 = vpop.permute.xlu0 %4549
      %4551 = vrot.lane.b32.xlu0 %v3669, 48
      %v4552 = vpop.permute.xlu0 %4551
      %4553 = vrot.lane.b32.xlu0 %v3670, 48
      %v4554 = vpop.permute.xlu0 %4553
      %4555 = vrot.lane.b32.xlu0 %v3671, 48
      %v4556 = vpop.permute.xlu0 %4555
      %4557 = vrot.lane.b32.xlu0 %v3672, 48
      %v4558 = vpop.permute.xlu0 %4557
      %4559 = vrot.lane.b32.xlu0 %v3673, 48
      %v4560 = vpop.permute.xlu0 %4559
      %4561 = vrot.lane.b32.xlu0 %v3674, 48
      %v4562 = vpop.permute.xlu0 %4561
      %4563 = vrot.lane.b32.xlu0 %v3675, 48
      %v4564 = vpop.permute.xlu0 %4563
      %4565 = vrot.lane.b32.xlu0 %v3676, 48
      %v4566 = vpop.permute.xlu0 %4565
      %4567 = vrot.lane.b32.xlu0 %v3677, 48
      %v4568 = vpop.permute.xlu0 %4567
      %4569 = vrot.lane.b32.xlu0 %v3678, 48
      %v4570 = vpop.permute.xlu0 %4569
      %4571 = vrot.lane.b32.xlu0 %v3679, 48
      %v4572 = vpop.permute.xlu0 %4571
      %4573 = vrot.lane.b32.xlu0 %v3680, 48
      %v4574 = vpop.permute.xlu0 %4573
      %4575 = vrot.lane.b32.xlu0 %v3681, 48
      %v4576 = vpop.permute.xlu0 %4575
      %4577 = vrot.lane.b32.xlu0 %v3682, 48
      %v4578 = vpop.permute.xlu0 %4577
      %4643 = vrot.lane.b32.xlu0 %v3683, 56
      %v4644 = vpop.permute.xlu0 %4643
      %4645 = vrot.lane.b32.xlu0 %v3684, 56
      %v4646 = vpop.permute.xlu0 %4645
      %4647 = vrot.lane.b32.xlu0 %v3685, 56
      %v4648 = vpop.permute.xlu0 %4647
      %4649 = vrot.lane.b32.xlu0 %v3686, 56
      %v4650 = vpop.permute.xlu0 %4649
      %4651 = vrot.lane.b32.xlu0 %v3687, 56
      %v4652 = vpop.permute.xlu0 %4651
      %4653 = vrot.lane.b32.xlu0 %v3688, 56
      %v4654 = vpop.permute.xlu0 %4653
      %4655 = vrot.lane.b32.xlu0 %v3689, 56
      %v4656 = vpop.permute.xlu0 %4655
      %4657 = vrot.lane.b32.xlu0 %v3690, 56
      %v4658 = vpop.permute.xlu0 %4657
      %4659 = vrot.lane.b32.xlu0 %v3691, 56
      %v4660 = vpop.permute.xlu0 %4659
      %4661 = vrot.lane.b32.xlu0 %v3692, 56
      %v4662 = vpop.permute.xlu0 %4661
      %4663 = vrot.lane.b32.xlu0 %v3693, 56
      %v4664 = vpop.permute.xlu0 %4663
      %4665 = vrot.lane.b32.xlu0 %v3694, 56
      %v4666 = vpop.permute.xlu0 %4665
      %4667 = vrot.lane.b32.xlu0 %v3695, 56
      %v4668 = vpop.permute.xlu0 %4667
      %4669 = vrot.lane.b32.xlu0 %v3696, 56
      %v4670 = vpop.permute.xlu0 %4669
      %4671 = vrot.lane.b32.xlu0 %v3697, 56
      %v4672 = vpop.permute.xlu0 %4671
      %4673 = vrot.lane.b32.xlu0 %v3698, 56
      %v4674 = vpop.permute.xlu0 %4673
      %4675 = vrot.lane.b32.xlu0 %v3699, 56
      %v4676 = vpop.permute.xlu0 %4675
      %4677 = vrot.lane.b32.xlu0 %v3700, 56
      %v4678 = vpop.permute.xlu0 %4677
      %4679 = vrot.lane.b32.xlu0 %v3701, 56
      %v4680 = vpop.permute.xlu0 %4679
      %4681 = vrot.lane.b32.xlu0 %v3702, 56
      %v4682 = vpop.permute.xlu0 %4681
      %4683 = vrot.lane.b32.xlu0 %v3703, 56
      %v4684 = vpop.permute.xlu0 %4683
      %4685 = vrot.lane.b32.xlu0 %v3704, 56
      %v4686 = vpop.permute.xlu0 %4685
      %4687 = vrot.lane.b32.xlu0 %v3705, 56
      %v4688 = vpop.permute.xlu0 %4687
      %4689 = vrot.lane.b32.xlu0 %v3706, 56
      %v4690 = vpop.permute.xlu0 %4689
      %4691 = vrot.lane.b32.xlu0 %v3707, 56
      %v4692 = vpop.permute.xlu0 %4691
      %4693 = vrot.lane.b32.xlu0 %v3708, 56
      %v4694 = vpop.permute.xlu0 %4693
      %4695 = vrot.lane.b32.xlu0 %v3709, 56
      %v4696 = vpop.permute.xlu0 %4695
      %4697 = vrot.lane.b32.xlu0 %v3710, 56
      %v4698 = vpop.permute.xlu0 %4697
      %4699 = vrot.lane.b32.xlu0 %v3711, 56
      %v4700 = vpop.permute.xlu0 %4699
      %4701 = vrot.lane.b32.xlu0 %v3712, 56
      %v4702 = vpop.permute.xlu0 %4701
      %4703 = vrot.lane.b32.xlu0 %v3713, 56
      %v4704 = vpop.permute.xlu0 %4703
      %4705 = vrot.lane.b32.xlu0 %v3714, 56
      %v4706 = vpop.permute.xlu0 %4705
      %v4739 = vsel %vm413, %v3748, %v3459
      %v4740 = vsel %vm413, %v3750, %v3460
      %v4741 = vsel %vm413, %v3752, %v3461
      %v4742 = vsel %vm413, %v3754, %v3462
      %v4743 = vsel %vm413, %v3756, %v3463
      %v4744 = vsel %vm413, %v3758, %v3464
      %v4745 = vsel %vm413, %v3760, %v3465
      %v4746 = vsel %vm413, %v3762, %v3466
      %v4747 = vsel %vm413, %v3764, %v3467
      %v4748 = vsel %vm413, %v3766, %v3468
      %v4749 = vsel %vm413, %v3768, %v3469
      %v4750 = vsel %vm413, %v3770, %v3470
      %v4751 = vsel %vm413, %v3772, %v3471
      %v4752 = vsel %vm413, %v3774, %v3472
      %v4753 = vsel %vm413, %v3776, %v3473
      %v4754 = vsel %vm413, %v3778, %v3474
      %v4755 = vsel %vm413, %v3780, %v3475
      %v4756 = vsel %vm413, %v3782, %v3476
      %v4757 = vsel %vm413, %v3784, %v3477
      %v4758 = vsel %vm413, %v3786, %v3478
      %v4759 = vsel %vm413, %v3788, %v3479
      %v4760 = vsel %vm413, %v3790, %v3480
      %v4761 = vsel %vm413, %v3792, %v3481
      %v4762 = vsel %vm413, %v3794, %v3482
      %v4763 = vsel %vm413, %v3796, %v3483
      %v4764 = vsel %vm413, %v3798, %v3484
      %v4765 = vsel %vm413, %v3800, %v3485
      %v4766 = vsel %vm413, %v3802, %v3486
      %v4767 = vsel %vm413, %v3804, %v3487
      %v4768 = vsel %vm413, %v3806, %v3488
      %v4769 = vsel %vm413, %v3808, %v3489
      %v4770 = vsel %vm413, %v3810, %v3490
      %v4771 = vsel %vm1791, %v4739, %v3876
      %v4772 = vsel %vm1791, %v4740, %v3878
      %v4773 = vsel %vm1791, %v4741, %v3880
      %v4774 = vsel %vm1791, %v4742, %v3882
      %v4775 = vsel %vm1791, %v4743, %v3884
      %v4776 = vsel %vm1791, %v4744, %v3886
      %v4777 = vsel %vm1791, %v4745, %v3888
      %v4778 = vsel %vm1791, %v4746, %v3890
      %v4779 = vsel %vm1791, %v4747, %v3892
      %v4780 = vsel %vm1791, %v4748, %v3894
      %v4781 = vsel %vm1791, %v4749, %v3896
      %v4782 = vsel %vm1791, %v4750, %v3898
      %v4783 = vsel %vm1791, %v4751, %v3900
      %v4784 = vsel %vm1791, %v4752, %v3902
      %v4785 = vsel %vm1791, %v4753, %v3904
      %v4786 = vsel %vm1791, %v4754, %v3906
      %v4787 = vsel %vm1791, %v4755, %v3908
      %v4788 = vsel %vm1791, %v4756, %v3910
      %v4789 = vsel %vm1791, %v4757, %v3912
      %v4790 = vsel %vm1791, %v4758, %v3914
      %v4791 = vsel %vm1791, %v4759, %v3916
      %v4792 = vsel %vm1791, %v4760, %v3918
      %v4793 = vsel %vm1791, %v4761, %v3920
      %v4794 = vsel %vm1791, %v4762, %v3922
      %v4795 = vsel %vm1791, %v4763, %v3924
      %v4796 = vsel %vm1791, %v4764, %v3926
      %v4797 = vsel %vm1791, %v4765, %v3928
      %v4798 = vsel %vm1791, %v4766, %v3930
      %v4799 = vsel %vm1791, %v4767, %v3932
      %v4800 = vsel %vm1791, %v4768, %v3934
      %v4801 = vsel %vm1791, %v4769, %v3936
      %v4802 = vsel %vm1791, %v4770, %v3938
      %v4803 = vsel %vm334, %v4771, %v4004
      %v4804 = vsel %vm334, %v4772, %v4006
      %v4805 = vsel %vm334, %v4773, %v4008
      %v4806 = vsel %vm334, %v4774, %v4010
      %v4807 = vsel %vm334, %v4775, %v4012
      %v4808 = vsel %vm334, %v4776, %v4014
      %v4809 = vsel %vm334, %v4777, %v4016
      %v4810 = vsel %vm334, %v4778, %v4018
      %v4811 = vsel %vm334, %v4779, %v4020
      %v4812 = vsel %vm334, %v4780, %v4022
      %v4813 = vsel %vm334, %v4781, %v4024
      %v4814 = vsel %vm334, %v4782, %v4026
      %v4815 = vsel %vm334, %v4783, %v4028
      %v4816 = vsel %vm334, %v4784, %v4030
      %v4817 = vsel %vm334, %v4785, %v4032
      %v4818 = vsel %vm334, %v4786, %v4034
      %v4819 = vsel %vm334, %v4787, %v4036
      %v4820 = vsel %vm334, %v4788, %v4038
      %v4821 = vsel %vm334, %v4789, %v4040
      %v4822 = vsel %vm334, %v4790, %v4042
      %v4823 = vsel %vm334, %v4791, %v4044
      %v4824 = vsel %vm334, %v4792, %v4046
      %v4825 = vsel %vm334, %v4793, %v4048
      %v4826 = vsel %vm334, %v4794, %v4050
      %v4827 = vsel %vm334, %v4795, %v4052
      %v4828 = vsel %vm334, %v4796, %v4054
      %v4829 = vsel %vm334, %v4797, %v4056
      %v4830 = vsel %vm334, %v4798, %v4058
      %v4831 = vsel %vm334, %v4799, %v4060
      %v4832 = vsel %vm334, %v4800, %v4062
      %v4833 = vsel %vm334, %v4801, %v4064
      %v4834 = vsel %vm334, %v4802, %v4066
      %v4835 = vsel %vm1856, %v4803, %v4132
      %v4836 = vsel %vm1856, %v4804, %v4134
      %v4837 = vsel %vm1856, %v4805, %v4136
      %v4838 = vsel %vm1856, %v4806, %v4138
      %v4839 = vsel %vm1856, %v4807, %v4140
      %v4840 = vsel %vm1856, %v4808, %v4142
      %v4841 = vsel %vm1856, %v4809, %v4144
      %v4842 = vsel %vm1856, %v4810, %v4146
      %v4843 = vsel %vm1856, %v4811, %v4148
      %v4844 = vsel %vm1856, %v4812, %v4150
      %v4845 = vsel %vm1856, %v4813, %v4152
      %v4846 = vsel %vm1856, %v4814, %v4154
      %v4847 = vsel %vm1856, %v4815, %v4156
      %v4848 = vsel %vm1856, %v4816, %v4158
      %v4849 = vsel %vm1856, %v4817, %v4160
      %v4850 = vsel %vm1856, %v4818, %v4162
      %v4851 = vsel %vm1856, %v4819, %v4164
      %v4852 = vsel %vm1856, %v4820, %v4166
      %v4853 = vsel %vm1856, %v4821, %v4168
      %v4854 = vsel %vm1856, %v4822, %v4170
      %v4855 = vsel %vm1856, %v4823, %v4172
      %v4856 = vsel %vm1856, %v4824, %v4174
      %v4857 = vsel %vm1856, %v4825, %v4176
      %v4858 = vsel %vm1856, %v4826, %v4178
      %v4859 = vsel %vm1856, %v4827, %v4180
      %v4860 = vsel %vm1856, %v4828, %v4182
      %v4861 = vsel %vm1856, %v4829, %v4184
      %v4862 = vsel %vm1856, %v4830, %v4186
      %v4863 = vsel %vm1856, %v4831, %v4188
      %v4864 = vsel %vm1856, %v4832, %v4190
      %v4865 = vsel %vm1856, %v4833, %v4192
      %v4866 = vsel %vm1856, %v4834, %v4194
      %v4867 = vsel %vm1889, %v4835, %v4260
      %v4868 = vsel %vm1889, %v4836, %v4262
      %v4869 = vsel %vm1889, %v4837, %v4264
      %v4870 = vsel %vm1889, %v4838, %v4266
      %v4871 = vsel %vm1889, %v4839, %v4268
      %v4872 = vsel %vm1889, %v4840, %v4270
      %v4873 = vsel %vm1889, %v4841, %v4272
      %v4874 = vsel %vm1889, %v4842, %v4274
      %v4875 = vsel %vm1889, %v4843, %v4276
      %v4876 = vsel %vm1889, %v4844, %v4278
      %v4877 = vsel %vm1889, %v4845, %v4280
      %v4878 = vsel %vm1889, %v4846, %v4282
      %v4879 = vsel %vm1889, %v4847, %v4284
      %v4880 = vsel %vm1889, %v4848, %v4286
      %v4881 = vsel %vm1889, %v4849, %v4288
      %v4882 = vsel %vm1889, %v4850, %v4290
      %v4883 = vsel %vm1889, %v4851, %v4292
      %v4884 = vsel %vm1889, %v4852, %v4294
      %v4885 = vsel %vm1889, %v4853, %v4296
      %v4886 = vsel %vm1889, %v4854, %v4298
      %v4887 = vsel %vm1889, %v4855, %v4300
      %v4888 = vsel %vm1889, %v4856, %v4302
      %v4889 = vsel %vm1889, %v4857, %v4304
      %v4890 = vsel %vm1889, %v4858, %v4306
      %v4891 = vsel %vm1889, %v4859, %v4308
      %v4892 = vsel %vm1889, %v4860, %v4310
      %v4893 = vsel %vm1889, %v4861, %v4312
      %v4894 = vsel %vm1889, %v4862, %v4314
      %v4895 = vsel %vm1889, %v4863, %v4316
      %v4896 = vsel %vm1889, %v4864, %v4318
      %v4897 = vsel %vm1889, %v4865, %v4320
      %v4898 = vsel %vm1889, %v4866, %v4322
      %v4899 = vsel %vm1922, %v4867, %v4388
      %v4900 = vsel %vm1922, %v4868, %v4390
      %v4901 = vsel %vm1922, %v4869, %v4392
      %v4902 = vsel %vm1922, %v4870, %v4394
      %v4903 = vsel %vm1922, %v4871, %v4396
      %v4904 = vsel %vm1922, %v4872, %v4398
      %v4905 = vsel %vm1922, %v4873, %v4400
      %v4906 = vsel %vm1922, %v4874, %v4402
      %v4907 = vsel %vm1922, %v4875, %v4404
      %v4908 = vsel %vm1922, %v4876, %v4406
      %v4909 = vsel %vm1922, %v4877, %v4408
      %v4910 = vsel %vm1922, %v4878, %v4410
      %v4911 = vsel %vm1922, %v4879, %v4412
      %v4912 = vsel %vm1922, %v4880, %v4414
      %v4913 = vsel %vm1922, %v4881, %v4416
      %v4914 = vsel %vm1922, %v4882, %v4418
      %v4915 = vsel %vm1922, %v4883, %v4420
      %v4916 = vsel %vm1922, %v4884, %v4422
      %v4917 = vsel %vm1922, %v4885, %v4424
      %v4918 = vsel %vm1922, %v4886, %v4426
      %v4919 = vsel %vm1922, %v4887, %v4428
      %v4920 = vsel %vm1922, %v4888, %v4430
      %v4921 = vsel %vm1922, %v4889, %v4432
      %v4922 = vsel %vm1922, %v4890, %v4434
      %v4923 = vsel %vm1922, %v4891, %v4436
      %v4924 = vsel %vm1922, %v4892, %v4438
      %v4925 = vsel %vm1922, %v4893, %v4440
      %v4926 = vsel %vm1922, %v4894, %v4442
      %v4927 = vsel %vm1922, %v4895, %v4444
      %v4928 = vsel %vm1922, %v4896, %v4446
      %v4929 = vsel %vm1922, %v4897, %v4448
      %v4930 = vsel %vm1922, %v4898, %v4450
      %v4931 = vsel %vm1955, %v4899, %v4516
      %v4932 = vsel %vm1955, %v4900, %v4518
      %v4933 = vsel %vm1955, %v4901, %v4520
      %v4934 = vsel %vm1955, %v4902, %v4522
      %v4935 = vsel %vm1955, %v4903, %v4524
      %v4936 = vsel %vm1955, %v4904, %v4526
      %v4937 = vsel %vm1955, %v4905, %v4528
      %v4938 = vsel %vm1955, %v4906, %v4530
      %v4939 = vsel %vm1955, %v4907, %v4532
      %v4940 = vsel %vm1955, %v4908, %v4534
      %v4941 = vsel %vm1955, %v4909, %v4536
      %v4942 = vsel %vm1955, %v4910, %v4538
      %v4943 = vsel %vm1955, %v4911, %v4540
      %v4944 = vsel %vm1955, %v4912, %v4542
      %v4945 = vsel %vm1955, %v4913, %v4544
      %v4946 = vsel %vm1955, %v4914, %v4546
      %v4947 = vsel %vm1955, %v4915, %v4548
      %v4948 = vsel %vm1955, %v4916, %v4550
      %v4949 = vsel %vm1955, %v4917, %v4552
      %v4950 = vsel %vm1955, %v4918, %v4554
      %v4951 = vsel %vm1955, %v4919, %v4556
      %v4952 = vsel %vm1955, %v4920, %v4558
      %v4953 = vsel %vm1955, %v4921, %v4560
      %v4954 = vsel %vm1955, %v4922, %v4562
      %v4955 = vsel %vm1955, %v4923, %v4564
      %v4956 = vsel %vm1955, %v4924, %v4566
      %v4957 = vsel %vm1955, %v4925, %v4568
      %v4958 = vsel %vm1955, %v4926, %v4570
      %v4959 = vsel %vm1955, %v4927, %v4572
      %v4960 = vsel %vm1955, %v4928, %v4574
      %v4961 = vsel %vm1955, %v4929, %v4576
      %v4962 = vsel %vm1955, %v4930, %v4578
      %v4963 = vsel %vm1988, %v4931, %v4644
      %v4964 = vsel %vm1988, %v4932, %v4646
      %v4965 = vsel %vm1988, %v4933, %v4648
      %v4966 = vsel %vm1988, %v4934, %v4650
      %v4967 = vsel %vm1988, %v4935, %v4652
      %v4968 = vsel %vm1988, %v4936, %v4654
      %v4969 = vsel %vm1988, %v4937, %v4656
      %v4970 = vsel %vm1988, %v4938, %v4658
      %v4971 = vsel %vm1988, %v4939, %v4660
      %v4972 = vsel %vm1988, %v4940, %v4662
      %v4973 = vsel %vm1988, %v4941, %v4664
      %v4974 = vsel %vm1988, %v4942, %v4666
      %v4975 = vsel %vm1988, %v4943, %v4668
      %v4976 = vsel %vm1988, %v4944, %v4670
      %v4977 = vsel %vm1988, %v4945, %v4672
      %v4978 = vsel %vm1988, %v4946, %v4674
      %v4979 = vsel %vm1988, %v4947, %v4676
      %v4980 = vsel %vm1988, %v4948, %v4678
      %v4981 = vsel %vm1988, %v4949, %v4680
      %v4982 = vsel %vm1988, %v4950, %v4682
      %v4983 = vsel %vm1988, %v4951, %v4684
      %v4984 = vsel %vm1988, %v4952, %v4686
      %v4985 = vsel %vm1988, %v4953, %v4688
      %v4986 = vsel %vm1988, %v4954, %v4690
      %v4987 = vsel %vm1988, %v4955, %v4692
      %v4988 = vsel %vm1988, %v4956, %v4694
      %v4989 = vsel %vm1988, %v4957, %v4696
      %v4990 = vsel %vm1988, %v4958, %v4698
      %v4991 = vsel %vm1988, %v4959, %v4700
      %v4992 = vsel %vm1988, %v4960, %v4702
      %v4993 = vsel %vm1988, %v4961, %v4704
      %v4994 = vsel %vm1988, %v4962, %v4706
      %5027 = vrot.lane.b32.xlu0 %v4963, 72
      %v5028 = vpop.permute.xlu0 %5027
      %5029 = vrot.lane.b32.xlu0 %v4964, 72
      %v5030 = vpop.permute.xlu0 %5029
      %5031 = vrot.lane.b32.xlu0 %v4965, 72
      %v5032 = vpop.permute.xlu0 %5031
      %5033 = vrot.lane.b32.xlu0 %v4966, 72
      %v5034 = vpop.permute.xlu0 %5033
      %5035 = vrot.lane.b32.xlu0 %v4967, 72
      %v5036 = vpop.permute.xlu0 %5035
      %5037 = vrot.lane.b32.xlu0 %v4968, 72
      %v5038 = vpop.permute.xlu0 %5037
      %5039 = vrot.lane.b32.xlu0 %v4969, 72
      %v5040 = vpop.permute.xlu0 %5039
      %5041 = vrot.lane.b32.xlu0 %v4970, 72
      %v5042 = vpop.permute.xlu0 %5041
      %5043 = vrot.lane.b32.xlu0 %v4971, 72
      %v5044 = vpop.permute.xlu0 %5043
      %5045 = vrot.lane.b32.xlu0 %v4972, 72
      %v5046 = vpop.permute.xlu0 %5045
      %5047 = vrot.lane.b32.xlu0 %v4973, 72
      %v5048 = vpop.permute.xlu0 %5047
      %5049 = vrot.lane.b32.xlu0 %v4974, 72
      %v5050 = vpop.permute.xlu0 %5049
      %5051 = vrot.lane.b32.xlu0 %v4975, 72
      %v5052 = vpop.permute.xlu0 %5051
      %5053 = vrot.lane.b32.xlu0 %v4976, 72
      %v5054 = vpop.permute.xlu0 %5053
      %5055 = vrot.lane.b32.xlu0 %v4977, 72
      %v5056 = vpop.permute.xlu0 %5055
      %5057 = vrot.lane.b32.xlu0 %v4978, 72
      %v5058 = vpop.permute.xlu0 %5057
      %5059 = vrot.lane.b32.xlu0 %v4979, 72
      %v5060 = vpop.permute.xlu0 %5059
      %5061 = vrot.lane.b32.xlu0 %v4980, 72
      %v5062 = vpop.permute.xlu0 %5061
      %5063 = vrot.lane.b32.xlu0 %v4981, 72
      %v5064 = vpop.permute.xlu0 %5063
      %5065 = vrot.lane.b32.xlu0 %v4982, 72
      %v5066 = vpop.permute.xlu0 %5065
      %5067 = vrot.lane.b32.xlu0 %v4983, 72
      %v5068 = vpop.permute.xlu0 %5067
      %5069 = vrot.lane.b32.xlu0 %v4984, 72
      %v5070 = vpop.permute.xlu0 %5069
      %5071 = vrot.lane.b32.xlu0 %v4985, 72
      %v5072 = vpop.permute.xlu0 %5071
      %5073 = vrot.lane.b32.xlu0 %v4986, 72
      %v5074 = vpop.permute.xlu0 %5073
      %5075 = vrot.lane.b32.xlu0 %v4987, 72
      %v5076 = vpop.permute.xlu0 %5075
      %5077 = vrot.lane.b32.xlu0 %v4988, 72
      %v5078 = vpop.permute.xlu0 %5077
      %5079 = vrot.lane.b32.xlu0 %v4989, 72
      %v5080 = vpop.permute.xlu0 %5079
      %5081 = vrot.lane.b32.xlu0 %v4990, 72
      %v5082 = vpop.permute.xlu0 %5081
      %5083 = vrot.lane.b32.xlu0 %v4991, 72
      %v5084 = vpop.permute.xlu0 %5083
      %5085 = vrot.lane.b32.xlu0 %v4992, 72
      %v5086 = vpop.permute.xlu0 %5085
      %5087 = vrot.lane.b32.xlu0 %v4993, 72
      %v5088 = vpop.permute.xlu0 %5087
      %5089 = vrot.lane.b32.xlu0 %v4994, 72
      %v5090 = vpop.permute.xlu0 %5089
      %vm5123 = vcmask 1048128
      %5124 = vst.msk [vmem:[#allocation3] sm:$0xff] %vm5123, %v5028
      %5125 = vst.msk [vmem:[#allocation3 + $0x8] sm:$0xff] %vm1791, %v5028
      %5126 = vst.msk [vmem:[#allocation3 + $0x10] sm:$0xff] %vm5123, %v5030
      %5127 = vst.msk [vmem:[#allocation3 + $0x18] sm:$0xff] %vm1791, %v5030
      %5128 = vst.msk [vmem:[#allocation3 + $0x20] sm:$0xff] %vm5123, %v5032
      %5129 = vst.msk [vmem:[#allocation3 + $0x28] sm:$0xff] %vm1791, %v5032
      %5130 = vst.msk [vmem:[#allocation3 + $0x30] sm:$0xff] %vm5123, %v5034
      %5131 = vst.msk [vmem:[#allocation3 + $0x38] sm:$0xff] %vm1791, %v5034
      %5132 = vst.msk [vmem:[#allocation3 + $0x40] sm:$0xff] %vm5123, %v5036
      %5133 = vst.msk [vmem:[#allocation3 + $0x48] sm:$0xff] %vm1791, %v5036
      %5134 = vst.msk [vmem:[#allocation3 + $0x50] sm:$0xff] %vm5123, %v5038
      %5135 = vst.msk [vmem:[#allocation3 + $0x58] sm:$0xff] %vm1791, %v5038
      %5136 = vst.msk [vmem:[#allocation3 + $0x60] sm:$0xff] %vm5123, %v5040
      %5137 = vst.msk [vmem:[#allocation3 + $0x68] sm:$0xff] %vm1791, %v5040
      %5138 = vst.msk [vmem:[#allocation3 + $0x70] sm:$0xff] %vm5123, %v5042
      %5139 = vst.msk [vmem:[#allocation3 + $0x78] sm:$0xff] %vm1791, %v5042
      %5140 = vst.msk [vmem:[#allocation3 + $0x80] sm:$0xff] %vm5123, %v5044
      %5141 = vst.msk [vmem:[#allocation3 + $0x88] sm:$0xff] %vm1791, %v5044
      %5142 = vst.msk [vmem:[#allocation3 + $0x90] sm:$0xff] %vm5123, %v5046
      %5143 = vst.msk [vmem:[#allocation3 + $0x98] sm:$0xff] %vm1791, %v5046
      %5144 = vst.msk [vmem:[#allocation3 + $0xa0] sm:$0xff] %vm5123, %v5048
      %5145 = vst.msk [vmem:[#allocation3 + $0xa8] sm:$0xff] %vm1791, %v5048
      %5146 = vst.msk [vmem:[#allocation3 + $0xb0] sm:$0xff] %vm5123, %v5050
      %5147 = vst.msk [vmem:[#allocation3 + $0xb8] sm:$0xff] %vm1791, %v5050
      %5148 = vst.msk [vmem:[#allocation3 + $0xc0] sm:$0xff] %vm5123, %v5052
      %5149 = vst.msk [vmem:[#allocation3 + $0xc8] sm:$0xff] %vm1791, %v5052
      %5150 = vst.msk [vmem:[#allocation3 + $0xd0] sm:$0xff] %vm5123, %v5054
      %5151 = vst.msk [vmem:[#allocation3 + $0xd8] sm:$0xff] %vm1791, %v5054
      %5152 = vst.msk [vmem:[#allocation3 + $0xe0] sm:$0xff] %vm5123, %v5056
      %5153 = vst.msk [vmem:[#allocation3 + $0xe8] sm:$0xff] %vm1791, %v5056
      %5154 = vst.msk [vmem:[#allocation3 + $0xf0] sm:$0xff] %vm5123, %v5058
      %5155 = vst.msk [vmem:[#allocation3 + $0xf8] sm:$0xff] %vm1791, %v5058
      %5156 = vst.msk [vmem:[#allocation3 + $0x100] sm:$0xff] %vm5123, %v5060
      %5157 = vst.msk [vmem:[#allocation3 + $0x108] sm:$0xff] %vm1791, %v5060
      %5158 = vst.msk [vmem:[#allocation3 + $0x110] sm:$0xff] %vm5123, %v5062
      %5159 = vst.msk [vmem:[#allocation3 + $0x118] sm:$0xff] %vm1791, %v5062
      %5160 = vst.msk [vmem:[#allocation3 + $0x120] sm:$0xff] %vm5123, %v5064
      %5161 = vst.msk [vmem:[#allocation3 + $0x128] sm:$0xff] %vm1791, %v5064
      %5162 = vst.msk [vmem:[#allocation3 + $0x130] sm:$0xff] %vm5123, %v5066
      %5163 = vst.msk [vmem:[#allocation3 + $0x138] sm:$0xff] %vm1791, %v5066
      %5164 = vst.msk [vmem:[#allocation3 + $0x140] sm:$0xff] %vm5123, %v5068
      %5165 = vst.msk [vmem:[#allocation3 + $0x148] sm:$0xff] %vm1791, %v5068
      %5166 = vst.msk [vmem:[#allocation3 + $0x150] sm:$0xff] %vm5123, %v5070
      %5167 = vst.msk [vmem:[#allocation3 + $0x158] sm:$0xff] %vm1791, %v5070
      %5168 = vst.msk [vmem:[#allocation3 + $0x160] sm:$0xff] %vm5123, %v5072
      %5169 = vst.msk [vmem:[#allocation3 + $0x168] sm:$0xff] %vm1791, %v5072
      %5170 = vst.msk [vmem:[#allocation3 + $0x170] sm:$0xff] %vm5123, %v5074
      %5171 = vst.msk [vmem:[#allocation3 + $0x178] sm:$0xff] %vm1791, %v5074
      %5172 = vst.msk [vmem:[#allocation3 + $0x180] sm:$0xff] %vm5123, %v5076
      %5173 = vst.msk [vmem:[#allocation3 + $0x188] sm:$0xff] %vm1791, %v5076
      %5174 = vst.msk [vmem:[#allocation3 + $0x190] sm:$0xff] %vm5123, %v5078
      %5175 = vst.msk [vmem:[#allocation3 + $0x198] sm:$0xff] %vm1791, %v5078
      %5176 = vst.msk [vmem:[#allocation3 + $0x1a0] sm:$0xff] %vm5123, %v5080
      %5177 = vst.msk [vmem:[#allocation3 + $0x1a8] sm:$0xff] %vm1791, %v5080
      %5178 = vst.msk [vmem:[#allocation3 + $0x1b0] sm:$0xff] %vm5123, %v5082
      %5179 = vst.msk [vmem:[#allocation3 + $0x1b8] sm:$0xff] %vm1791, %v5082
      %5180 = vst.msk [vmem:[#allocation3 + $0x1c0] sm:$0xff] %vm5123, %v5084
      %5181 = vst.msk [vmem:[#allocation3 + $0x1c8] sm:$0xff] %vm1791, %v5084
      %5182 = vst.msk [vmem:[#allocation3 + $0x1d0] sm:$0xff] %vm5123, %v5086
      %5183 = vst.msk [vmem:[#allocation3 + $0x1d8] sm:$0xff] %vm1791, %v5086
      %5184 = vst.msk [vmem:[#allocation3 + $0x1e0] sm:$0xff] %vm5123, %v5088
      %5185 = vst.msk [vmem:[#allocation3 + $0x1e8] sm:$0xff] %vm1791, %v5088
      %5186 = vst.msk [vmem:[#allocation3 + $0x1f0] sm:$0xff] %vm5123, %v5090
      %5187 = vst.msk [vmem:[#allocation3 + $0x1f8] sm:$0xff] %vm1791, %v5090
      %v5188 = vld [vmem:[#allocation3] sm:$0xff]
      %v5189 = vld [vmem:[#allocation3 + $0x8] sm:$0xff]
      %v5190 = vld [vmem:[#allocation3 + $0x10] sm:$0xff]
      %v5191 = vld [vmem:[#allocation3 + $0x18] sm:$0xff]
      %v5192 = vld [vmem:[#allocation3 + $0x20] sm:$0xff]
      %v5193 = vld [vmem:[#allocation3 + $0x28] sm:$0xff]
      %v5194 = vld [vmem:[#allocation3 + $0x30] sm:$0xff]
      %v5195 = vld [vmem:[#allocation3 + $0x38] sm:$0xff]
      %v5196 = vld [vmem:[#allocation3 + $0x40] sm:$0xff]
      %v5197 = vld [vmem:[#allocation3 + $0x48] sm:$0xff]
      %v5198 = vld [vmem:[#allocation3 + $0x50] sm:$0xff]
      %v5199 = vld [vmem:[#allocation3 + $0x58] sm:$0xff]
      %v5200 = vld [vmem:[#allocation3 + $0x60] sm:$0xff]
      %v5201 = vld [vmem:[#allocation3 + $0x68] sm:$0xff]
      %v5202 = vld [vmem:[#allocation3 + $0x70] sm:$0xff]
      %v5203 = vld [vmem:[#allocation3 + $0x78] sm:$0xff]
      %v5204 = vld [vmem:[#allocation3 + $0x80] sm:$0xff]
      %v5205 = vld [vmem:[#allocation3 + $0x88] sm:$0xff]
      %v5206 = vld [vmem:[#allocation3 + $0x90] sm:$0xff]
      %v5207 = vld [vmem:[#allocation3 + $0x98] sm:$0xff]
      %v5208 = vld [vmem:[#allocation3 + $0xa0] sm:$0xff]
      %v5209 = vld [vmem:[#allocation3 + $0xa8] sm:$0xff]
      %v5210 = vld [vmem:[#allocation3 + $0xb0] sm:$0xff]
      %v5211 = vld [vmem:[#allocation3 + $0xb8] sm:$0xff]
      %v5212 = vld [vmem:[#allocation3 + $0xc0] sm:$0xff]
      %v5213 = vld [vmem:[#allocation3 + $0xc8] sm:$0xff]
      %v5214 = vld [vmem:[#allocation3 + $0xd0] sm:$0xff]
      %v5215 = vld [vmem:[#allocation3 + $0xd8] sm:$0xff]
      %v5216 = vld [vmem:[#allocation3 + $0xe0] sm:$0xff]
      %v5217 = vld [vmem:[#allocation3 + $0xe8] sm:$0xff]
      %v5218 = vld [vmem:[#allocation3 + $0xf0] sm:$0xff]
      %v5219 = vld [vmem:[#allocation3 + $0xf8] sm:$0xff]
      %v5220 = vld [vmem:[#allocation3 + $0x100] sm:$0xff]
      %v5221 = vld [vmem:[#allocation3 + $0x108] sm:$0xff]
      %v5222 = vld [vmem:[#allocation3 + $0x110] sm:$0xff]
      %v5223 = vld [vmem:[#allocation3 + $0x118] sm:$0xff]
      %v5224 = vld [vmem:[#allocation3 + $0x120] sm:$0xff]
      %v5225 = vld [vmem:[#allocation3 + $0x128] sm:$0xff]
      %v5226 = vld [vmem:[#allocation3 + $0x130] sm:$0xff]
      %v5227 = vld [vmem:[#allocation3 + $0x138] sm:$0xff]
      %v5228 = vld [vmem:[#allocation3 + $0x140] sm:$0xff]
      %v5229 = vld [vmem:[#allocation3 + $0x148] sm:$0xff]
      %v5230 = vld [vmem:[#allocation3 + $0x150] sm:$0xff]
      %v5231 = vld [vmem:[#allocation3 + $0x158] sm:$0xff]
      %v5232 = vld [vmem:[#allocation3 + $0x160] sm:$0xff]
      %v5233 = vld [vmem:[#allocation3 + $0x168] sm:$0xff]
      %v5234 = vld [vmem:[#allocation3 + $0x170] sm:$0xff]
      %v5235 = vld [vmem:[#allocation3 + $0x178] sm:$0xff]
      %v5236 = vld [vmem:[#allocation3 + $0x180] sm:$0xff]
      %v5237 = vld [vmem:[#allocation3 + $0x188] sm:$0xff]
      %v5238 = vld [vmem:[#allocation3 + $0x190] sm:$0xff]
      %v5239 = vld [vmem:[#allocation3 + $0x198] sm:$0xff]
      %v5240 = vld [vmem:[#allocation3 + $0x1a0] sm:$0xff]
      %v5241 = vld [vmem:[#allocation3 + $0x1a8] sm:$0xff]
      %v5242 = vld [vmem:[#allocation3 + $0x1b0] sm:$0xff]
      %v5243 = vld [vmem:[#allocation3 + $0x1b8] sm:$0xff]
      %v5244 = vld [vmem:[#allocation3 + $0x1c0] sm:$0xff]
      %v5245 = vld [vmem:[#allocation3 + $0x1c8] sm:$0xff]
      %v5246 = vld [vmem:[#allocation3 + $0x1d0] sm:$0xff]
      %v5247 = vld [vmem:[#allocation3 + $0x1d8] sm:$0xff]
      %v5248 = vld [vmem:[#allocation3 + $0x1e0] sm:$0xff]
      %v5249 = vld [vmem:[#allocation3 + $0x1e8] sm:$0xff]
      %v5250 = vld [vmem:[#allocation3 + $0x1f0] sm:$0xff]
      %v5251 = vld [vmem:[#allocation3 + $0x1f8] sm:$0xff]
      %v5252 = vld [vmem:[%s3] sm:$0xff]
      %v5253 = vld [vmem:[%s3 + $0x8] sm:$0xff]
      %v5254 = vld [vmem:[%s3 + $0x10] sm:$0xff]
      %v5255 = vld [vmem:[%s3 + $0x18] sm:$0xff]
      %v5256 = vld [vmem:[%s3 + $0x20] sm:$0xff]
      %v5257 = vld [vmem:[%s3 + $0x28] sm:$0xff]
      %v5258 = vld [vmem:[%s3 + $0x30] sm:$0xff]
      %v5259 = vld [vmem:[%s3 + $0x38] sm:$0xff]
      %v5260 = vld [vmem:[%s3 + $0x40] sm:$0xff]
      %v5261 = vld [vmem:[%s3 + $0x48] sm:$0xff]
      %v5262 = vld [vmem:[%s3 + $0x50] sm:$0xff]
      %v5263 = vld [vmem:[%s3 + $0x58] sm:$0xff]
      %v5264 = vld [vmem:[%s3 + $0x60] sm:$0xff]
      %v5265 = vld [vmem:[%s3 + $0x68] sm:$0xff]
      %v5266 = vld [vmem:[%s3 + $0x70] sm:$0xff]
      %v5267 = vld [vmem:[%s3 + $0x78] sm:$0xff]
      %v5268 = vld [vmem:[%s3 + $0x80] sm:$0xff]
      %v5269 = vld [vmem:[%s3 + $0x88] sm:$0xff]
      %v5270 = vld [vmem:[%s4] sm:$0x1]
      %v5272 = vlaneseq
      %v5273 = vshrl.u32 %v5272, 7
      %v5274 = vsub.s32 0, %v5273
      %v5275 = vrot.slane %v5270, %v5274
      %v5278 = vsel %vm1791, %v5189, 0
      %v5281 = vsel %vm1791, %v5191, 0
      %v5284 = vsel %vm1791, %v5193, 0
      %v5287 = vsel %vm1791, %v5195, 0
      %v5290 = vsel %vm1791, %v5197, 0
      %v5293 = vsel %vm1791, %v5199, 0
      %v5296 = vsel %vm1791, %v5201, 0
      %v5299 = vsel %vm1791, %v5203, 0
      %v5302 = vsel %vm1791, %v5205, 0
      %v5305 = vsel %vm1791, %v5207, 0
      %v5308 = vsel %vm1791, %v5209, 0
      %v5311 = vsel %vm1791, %v5211, 0
      %v5314 = vsel %vm1791, %v5213, 0
      %v5317 = vsel %vm1791, %v5215, 0
      %v5320 = vsel %vm1791, %v5217, 0
      %v5323 = vsel %vm1791, %v5219, 0
      %v5326 = vsel %vm1791, %v5221, 0
      %v5329 = vsel %vm1791, %v5223, 0
      %v5332 = vsel %vm1791, %v5225, 0
      %v5335 = vsel %vm1791, %v5227, 0
      %v5338 = vsel %vm1791, %v5229, 0
      %v5341 = vsel %vm1791, %v5231, 0
      %v5344 = vsel %vm1791, %v5233, 0
      %v5347 = vsel %vm1791, %v5235, 0
      %v5350 = vsel %vm1791, %v5237, 0
      %v5353 = vsel %vm1791, %v5239, 0
      %v5356 = vsel %vm1791, %v5241, 0
      %v5359 = vsel %vm1791, %v5243, 0
      %v5362 = vsel %vm1791, %v5245, 0
      %v5365 = vsel %vm1791, %v5247, 0
      %v5368 = vsel %vm1791, %v5249, 0
      %v5371 = vsel %vm1791, %v5251, 0
      %5373 = vmatprep.subr.mxu0 0.0
      %5374 = vmatpush1.msra.mxu0 %v5252
      %5375 = vmatprep.subr.mxu0 0.0
      %5376 = vmatpush1.msra.mxu0 %v5253
      %5377 = vmatprep.subr.mxu0 0.0
      %5378 = vmatpush1.msra.mxu0 %v5254
      %5379 = vmatprep.subr.mxu0 0.0
      %5380 = vmatpush1.msra.mxu0 %v5255
      %5381 = vmatprep.subr.mxu0 0.0
      %5382 = vmatpush1.msra.mxu0 %v5256
      %5383 = vmatprep.subr.mxu0 0.0
      %5384 = vmatpush1.msra.mxu0 %v5257
      %5385 = vmatprep.subr.mxu0 0.0
      %5386 = vmatpush1.msra.mxu0 %v5258
      %5387 = vmatprep.subr.mxu0 0.0
      %5388 = vmatpush1.msra.mxu0 %v5259
      %5389 = vmatprep.subr.mxu0 0.0
      %5390 = vmatpush1.msra.mxu0 %v5260
      %5391 = vmatprep.subr.mxu0 0.0
      %5392 = vmatpush1.msra.mxu0 %v5261
      %5393 = vmatprep.subr.mxu0 0.0
      %5394 = vmatpush1.msra.mxu0 %v5262
      %5395 = vmatprep.subr.mxu0 0.0
      %5396 = vmatpush1.msra.mxu0 %v5263
      %5397 = vmatprep.subr.mxu0 0.0
      %5398 = vmatpush1.msra.mxu0 %v5264
      %5399 = vmatprep.subr.mxu0 0.0
      %5400 = vmatpush1.msra.mxu0 %v5265
      %5401 = vmatprep.subr.mxu0 0.0
      %5402 = vmatpush1.msra.mxu0 %v5266
      %5403 = vmatprep.subr.mxu0 0.0
      %5404 = vmatpush1.msra.mxu0 %v5267
      %5405 = vmatprep.subr.mxu0 0.0
      %5406 = vmatpush1.msra.mxu0 %v5268
      %5407 = vmatprep.subr.mxu0 0.0
      %5408 = vmatpush1.msra.mxu0 %v5269
      %5409 = vmatprep.subr.mxu0 0.0
      %5410 = vmatpush1.msra.mxu0 0.0
      %5411 = vmatprep.subr.mxu0 0.0
      %5412 = vmatpush1.msra.mxu0 0.0
      %5413 = vmatprep.subr.mxu0 0.0
      %5414 = vmatpush1.msra.mxu0 0.0
      %5415 = vmatprep.subr.mxu0 0.0
      %5416 = vmatpush1.msra.mxu0 0.0
      %5417 = vmatprep.subr.mxu0 0.0
      %5418 = vmatpush1.msra.mxu0 0.0
      %5419 = vmatprep.subr.mxu0 0.0
      %5420 = vmatpush1.msra.mxu0 0.0
      %5421 = vmatprep.subr.mxu0 0.0
      %5422 = vmatpush1.msra.mxu0 0.0
      %5423 = vmatprep.subr.mxu0 0.0
      %5424 = vmatpush1.msra.mxu0 0.0
      %5425 = vmatprep.subr.mxu0 0.0
      %5426 = vmatpush1.msra.mxu0 0.0
      %5427 = vmatprep.subr.mxu0 0.0
      %5428 = vmatpush1.msra.mxu0 0.0
      %5429 = vmatprep.subr.mxu0 0.0
      %5430 = vmatpush1.msra.mxu0 0.0
      %5431 = vmatprep.subr.mxu0 0.0
      %5432 = vmatpush1.msra.mxu0 0.0
      %5433 = vmatprep.subr.mxu0 0.0
      %5434 = vmatpush1.msra.mxu0 0.0
      %5435 = vmatprep.subr.mxu0 0.0
      %5436 = vmatpush1.msra.mxu0 0.0
      %5437 = vmatprep.mubr.f32.mxu0 %v5278
      %5438 = vmatmul.mubr.f32.gmra.mrb[0].mxu0 %v5188
      %v5439 = vpop.f32.mrb[0].mxu0
      %v5440 = vadd.f32 %v5275, %v5439
      %v5441 = vpop.f32.mrb[0].mxu0
      %5442 = vmatprep.mubr.f32.mxu0 %v5281
      %5443 = vmatmul.mubr.f32.gmra.mrb[0].mxu0 %v5190
      %v5444 = vpop.f32.mrb[0].mxu0
      %v5445 = vadd.f32 %v5275, %v5444
      %v5446 = vpop.f32.mrb[0].mxu0
      %5447 = vmatprep.mubr.f32.mxu0 %v5284
      %5448 = vmatmul.mubr.f32.gmra.mrb[0].mxu0 %v5192
      %v5449 = vpop.f32.mrb[0].mxu0
      %v5450 = vadd.f32 %v5275, %v5449
      %v5451 = vpop.f32.mrb[0].mxu0
      %5452 = vmatprep.mubr.f32.mxu0 %v5287
      %5453 = vmatmul.mubr.f32.gmra.mrb[0].mxu0 %v5194
      %v5454 = vpop.f32.mrb[0].mxu0
      %v5455 = vadd.f32 %v5275, %v5454
      %v5456 = vpop.f32.mrb[0].mxu0
      %5457 = vmatprep.mubr.f32.mxu0 %v5290
      %5458 = vmatmul.mubr.f32.gmra.mrb[0].mxu0 %v5196
      %v5459 = vpop.f32.mrb[0].mxu0
      %v5460 = vadd.f32 %v5275, %v5459
      %v5461 = vpop.f32.mrb[0].mxu0
      %5462 = vmatprep.mubr.f32.mxu0 %v5293
      %5463 = vmatmul.mubr.f32.gmra.mrb[0].mxu0 %v5198
      %v5464 = vpop.f32.mrb[0].mxu0
      %v5465 = vadd.f32 %v5275, %v5464
      %v5466 = vpop.f32.mrb[0].mxu0
      %5467 = vmatprep.mubr.f32.mxu0 %v5296
      %5468 = vmatmul.mubr.f32.gmra.mrb[0].mxu0 %v5200
      %v5469 = vpop.f32.mrb[0].mxu0
      %v5470 = vadd.f32 %v5275, %v5469
      %v5471 = vpop.f32.mrb[0].mxu0
      %5472 = vmatprep.mubr.f32.mxu0 %v5299
      %5473 = vmatmul.mubr.f32.gmra.mrb[0].mxu0 %v5202
      %v5474 = vpop.f32.mrb[0].mxu0
      %v5475 = vadd.f32 %v5275, %v5474
      %v5476 = vpop.f32.mrb[0].mxu0
      %5477 = vmatprep.mubr.f32.mxu0 %v5302
      %5478 = vmatmul.mubr.f32.gmra.mrb[0].mxu0 %v5204
      %v5479 = vpop.f32.mrb[0].mxu0
      %v5480 = vadd.f32 %v5275, %v5479
      %v5481 = vpop.f32.mrb[0].mxu0
      %5482 = vmatprep.mubr.f32.mxu0 %v5305
      %5483 = vmatmul.mubr.f32.gmra.mrb[0].mxu0 %v5206
      %v5484 = vpop.f32.mrb[0].mxu0
      %v5485 = vadd.f32 %v5275, %v5484
      %v5486 = vpop.f32.mrb[0].mxu0
      %5487 = vmatprep.mubr.f32.mxu0 %v5308
      %5488 = vmatmul.mubr.f32.gmra.mrb[0].mxu0 %v5208
      %v5489 = vpop.f32.mrb[0].mxu0
      %v5490 = vadd.f32 %v5275, %v5489
      %v5491 = vpop.f32.mrb[0].mxu0
      %5492 = vmatprep.mubr.f32.mxu0 %v5311
      %5493 = vmatmul.mubr.f32.gmra.mrb[0].mxu0 %v5210
      %v5494 = vpop.f32.mrb[0].mxu0
      %v5495 = vadd.f32 %v5275, %v5494
      %v5496 = vpop.f32.mrb[0].mxu0
      %5497 = vmatprep.mubr.f32.mxu0 %v5314
      %5498 = vmatmul.mubr.f32.gmra.mrb[0].mxu0 %v5212
      %v5499 = vpop.f32.mrb[0].mxu0
      %v5500 = vadd.f32 %v5275, %v5499
      %v5501 = vpop.f32.mrb[0].mxu0
      %5502 = vmatprep.mubr.f32.mxu0 %v5317
      %5503 = vmatmul.mubr.f32.gmra.mrb[0].mxu0 %v5214
      %v5504 = vpop.f32.mrb[0].mxu0
      %v5505 = vadd.f32 %v5275, %v5504
      %v5506 = vpop.f32.mrb[0].mxu0
      %5507 = vmatprep.mubr.f32.mxu0 %v5320
      %5508 = vmatmul.mubr.f32.gmra.mrb[0].mxu0 %v5216
      %v5509 = vpop.f32.mrb[0].mxu0
      %v5510 = vadd.f32 %v5275, %v5509
      %v5511 = vpop.f32.mrb[0].mxu0
      %5512 = vmatprep.mubr.f32.mxu0 %v5323
      %5513 = vmatmul.mubr.f32.gmra.mrb[0].mxu0 %v5218
      %v5514 = vpop.f32.mrb[0].mxu0
      %v5515 = vadd.f32 %v5275, %v5514
      %v5516 = vpop.f32.mrb[0].mxu0
      %5517 = vmatprep.mubr.f32.mxu0 %v5326
      %5518 = vmatmul.mubr.f32.gmra.mrb[0].mxu0 %v5220
      %v5519 = vpop.f32.mrb[0].mxu0
      %v5520 = vadd.f32 %v5275, %v5519
      %v5521 = vpop.f32.mrb[0].mxu0
      %5522 = vmatprep.mubr.f32.mxu0 %v5329
      %5523 = vmatmul.mubr.f32.gmra.mrb[0].mxu0 %v5222
      %v5524 = vpop.f32.mrb[0].mxu0
      %v5525 = vadd.f32 %v5275, %v5524
      %v5526 = vpop.f32.mrb[0].mxu0
      %5527 = vmatprep.mubr.f32.mxu0 %v5332
      %5528 = vmatmul.mubr.f32.gmra.mrb[0].mxu0 %v5224
      %v5529 = vpop.f32.mrb[0].mxu0
      %v5530 = vadd.f32 %v5275, %v5529
      %v5531 = vpop.f32.mrb[0].mxu0
      %5532 = vmatprep.mubr.f32.mxu0 %v5335
      %5533 = vmatmul.mubr.f32.gmra.mrb[0].mxu0 %v5226
      %v5534 = vpop.f32.mrb[0].mxu0
      %v5535 = vadd.f32 %v5275, %v5534
      %v5536 = vpop.f32.mrb[0].mxu0
      %5537 = vmatprep.mubr.f32.mxu0 %v5338
      %5538 = vmatmul.mubr.f32.gmra.mrb[0].mxu0 %v5228
      %v5539 = vpop.f32.mrb[0].mxu0
      %v5540 = vadd.f32 %v5275, %v5539
      %v5541 = vpop.f32.mrb[0].mxu0
      %5542 = vmatprep.mubr.f32.mxu0 %v5341
      %5543 = vmatmul.mubr.f32.gmra.mrb[0].mxu0 %v5230
      %v5544 = vpop.f32.mrb[0].mxu0
      %v5545 = vadd.f32 %v5275, %v5544
      %v5546 = vpop.f32.mrb[0].mxu0
      %5547 = vmatprep.mubr.f32.mxu0 %v5344
      %5548 = vmatmul.mubr.f32.gmra.mrb[0].mxu0 %v5232
      %v5549 = vpop.f32.mrb[0].mxu0
      %v5550 = vadd.f32 %v5275, %v5549
      %v5551 = vpop.f32.mrb[0].mxu0
      %5552 = vmatprep.mubr.f32.mxu0 %v5347
      %5553 = vmatmul.mubr.f32.gmra.mrb[0].mxu0 %v5234
      %v5554 = vpop.f32.mrb[0].mxu0
      %v5555 = vadd.f32 %v5275, %v5554
      %v5556 = vpop.f32.mrb[0].mxu0
      %5557 = vmatprep.mubr.f32.mxu0 %v5350
      %5558 = vmatmul.mubr.f32.gmra.mrb[0].mxu0 %v5236
      %v5559 = vpop.f32.mrb[0].mxu0
      %v5560 = vadd.f32 %v5275, %v5559
      %v5561 = vpop.f32.mrb[0].mxu0
      %5562 = vmatprep.mubr.f32.mxu0 %v5353
      %5563 = vmatmul.mubr.f32.gmra.mrb[0].mxu0 %v5238
      %v5564 = vpop.f32.mrb[0].mxu0
      %v5565 = vadd.f32 %v5275, %v5564
      %v5566 = vpop.f32.mrb[0].mxu0
      %5567 = vmatprep.mubr.f32.mxu0 %v5356
      %5568 = vmatmul.mubr.f32.gmra.mrb[0].mxu0 %v5240
      %v5569 = vpop.f32.mrb[0].mxu0
      %v5570 = vadd.f32 %v5275, %v5569
      %v5571 = vpop.f32.mrb[0].mxu0
      %5572 = vmatprep.mubr.f32.mxu0 %v5359
      %5573 = vmatmul.mubr.f32.gmra.mrb[0].mxu0 %v5242
      %v5574 = vpop.f32.mrb[0].mxu0
      %v5575 = vadd.f32 %v5275, %v5574
      %v5576 = vpop.f32.mrb[0].mxu0
      %5577 = vmatprep.mubr.f32.mxu0 %v5362
      %5578 = vmatmul.mubr.f32.gmra.mrb[0].mxu0 %v5244
      %v5579 = vpop.f32.mrb[0].mxu0
      %v5580 = vadd.f32 %v5275, %v5579
      %v5581 = vpop.f32.mrb[0].mxu0
      %5582 = vmatprep.mubr.f32.mxu0 %v5365
      %5583 = vmatmul.mubr.f32.gmra.mrb[0].mxu0 %v5246
      %v5584 = vpop.f32.mrb[0].mxu0
      %v5585 = vadd.f32 %v5275, %v5584
      %v5586 = vpop.f32.mrb[0].mxu0
      %5587 = vmatprep.mubr.f32.mxu0 %v5368
      %5588 = vmatmul.mubr.f32.gmra.mrb[0].mxu0 %v5248
      %v5589 = vpop.f32.mrb[0].mxu0
      %v5590 = vadd.f32 %v5275, %v5589
      %v5591 = vpop.f32.mrb[0].mxu0
      %5592 = vmatprep.mubr.f32.mxu0 %v5371
      %5593 = vmatmul.mubr.f32.gmra.mrb[0].mxu0 %v5250
      %v5594 = vpop.f32.mrb[0].mxu0
      %v5595 = vadd.f32 %v5275, %v5594
      %v5596 = vpop.f32.mrb[0].mxu0
      %5597 = vdwg.mxu0
      %v5598 = vmul.f32 %v5440, 0.1
      %v5599 = vmul.f32 %v5445, 0.1
      %v5600 = vmul.f32 %v5450, 0.1
      %v5601 = vmul.f32 %v5455, 0.1
      %v5602 = vmul.f32 %v5460, 0.1
      %v5603 = vmul.f32 %v5465, 0.1
      %v5604 = vmul.f32 %v5470, 0.1
      %v5605 = vmul.f32 %v5475, 0.1
      %v5606 = vmul.f32 %v5480, 0.1
      %v5607 = vmul.f32 %v5485, 0.1
      %v5608 = vmul.f32 %v5490, 0.1
      %v5609 = vmul.f32 %v5495, 0.1
      %v5610 = vmul.f32 %v5500, 0.1
      %v5611 = vmul.f32 %v5505, 0.1
      %v5612 = vmul.f32 %v5510, 0.1
      %v5613 = vmul.f32 %v5515, 0.1
      %v5614 = vmul.f32 %v5520, 0.1
      %v5615 = vmul.f32 %v5525, 0.1
      %v5616 = vmul.f32 %v5530, 0.1
      %v5617 = vmul.f32 %v5535, 0.1
      %v5618 = vmul.f32 %v5540, 0.1
      %v5619 = vmul.f32 %v5545, 0.1
      %v5620 = vmul.f32 %v5550, 0.1
      %v5621 = vmul.f32 %v5555, 0.1
      %v5622 = vmul.f32 %v5560, 0.1
      %v5623 = vmul.f32 %v5565, 0.1
      %v5624 = vmul.f32 %v5570, 0.1
      %v5625 = vmul.f32 %v5575, 0.1
      %v5626 = vmul.f32 %v5580, 0.1
      %v5627 = vmul.f32 %v5585, 0.1
      %v5628 = vmul.f32 %v5590, 0.1
      %v5629 = vmul.f32 %v5595, 0.1
      %v5630 = vmax.f32 %v5440, %v5598
      %v5631 = vmax.f32 %v5445, %v5599
      %v5632 = vmax.f32 %v5450, %v5600
      %v5633 = vmax.f32 %v5455, %v5601
      %v5634 = vmax.f32 %v5460, %v5602
      %v5635 = vmax.f32 %v5465, %v5603
      %v5636 = vmax.f32 %v5470, %v5604
      %v5637 = vmax.f32 %v5475, %v5605
      %v5638 = vmax.f32 %v5480, %v5606
      %v5639 = vmax.f32 %v5485, %v5607
      %v5640 = vmax.f32 %v5490, %v5608
      %v5641 = vmax.f32 %v5495, %v5609
      %v5642 = vmax.f32 %v5500, %v5610
      %v5643 = vmax.f32 %v5505, %v5611
      %v5644 = vmax.f32 %v5510, %v5612
      %v5645 = vmax.f32 %v5515, %v5613
      %v5646 = vmax.f32 %v5520, %v5614
      %v5647 = vmax.f32 %v5525, %v5615
      %v5648 = vmax.f32 %v5530, %v5616
      %v5649 = vmax.f32 %v5535, %v5617
      %v5650 = vmax.f32 %v5540, %v5618
      %v5651 = vmax.f32 %v5545, %v5619
      %v5652 = vmax.f32 %v5550, %v5620
      %v5653 = vmax.f32 %v5555, %v5621
      %v5654 = vmax.f32 %v5560, %v5622
      %v5655 = vmax.f32 %v5565, %v5623
      %v5656 = vmax.f32 %v5570, %v5624
      %v5657 = vmax.f32 %v5575, %v5625
      %v5658 = vmax.f32 %v5580, %v5626
      %v5659 = vmax.f32 %v5585, %v5627
      %v5660 = vmax.f32 %v5590, %v5628
      %v5661 = vmax.f32 %v5595, %v5629
      %v5662 = vld [vmem:[#allocation4] sm:$0xff]
      %v5663 = vld [vmem:[#allocation4 + $0x8] sm:$0xff]
      %v5664 = vld [vmem:[#allocation4 + $0x10] sm:$0xff]
      %v5665 = vld [vmem:[#allocation4 + $0x18] sm:$0xff]
      %v5666 = vld [vmem:[#allocation4 + $0x20] sm:$0xff]
      %v5667 = vld [vmem:[#allocation4 + $0x28] sm:$0xff]
      %v5668 = vld [vmem:[#allocation4 + $0x30] sm:$0xff]
      %v5669 = vld [vmem:[#allocation4 + $0x38] sm:$0xff]
      %v5670 = vld [vmem:[#allocation4 + $0x40] sm:$0xff]
      %v5671 = vld [vmem:[#allocation4 + $0x48] sm:$0xff]
      %v5672 = vld [vmem:[#allocation4 + $0x50] sm:$0xff]
      %v5673 = vld [vmem:[#allocation4 + $0x58] sm:$0xff]
      %v5674 = vld [vmem:[#allocation4 + $0x60] sm:$0xff]
      %v5675 = vld [vmem:[#allocation4 + $0x68] sm:$0xff]
      %v5676 = vld [vmem:[#allocation4 + $0x70] sm:$0xff]
      %v5677 = vld [vmem:[#allocation4 + $0x78] sm:$0xff]
      %v5678 = vld [vmem:[#allocation4 + $0x80] sm:$0xff]
      %v5679 = vld [vmem:[#allocation4 + $0x88] sm:$0xff]
      %v5680 = vld [vmem:[#allocation4 + $0x90] sm:$0xff]
      %v5681 = vld [vmem:[#allocation4 + $0x98] sm:$0xff]
      %v5682 = vld [vmem:[#allocation4 + $0xa0] sm:$0xff]
      %v5683 = vld [vmem:[#allocation4 + $0xa8] sm:$0xff]
      %v5684 = vld [vmem:[#allocation4 + $0xb0] sm:$0xff]
      %v5685 = vld [vmem:[#allocation4 + $0xb8] sm:$0xff]
      %v5686 = vld [vmem:[#allocation4 + $0xc0] sm:$0xff]
      %v5687 = vld [vmem:[#allocation4 + $0xc8] sm:$0xff]
      %v5688 = vld [vmem:[#allocation4 + $0xd0] sm:$0xff]
      %v5689 = vld [vmem:[#allocation4 + $0xd8] sm:$0xff]
      %v5690 = vld [vmem:[#allocation4 + $0xe0] sm:$0xff]
      %v5691 = vld [vmem:[#allocation4 + $0xe8] sm:$0xff]
      %v5692 = vld [vmem:[#allocation4 + $0xf0] sm:$0xff]
      %v5693 = vld [vmem:[#allocation4 + $0xf8] sm:$0xff]
      %v5694 = vld [vmem:[%s7 + $0x10] sm:$0xff]
      %v5696 = vsel %vm413, %v5630, 0
      %v5699 = vsel %vm413, %v5631, 0
      %v5702 = vsel %vm413, %v5632, 0
      %v5705 = vsel %vm413, %v5633, 0
      %v5708 = vsel %vm413, %v5634, 0
      %v5711 = vsel %vm413, %v5635, 0
      %v5714 = vsel %vm413, %v5636, 0
      %v5717 = vsel %vm413, %v5637, 0
      %v5720 = vsel %vm413, %v5638, 0
      %v5723 = vsel %vm413, %v5639, 0
      %v5726 = vsel %vm413, %v5640, 0
      %v5729 = vsel %vm413, %v5641, 0
      %v5732 = vsel %vm413, %v5642, 0
      %v5735 = vsel %vm413, %v5643, 0
      %v5738 = vsel %vm413, %v5644, 0
      %v5741 = vsel %vm413, %v5645, 0
      %v5744 = vsel %vm413, %v5646, 0
      %v5747 = vsel %vm413, %v5647, 0
      %v5750 = vsel %vm413, %v5648, 0
      %v5753 = vsel %vm413, %v5649, 0
      %v5756 = vsel %vm413, %v5650, 0
      %v5759 = vsel %vm413, %v5651, 0
      %v5762 = vsel %vm413, %v5652, 0
      %v5765 = vsel %vm413, %v5653, 0
      %v5768 = vsel %vm413, %v5654, 0
      %v5771 = vsel %vm413, %v5655, 0
      %v5774 = vsel %vm413, %v5656, 0
      %v5777 = vsel %vm413, %v5657, 0
      %v5780 = vsel %vm413, %v5658, 0
      %v5783 = vsel %vm413, %v5659, 0
      %v5786 = vsel %vm413, %v5660, 0
      %v5789 = vsel %vm413, %v5661, 0
      %5791 = vmatprep.subr.mxu0 0.0
      %5792 = vmatpush1.msra.mxu0 %v5694
      %5793 = vmatprep.subr.mxu0 0.0
      %5794 = vmatpush1.msra.mxu0 0.0
      %5795 = vmatprep.subr.mxu0 0.0
      %5796 = vmatpush1.msra.mxu0 0.0
      %5797 = vmatprep.subr.mxu0 0.0
      %5798 = vmatpush1.msra.mxu0 0.0
      %5799 = vmatprep.subr.mxu0 0.0
      %5800 = vmatpush1.msra.mxu0 0.0
      %5801 = vmatprep.subr.mxu0 0.0
      %5802 = vmatpush1.msra.mxu0 0.0
      %5803 = vmatprep.subr.mxu0 0.0
      %5804 = vmatpush1.msra.mxu0 0.0
      %5805 = vmatprep.subr.mxu0 0.0
      %5806 = vmatpush1.msra.mxu0 0.0
      %5807 = vmatprep.subr.mxu0 0.0
      %5808 = vmatpush1.msra.mxu0 0.0
      %5809 = vmatprep.subr.mxu0 0.0
      %5810 = vmatpush1.msra.mxu0 0.0
      %5811 = vmatprep.subr.mxu0 0.0
      %5812 = vmatpush1.msra.mxu0 0.0
      %5813 = vmatprep.subr.mxu0 0.0
      %5814 = vmatpush1.msra.mxu0 0.0
      %5815 = vmatprep.subr.mxu0 0.0
      %5816 = vmatpush1.msra.mxu0 0.0
      %5817 = vmatprep.subr.mxu0 0.0
      %5818 = vmatpush1.msra.mxu0 0.0
      %5819 = vmatprep.subr.mxu0 0.0
      %5820 = vmatpush1.msra.mxu0 0.0
      %5821 = vmatprep.subr.mxu0 0.0
      %5822 = vmatpush1.msra.mxu0 0.0
      %5823 = vmatprep.subr.mxu0 0.0
      %5824 = vmatpush1.msra.mxu0 0.0
      %5825 = vmatprep.subr.mxu0 0.0
      %5826 = vmatpush1.msra.mxu0 0.0
      %5827 = vmatprep.subr.mxu0 0.0
      %5828 = vmatpush1.msra.mxu0 0.0
      %5829 = vmatprep.subr.mxu0 0.0
      %5830 = vmatpush1.msra.mxu0 0.0
      %5831 = vmatprep.subr.mxu0 0.0
      %5832 = vmatpush1.msra.mxu0 0.0
      %5833 = vmatprep.subr.mxu0 0.0
      %5834 = vmatpush1.msra.mxu0 0.0
      %5835 = vmatprep.subr.mxu0 0.0
      %5836 = vmatpush1.msra.mxu0 0.0
      %5837 = vmatprep.subr.mxu0 0.0
      %5838 = vmatpush1.msra.mxu0 0.0
      %5839 = vmatprep.subr.mxu0 0.0
      %5840 = vmatpush1.msra.mxu0 0.0
      %5841 = vmatprep.subr.mxu0 0.0
      %5842 = vmatpush1.msra.mxu0 0.0
      %5843 = vmatprep.subr.mxu0 0.0
      %5844 = vmatpush1.msra.mxu0 0.0
      %5845 = vmatprep.subr.mxu0 0.0
      %5846 = vmatpush1.msra.mxu0 0.0
      %5847 = vmatprep.subr.mxu0 0.0
      %5848 = vmatpush1.msra.mxu0 0.0
      %5849 = vmatprep.subr.mxu0 0.0
      %5850 = vmatpush1.msra.mxu0 0.0
      %5851 = vmatprep.subr.mxu0 0.0
      %5852 = vmatpush1.msra.mxu0 0.0
      %5853 = vmatprep.subr.mxu0 0.0
      %5854 = vmatpush1.msra.mxu0 0.0
      %5855 = vmatprep.mubr.f32.mxu0 0.0
      %5856 = vmatmul.mubr.f32.gmra.mrb[0].mxu0 %v5696
      %v5857 = vpop.f32.mrb[0].mxu0
      %v5858 = vadd.f32 0.0, %v5857
      %v5859 = vpop.f32.mrb[0].mxu0
      %5860 = vmatprep.mubr.f32.mxu0 0.0
      %5861 = vmatmul.mubr.f32.gmra.mrb[0].mxu0 %v5699
      %v5862 = vpop.f32.mrb[0].mxu0
      %v5863 = vadd.f32 0.0, %v5862
      %v5864 = vpop.f32.mrb[0].mxu0
      %5865 = vmatprep.mubr.f32.mxu0 0.0
      %5866 = vmatmul.mubr.f32.gmra.mrb[0].mxu0 %v5702
      %v5867 = vpop.f32.mrb[0].mxu0
      %v5868 = vadd.f32 0.0, %v5867
      %v5869 = vpop.f32.mrb[0].mxu0
      %5870 = vmatprep.mubr.f32.mxu0 0.0
      %5871 = vmatmul.mubr.f32.gmra.mrb[0].mxu0 %v5705
      %v5872 = vpop.f32.mrb[0].mxu0
      %v5873 = vadd.f32 0.0, %v5872
      %v5874 = vpop.f32.mrb[0].mxu0
      %5875 = vmatprep.mubr.f32.mxu0 0.0
      %5876 = vmatmul.mubr.f32.gmra.mrb[0].mxu0 %v5708
      %v5877 = vpop.f32.mrb[0].mxu0
      %v5878 = vadd.f32 0.0, %v5877
      %v5879 = vpop.f32.mrb[0].mxu0
      %5880 = vmatprep.mubr.f32.mxu0 0.0
      %5881 = vmatmul.mubr.f32.gmra.mrb[0].mxu0 %v5711
      %v5882 = vpop.f32.mrb[0].mxu0
      %v5883 = vadd.f32 0.0, %v5882
      %v5884 = vpop.f32.mrb[0].mxu0
      %5885 = vmatprep.mubr.f32.mxu0 0.0
      %5886 = vmatmul.mubr.f32.gmra.mrb[0].mxu0 %v5714
      %v5887 = vpop.f32.mrb[0].mxu0
      %v5888 = vadd.f32 0.0, %v5887
      %v5889 = vpop.f32.mrb[0].mxu0
      %5890 = vmatprep.mubr.f32.mxu0 0.0
      %5891 = vmatmul.mubr.f32.gmra.mrb[0].mxu0 %v5717
      %v5892 = vpop.f32.mrb[0].mxu0
      %v5893 = vadd.f32 0.0, %v5892
      %v5894 = vpop.f32.mrb[0].mxu0
      %5895 = vmatprep.mubr.f32.mxu0 0.0
      %5896 = vmatmul.mubr.f32.gmra.mrb[0].mxu0 %v5720
      %v5897 = vpop.f32.mrb[0].mxu0
      %v5898 = vadd.f32 0.0, %v5897
      %v5899 = vpop.f32.mrb[0].mxu0
      %5900 = vmatprep.mubr.f32.mxu0 0.0
      %5901 = vmatmul.mubr.f32.gmra.mrb[0].mxu0 %v5723
      %v5902 = vpop.f32.mrb[0].mxu0
      %v5903 = vadd.f32 0.0, %v5902
      %v5904 = vpop.f32.mrb[0].mxu0
      %5905 = vmatprep.mubr.f32.mxu0 0.0
      %5906 = vmatmul.mubr.f32.gmra.mrb[0].mxu0 %v5726
      %v5907 = vpop.f32.mrb[0].mxu0
      %v5908 = vadd.f32 0.0, %v5907
      %v5909 = vpop.f32.mrb[0].mxu0
      %5910 = vmatprep.mubr.f32.mxu0 0.0
      %5911 = vmatmul.mubr.f32.gmra.mrb[0].mxu0 %v5729
      %v5912 = vpop.f32.mrb[0].mxu0
      %v5913 = vadd.f32 0.0, %v5912
      %v5914 = vpop.f32.mrb[0].mxu0
      %5915 = vmatprep.mubr.f32.mxu0 0.0
      %5916 = vmatmul.mubr.f32.gmra.mrb[0].mxu0 %v5732
      %v5917 = vpop.f32.mrb[0].mxu0
      %v5918 = vadd.f32 0.0, %v5917
      %v5919 = vpop.f32.mrb[0].mxu0
      %5920 = vmatprep.mubr.f32.mxu0 0.0
      %5921 = vmatmul.mubr.f32.gmra.mrb[0].mxu0 %v5735
      %v5922 = vpop.f32.mrb[0].mxu0
      %v5923 = vadd.f32 0.0, %v5922
      %v5924 = vpop.f32.mrb[0].mxu0
      %5925 = vmatprep.mubr.f32.mxu0 0.0
      %5926 = vmatmul.mubr.f32.gmra.mrb[0].mxu0 %v5738
      %v5927 = vpop.f32.mrb[0].mxu0
      %v5928 = vadd.f32 0.0, %v5927
      %v5929 = vpop.f32.mrb[0].mxu0
      %5930 = vmatprep.mubr.f32.mxu0 0.0
      %5931 = vmatmul.mubr.f32.gmra.mrb[0].mxu0 %v5741
      %v5932 = vpop.f32.mrb[0].mxu0
      %v5933 = vadd.f32 0.0, %v5932
      %v5934 = vpop.f32.mrb[0].mxu0
      %5935 = vmatprep.mubr.f32.mxu0 0.0
      %5936 = vmatmul.mubr.f32.gmra.mrb[0].mxu0 %v5744
      %v5937 = vpop.f32.mrb[0].mxu0
      %v5938 = vadd.f32 0.0, %v5937
      %v5939 = vpop.f32.mrb[0].mxu0
      %5940 = vmatprep.mubr.f32.mxu0 0.0
      %5941 = vmatmul.mubr.f32.gmra.mrb[0].mxu0 %v5747
      %v5942 = vpop.f32.mrb[0].mxu0
      %v5943 = vadd.f32 0.0, %v5942
      %v5944 = vpop.f32.mrb[0].mxu0
      %5945 = vmatprep.mubr.f32.mxu0 0.0
      %5946 = vmatmul.mubr.f32.gmra.mrb[0].mxu0 %v5750
      %v5947 = vpop.f32.mrb[0].mxu0
      %v5948 = vadd.f32 0.0, %v5947
      %v5949 = vpop.f32.mrb[0].mxu0
      %5950 = vmatprep.mubr.f32.mxu0 0.0
      %5951 = vmatmul.mubr.f32.gmra.mrb[0].mxu0 %v5753
      %v5952 = vpop.f32.mrb[0].mxu0
      %v5953 = vadd.f32 0.0, %v5952
      %v5954 = vpop.f32.mrb[0].mxu0
      %5955 = vmatprep.mubr.f32.mxu0 0.0
      %5956 = vmatmul.mubr.f32.gmra.mrb[0].mxu0 %v5756
      %v5957 = vpop.f32.mrb[0].mxu0
      %v5958 = vadd.f32 0.0, %v5957
      %v5959 = vpop.f32.mrb[0].mxu0
      %5960 = vmatprep.mubr.f32.mxu0 0.0
      %5961 = vmatmul.mubr.f32.gmra.mrb[0].mxu0 %v5759
      %v5962 = vpop.f32.mrb[0].mxu0
      %v5963 = vadd.f32 0.0, %v5962
      %v5964 = vpop.f32.mrb[0].mxu0
      %5965 = vmatprep.mubr.f32.mxu0 0.0
      %5966 = vmatmul.mubr.f32.gmra.mrb[0].mxu0 %v5762
      %v5967 = vpop.f32.mrb[0].mxu0
      %v5968 = vadd.f32 0.0, %v5967
      %v5969 = vpop.f32.mrb[0].mxu0
      %5970 = vmatprep.mubr.f32.mxu0 0.0
      %5971 = vmatmul.mubr.f32.gmra.mrb[0].mxu0 %v5765
      %v5972 = vpop.f32.mrb[0].mxu0
      %v5973 = vadd.f32 0.0, %v5972
      %v5974 = vpop.f32.mrb[0].mxu0
      %5975 = vmatprep.mubr.f32.mxu0 0.0
      %5976 = vmatmul.mubr.f32.gmra.mrb[0].mxu0 %v5768
      %v5977 = vpop.f32.mrb[0].mxu0
      %v5978 = vadd.f32 0.0, %v5977
      %v5979 = vpop.f32.mrb[0].mxu0
      %5980 = vmatprep.mubr.f32.mxu0 0.0
      %5981 = vmatmul.mubr.f32.gmra.mrb[0].mxu0 %v5771
      %v5982 = vpop.f32.mrb[0].mxu0
      %v5983 = vadd.f32 0.0, %v5982
      %v5984 = vpop.f32.mrb[0].mxu0
      %5985 = vmatprep.mubr.f32.mxu0 0.0
      %5986 = vmatmul.mubr.f32.gmra.mrb[0].mxu0 %v5774
      %v5987 = vpop.f32.mrb[0].mxu0
      %v5988 = vadd.f32 0.0, %v5987
      %v5989 = vpop.f32.mrb[0].mxu0
      %5990 = vmatprep.mubr.f32.mxu0 0.0
      %5991 = vmatmul.mubr.f32.gmra.mrb[0].mxu0 %v5777
      %v5992 = vpop.f32.mrb[0].mxu0
      %v5993 = vadd.f32 0.0, %v5992
      %v5994 = vpop.f32.mrb[0].mxu0
      %5995 = vmatprep.mubr.f32.mxu0 0.0
      %5996 = vmatmul.mubr.f32.gmra.mrb[0].mxu0 %v5780
      %v5997 = vpop.f32.mrb[0].mxu0
      %v5998 = vadd.f32 0.0, %v5997
      %v5999 = vpop.f32.mrb[0].mxu0
      %6000 = vmatprep.mubr.f32.mxu0 0.0
      %6001 = vmatmul.mubr.f32.gmra.mrb[0].mxu0 %v5783
      %v6002 = vpop.f32.mrb[0].mxu0
      %v6003 = vadd.f32 0.0, %v6002
      %v6004 = vpop.f32.mrb[0].mxu0
      %6005 = vmatprep.mubr.f32.mxu0 0.0
      %6006 = vmatmul.mubr.f32.gmra.mrb[0].mxu0 %v5786
      %v6007 = vpop.f32.mrb[0].mxu0
      %v6008 = vadd.f32 0.0, %v6007
      %v6009 = vpop.f32.mrb[0].mxu0
      %6010 = vmatprep.mubr.f32.mxu0 0.0
      %6011 = vmatmul.mubr.f32.gmra.mrb[0].mxu0 %v5789
      %v6012 = vpop.f32.mrb[0].mxu0
      %v6013 = vadd.f32 0.0, %v6012
      %v6014 = vpop.f32.mrb[0].mxu0
      %6015 = vdwg.mxu0
      %v6016 = vadd.f32 %v5662, %v5858
      %v6017 = vadd.f32 %v5663, %v5863
      %v6018 = vadd.f32 %v5664, %v5868
      %v6019 = vadd.f32 %v5665, %v5873
      %v6020 = vadd.f32 %v5666, %v5878
      %v6021 = vadd.f32 %v5667, %v5883
      %v6022 = vadd.f32 %v5668, %v5888
      %v6023 = vadd.f32 %v5669, %v5893
      %v6024 = vadd.f32 %v5670, %v5898
      %v6025 = vadd.f32 %v5671, %v5903
      %v6026 = vadd.f32 %v5672, %v5908
      %v6027 = vadd.f32 %v5673, %v5913
      %v6028 = vadd.f32 %v5674, %v5918
      %v6029 = vadd.f32 %v5675, %v5923
      %v6030 = vadd.f32 %v5676, %v5928
      %v6031 = vadd.f32 %v5677, %v5933
      %v6032 = vadd.f32 %v5678, %v5938
      %v6033 = vadd.f32 %v5679, %v5943
      %v6034 = vadd.f32 %v5680, %v5948
      %v6035 = vadd.f32 %v5681, %v5953
      %v6036 = vadd.f32 %v5682, %v5958
      %v6037 = vadd.f32 %v5683, %v5963
      %v6038 = vadd.f32 %v5684, %v5968
      %v6039 = vadd.f32 %v5685, %v5973
      %v6040 = vadd.f32 %v5686, %v5978
      %v6041 = vadd.f32 %v5687, %v5983
      %v6042 = vadd.f32 %v5688, %v5988
      %v6043 = vadd.f32 %v5689, %v5993
      %v6044 = vadd.f32 %v5690, %v5998
      %v6045 = vadd.f32 %v5691, %v6003
      %v6046 = vadd.f32 %v5692, %v6008
      %v6047 = vadd.f32 %v5693, %v6013
      %6048 = vst.msk [vmem:[#allocation4] sm:$0xff] %vm413, %v6016
      %6049 = vst.msk [vmem:[#allocation4 + $0x8] sm:$0xff] %vm413, %v6017
      %6050 = vst.msk [vmem:[#allocation4 + $0x10] sm:$0xff] %vm413, %v6018
      %6051 = vst.msk [vmem:[#allocation4 + $0x18] sm:$0xff] %vm413, %v6019
      %6052 = vst.msk [vmem:[#allocation4 + $0x20] sm:$0xff] %vm413, %v6020
      %6053 = vst.msk [vmem:[#allocation4 + $0x28] sm:$0xff] %vm413, %v6021
      %6054 = vst.msk [vmem:[#allocation4 + $0x30] sm:$0xff] %vm413, %v6022
      %6055 = vst.msk [vmem:[#allocation4 + $0x38] sm:$0xff] %vm413, %v6023
      %6056 = vst.msk [vmem:[#allocation4 + $0x40] sm:$0xff] %vm413, %v6024
      %6057 = vst.msk [vmem:[#allocation4 + $0x48] sm:$0xff] %vm413, %v6025
      %6058 = vst.msk [vmem:[#allocation4 + $0x50] sm:$0xff] %vm413, %v6026
      %6059 = vst.msk [vmem:[#allocation4 + $0x58] sm:$0xff] %vm413, %v6027
      %6060 = vst.msk [vmem:[#allocation4 + $0x60] sm:$0xff] %vm413, %v6028
      %6061 = vst.msk [vmem:[#allocation4 + $0x68] sm:$0xff] %vm413, %v6029
      %6062 = vst.msk [vmem:[#allocation4 + $0x70] sm:$0xff] %vm413, %v6030
      %6063 = vst.msk [vmem:[#allocation4 + $0x78] sm:$0xff] %vm413, %v6031
      %6064 = vst.msk [vmem:[#allocation4 + $0x80] sm:$0xff] %vm413, %v6032
      %6065 = vst.msk [vmem:[#allocation4 + $0x88] sm:$0xff] %vm413, %v6033
      %6066 = vst.msk [vmem:[#allocation4 + $0x90] sm:$0xff] %vm413, %v6034
      %6067 = vst.msk [vmem:[#allocation4 + $0x98] sm:$0xff] %vm413, %v6035
      %6068 = vst.msk [vmem:[#allocation4 + $0xa0] sm:$0xff] %vm413, %v6036
      %6069 = vst.msk [vmem:[#allocation4 + $0xa8] sm:$0xff] %vm413, %v6037
      %6070 = vst.msk [vmem:[#allocation4 + $0xb0] sm:$0xff] %vm413, %v6038
      %6071 = vst.msk [vmem:[#allocation4 + $0xb8] sm:$0xff] %vm413, %v6039
      %6072 = vst.msk [vmem:[#allocation4 + $0xc0] sm:$0xff] %vm413, %v6040
      %6073 = vst.msk [vmem:[#allocation4 + $0xc8] sm:$0xff] %vm413, %v6041
      %6074 = vst.msk [vmem:[#allocation4 + $0xd0] sm:$0xff] %vm413, %v6042
      %6075 = vst.msk [vmem:[#allocation4 + $0xd8] sm:$0xff] %vm413, %v6043
      %6076 = vst.msk [vmem:[#allocation4 + $0xe0] sm:$0xff] %vm413, %v6044
      %6077 = vst.msk [vmem:[#allocation4 + $0xe8] sm:$0xff] %vm413, %v6045
      %6078 = vst.msk [vmem:[#allocation4 + $0xf0] sm:$0xff] %vm413, %v6046
      %6079 = vst.msk [vmem:[#allocation4 + $0xf8] sm:$0xff] %vm413, %v6047
      %6080 = vrot.lane.b32.xlu0 %v5630, 16
      %v6081 = vpop.permute.xlu0 %6080
      %6082 = vrot.lane.b32.xlu0 %v5631, 16
      %v6083 = vpop.permute.xlu0 %6082
      %6084 = vrot.lane.b32.xlu0 %v5632, 16
      %v6085 = vpop.permute.xlu0 %6084
      %6086 = vrot.lane.b32.xlu0 %v5633, 16
      %v6087 = vpop.permute.xlu0 %6086
      %6088 = vrot.lane.b32.xlu0 %v5634, 16
      %v6089 = vpop.permute.xlu0 %6088
      %6090 = vrot.lane.b32.xlu0 %v5635, 16
      %v6091 = vpop.permute.xlu0 %6090
      %6092 = vrot.lane.b32.xlu0 %v5636, 16
      %v6093 = vpop.permute.xlu0 %6092
      %6094 = vrot.lane.b32.xlu0 %v5637, 16
      %v6095 = vpop.permute.xlu0 %6094
      %6096 = vrot.lane.b32.xlu0 %v5638, 16
      %v6097 = vpop.permute.xlu0 %6096
      %6098 = vrot.lane.b32.xlu0 %v5639, 16
      %v6099 = vpop.permute.xlu0 %6098
      %6100 = vrot.lane.b32.xlu0 %v5640, 16
      %v6101 = vpop.permute.xlu0 %6100
      %6102 = vrot.lane.b32.xlu0 %v5641, 16
      %v6103 = vpop.permute.xlu0 %6102
      %6104 = vrot.lane.b32.xlu0 %v5642, 16
      %v6105 = vpop.permute.xlu0 %6104
      %6106 = vrot.lane.b32.xlu0 %v5643, 16
      %v6107 = vpop.permute.xlu0 %6106
      %6108 = vrot.lane.b32.xlu0 %v5644, 16
      %v6109 = vpop.permute.xlu0 %6108
      %6110 = vrot.lane.b32.xlu0 %v5645, 16
      %v6111 = vpop.permute.xlu0 %6110
      %6112 = vrot.lane.b32.xlu0 %v5646, 16
      %v6113 = vpop.permute.xlu0 %6112
      %6114 = vrot.lane.b32.xlu0 %v5647, 16
      %v6115 = vpop.permute.xlu0 %6114
      %6116 = vrot.lane.b32.xlu0 %v5648, 16
      %v6117 = vpop.permute.xlu0 %6116
      %6118 = vrot.lane.b32.xlu0 %v5649, 16
      %v6119 = vpop.permute.xlu0 %6118
      %6120 = vrot.lane.b32.xlu0 %v5650, 16
      %v6121 = vpop.permute.xlu0 %6120
      %6122 = vrot.lane.b32.xlu0 %v5651, 16
      %v6123 = vpop.permute.xlu0 %6122
      %6124 = vrot.lane.b32.xlu0 %v5652, 16
      %v6125 = vpop.permute.xlu0 %6124
      %6126 = vrot.lane.b32.xlu0 %v5653, 16
      %v6127 = vpop.permute.xlu0 %6126
      %6128 = vrot.lane.b32.xlu0 %v5654, 16
      %v6129 = vpop.permute.xlu0 %6128
      %6130 = vrot.lane.b32.xlu0 %v5655, 16
      %v6131 = vpop.permute.xlu0 %6130
      %6132 = vrot.lane.b32.xlu0 %v5656, 16
      %v6133 = vpop.permute.xlu0 %6132
      %6134 = vrot.lane.b32.xlu0 %v5657, 16
      %v6135 = vpop.permute.xlu0 %6134
      %6136 = vrot.lane.b32.xlu0 %v5658, 16
      %v6137 = vpop.permute.xlu0 %6136
      %6138 = vrot.lane.b32.xlu0 %v5659, 16
      %v6139 = vpop.permute.xlu0 %6138
      %6140 = vrot.lane.b32.xlu0 %v5660, 16
      %v6141 = vpop.permute.xlu0 %6140
      %6142 = vrot.lane.b32.xlu0 %v5661, 16
      %v6143 = vpop.permute.xlu0 %6142
      %vm6176 = vcmask 195712
      %6177 = vst.msk [vmem:[%s412 + $0x1] sm:$0xff] %vm6176, %v6081
      %6178 = vst.msk [vmem:[%s412 + $0x9] sm:$0xff] %vm6176, %v6083
      %6179 = vst.msk [vmem:[%s412 + $0x19] sm:$0xff] %vm6176, %v6085
      %6180 = vst.msk [vmem:[%s412 + $0x21] sm:$0xff] %vm6176, %v6087
      %6181 = vst.msk [vmem:[%s412 + $0x31] sm:$0xff] %vm6176, %v6089
      %6182 = vst.msk [vmem:[%s412 + $0x39] sm:$0xff] %vm6176, %v6091
      %6183 = vst.msk [vmem:[%s412 + $0x49] sm:$0xff] %vm6176, %v6093
      %6184 = vst.msk [vmem:[%s412 + $0x51] sm:$0xff] %vm6176, %v6095
      %6185 = vst.msk [vmem:[%s412 + $0x61] sm:$0xff] %vm6176, %v6097
      %6186 = vst.msk [vmem:[%s412 + $0x69] sm:$0xff] %vm6176, %v6099
      %6187 = vst.msk [vmem:[%s412 + $0x79] sm:$0xff] %vm6176, %v6101
      %6188 = vst.msk [vmem:[%s412 + $0x81] sm:$0xff] %vm6176, %v6103
      %6189 = vst.msk [vmem:[%s412 + $0x91] sm:$0xff] %vm6176, %v6105
      %6190 = vst.msk [vmem:[%s412 + $0x99] sm:$0xff] %vm6176, %v6107
      %6191 = vst.msk [vmem:[%s412 + $0xa9] sm:$0xff] %vm6176, %v6109
      %6192 = vst.msk [vmem:[%s412 + $0xb1] sm:$0xff] %vm6176, %v6111
      %6193 = vst.msk [vmem:[%s412 + $0xc1] sm:$0xff] %vm6176, %v6113
      %6194 = vst.msk [vmem:[%s412 + $0xc9] sm:$0xff] %vm6176, %v6115
      %6195 = vst.msk [vmem:[%s412 + $0xd9] sm:$0xff] %vm6176, %v6117
      %6196 = vst.msk [vmem:[%s412 + $0xe1] sm:$0xff] %vm6176, %v6119
      %6197 = vst.msk [vmem:[%s412 + $0xf1] sm:$0xff] %vm6176, %v6121
      %6198 = vst.msk [vmem:[%s412 + $0xf9] sm:$0xff] %vm6176, %v6123
      %6199 = vst.msk [vmem:[%s412 + $0x109] sm:$0xff] %vm6176, %v6125
      %6200 = vst.msk [vmem:[%s412 + $0x111] sm:$0xff] %vm6176, %v6127
      %6201 = vst.msk [vmem:[%s412 + $0x121] sm:$0xff] %vm6176, %v6129
      %6202 = vst.msk [vmem:[%s412 + $0x129] sm:$0xff] %vm6176, %v6131
      %6203 = vst.msk [vmem:[%s412 + $0x139] sm:$0xff] %vm6176, %v6133
      %6204 = vst.msk [vmem:[%s412 + $0x141] sm:$0xff] %vm6176, %v6135
      %6205 = vst.msk [vmem:[%s412 + $0x151] sm:$0xff] %vm6176, %v6137
      %6206 = vst.msk [vmem:[%s412 + $0x159] sm:$0xff] %vm6176, %v6139
      %6207 = vst.msk [vmem:[%s412 + $0x169] sm:$0xff] %vm6176, %v6141
      %6208 = vst.msk [vmem:[%s412 + $0x171] sm:$0xff] %vm6176, %v6143
      %v6209 = vld [vmem:[#allocation2] sm:$0xff]
      %v6210 = vld [vmem:[#allocation2 + $0x8] sm:$0xff]
      %v6211 = vld [vmem:[#allocation2 + $0x18] sm:$0xff]
      %v6212 = vld [vmem:[#allocation2 + $0x20] sm:$0xff]
      %v6213 = vld [vmem:[#allocation2 + $0x30] sm:$0xff]
      %v6214 = vld [vmem:[#allocation2 + $0x38] sm:$0xff]
      %v6215 = vld [vmem:[#allocation2 + $0x48] sm:$0xff]
      %v6216 = vld [vmem:[#allocation2 + $0x50] sm:$0xff]
      %v6217 = vld [vmem:[#allocation2 + $0x60] sm:$0xff]
      %v6218 = vld [vmem:[#allocation2 + $0x68] sm:$0xff]
      %v6219 = vld [vmem:[#allocation2 + $0x78] sm:$0xff]
      %v6220 = vld [vmem:[#allocation2 + $0x80] sm:$0xff]
      %v6221 = vld [vmem:[#allocation2 + $0x90] sm:$0xff]
      %v6222 = vld [vmem:[#allocation2 + $0x98] sm:$0xff]
      %v6223 = vld [vmem:[#allocation2 + $0xa8] sm:$0xff]
      %v6224 = vld [vmem:[#allocation2 + $0xb0] sm:$0xff]
      %v6225 = vld [vmem:[#allocation2 + $0xc0] sm:$0xff]
      %v6226 = vld [vmem:[#allocation2 + $0xc8] sm:$0xff]
      %v6227 = vld [vmem:[#allocation2 + $0xd8] sm:$0xff]
      %v6228 = vld [vmem:[#allocation2 + $0xe0] sm:$0xff]
      %v6229 = vld [vmem:[#allocation2 + $0xf0] sm:$0xff]
      %v6230 = vld [vmem:[#allocation2 + $0xf8] sm:$0xff]
      %v6231 = vld [vmem:[#allocation2 + $0x108] sm:$0xff]
      %v6232 = vld [vmem:[#allocation2 + $0x110] sm:$0xff]
      %v6233 = vld [vmem:[#allocation2 + $0x120] sm:$0xff]
      %v6234 = vld [vmem:[#allocation2 + $0x128] sm:$0xff]
      %v6235 = vld [vmem:[#allocation2 + $0x138] sm:$0xff]
      %v6236 = vld [vmem:[#allocation2 + $0x140] sm:$0xff]
      %v6237 = vld [vmem:[#allocation2 + $0x150] sm:$0xff]
      %v6238 = vld [vmem:[#allocation2 + $0x158] sm:$0xff]
      %v6239 = vld [vmem:[#allocation2 + $0x168] sm:$0xff]
      %v6240 = vld [vmem:[#allocation2 + $0x170] sm:$0xff]
      %v6241 = vld [vmem:[#allocation2 + $0x1] sm:$0xff]
      %v6242 = vld [vmem:[#allocation2 + $0x9] sm:$0xff]
      %v6243 = vld [vmem:[#allocation2 + $0x19] sm:$0xff]
      %v6244 = vld [vmem:[#allocation2 + $0x21] sm:$0xff]
      %v6245 = vld [vmem:[#allocation2 + $0x31] sm:$0xff]
      %v6246 = vld [vmem:[#allocation2 + $0x39] sm:$0xff]
      %v6247 = vld [vmem:[#allocation2 + $0x49] sm:$0xff]
      %v6248 = vld [vmem:[#allocation2 + $0x51] sm:$0xff]
      %v6249 = vld [vmem:[#allocation2 + $0x61] sm:$0xff]
      %v6250 = vld [vmem:[#allocation2 + $0x69] sm:$0xff]
      %v6251 = vld [vmem:[#allocation2 + $0x79] sm:$0xff]
      %v6252 = vld [vmem:[#allocation2 + $0x81] sm:$0xff]
      %v6253 = vld [vmem:[#allocation2 + $0x91] sm:$0xff]
      %v6254 = vld [vmem:[#allocation2 + $0x99] sm:$0xff]
      %v6255 = vld [vmem:[#allocation2 + $0xa9] sm:$0xff]
      %v6256 = vld [vmem:[#allocation2 + $0xb1] sm:$0xff]
      %v6257 = vld [vmem:[#allocation2 + $0xc1] sm:$0xff]
      %v6258 = vld [vmem:[#allocation2 + $0xc9] sm:$0xff]
      %v6259 = vld [vmem:[#allocation2 + $0xd9] sm:$0xff]
      %v6260 = vld [vmem:[#allocation2 + $0xe1] sm:$0xff]
      %v6261 = vld [vmem:[#allocation2 + $0xf1] sm:$0xff]
      %v6262 = vld [vmem:[#allocation2 + $0xf9] sm:$0xff]
      %v6263 = vld [vmem:[#allocation2 + $0x109] sm:$0xff]
      %v6264 = vld [vmem:[#allocation2 + $0x111] sm:$0xff]
      %v6265 = vld [vmem:[#allocation2 + $0x121] sm:$0xff]
      %v6266 = vld [vmem:[#allocation2 + $0x129] sm:$0xff]
      %v6267 = vld [vmem:[#allocation2 + $0x139] sm:$0xff]
      %v6268 = vld [vmem:[#allocation2 + $0x141] sm:$0xff]
      %v6269 = vld [vmem:[#allocation2 + $0x151] sm:$0xff]
      %v6270 = vld [vmem:[#allocation2 + $0x159] sm:$0xff]
      %v6271 = vld [vmem:[#allocation2 + $0x169] sm:$0xff]
      %v6272 = vld [vmem:[#allocation2 + $0x171] sm:$0xff]
      %v6273 = vld [vmem:[#allocation2 + $0x2] sm:$0xff]
      %v6274 = vld [vmem:[#allocation2 + $0xa] sm:$0xff]
      %v6275 = vld [vmem:[#allocation2 + $0x1a] sm:$0xff]
      %v6276 = vld [vmem:[#allocation2 + $0x22] sm:$0xff]
      %v6277 = vld [vmem:[#allocation2 + $0x32] sm:$0xff]
      %v6278 = vld [vmem:[#allocation2 + $0x3a] sm:$0xff]
      %v6279 = vld [vmem:[#allocation2 + $0x4a] sm:$0xff]
      %v6280 = vld [vmem:[#allocation2 + $0x52] sm:$0xff]
      %v6281 = vld [vmem:[#allocation2 + $0x62] sm:$0xff]
      %v6282 = vld [vmem:[#allocation2 + $0x6a] sm:$0xff]
      %v6283 = vld [vmem:[#allocation2 + $0x7a] sm:$0xff]
      %v6284 = vld [vmem:[#allocation2 + $0x82] sm:$0xff]
      %v6285 = vld [vmem:[#allocation2 + $0x92] sm:$0xff]
      %v6286 = vld [vmem:[#allocation2 + $0x9a] sm:$0xff]
      %v6287 = vld [vmem:[#allocation2 + $0xaa] sm:$0xff]
      %v6288 = vld [vmem:[#allocation2 + $0xb2] sm:$0xff]
      %v6289 = vld [vmem:[#allocation2 + $0xc2] sm:$0xff]
      %v6290 = vld [vmem:[#allocation2 + $0xca] sm:$0xff]
      %v6291 = vld [vmem:[#allocation2 + $0xda] sm:$0xff]
      %v6292 = vld [vmem:[#allocation2 + $0xe2] sm:$0xff]
      %v6293 = vld [vmem:[#allocation2 + $0xf2] sm:$0xff]
      %v6294 = vld [vmem:[#allocation2 + $0xfa] sm:$0xff]
      %v6295 = vld [vmem:[#allocation2 + $0x10a] sm:$0xff]
      %v6296 = vld [vmem:[#allocation2 + $0x112] sm:$0xff]
      %v6297 = vld [vmem:[#allocation2 + $0x122] sm:$0xff]
      %v6298 = vld [vmem:[#allocation2 + $0x12a] sm:$0xff]
      %v6299 = vld [vmem:[#allocation2 + $0x13a] sm:$0xff]
      %v6300 = vld [vmem:[#allocation2 + $0x142] sm:$0xff]
      %v6301 = vld [vmem:[#allocation2 + $0x152] sm:$0xff]
      %v6302 = vld [vmem:[#allocation2 + $0x15a] sm:$0xff]
      %v6303 = vld [vmem:[#allocation2 + $0x16a] sm:$0xff]
      %v6304 = vld [vmem:[#allocation2 + $0x172] sm:$0xff]
      %v6305 = vld [vmem:[%s412] sm:$0xff]
      %v6306 = vld [vmem:[%s412 + $0x8] sm:$0xff]
      %v6307 = vld [vmem:[%s412 + $0x18] sm:$0xff]
      %v6308 = vld [vmem:[%s412 + $0x20] sm:$0xff]
      %v6309 = vld [vmem:[%s412 + $0x30] sm:$0xff]
      %v6310 = vld [vmem:[%s412 + $0x38] sm:$0xff]
      %v6311 = vld [vmem:[%s412 + $0x48] sm:$0xff]
      %v6312 = vld [vmem:[%s412 + $0x50] sm:$0xff]
      %v6313 = vld [vmem:[%s412 + $0x60] sm:$0xff]
      %v6314 = vld [vmem:[%s412 + $0x68] sm:$0xff]
      %v6315 = vld [vmem:[%s412 + $0x78] sm:$0xff]
      %v6316 = vld [vmem:[%s412 + $0x80] sm:$0xff]
      %v6317 = vld [vmem:[%s412 + $0x90] sm:$0xff]
      %v6318 = vld [vmem:[%s412 + $0x98] sm:$0xff]
      %v6319 = vld [vmem:[%s412 + $0xa8] sm:$0xff]
      %v6320 = vld [vmem:[%s412 + $0xb0] sm:$0xff]
      %v6321 = vld [vmem:[%s412 + $0xc0] sm:$0xff]
      %v6322 = vld [vmem:[%s412 + $0xc8] sm:$0xff]
      %v6323 = vld [vmem:[%s412 + $0xd8] sm:$0xff]
      %v6324 = vld [vmem:[%s412 + $0xe0] sm:$0xff]
      %v6325 = vld [vmem:[%s412 + $0xf0] sm:$0xff]
      %v6326 = vld [vmem:[%s412 + $0xf8] sm:$0xff]
      %v6327 = vld [vmem:[%s412 + $0x108] sm:$0xff]
      %v6328 = vld [vmem:[%s412 + $0x110] sm:$0xff]
      %v6329 = vld [vmem:[%s412 + $0x120] sm:$0xff]
      %v6330 = vld [vmem:[%s412 + $0x128] sm:$0xff]
      %v6331 = vld [vmem:[%s412 + $0x138] sm:$0xff]
      %v6332 = vld [vmem:[%s412 + $0x140] sm:$0xff]
      %v6333 = vld [vmem:[%s412 + $0x150] sm:$0xff]
      %v6334 = vld [vmem:[%s412 + $0x158] sm:$0xff]
      %v6335 = vld [vmem:[%s412 + $0x168] sm:$0xff]
      %v6336 = vld [vmem:[%s412 + $0x170] sm:$0xff]
      %v6337 = vld [vmem:[%s412 + $0x1] sm:$0xff]
      %v6338 = vld [vmem:[%s412 + $0x9] sm:$0xff]
      %v6339 = vld [vmem:[%s412 + $0x19] sm:$0xff]
      %v6340 = vld [vmem:[%s412 + $0x21] sm:$0xff]
      %v6341 = vld [vmem:[%s412 + $0x31] sm:$0xff]
      %v6342 = vld [vmem:[%s412 + $0x39] sm:$0xff]
      %v6343 = vld [vmem:[%s412 + $0x49] sm:$0xff]
      %v6344 = vld [vmem:[%s412 + $0x51] sm:$0xff]
      %v6345 = vld [vmem:[%s412 + $0x61] sm:$0xff]
      %v6346 = vld [vmem:[%s412 + $0x69] sm:$0xff]
      %v6347 = vld [vmem:[%s412 + $0x79] sm:$0xff]
      %v6348 = vld [vmem:[%s412 + $0x81] sm:$0xff]
      %v6349 = vld [vmem:[%s412 + $0x91] sm:$0xff]
      %v6350 = vld [vmem:[%s412 + $0x99] sm:$0xff]
      %v6351 = vld [vmem:[%s412 + $0xa9] sm:$0xff]
      %v6352 = vld [vmem:[%s412 + $0xb1] sm:$0xff]
      %v6353 = vld [vmem:[%s412 + $0xc1] sm:$0xff]
      %v6354 = vld [vmem:[%s412 + $0xc9] sm:$0xff]
      %v6355 = vld [vmem:[%s412 + $0xd9] sm:$0xff]
      %v6356 = vld [vmem:[%s412 + $0xe1] sm:$0xff]
      %v6357 = vld [vmem:[%s412 + $0xf1] sm:$0xff]
      %v6358 = vld [vmem:[%s412 + $0xf9] sm:$0xff]
      %v6359 = vld [vmem:[%s412 + $0x109] sm:$0xff]
      %v6360 = vld [vmem:[%s412 + $0x111] sm:$0xff]
      %v6361 = vld [vmem:[%s412 + $0x121] sm:$0xff]
      %v6362 = vld [vmem:[%s412 + $0x129] sm:$0xff]
      %v6363 = vld [vmem:[%s412 + $0x139] sm:$0xff]
      %v6364 = vld [vmem:[%s412 + $0x141] sm:$0xff]
      %v6365 = vld [vmem:[%s412 + $0x151] sm:$0xff]
      %v6366 = vld [vmem:[%s412 + $0x159] sm:$0xff]
      %v6367 = vld [vmem:[%s412 + $0x169] sm:$0xff]
      %v6368 = vld [vmem:[%s412 + $0x171] sm:$0xff]
      %v6369 = vld [vmem:[%s412 + $0x2] sm:$0xff]
      %v6370 = vld [vmem:[%s412 + $0xa] sm:$0xff]
      %v6371 = vld [vmem:[%s412 + $0x1a] sm:$0xff]
      %v6372 = vld [vmem:[%s412 + $0x22] sm:$0xff]
      %v6373 = vld [vmem:[%s412 + $0x32] sm:$0xff]
      %v6374 = vld [vmem:[%s412 + $0x3a] sm:$0xff]
      %v6375 = vld [vmem:[%s412 + $0x4a] sm:$0xff]
      %v6376 = vld [vmem:[%s412 + $0x52] sm:$0xff]
      %v6377 = vld [vmem:[%s412 + $0x62] sm:$0xff]
      %v6378 = vld [vmem:[%s412 + $0x6a] sm:$0xff]
      %v6379 = vld [vmem:[%s412 + $0x7a] sm:$0xff]
      %v6380 = vld [vmem:[%s412 + $0x82] sm:$0xff]
      %v6381 = vld [vmem:[%s412 + $0x92] sm:$0xff]
      %v6382 = vld [vmem:[%s412 + $0x9a] sm:$0xff]
      %v6383 = vld [vmem:[%s412 + $0xaa] sm:$0xff]
      %v6384 = vld [vmem:[%s412 + $0xb2] sm:$0xff]
      %v6385 = vld [vmem:[%s412 + $0xc2] sm:$0xff]
      %v6386 = vld [vmem:[%s412 + $0xca] sm:$0xff]
      %v6387 = vld [vmem:[%s412 + $0xda] sm:$0xff]
      %v6388 = vld [vmem:[%s412 + $0xe2] sm:$0xff]
      %v6389 = vld [vmem:[%s412 + $0xf2] sm:$0xff]
      %v6390 = vld [vmem:[%s412 + $0xfa] sm:$0xff]
      %v6391 = vld [vmem:[%s412 + $0x10a] sm:$0xff]
      %v6392 = vld [vmem:[%s412 + $0x112] sm:$0xff]
      %v6393 = vld [vmem:[%s412 + $0x122] sm:$0xff]
      %v6394 = vld [vmem:[%s412 + $0x12a] sm:$0xff]
      %v6395 = vld [vmem:[%s412 + $0x13a] sm:$0xff]
      %v6396 = vld [vmem:[%s412 + $0x142] sm:$0xff]
      %v6397 = vld [vmem:[%s412 + $0x152] sm:$0xff]
      %v6398 = vld [vmem:[%s412 + $0x15a] sm:$0xff]
      %v6399 = vld [vmem:[%s412 + $0x16a] sm:$0xff]
      %v6400 = vld [vmem:[%s412 + $0x172] sm:$0xff]
      %v6401 = vld [vmem:[%s638] sm:$0xff]
      %v6402 = vld [vmem:[%s638 + $0x8] sm:$0xff]
      %v6403 = vld [vmem:[%s638 + $0x18] sm:$0xff]
      %v6404 = vld [vmem:[%s638 + $0x20] sm:$0xff]
      %v6405 = vld [vmem:[%s638 + $0x30] sm:$0xff]
      %v6406 = vld [vmem:[%s638 + $0x38] sm:$0xff]
      %v6407 = vld [vmem:[%s638 + $0x48] sm:$0xff]
      %v6408 = vld [vmem:[%s638 + $0x50] sm:$0xff]
      %v6409 = vld [vmem:[%s638 + $0x60] sm:$0xff]
      %v6410 = vld [vmem:[%s638 + $0x68] sm:$0xff]
      %v6411 = vld [vmem:[%s638 + $0x78] sm:$0xff]
      %v6412 = vld [vmem:[%s638 + $0x80] sm:$0xff]
      %v6413 = vld [vmem:[%s638 + $0x90] sm:$0xff]
      %v6414 = vld [vmem:[%s638 + $0x98] sm:$0xff]
      %v6415 = vld [vmem:[%s638 + $0xa8] sm:$0xff]
      %v6416 = vld [vmem:[%s638 + $0xb0] sm:$0xff]
      %v6417 = vld [vmem:[%s638 + $0xc0] sm:$0xff]
      %v6418 = vld [vmem:[%s638 + $0xc8] sm:$0xff]
      %v6419 = vld [vmem:[%s638 + $0xd8] sm:$0xff]
      %v6420 = vld [vmem:[%s638 + $0xe0] sm:$0xff]
      %v6421 = vld [vmem:[%s638 + $0xf0] sm:$0xff]
      %v6422 = vld [vmem:[%s638 + $0xf8] sm:$0xff]
      %v6423 = vld [vmem:[%s638 + $0x108] sm:$0xff]
      %v6424 = vld [vmem:[%s638 + $0x110] sm:$0xff]
      %v6425 = vld [vmem:[%s638 + $0x120] sm:$0xff]
      %v6426 = vld [vmem:[%s638 + $0x128] sm:$0xff]
      %v6427 = vld [vmem:[%s638 + $0x138] sm:$0xff]
      %v6428 = vld [vmem:[%s638 + $0x140] sm:$0xff]
      %v6429 = vld [vmem:[%s638 + $0x150] sm:$0xff]
      %v6430 = vld [vmem:[%s638 + $0x158] sm:$0xff]
      %v6431 = vld [vmem:[%s638 + $0x168] sm:$0xff]
      %v6432 = vld [vmem:[%s638 + $0x170] sm:$0xff]
      %v6433 = vld [vmem:[%s638 + $0x1] sm:$0xff]
      %v6434 = vld [vmem:[%s638 + $0x9] sm:$0xff]
      %v6435 = vld [vmem:[%s638 + $0x19] sm:$0xff]
      %v6436 = vld [vmem:[%s638 + $0x21] sm:$0xff]
      %v6437 = vld [vmem:[%s638 + $0x31] sm:$0xff]
      %v6438 = vld [vmem:[%s638 + $0x39] sm:$0xff]
      %v6439 = vld [vmem:[%s638 + $0x49] sm:$0xff]
      %v6440 = vld [vmem:[%s638 + $0x51] sm:$0xff]
      %v6441 = vld [vmem:[%s638 + $0x61] sm:$0xff]
      %v6442 = vld [vmem:[%s638 + $0x69] sm:$0xff]
      %v6443 = vld [vmem:[%s638 + $0x79] sm:$0xff]
      %v6444 = vld [vmem:[%s638 + $0x81] sm:$0xff]
      %v6445 = vld [vmem:[%s638 + $0x91] sm:$0xff]
      %v6446 = vld [vmem:[%s638 + $0x99] sm:$0xff]
      %v6447 = vld [vmem:[%s638 + $0xa9] sm:$0xff]
      %v6448 = vld [vmem:[%s638 + $0xb1] sm:$0xff]
      %v6449 = vld [vmem:[%s638 + $0xc1] sm:$0xff]
      %v6450 = vld [vmem:[%s638 + $0xc9] sm:$0xff]
      %v6451 = vld [vmem:[%s638 + $0xd9] sm:$0xff]
      %v6452 = vld [vmem:[%s638 + $0xe1] sm:$0xff]
      %v6453 = vld [vmem:[%s638 + $0xf1] sm:$0xff]
      %v6454 = vld [vmem:[%s638 + $0xf9] sm:$0xff]
      %v6455 = vld [vmem:[%s638 + $0x109] sm:$0xff]
      %v6456 = vld [vmem:[%s638 + $0x111] sm:$0xff]
      %v6457 = vld [vmem:[%s638 + $0x121] sm:$0xff]
      %v6458 = vld [vmem:[%s638 + $0x129] sm:$0xff]
      %v6459 = vld [vmem:[%s638 + $0x139] sm:$0xff]
      %v6460 = vld [vmem:[%s638 + $0x141] sm:$0xff]
      %v6461 = vld [vmem:[%s638 + $0x151] sm:$0xff]
      %v6462 = vld [vmem:[%s638 + $0x159] sm:$0xff]
      %v6463 = vld [vmem:[%s638 + $0x169] sm:$0xff]
      %v6464 = vld [vmem:[%s638 + $0x171] sm:$0xff]
      %v6465 = vld [vmem:[%s638 + $0x2] sm:$0xff]
      %v6466 = vld [vmem:[%s638 + $0xa] sm:$0xff]
      %v6467 = vld [vmem:[%s638 + $0x1a] sm:$0xff]
      %v6468 = vld [vmem:[%s638 + $0x22] sm:$0xff]
      %v6469 = vld [vmem:[%s638 + $0x32] sm:$0xff]
      %v6470 = vld [vmem:[%s638 + $0x3a] sm:$0xff]
      %v6471 = vld [vmem:[%s638 + $0x4a] sm:$0xff]
      %v6472 = vld [vmem:[%s638 + $0x52] sm:$0xff]
      %v6473 = vld [vmem:[%s638 + $0x62] sm:$0xff]
      %v6474 = vld [vmem:[%s638 + $0x6a] sm:$0xff]
      %v6475 = vld [vmem:[%s638 + $0x7a] sm:$0xff]
      %v6476 = vld [vmem:[%s638 + $0x82] sm:$0xff]
      %v6477 = vld [vmem:[%s638 + $0x92] sm:$0xff]
      %v6478 = vld [vmem:[%s638 + $0x9a] sm:$0xff]
      %v6479 = vld [vmem:[%s638 + $0xaa] sm:$0xff]
      %v6480 = vld [vmem:[%s638 + $0xb2] sm:$0xff]
      %v6481 = vld [vmem:[%s638 + $0xc2] sm:$0xff]
      %v6482 = vld [vmem:[%s638 + $0xca] sm:$0xff]
      %v6483 = vld [vmem:[%s638 + $0xda] sm:$0xff]
      %v6484 = vld [vmem:[%s638 + $0xe2] sm:$0xff]
      %v6485 = vld [vmem:[%s638 + $0xf2] sm:$0xff]
      %v6486 = vld [vmem:[%s638 + $0xfa] sm:$0xff]
      %v6487 = vld [vmem:[%s638 + $0x10a] sm:$0xff]
      %v6488 = vld [vmem:[%s638 + $0x112] sm:$0xff]
      %v6489 = vld [vmem:[%s638 + $0x122] sm:$0xff]
      %v6490 = vld [vmem:[%s638 + $0x12a] sm:$0xff]
      %v6491 = vld [vmem:[%s638 + $0x13a] sm:$0xff]
      %v6492 = vld [vmem:[%s638 + $0x142] sm:$0xff]
      %v6493 = vld [vmem:[%s638 + $0x152] sm:$0xff]
      %v6494 = vld [vmem:[%s638 + $0x15a] sm:$0xff]
      %v6495 = vld [vmem:[%s638 + $0x16a] sm:$0xff]
      %v6496 = vld [vmem:[%s638 + $0x172] sm:$0xff]
      %6529 = vrot.lane.b32.xlu0 %v6209, 112
      %v6530 = vpop.permute.xlu0 %6529
      %6531 = vrot.lane.b32.xlu0 %v6210, 112
      %v6532 = vpop.permute.xlu0 %6531
      %6533 = vrot.lane.b32.xlu0 %v6211, 112
      %v6534 = vpop.permute.xlu0 %6533
      %6535 = vrot.lane.b32.xlu0 %v6212, 112
      %v6536 = vpop.permute.xlu0 %6535
      %6537 = vrot.lane.b32.xlu0 %v6213, 112
      %v6538 = vpop.permute.xlu0 %6537
      %6539 = vrot.lane.b32.xlu0 %v6214, 112
      %v6540 = vpop.permute.xlu0 %6539
      %6541 = vrot.lane.b32.xlu0 %v6215, 112
      %v6542 = vpop.permute.xlu0 %6541
      %6543 = vrot.lane.b32.xlu0 %v6216, 112
      %v6544 = vpop.permute.xlu0 %6543
      %6545 = vrot.lane.b32.xlu0 %v6217, 112
      %v6546 = vpop.permute.xlu0 %6545
      %6547 = vrot.lane.b32.xlu0 %v6218, 112
      %v6548 = vpop.permute.xlu0 %6547
      %6549 = vrot.lane.b32.xlu0 %v6219, 112
      %v6550 = vpop.permute.xlu0 %6549
      %6551 = vrot.lane.b32.xlu0 %v6220, 112
      %v6552 = vpop.permute.xlu0 %6551
      %6553 = vrot.lane.b32.xlu0 %v6221, 112
      %v6554 = vpop.permute.xlu0 %6553
      %6555 = vrot.lane.b32.xlu0 %v6222, 112
      %v6556 = vpop.permute.xlu0 %6555
      %6557 = vrot.lane.b32.xlu0 %v6223, 112
      %v6558 = vpop.permute.xlu0 %6557
      %6559 = vrot.lane.b32.xlu0 %v6224, 112
      %v6560 = vpop.permute.xlu0 %6559
      %6561 = vrot.lane.b32.xlu0 %v6225, 112
      %v6562 = vpop.permute.xlu0 %6561
      %6563 = vrot.lane.b32.xlu0 %v6226, 112
      %v6564 = vpop.permute.xlu0 %6563
      %6565 = vrot.lane.b32.xlu0 %v6227, 112
      %v6566 = vpop.permute.xlu0 %6565
      %6567 = vrot.lane.b32.xlu0 %v6228, 112
      %v6568 = vpop.permute.xlu0 %6567
      %6569 = vrot.lane.b32.xlu0 %v6229, 112
      %v6570 = vpop.permute.xlu0 %6569
      %6571 = vrot.lane.b32.xlu0 %v6230, 112
      %v6572 = vpop.permute.xlu0 %6571
      %6573 = vrot.lane.b32.xlu0 %v6231, 112
      %v6574 = vpop.permute.xlu0 %6573
      %6575 = vrot.lane.b32.xlu0 %v6232, 112
      %v6576 = vpop.permute.xlu0 %6575
      %6577 = vrot.lane.b32.xlu0 %v6233, 112
      %v6578 = vpop.permute.xlu0 %6577
      %6579 = vrot.lane.b32.xlu0 %v6234, 112
      %v6580 = vpop.permute.xlu0 %6579
      %6581 = vrot.lane.b32.xlu0 %v6235, 112
      %v6582 = vpop.permute.xlu0 %6581
      %6583 = vrot.lane.b32.xlu0 %v6236, 112
      %v6584 = vpop.permute.xlu0 %6583
      %6585 = vrot.lane.b32.xlu0 %v6237, 112
      %v6586 = vpop.permute.xlu0 %6585
      %6587 = vrot.lane.b32.xlu0 %v6238, 112
      %v6588 = vpop.permute.xlu0 %6587
      %6589 = vrot.lane.b32.xlu0 %v6239, 112
      %v6590 = vpop.permute.xlu0 %6589
      %6591 = vrot.lane.b32.xlu0 %v6240, 112
      %v6592 = vpop.permute.xlu0 %6591
      %6657 = vrot.lane.b32.xlu0 %v6241, 120
      %v6658 = vpop.permute.xlu0 %6657
      %6659 = vrot.lane.b32.xlu0 %v6242, 120
      %v6660 = vpop.permute.xlu0 %6659
      %6661 = vrot.lane.b32.xlu0 %v6243, 120
      %v6662 = vpop.permute.xlu0 %6661
      %6663 = vrot.lane.b32.xlu0 %v6244, 120
      %v6664 = vpop.permute.xlu0 %6663
      %6665 = vrot.lane.b32.xlu0 %v6245, 120
      %v6666 = vpop.permute.xlu0 %6665
      %6667 = vrot.lane.b32.xlu0 %v6246, 120
      %v6668 = vpop.permute.xlu0 %6667
      %6669 = vrot.lane.b32.xlu0 %v6247, 120
      %v6670 = vpop.permute.xlu0 %6669
      %6671 = vrot.lane.b32.xlu0 %v6248, 120
      %v6672 = vpop.permute.xlu0 %6671
      %6673 = vrot.lane.b32.xlu0 %v6249, 120
      %v6674 = vpop.permute.xlu0 %6673
      %6675 = vrot.lane.b32.xlu0 %v6250, 120
      %v6676 = vpop.permute.xlu0 %6675
      %6677 = vrot.lane.b32.xlu0 %v6251, 120
      %v6678 = vpop.permute.xlu0 %6677
      %6679 = vrot.lane.b32.xlu0 %v6252, 120
      %v6680 = vpop.permute.xlu0 %6679
      %6681 = vrot.lane.b32.xlu0 %v6253, 120
      %v6682 = vpop.permute.xlu0 %6681
      %6683 = vrot.lane.b32.xlu0 %v6254, 120
      %v6684 = vpop.permute.xlu0 %6683
      %6685 = vrot.lane.b32.xlu0 %v6255, 120
      %v6686 = vpop.permute.xlu0 %6685
      %6687 = vrot.lane.b32.xlu0 %v6256, 120
      %v6688 = vpop.permute.xlu0 %6687
      %6689 = vrot.lane.b32.xlu0 %v6257, 120
      %v6690 = vpop.permute.xlu0 %6689
      %6691 = vrot.lane.b32.xlu0 %v6258, 120
      %v6692 = vpop.permute.xlu0 %6691
      %6693 = vrot.lane.b32.xlu0 %v6259, 120
      %v6694 = vpop.permute.xlu0 %6693
      %6695 = vrot.lane.b32.xlu0 %v6260, 120
      %v6696 = vpop.permute.xlu0 %6695
      %6697 = vrot.lane.b32.xlu0 %v6261, 120
      %v6698 = vpop.permute.xlu0 %6697
      %6699 = vrot.lane.b32.xlu0 %v6262, 120
      %v6700 = vpop.permute.xlu0 %6699
      %6701 = vrot.lane.b32.xlu0 %v6263, 120
      %v6702 = vpop.permute.xlu0 %6701
      %6703 = vrot.lane.b32.xlu0 %v6264, 120
      %v6704 = vpop.permute.xlu0 %6703
      %6705 = vrot.lane.b32.xlu0 %v6265, 120
      %v6706 = vpop.permute.xlu0 %6705
      %6707 = vrot.lane.b32.xlu0 %v6266, 120
      %v6708 = vpop.permute.xlu0 %6707
      %6709 = vrot.lane.b32.xlu0 %v6267, 120
      %v6710 = vpop.permute.xlu0 %6709
      %6711 = vrot.lane.b32.xlu0 %v6268, 120
      %v6712 = vpop.permute.xlu0 %6711
      %6713 = vrot.lane.b32.xlu0 %v6269, 120
      %v6714 = vpop.permute.xlu0 %6713
      %6715 = vrot.lane.b32.xlu0 %v6270, 120
      %v6716 = vpop.permute.xlu0 %6715
      %6717 = vrot.lane.b32.xlu0 %v6271, 120
      %v6718 = vpop.permute.xlu0 %6717
      %6719 = vrot.lane.b32.xlu0 %v6272, 120
      %v6720 = vpop.permute.xlu0 %6719
      %6785 = vrot.lane.b32.xlu0 %v6305, 8
      %v6786 = vpop.permute.xlu0 %6785
      %6787 = vrot.lane.b32.xlu0 %v6306, 8
      %v6788 = vpop.permute.xlu0 %6787
      %6789 = vrot.lane.b32.xlu0 %v6307, 8
      %v6790 = vpop.permute.xlu0 %6789
      %6791 = vrot.lane.b32.xlu0 %v6308, 8
      %v6792 = vpop.permute.xlu0 %6791
      %6793 = vrot.lane.b32.xlu0 %v6309, 8
      %v6794 = vpop.permute.xlu0 %6793
      %6795 = vrot.lane.b32.xlu0 %v6310, 8
      %v6796 = vpop.permute.xlu0 %6795
      %6797 = vrot.lane.b32.xlu0 %v6311, 8
      %v6798 = vpop.permute.xlu0 %6797
      %6799 = vrot.lane.b32.xlu0 %v6312, 8
      %v6800 = vpop.permute.xlu0 %6799
      %6801 = vrot.lane.b32.xlu0 %v6313, 8
      %v6802 = vpop.permute.xlu0 %6801
      %6803 = vrot.lane.b32.xlu0 %v6314, 8
      %v6804 = vpop.permute.xlu0 %6803
      %6805 = vrot.lane.b32.xlu0 %v6315, 8
      %v6806 = vpop.permute.xlu0 %6805
      %6807 = vrot.lane.b32.xlu0 %v6316, 8
      %v6808 = vpop.permute.xlu0 %6807
      %6809 = vrot.lane.b32.xlu0 %v6317, 8
      %v6810 = vpop.permute.xlu0 %6809
      %6811 = vrot.lane.b32.xlu0 %v6318, 8
      %v6812 = vpop.permute.xlu0 %6811
      %6813 = vrot.lane.b32.xlu0 %v6319, 8
      %v6814 = vpop.permute.xlu0 %6813
      %6815 = vrot.lane.b32.xlu0 %v6320, 8
      %v6816 = vpop.permute.xlu0 %6815
      %6817 = vrot.lane.b32.xlu0 %v6321, 8
      %v6818 = vpop.permute.xlu0 %6817
      %6819 = vrot.lane.b32.xlu0 %v6322, 8
      %v6820 = vpop.permute.xlu0 %6819
      %6821 = vrot.lane.b32.xlu0 %v6323, 8
      %v6822 = vpop.permute.xlu0 %6821
      %6823 = vrot.lane.b32.xlu0 %v6324, 8
      %v6824 = vpop.permute.xlu0 %6823
      %6825 = vrot.lane.b32.xlu0 %v6325, 8
      %v6826 = vpop.permute.xlu0 %6825
      %6827 = vrot.lane.b32.xlu0 %v6326, 8
      %v6828 = vpop.permute.xlu0 %6827
      %6829 = vrot.lane.b32.xlu0 %v6327, 8
      %v6830 = vpop.permute.xlu0 %6829
      %6831 = vrot.lane.b32.xlu0 %v6328, 8
      %v6832 = vpop.permute.xlu0 %6831
      %6833 = vrot.lane.b32.xlu0 %v6329, 8
      %v6834 = vpop.permute.xlu0 %6833
      %6835 = vrot.lane.b32.xlu0 %v6330, 8
      %v6836 = vpop.permute.xlu0 %6835
      %6837 = vrot.lane.b32.xlu0 %v6331, 8
      %v6838 = vpop.permute.xlu0 %6837
      %6839 = vrot.lane.b32.xlu0 %v6332, 8
      %v6840 = vpop.permute.xlu0 %6839
      %6841 = vrot.lane.b32.xlu0 %v6333, 8
      %v6842 = vpop.permute.xlu0 %6841
      %6843 = vrot.lane.b32.xlu0 %v6334, 8
      %v6844 = vpop.permute.xlu0 %6843
      %6845 = vrot.lane.b32.xlu0 %v6335, 8
      %v6846 = vpop.permute.xlu0 %6845
      %6847 = vrot.lane.b32.xlu0 %v6336, 8
      %v6848 = vpop.permute.xlu0 %6847
      %6913 = vrot.lane.b32.xlu0 %v6337, 16
      %v6914 = vpop.permute.xlu0 %6913
      %6915 = vrot.lane.b32.xlu0 %v6338, 16
      %v6916 = vpop.permute.xlu0 %6915
      %6917 = vrot.lane.b32.xlu0 %v6339, 16
      %v6918 = vpop.permute.xlu0 %6917
      %6919 = vrot.lane.b32.xlu0 %v6340, 16
      %v6920 = vpop.permute.xlu0 %6919
      %6921 = vrot.lane.b32.xlu0 %v6341, 16
      %v6922 = vpop.permute.xlu0 %6921
      %6923 = vrot.lane.b32.xlu0 %v6342, 16
      %v6924 = vpop.permute.xlu0 %6923
      %6925 = vrot.lane.b32.xlu0 %v6343, 16
      %v6926 = vpop.permute.xlu0 %6925
      %6927 = vrot.lane.b32.xlu0 %v6344, 16
      %v6928 = vpop.permute.xlu0 %6927
      %6929 = vrot.lane.b32.xlu0 %v6345, 16
      %v6930 = vpop.permute.xlu0 %6929
      %6931 = vrot.lane.b32.xlu0 %v6346, 16
      %v6932 = vpop.permute.xlu0 %6931
      %6933 = vrot.lane.b32.xlu0 %v6347, 16
      %v6934 = vpop.permute.xlu0 %6933
      %6935 = vrot.lane.b32.xlu0 %v6348, 16
      %v6936 = vpop.permute.xlu0 %6935
      %6937 = vrot.lane.b32.xlu0 %v6349, 16
      %v6938 = vpop.permute.xlu0 %6937
      %6939 = vrot.lane.b32.xlu0 %v6350, 16
      %v6940 = vpop.permute.xlu0 %6939
      %6941 = vrot.lane.b32.xlu0 %v6351, 16
      %v6942 = vpop.permute.xlu0 %6941
      %6943 = vrot.lane.b32.xlu0 %v6352, 16
      %v6944 = vpop.permute.xlu0 %6943
      %6945 = vrot.lane.b32.xlu0 %v6353, 16
      %v6946 = vpop.permute.xlu0 %6945
      %6947 = vrot.lane.b32.xlu0 %v6354, 16
      %v6948 = vpop.permute.xlu0 %6947
      %6949 = vrot.lane.b32.xlu0 %v6355, 16
      %v6950 = vpop.permute.xlu0 %6949
      %6951 = vrot.lane.b32.xlu0 %v6356, 16
      %v6952 = vpop.permute.xlu0 %6951
      %6953 = vrot.lane.b32.xlu0 %v6357, 16
      %v6954 = vpop.permute.xlu0 %6953
      %6955 = vrot.lane.b32.xlu0 %v6358, 16
      %v6956 = vpop.permute.xlu0 %6955
      %6957 = vrot.lane.b32.xlu0 %v6359, 16
      %v6958 = vpop.permute.xlu0 %6957
      %6959 = vrot.lane.b32.xlu0 %v6360, 16
      %v6960 = vpop.permute.xlu0 %6959
      %6961 = vrot.lane.b32.xlu0 %v6361, 16
      %v6962 = vpop.permute.xlu0 %6961
      %6963 = vrot.lane.b32.xlu0 %v6362, 16
      %v6964 = vpop.permute.xlu0 %6963
      %6965 = vrot.lane.b32.xlu0 %v6363, 16
      %v6966 = vpop.permute.xlu0 %6965
      %6967 = vrot.lane.b32.xlu0 %v6364, 16
      %v6968 = vpop.permute.xlu0 %6967
      %6969 = vrot.lane.b32.xlu0 %v6365, 16
      %v6970 = vpop.permute.xlu0 %6969
      %6971 = vrot.lane.b32.xlu0 %v6366, 16
      %v6972 = vpop.permute.xlu0 %6971
      %6973 = vrot.lane.b32.xlu0 %v6367, 16
      %v6974 = vpop.permute.xlu0 %6973
      %6975 = vrot.lane.b32.xlu0 %v6368, 16
      %v6976 = vpop.permute.xlu0 %6975
      %7041 = vrot.lane.b32.xlu0 %v6369, 24
      %v7042 = vpop.permute.xlu0 %7041
      %7043 = vrot.lane.b32.xlu0 %v6370, 24
      %v7044 = vpop.permute.xlu0 %7043
      %7045 = vrot.lane.b32.xlu0 %v6371, 24
      %v7046 = vpop.permute.xlu0 %7045
      %7047 = vrot.lane.b32.xlu0 %v6372, 24
      %v7048 = vpop.permute.xlu0 %7047
      %7049 = vrot.lane.b32.xlu0 %v6373, 24
      %v7050 = vpop.permute.xlu0 %7049
      %7051 = vrot.lane.b32.xlu0 %v6374, 24
      %v7052 = vpop.permute.xlu0 %7051
      %7053 = vrot.lane.b32.xlu0 %v6375, 24
      %v7054 = vpop.permute.xlu0 %7053
      %7055 = vrot.lane.b32.xlu0 %v6376, 24
      %v7056 = vpop.permute.xlu0 %7055
      %7057 = vrot.lane.b32.xlu0 %v6377, 24
      %v7058 = vpop.permute.xlu0 %7057
      %7059 = vrot.lane.b32.xlu0 %v6378, 24
      %v7060 = vpop.permute.xlu0 %7059
      %7061 = vrot.lane.b32.xlu0 %v6379, 24
      %v7062 = vpop.permute.xlu0 %7061
      %7063 = vrot.lane.b32.xlu0 %v6380, 24
      %v7064 = vpop.permute.xlu0 %7063
      %7065 = vrot.lane.b32.xlu0 %v6381, 24
      %v7066 = vpop.permute.xlu0 %7065
      %7067 = vrot.lane.b32.xlu0 %v6382, 24
      %v7068 = vpop.permute.xlu0 %7067
      %7069 = vrot.lane.b32.xlu0 %v6383, 24
      %v7070 = vpop.permute.xlu0 %7069
      %7071 = vrot.lane.b32.xlu0 %v6384, 24
      %v7072 = vpop.permute.xlu0 %7071
      %7073 = vrot.lane.b32.xlu0 %v6385, 24
      %v7074 = vpop.permute.xlu0 %7073
      %7075 = vrot.lane.b32.xlu0 %v6386, 24
      %v7076 = vpop.permute.xlu0 %7075
      %7077 = vrot.lane.b32.xlu0 %v6387, 24
      %v7078 = vpop.permute.xlu0 %7077
      %7079 = vrot.lane.b32.xlu0 %v6388, 24
      %v7080 = vpop.permute.xlu0 %7079
      %7081 = vrot.lane.b32.xlu0 %v6389, 24
      %v7082 = vpop.permute.xlu0 %7081
      %7083 = vrot.lane.b32.xlu0 %v6390, 24
      %v7084 = vpop.permute.xlu0 %7083
      %7085 = vrot.lane.b32.xlu0 %v6391, 24
      %v7086 = vpop.permute.xlu0 %7085
      %7087 = vrot.lane.b32.xlu0 %v6392, 24
      %v7088 = vpop.permute.xlu0 %7087
      %7089 = vrot.lane.b32.xlu0 %v6393, 24
      %v7090 = vpop.permute.xlu0 %7089
      %7091 = vrot.lane.b32.xlu0 %v6394, 24
      %v7092 = vpop.permute.xlu0 %7091
      %7093 = vrot.lane.b32.xlu0 %v6395, 24
      %v7094 = vpop.permute.xlu0 %7093
      %7095 = vrot.lane.b32.xlu0 %v6396, 24
      %v7096 = vpop.permute.xlu0 %7095
      %7097 = vrot.lane.b32.xlu0 %v6397, 24
      %v7098 = vpop.permute.xlu0 %7097
      %7099 = vrot.lane.b32.xlu0 %v6398, 24
      %v7100 = vpop.permute.xlu0 %7099
      %7101 = vrot.lane.b32.xlu0 %v6399, 24
      %v7102 = vpop.permute.xlu0 %7101
      %7103 = vrot.lane.b32.xlu0 %v6400, 24
      %v7104 = vpop.permute.xlu0 %7103
      %7169 = vrot.lane.b32.xlu0 %v6401, 32
      %v7170 = vpop.permute.xlu0 %7169
      %7171 = vrot.lane.b32.xlu0 %v6402, 32
      %v7172 = vpop.permute.xlu0 %7171
      %7173 = vrot.lane.b32.xlu0 %v6403, 32
      %v7174 = vpop.permute.xlu0 %7173
      %7175 = vrot.lane.b32.xlu0 %v6404, 32
      %v7176 = vpop.permute.xlu0 %7175
      %7177 = vrot.lane.b32.xlu0 %v6405, 32
      %v7178 = vpop.permute.xlu0 %7177
      %7179 = vrot.lane.b32.xlu0 %v6406, 32
      %v7180 = vpop.permute.xlu0 %7179
      %7181 = vrot.lane.b32.xlu0 %v6407, 32
      %v7182 = vpop.permute.xlu0 %7181
      %7183 = vrot.lane.b32.xlu0 %v6408, 32
      %v7184 = vpop.permute.xlu0 %7183
      %7185 = vrot.lane.b32.xlu0 %v6409, 32
      %v7186 = vpop.permute.xlu0 %7185
      %7187 = vrot.lane.b32.xlu0 %v6410, 32
      %v7188 = vpop.permute.xlu0 %7187
      %7189 = vrot.lane.b32.xlu0 %v6411, 32
      %v7190 = vpop.permute.xlu0 %7189
      %7191 = vrot.lane.b32.xlu0 %v6412, 32
      %v7192 = vpop.permute.xlu0 %7191
      %7193 = vrot.lane.b32.xlu0 %v6413, 32
      %v7194 = vpop.permute.xlu0 %7193
      %7195 = vrot.lane.b32.xlu0 %v6414, 32
      %v7196 = vpop.permute.xlu0 %7195
      %7197 = vrot.lane.b32.xlu0 %v6415, 32
      %v7198 = vpop.permute.xlu0 %7197
      %7199 = vrot.lane.b32.xlu0 %v6416, 32
      %v7200 = vpop.permute.xlu0 %7199
      %7201 = vrot.lane.b32.xlu0 %v6417, 32
      %v7202 = vpop.permute.xlu0 %7201
      %7203 = vrot.lane.b32.xlu0 %v6418, 32
      %v7204 = vpop.permute.xlu0 %7203
      %7205 = vrot.lane.b32.xlu0 %v6419, 32
      %v7206 = vpop.permute.xlu0 %7205
      %7207 = vrot.lane.b32.xlu0 %v6420, 32
      %v7208 = vpop.permute.xlu0 %7207
      %7209 = vrot.lane.b32.xlu0 %v6421, 32
      %v7210 = vpop.permute.xlu0 %7209
      %7211 = vrot.lane.b32.xlu0 %v6422, 32
      %v7212 = vpop.permute.xlu0 %7211
      %7213 = vrot.lane.b32.xlu0 %v6423, 32
      %v7214 = vpop.permute.xlu0 %7213
      %7215 = vrot.lane.b32.xlu0 %v6424, 32
      %v7216 = vpop.permute.xlu0 %7215
      %7217 = vrot.lane.b32.xlu0 %v6425, 32
      %v7218 = vpop.permute.xlu0 %7217
      %7219 = vrot.lane.b32.xlu0 %v6426, 32
      %v7220 = vpop.permute.xlu0 %7219
      %7221 = vrot.lane.b32.xlu0 %v6427, 32
      %v7222 = vpop.permute.xlu0 %7221
      %7223 = vrot.lane.b32.xlu0 %v6428, 32
      %v7224 = vpop.permute.xlu0 %7223
      %7225 = vrot.lane.b32.xlu0 %v6429, 32
      %v7226 = vpop.permute.xlu0 %7225
      %7227 = vrot.lane.b32.xlu0 %v6430, 32
      %v7228 = vpop.permute.xlu0 %7227
      %7229 = vrot.lane.b32.xlu0 %v6431, 32
      %v7230 = vpop.permute.xlu0 %7229
      %7231 = vrot.lane.b32.xlu0 %v6432, 32
      %v7232 = vpop.permute.xlu0 %7231
      %7297 = vrot.lane.b32.xlu0 %v6433, 40
      %v7298 = vpop.permute.xlu0 %7297
      %7299 = vrot.lane.b32.xlu0 %v6434, 40
      %v7300 = vpop.permute.xlu0 %7299
      %7301 = vrot.lane.b32.xlu0 %v6435, 40
      %v7302 = vpop.permute.xlu0 %7301
      %7303 = vrot.lane.b32.xlu0 %v6436, 40
      %v7304 = vpop.permute.xlu0 %7303
      %7305 = vrot.lane.b32.xlu0 %v6437, 40
      %v7306 = vpop.permute.xlu0 %7305
      %7307 = vrot.lane.b32.xlu0 %v6438, 40
      %v7308 = vpop.permute.xlu0 %7307
      %7309 = vrot.lane.b32.xlu0 %v6439, 40
      %v7310 = vpop.permute.xlu0 %7309
      %7311 = vrot.lane.b32.xlu0 %v6440, 40
      %v7312 = vpop.permute.xlu0 %7311
      %7313 = vrot.lane.b32.xlu0 %v6441, 40
      %v7314 = vpop.permute.xlu0 %7313
      %7315 = vrot.lane.b32.xlu0 %v6442, 40
      %v7316 = vpop.permute.xlu0 %7315
      %7317 = vrot.lane.b32.xlu0 %v6443, 40
      %v7318 = vpop.permute.xlu0 %7317
      %7319 = vrot.lane.b32.xlu0 %v6444, 40
      %v7320 = vpop.permute.xlu0 %7319
      %7321 = vrot.lane.b32.xlu0 %v6445, 40
      %v7322 = vpop.permute.xlu0 %7321
      %7323 = vrot.lane.b32.xlu0 %v6446, 40
      %v7324 = vpop.permute.xlu0 %7323
      %7325 = vrot.lane.b32.xlu0 %v6447, 40
      %v7326 = vpop.permute.xlu0 %7325
      %7327 = vrot.lane.b32.xlu0 %v6448, 40
      %v7328 = vpop.permute.xlu0 %7327
      %7329 = vrot.lane.b32.xlu0 %v6449, 40
      %v7330 = vpop.permute.xlu0 %7329
      %7331 = vrot.lane.b32.xlu0 %v6450, 40
      %v7332 = vpop.permute.xlu0 %7331
      %7333 = vrot.lane.b32.xlu0 %v6451, 40
      %v7334 = vpop.permute.xlu0 %7333
      %7335 = vrot.lane.b32.xlu0 %v6452, 40
      %v7336 = vpop.permute.xlu0 %7335
      %7337 = vrot.lane.b32.xlu0 %v6453, 40
      %v7338 = vpop.permute.xlu0 %7337
      %7339 = vrot.lane.b32.xlu0 %v6454, 40
      %v7340 = vpop.permute.xlu0 %7339
      %7341 = vrot.lane.b32.xlu0 %v6455, 40
      %v7342 = vpop.permute.xlu0 %7341
      %7343 = vrot.lane.b32.xlu0 %v6456, 40
      %v7344 = vpop.permute.xlu0 %7343
      %7345 = vrot.lane.b32.xlu0 %v6457, 40
      %v7346 = vpop.permute.xlu0 %7345
      %7347 = vrot.lane.b32.xlu0 %v6458, 40
      %v7348 = vpop.permute.xlu0 %7347
      %7349 = vrot.lane.b32.xlu0 %v6459, 40
      %v7350 = vpop.permute.xlu0 %7349
      %7351 = vrot.lane.b32.xlu0 %v6460, 40
      %v7352 = vpop.permute.xlu0 %7351
      %7353 = vrot.lane.b32.xlu0 %v6461, 40
      %v7354 = vpop.permute.xlu0 %7353
      %7355 = vrot.lane.b32.xlu0 %v6462, 40
      %v7356 = vpop.permute.xlu0 %7355
      %7357 = vrot.lane.b32.xlu0 %v6463, 40
      %v7358 = vpop.permute.xlu0 %7357
      %7359 = vrot.lane.b32.xlu0 %v6464, 40
      %v7360 = vpop.permute.xlu0 %7359
      %7425 = vrot.lane.b32.xlu0 %v6465, 48
      %v7426 = vpop.permute.xlu0 %7425
      %7427 = vrot.lane.b32.xlu0 %v6466, 48
      %v7428 = vpop.permute.xlu0 %7427
      %7429 = vrot.lane.b32.xlu0 %v6467, 48
      %v7430 = vpop.permute.xlu0 %7429
      %7431 = vrot.lane.b32.xlu0 %v6468, 48
      %v7432 = vpop.permute.xlu0 %7431
      %7433 = vrot.lane.b32.xlu0 %v6469, 48
      %v7434 = vpop.permute.xlu0 %7433
      %7435 = vrot.lane.b32.xlu0 %v6470, 48
      %v7436 = vpop.permute.xlu0 %7435
      %7437 = vrot.lane.b32.xlu0 %v6471, 48
      %v7438 = vpop.permute.xlu0 %7437
      %7439 = vrot.lane.b32.xlu0 %v6472, 48
      %v7440 = vpop.permute.xlu0 %7439
      %7441 = vrot.lane.b32.xlu0 %v6473, 48
      %v7442 = vpop.permute.xlu0 %7441
      %7443 = vrot.lane.b32.xlu0 %v6474, 48
      %v7444 = vpop.permute.xlu0 %7443
      %7445 = vrot.lane.b32.xlu0 %v6475, 48
      %v7446 = vpop.permute.xlu0 %7445
      %7447 = vrot.lane.b32.xlu0 %v6476, 48
      %v7448 = vpop.permute.xlu0 %7447
      %7449 = vrot.lane.b32.xlu0 %v6477, 48
      %v7450 = vpop.permute.xlu0 %7449
      %7451 = vrot.lane.b32.xlu0 %v6478, 48
      %v7452 = vpop.permute.xlu0 %7451
      %7453 = vrot.lane.b32.xlu0 %v6479, 48
      %v7454 = vpop.permute.xlu0 %7453
      %7455 = vrot.lane.b32.xlu0 %v6480, 48
      %v7456 = vpop.permute.xlu0 %7455
      %7457 = vrot.lane.b32.xlu0 %v6481, 48
      %v7458 = vpop.permute.xlu0 %7457
      %7459 = vrot.lane.b32.xlu0 %v6482, 48
      %v7460 = vpop.permute.xlu0 %7459
      %7461 = vrot.lane.b32.xlu0 %v6483, 48
      %v7462 = vpop.permute.xlu0 %7461
      %7463 = vrot.lane.b32.xlu0 %v6484, 48
      %v7464 = vpop.permute.xlu0 %7463
      %7465 = vrot.lane.b32.xlu0 %v6485, 48
      %v7466 = vpop.permute.xlu0 %7465
      %7467 = vrot.lane.b32.xlu0 %v6486, 48
      %v7468 = vpop.permute.xlu0 %7467
      %7469 = vrot.lane.b32.xlu0 %v6487, 48
      %v7470 = vpop.permute.xlu0 %7469
      %7471 = vrot.lane.b32.xlu0 %v6488, 48
      %v7472 = vpop.permute.xlu0 %7471
      %7473 = vrot.lane.b32.xlu0 %v6489, 48
      %v7474 = vpop.permute.xlu0 %7473
      %7475 = vrot.lane.b32.xlu0 %v6490, 48
      %v7476 = vpop.permute.xlu0 %7475
      %7477 = vrot.lane.b32.xlu0 %v6491, 48
      %v7478 = vpop.permute.xlu0 %7477
      %7479 = vrot.lane.b32.xlu0 %v6492, 48
      %v7480 = vpop.permute.xlu0 %7479
      %7481 = vrot.lane.b32.xlu0 %v6493, 48
      %v7482 = vpop.permute.xlu0 %7481
      %7483 = vrot.lane.b32.xlu0 %v6494, 48
      %v7484 = vpop.permute.xlu0 %7483
      %7485 = vrot.lane.b32.xlu0 %v6495, 48
      %v7486 = vpop.permute.xlu0 %7485
      %7487 = vrot.lane.b32.xlu0 %v6496, 48
      %v7488 = vpop.permute.xlu0 %7487
      %v7521 = vsel %vm413, %v6530, %v6658
      %v7522 = vsel %vm413, %v6532, %v6660
      %v7523 = vsel %vm413, %v6534, %v6662
      %v7524 = vsel %vm413, %v6536, %v6664
      %v7525 = vsel %vm413, %v6538, %v6666
      %v7526 = vsel %vm413, %v6540, %v6668
      %v7527 = vsel %vm413, %v6542, %v6670
      %v7528 = vsel %vm413, %v6544, %v6672
      %v7529 = vsel %vm413, %v6546, %v6674
      %v7530 = vsel %vm413, %v6548, %v6676
      %v7531 = vsel %vm413, %v6550, %v6678
      %v7532 = vsel %vm413, %v6552, %v6680
      %v7533 = vsel %vm413, %v6554, %v6682
      %v7534 = vsel %vm413, %v6556, %v6684
      %v7535 = vsel %vm413, %v6558, %v6686
      %v7536 = vsel %vm413, %v6560, %v6688
      %v7537 = vsel %vm413, %v6562, %v6690
      %v7538 = vsel %vm413, %v6564, %v6692
      %v7539 = vsel %vm413, %v6566, %v6694
      %v7540 = vsel %vm413, %v6568, %v6696
      %v7541 = vsel %vm413, %v6570, %v6698
      %v7542 = vsel %vm413, %v6572, %v6700
      %v7543 = vsel %vm413, %v6574, %v6702
      %v7544 = vsel %vm413, %v6576, %v6704
      %v7545 = vsel %vm413, %v6578, %v6706
      %v7546 = vsel %vm413, %v6580, %v6708
      %v7547 = vsel %vm413, %v6582, %v6710
      %v7548 = vsel %vm413, %v6584, %v6712
      %v7549 = vsel %vm413, %v6586, %v6714
      %v7550 = vsel %vm413, %v6588, %v6716
      %v7551 = vsel %vm413, %v6590, %v6718
      %v7552 = vsel %vm413, %v6592, %v6720
      %v7553 = vsel %vm1791, %v7521, %v6273
      %v7554 = vsel %vm1791, %v7522, %v6274
      %v7555 = vsel %vm1791, %v7523, %v6275
      %v7556 = vsel %vm1791, %v7524, %v6276
      %v7557 = vsel %vm1791, %v7525, %v6277
      %v7558 = vsel %vm1791, %v7526, %v6278
      %v7559 = vsel %vm1791, %v7527, %v6279
      %v7560 = vsel %vm1791, %v7528, %v6280
      %v7561 = vsel %vm1791, %v7529, %v6281
      %v7562 = vsel %vm1791, %v7530, %v6282
      %v7563 = vsel %vm1791, %v7531, %v6283
      %v7564 = vsel %vm1791, %v7532, %v6284
      %v7565 = vsel %vm1791, %v7533, %v6285
      %v7566 = vsel %vm1791, %v7534, %v6286
      %v7567 = vsel %vm1791, %v7535, %v6287
      %v7568 = vsel %vm1791, %v7536, %v6288
      %v7569 = vsel %vm1791, %v7537, %v6289
      %v7570 = vsel %vm1791, %v7538, %v6290
      %v7571 = vsel %vm1791, %v7539, %v6291
      %v7572 = vsel %vm1791, %v7540, %v6292
      %v7573 = vsel %vm1791, %v7541, %v6293
      %v7574 = vsel %vm1791, %v7542, %v6294
      %v7575 = vsel %vm1791, %v7543, %v6295
      %v7576 = vsel %vm1791, %v7544, %v6296
      %v7577 = vsel %vm1791, %v7545, %v6297
      %v7578 = vsel %vm1791, %v7546, %v6298
      %v7579 = vsel %vm1791, %v7547, %v6299
      %v7580 = vsel %vm1791, %v7548, %v6300
      %v7581 = vsel %vm1791, %v7549, %v6301
      %v7582 = vsel %vm1791, %v7550, %v6302
      %v7583 = vsel %vm1791, %v7551, %v6303
      %v7584 = vsel %vm1791, %v7552, %v6304
      %v7585 = vsel %vm334, %v7553, %v6786
      %v7586 = vsel %vm334, %v7554, %v6788
      %v7587 = vsel %vm334, %v7555, %v6790
      %v7588 = vsel %vm334, %v7556, %v6792
      %v7589 = vsel %vm334, %v7557, %v6794
      %v7590 = vsel %vm334, %v7558, %v6796
      %v7591 = vsel %vm334, %v7559, %v6798
      %v7592 = vsel %vm334, %v7560, %v6800
      %v7593 = vsel %vm334, %v7561, %v6802
      %v7594 = vsel %vm334, %v7562, %v6804
      %v7595 = vsel %vm334, %v7563, %v6806
      %v7596 = vsel %vm334, %v7564, %v6808
      %v7597 = vsel %vm334, %v7565, %v6810
      %v7598 = vsel %vm334, %v7566, %v6812
      %v7599 = vsel %vm334, %v7567, %v6814
      %v7600 = vsel %vm334, %v7568, %v6816
      %v7601 = vsel %vm334, %v7569, %v6818
      %v7602 = vsel %vm334, %v7570, %v6820
      %v7603 = vsel %vm334, %v7571, %v6822
      %v7604 = vsel %vm334, %v7572, %v6824
      %v7605 = vsel %vm334, %v7573, %v6826
      %v7606 = vsel %vm334, %v7574, %v6828
      %v7607 = vsel %vm334, %v7575, %v6830
      %v7608 = vsel %vm334, %v7576, %v6832
      %v7609 = vsel %vm334, %v7577, %v6834
      %v7610 = vsel %vm334, %v7578, %v6836
      %v7611 = vsel %vm334, %v7579, %v6838
      %v7612 = vsel %vm334, %v7580, %v6840
      %v7613 = vsel %vm334, %v7581, %v6842
      %v7614 = vsel %vm334, %v7582, %v6844
      %v7615 = vsel %vm334, %v7583, %v6846
      %v7616 = vsel %vm334, %v7584, %v6848
      %v7617 = vsel %vm1856, %v7585, %v6914
      %v7618 = vsel %vm1856, %v7586, %v6916
      %v7619 = vsel %vm1856, %v7587, %v6918
      %v7620 = vsel %vm1856, %v7588, %v6920
      %v7621 = vsel %vm1856, %v7589, %v6922
      %v7622 = vsel %vm1856, %v7590, %v6924
      %v7623 = vsel %vm1856, %v7591, %v6926
      %v7624 = vsel %vm1856, %v7592, %v6928
      %v7625 = vsel %vm1856, %v7593, %v6930
      %v7626 = vsel %vm1856, %v7594, %v6932
      %v7627 = vsel %vm1856, %v7595, %v6934
      %v7628 = vsel %vm1856, %v7596, %v6936
      %v7629 = vsel %vm1856, %v7597, %v6938
      %v7630 = vsel %vm1856, %v7598, %v6940
      %v7631 = vsel %vm1856, %v7599, %v6942
      %v7632 = vsel %vm1856, %v7600, %v6944
      %v7633 = vsel %vm1856, %v7601, %v6946
      %v7634 = vsel %vm1856, %v7602, %v6948
      %v7635 = vsel %vm1856, %v7603, %v6950
      %v7636 = vsel %vm1856, %v7604, %v6952
      %v7637 = vsel %vm1856, %v7605, %v6954
      %v7638 = vsel %vm1856, %v7606, %v6956
      %v7639 = vsel %vm1856, %v7607, %v6958
      %v7640 = vsel %vm1856, %v7608, %v6960
      %v7641 = vsel %vm1856, %v7609, %v6962
      %v7642 = vsel %vm1856, %v7610, %v6964
      %v7643 = vsel %vm1856, %v7611, %v6966
      %v7644 = vsel %vm1856, %v7612, %v6968
      %v7645 = vsel %vm1856, %v7613, %v6970
      %v7646 = vsel %vm1856, %v7614, %v6972
      %v7647 = vsel %vm1856, %v7615, %v6974
      %v7648 = vsel %vm1856, %v7616, %v6976
      %v7649 = vsel %vm1889, %v7617, %v7042
      %v7650 = vsel %vm1889, %v7618, %v7044
      %v7651 = vsel %vm1889, %v7619, %v7046
      %v7652 = vsel %vm1889, %v7620, %v7048
      %v7653 = vsel %vm1889, %v7621, %v7050
      %v7654 = vsel %vm1889, %v7622, %v7052
      %v7655 = vsel %vm1889, %v7623, %v7054
      %v7656 = vsel %vm1889, %v7624, %v7056
      %v7657 = vsel %vm1889, %v7625, %v7058
      %v7658 = vsel %vm1889, %v7626, %v7060
      %v7659 = vsel %vm1889, %v7627, %v7062
      %v7660 = vsel %vm1889, %v7628, %v7064
      %v7661 = vsel %vm1889, %v7629, %v7066
      %v7662 = vsel %vm1889, %v7630, %v7068
      %v7663 = vsel %vm1889, %v7631, %v7070
      %v7664 = vsel %vm1889, %v7632, %v7072
      %v7665 = vsel %vm1889, %v7633, %v7074
      %v7666 = vsel %vm1889, %v7634, %v7076
      %v7667 = vsel %vm1889, %v7635, %v7078
      %v7668 = vsel %vm1889, %v7636, %v7080
      %v7669 = vsel %vm1889, %v7637, %v7082
      %v7670 = vsel %vm1889, %v7638, %v7084
      %v7671 = vsel %vm1889, %v7639, %v7086
      %v7672 = vsel %vm1889, %v7640, %v7088
      %v7673 = vsel %vm1889, %v7641, %v7090
      %v7674 = vsel %vm1889, %v7642, %v7092
      %v7675 = vsel %vm1889, %v7643, %v7094
      %v7676 = vsel %vm1889, %v7644, %v7096
      %v7677 = vsel %vm1889, %v7645, %v7098
      %v7678 = vsel %vm1889, %v7646, %v7100
      %v7679 = vsel %vm1889, %v7647, %v7102
      %v7680 = vsel %vm1889, %v7648, %v7104
      %v7681 = vsel %vm1922, %v7649, %v7170
      %v7682 = vsel %vm1922, %v7650, %v7172
      %v7683 = vsel %vm1922, %v7651, %v7174
      %v7684 = vsel %vm1922, %v7652, %v7176
      %v7685 = vsel %vm1922, %v7653, %v7178
      %v7686 = vsel %vm1922, %v7654, %v7180
      %v7687 = vsel %vm1922, %v7655, %v7182
      %v7688 = vsel %vm1922, %v7656, %v7184
      %v7689 = vsel %vm1922, %v7657, %v7186
      %v7690 = vsel %vm1922, %v7658, %v7188
      %v7691 = vsel %vm1922, %v7659, %v7190
      %v7692 = vsel %vm1922, %v7660, %v7192
      %v7693 = vsel %vm1922, %v7661, %v7194
      %v7694 = vsel %vm1922, %v7662, %v7196
      %v7695 = vsel %vm1922, %v7663, %v7198
      %v7696 = vsel %vm1922, %v7664, %v7200
      %v7697 = vsel %vm1922, %v7665, %v7202
      %v7698 = vsel %vm1922, %v7666, %v7204
      %v7699 = vsel %vm1922, %v7667, %v7206
      %v7700 = vsel %vm1922, %v7668, %v7208
      %v7701 = vsel %vm1922, %v7669, %v7210
      %v7702 = vsel %vm1922, %v7670, %v7212
      %v7703 = vsel %vm1922, %v7671, %v7214
      %v7704 = vsel %vm1922, %v7672, %v7216
      %v7705 = vsel %vm1922, %v7673, %v7218
      %v7706 = vsel %vm1922, %v7674, %v7220
      %v7707 = vsel %vm1922, %v7675, %v7222
      %v7708 = vsel %vm1922, %v7676, %v7224
      %v7709 = vsel %vm1922, %v7677, %v7226
      %v7710 = vsel %vm1922, %v7678, %v7228
      %v7711 = vsel %vm1922, %v7679, %v7230
      %v7712 = vsel %vm1922, %v7680, %v7232
      %v7713 = vsel %vm1955, %v7681, %v7298
      %v7714 = vsel %vm1955, %v7682, %v7300
      %v7715 = vsel %vm1955, %v7683, %v7302
      %v7716 = vsel %vm1955, %v7684, %v7304
      %v7717 = vsel %vm1955, %v7685, %v7306
      %v7718 = vsel %vm1955, %v7686, %v7308
      %v7719 = vsel %vm1955, %v7687, %v7310
      %v7720 = vsel %vm1955, %v7688, %v7312
      %v7721 = vsel %vm1955, %v7689, %v7314
      %v7722 = vsel %vm1955, %v7690, %v7316
      %v7723 = vsel %vm1955, %v7691, %v7318
      %v7724 = vsel %vm1955, %v7692, %v7320
      %v7725 = vsel %vm1955, %v7693, %v7322
      %v7726 = vsel %vm1955, %v7694, %v7324
      %v7727 = vsel %vm1955, %v7695, %v7326
      %v7728 = vsel %vm1955, %v7696, %v7328
      %v7729 = vsel %vm1955, %v7697, %v7330
      %v7730 = vsel %vm1955, %v7698, %v7332
      %v7731 = vsel %vm1955, %v7699, %v7334
      %v7732 = vsel %vm1955, %v7700, %v7336
      %v7733 = vsel %vm1955, %v7701, %v7338
      %v7734 = vsel %vm1955, %v7702, %v7340
      %v7735 = vsel %vm1955, %v7703, %v7342
      %v7736 = vsel %vm1955, %v7704, %v7344
      %v7737 = vsel %vm1955, %v7705, %v7346
      %v7738 = vsel %vm1955, %v7706, %v7348
      %v7739 = vsel %vm1955, %v7707, %v7350
      %v7740 = vsel %vm1955, %v7708, %v7352
      %v7741 = vsel %vm1955, %v7709, %v7354
      %v7742 = vsel %vm1955, %v7710, %v7356
      %v7743 = vsel %vm1955, %v7711, %v7358
      %v7744 = vsel %vm1955, %v7712, %v7360
      %v7745 = vsel %vm1988, %v7713, %v7426
      %v7746 = vsel %vm1988, %v7714, %v7428
      %v7747 = vsel %vm1988, %v7715, %v7430
      %v7748 = vsel %vm1988, %v7716, %v7432
      %v7749 = vsel %vm1988, %v7717, %v7434
      %v7750 = vsel %vm1988, %v7718, %v7436
      %v7751 = vsel %vm1988, %v7719, %v7438
      %v7752 = vsel %vm1988, %v7720, %v7440
      %v7753 = vsel %vm1988, %v7721, %v7442
      %v7754 = vsel %vm1988, %v7722, %v7444
      %v7755 = vsel %vm1988, %v7723, %v7446
      %v7756 = vsel %vm1988, %v7724, %v7448
      %v7757 = vsel %vm1988, %v7725, %v7450
      %v7758 = vsel %vm1988, %v7726, %v7452
      %v7759 = vsel %vm1988, %v7727, %v7454
      %v7760 = vsel %vm1988, %v7728, %v7456
      %v7761 = vsel %vm1988, %v7729, %v7458
      %v7762 = vsel %vm1988, %v7730, %v7460
      %v7763 = vsel %vm1988, %v7731, %v7462
      %v7764 = vsel %vm1988, %v7732, %v7464
      %v7765 = vsel %vm1988, %v7733, %v7466
      %v7766 = vsel %vm1988, %v7734, %v7468
      %v7767 = vsel %vm1988, %v7735, %v7470
      %v7768 = vsel %vm1988, %v7736, %v7472
      %v7769 = vsel %vm1988, %v7737, %v7474
      %v7770 = vsel %vm1988, %v7738, %v7476
      %v7771 = vsel %vm1988, %v7739, %v7478
      %v7772 = vsel %vm1988, %v7740, %v7480
      %v7773 = vsel %vm1988, %v7741, %v7482
      %v7774 = vsel %vm1988, %v7742, %v7484
      %v7775 = vsel %vm1988, %v7743, %v7486
      %v7776 = vsel %vm1988, %v7744, %v7488
      %7809 = vrot.lane.b32.xlu0 %v7745, 16
      %v7810 = vpop.permute.xlu0 %7809
      %7811 = vrot.lane.b32.xlu0 %v7746, 16
      %v7812 = vpop.permute.xlu0 %7811
      %7813 = vrot.lane.b32.xlu0 %v7747, 16
      %v7814 = vpop.permute.xlu0 %7813
      %7815 = vrot.lane.b32.xlu0 %v7748, 16
      %v7816 = vpop.permute.xlu0 %7815
      %7817 = vrot.lane.b32.xlu0 %v7749, 16
      %v7818 = vpop.permute.xlu0 %7817
      %7819 = vrot.lane.b32.xlu0 %v7750, 16
      %v7820 = vpop.permute.xlu0 %7819
      %7821 = vrot.lane.b32.xlu0 %v7751, 16
      %v7822 = vpop.permute.xlu0 %7821
      %7823 = vrot.lane.b32.xlu0 %v7752, 16
      %v7824 = vpop.permute.xlu0 %7823
      %7825 = vrot.lane.b32.xlu0 %v7753, 16
      %v7826 = vpop.permute.xlu0 %7825
      %7827 = vrot.lane.b32.xlu0 %v7754, 16
      %v7828 = vpop.permute.xlu0 %7827
      %7829 = vrot.lane.b32.xlu0 %v7755, 16
      %v7830 = vpop.permute.xlu0 %7829
      %7831 = vrot.lane.b32.xlu0 %v7756, 16
      %v7832 = vpop.permute.xlu0 %7831
      %7833 = vrot.lane.b32.xlu0 %v7757, 16
      %v7834 = vpop.permute.xlu0 %7833
      %7835 = vrot.lane.b32.xlu0 %v7758, 16
      %v7836 = vpop.permute.xlu0 %7835
      %7837 = vrot.lane.b32.xlu0 %v7759, 16
      %v7838 = vpop.permute.xlu0 %7837
      %7839 = vrot.lane.b32.xlu0 %v7760, 16
      %v7840 = vpop.permute.xlu0 %7839
      %7841 = vrot.lane.b32.xlu0 %v7761, 16
      %v7842 = vpop.permute.xlu0 %7841
      %7843 = vrot.lane.b32.xlu0 %v7762, 16
      %v7844 = vpop.permute.xlu0 %7843
      %7845 = vrot.lane.b32.xlu0 %v7763, 16
      %v7846 = vpop.permute.xlu0 %7845
      %7847 = vrot.lane.b32.xlu0 %v7764, 16
      %v7848 = vpop.permute.xlu0 %7847
      %7849 = vrot.lane.b32.xlu0 %v7765, 16
      %v7850 = vpop.permute.xlu0 %7849
      %7851 = vrot.lane.b32.xlu0 %v7766, 16
      %v7852 = vpop.permute.xlu0 %7851
      %7853 = vrot.lane.b32.xlu0 %v7767, 16
      %v7854 = vpop.permute.xlu0 %7853
      %7855 = vrot.lane.b32.xlu0 %v7768, 16
      %v7856 = vpop.permute.xlu0 %7855
      %7857 = vrot.lane.b32.xlu0 %v7769, 16
      %v7858 = vpop.permute.xlu0 %7857
      %7859 = vrot.lane.b32.xlu0 %v7770, 16
      %v7860 = vpop.permute.xlu0 %7859
      %7861 = vrot.lane.b32.xlu0 %v7771, 16
      %v7862 = vpop.permute.xlu0 %7861
      %7863 = vrot.lane.b32.xlu0 %v7772, 16
      %v7864 = vpop.permute.xlu0 %7863
      %7865 = vrot.lane.b32.xlu0 %v7773, 16
      %v7866 = vpop.permute.xlu0 %7865
      %7867 = vrot.lane.b32.xlu0 %v7774, 16
      %v7868 = vpop.permute.xlu0 %7867
      %7869 = vrot.lane.b32.xlu0 %v7775, 16
      %v7870 = vpop.permute.xlu0 %7869
      %7871 = vrot.lane.b32.xlu0 %v7776, 16
      %v7872 = vpop.permute.xlu0 %7871
      %vm7905 = vcmask 720000
      %7906 = vst.msk [vmem:[#allocation3 + $0x8] sm:$0xff] %vm7905, %v7810
      %7907 = vst.msk [vmem:[#allocation3 + $0x18] sm:$0xff] %vm7905, %v7812
      %7908 = vst.msk [vmem:[#allocation3 + $0x28] sm:$0xff] %vm7905, %v7814
      %7909 = vst.msk [vmem:[#allocation3 + $0x38] sm:$0xff] %vm7905, %v7816
      %7910 = vst.msk [vmem:[#allocation3 + $0x48] sm:$0xff] %vm7905, %v7818
      %7911 = vst.msk [vmem:[#allocation3 + $0x58] sm:$0xff] %vm7905, %v7820
      %7912 = vst.msk [vmem:[#allocation3 + $0x68] sm:$0xff] %vm7905, %v7822
      %7913 = vst.msk [vmem:[#allocation3 + $0x78] sm:$0xff] %vm7905, %v7824
      %7914 = vst.msk [vmem:[#allocation3 + $0x88] sm:$0xff] %vm7905, %v7826
      %7915 = vst.msk [vmem:[#allocation3 + $0x98] sm:$0xff] %vm7905, %v7828
      %7916 = vst.msk [vmem:[#allocation3 + $0xa8] sm:$0xff] %vm7905, %v7830
      %7917 = vst.msk [vmem:[#allocation3 + $0xb8] sm:$0xff] %vm7905, %v7832
      %7918 = vst.msk [vmem:[#allocation3 + $0xc8] sm:$0xff] %vm7905, %v7834
      %7919 = vst.msk [vmem:[#allocation3 + $0xd8] sm:$0xff] %vm7905, %v7836
      %7920 = vst.msk [vmem:[#allocation3 + $0xe8] sm:$0xff] %vm7905, %v7838
      %7921 = vst.msk [vmem:[#allocation3 + $0xf8] sm:$0xff] %vm7905, %v7840
      %7922 = vst.msk [vmem:[#allocation3 + $0x108] sm:$0xff] %vm7905, %v7842
      %7923 = vst.msk [vmem:[#allocation3 + $0x118] sm:$0xff] %vm7905, %v7844
      %7924 = vst.msk [vmem:[#allocation3 + $0x128] sm:$0xff] %vm7905, %v7846
      %7925 = vst.msk [vmem:[#allocation3 + $0x138] sm:$0xff] %vm7905, %v7848
      %7926 = vst.msk [vmem:[#allocation3 + $0x148] sm:$0xff] %vm7905, %v7850
      %7927 = vst.msk [vmem:[#allocation3 + $0x158] sm:$0xff] %vm7905, %v7852
      %7928 = vst.msk [vmem:[#allocation3 + $0x168] sm:$0xff] %vm7905, %v7854
      %7929 = vst.msk [vmem:[#allocation3 + $0x178] sm:$0xff] %vm7905, %v7856
      %7930 = vst.msk [vmem:[#allocation3 + $0x188] sm:$0xff] %vm7905, %v7858
      %7931 = vst.msk [vmem:[#allocation3 + $0x198] sm:$0xff] %vm7905, %v7860
      %7932 = vst.msk [vmem:[#allocation3 + $0x1a8] sm:$0xff] %vm7905, %v7862
      %7933 = vst.msk [vmem:[#allocation3 + $0x1b8] sm:$0xff] %vm7905, %v7864
      %7934 = vst.msk [vmem:[#allocation3 + $0x1c8] sm:$0xff] %vm7905, %v7866
      %7935 = vst.msk [vmem:[#allocation3 + $0x1d8] sm:$0xff] %vm7905, %v7868
      %7936 = vst.msk [vmem:[#allocation3 + $0x1e8] sm:$0xff] %vm7905, %v7870
      %7937 = vst.msk [vmem:[#allocation3 + $0x1f8] sm:$0xff] %vm7905, %v7872
      %v7938 = vld [vmem:[#allocation3] sm:$0xff]
      %v7939 = vld [vmem:[#allocation3 + $0x8] sm:$0xff]
      %v7940 = vld [vmem:[#allocation3 + $0x10] sm:$0xff]
      %v7941 = vld [vmem:[#allocation3 + $0x18] sm:$0xff]
      %v7942 = vld [vmem:[#allocation3 + $0x20] sm:$0xff]
      %v7943 = vld [vmem:[#allocation3 + $0x28] sm:$0xff]
      %v7944 = vld [vmem:[#allocation3 + $0x30] sm:$0xff]
      %v7945 = vld [vmem:[#allocation3 + $0x38] sm:$0xff]
      %v7946 = vld [vmem:[#allocation3 + $0x40] sm:$0xff]
      %v7947 = vld [vmem:[#allocation3 + $0x48] sm:$0xff]
      %v7948 = vld [vmem:[#allocation3 + $0x50] sm:$0xff]
      %v7949 = vld [vmem:[#allocation3 + $0x58] sm:$0xff]
      %v7950 = vld [vmem:[#allocation3 + $0x60] sm:$0xff]
      %v7951 = vld [vmem:[#allocation3 + $0x68] sm:$0xff]
      %v7952 = vld [vmem:[#allocation3 + $0x70] sm:$0xff]
      %v7953 = vld [vmem:[#allocation3 + $0x78] sm:$0xff]
      %v7954 = vld [vmem:[#allocation3 + $0x80] sm:$0xff]
      %v7955 = vld [vmem:[#allocation3 + $0x88] sm:$0xff]
      %v7956 = vld [vmem:[#allocation3 + $0x90] sm:$0xff]
      %v7957 = vld [vmem:[#allocation3 + $0x98] sm:$0xff]
      %v7958 = vld [vmem:[#allocation3 + $0xa0] sm:$0xff]
      %v7959 = vld [vmem:[#allocation3 + $0xa8] sm:$0xff]
      %v7960 = vld [vmem:[#allocation3 + $0xb0] sm:$0xff]
      %v7961 = vld [vmem:[#allocation3 + $0xb8] sm:$0xff]
      %v7962 = vld [vmem:[#allocation3 + $0xc0] sm:$0xff]
      %v7963 = vld [vmem:[#allocation3 + $0xc8] sm:$0xff]
      %v7964 = vld [vmem:[#allocation3 + $0xd0] sm:$0xff]
      %v7965 = vld [vmem:[#allocation3 + $0xd8] sm:$0xff]
      %v7966 = vld [vmem:[#allocation3 + $0xe0] sm:$0xff]
      %v7967 = vld [vmem:[#allocation3 + $0xe8] sm:$0xff]
      %v7968 = vld [vmem:[#allocation3 + $0xf0] sm:$0xff]
      %v7969 = vld [vmem:[#allocation3 + $0xf8] sm:$0xff]
      %v7970 = vld [vmem:[#allocation3 + $0x100] sm:$0xff]
      %v7971 = vld [vmem:[#allocation3 + $0x108] sm:$0xff]
      %v7972 = vld [vmem:[#allocation3 + $0x110] sm:$0xff]
      %v7973 = vld [vmem:[#allocation3 + $0x118] sm:$0xff]
      %v7974 = vld [vmem:[#allocation3 + $0x120] sm:$0xff]
      %v7975 = vld [vmem:[#allocation3 + $0x128] sm:$0xff]
      %v7976 = vld [vmem:[#allocation3 + $0x130] sm:$0xff]
      %v7977 = vld [vmem:[#allocation3 + $0x138] sm:$0xff]
      %v7978 = vld [vmem:[#allocation3 + $0x140] sm:$0xff]
      %v7979 = vld [vmem:[#allocation3 + $0x148] sm:$0xff]
      %v7980 = vld [vmem:[#allocation3 + $0x150] sm:$0xff]
      %v7981 = vld [vmem:[#allocation3 + $0x158] sm:$0xff]
      %v7982 = vld [vmem:[#allocation3 + $0x160] sm:$0xff]
      %v7983 = vld [vmem:[#allocation3 + $0x168] sm:$0xff]
      %v7984 = vld [vmem:[#allocation3 + $0x170] sm:$0xff]
      %v7985 = vld [vmem:[#allocation3 + $0x178] sm:$0xff]
      %v7986 = vld [vmem:[#allocation3 + $0x180] sm:$0xff]
      %v7987 = vld [vmem:[#allocation3 + $0x188] sm:$0xff]
      %v7988 = vld [vmem:[#allocation3 + $0x190] sm:$0xff]
      %v7989 = vld [vmem:[#allocation3 + $0x198] sm:$0xff]
      %v7990 = vld [vmem:[#allocation3 + $0x1a0] sm:$0xff]
      %v7991 = vld [vmem:[#allocation3 + $0x1a8] sm:$0xff]
      %v7992 = vld [vmem:[#allocation3 + $0x1b0] sm:$0xff]
      %v7993 = vld [vmem:[#allocation3 + $0x1b8] sm:$0xff]
      %v7994 = vld [vmem:[#allocation3 + $0x1c0] sm:$0xff]
      %v7995 = vld [vmem:[#allocation3 + $0x1c8] sm:$0xff]
      %v7996 = vld [vmem:[#allocation3 + $0x1d0] sm:$0xff]
      %v7997 = vld [vmem:[#allocation3 + $0x1d8] sm:$0xff]
      %v7998 = vld [vmem:[#allocation3 + $0x1e0] sm:$0xff]
      %v7999 = vld [vmem:[#allocation3 + $0x1e8] sm:$0xff]
      %v8000 = vld [vmem:[#allocation3 + $0x1f0] sm:$0xff]
      %v8001 = vld [vmem:[#allocation3 + $0x1f8] sm:$0xff]
      %v8002 = vld [vmem:[%s5] sm:$0xff]
      %v8003 = vld [vmem:[%s5 + $0x8] sm:$0xff]
      %v8004 = vld [vmem:[%s5 + $0x10] sm:$0xff]
      %v8005 = vld [vmem:[%s5 + $0x18] sm:$0xff]
      %v8006 = vld [vmem:[%s5 + $0x20] sm:$0xff]
      %v8007 = vld [vmem:[%s5 + $0x28] sm:$0xff]
      %v8008 = vld [vmem:[%s5 + $0x30] sm:$0xff]
      %v8009 = vld [vmem:[%s5 + $0x38] sm:$0xff]
      %v8010 = vld [vmem:[%s5 + $0x40] sm:$0xff]
      %v8011 = vld [vmem:[%s5 + $0x48] sm:$0xff]
      %v8012 = vld [vmem:[%s5 + $0x50] sm:$0xff]
      %v8013 = vld [vmem:[%s5 + $0x58] sm:$0xff]
      %v8014 = vld [vmem:[%s5 + $0x60] sm:$0xff]
      %v8015 = vld [vmem:[%s5 + $0x68] sm:$0xff]
      %v8016 = vld [vmem:[%s5 + $0x70] sm:$0xff]
      %v8017 = vld [vmem:[%s5 + $0x78] sm:$0xff]
      %v8018 = vld [vmem:[%s5 + $0x80] sm:$0xff]
      %v8019 = vld [vmem:[%s5 + $0x88] sm:$0xff]
      %v8020 = vld [vmem:[%s5 + $0x90] sm:$0xff]
      %v8021 = vld [vmem:[%s5 + $0x98] sm:$0xff]
      %v8022 = vld [vmem:[%s5 + $0xa0] sm:$0xff]
      %v8023 = vld [vmem:[%s5 + $0xa8] sm:$0xff]
      %v8024 = vld [vmem:[%s5 + $0xb0] sm:$0xff]
      %v8025 = vld [vmem:[%s5 + $0xb8] sm:$0xff]
      %v8026 = vld [vmem:[%s5 + $0xc0] sm:$0xff]
      %v8027 = vld [vmem:[%s5 + $0xc8] sm:$0xff]
      %v8028 = vld [vmem:[%s5 + $0xd0] sm:$0xff]
      %v8029 = vld [vmem:[%s6] sm:$0x1]
      %v8031 = vlaneseq
      %v8032 = vshrl.u32 %v8031, 7
      %v8033 = vsub.s32 0, %v8032
      %v8034 = vrot.slane %v8029, %v8033
      %vm8036 = vcmask 719872
      %v8038 = vsel %vm8036, %v7939, 0
      %v8041 = vsel %vm8036, %v7941, 0
      %v8044 = vsel %vm8036, %v7943, 0
      %v8047 = vsel %vm8036, %v7945, 0
      %v8050 = vsel %vm8036, %v7947, 0
      %v8053 = vsel %vm8036, %v7949, 0
      %v8056 = vsel %vm8036, %v7951, 0
      %v8059 = vsel %vm8036, %v7953, 0
      %v8062 = vsel %vm8036, %v7955, 0
      %v8065 = vsel %vm8036, %v7957, 0
      %v8068 = vsel %vm8036, %v7959, 0
      %v8071 = vsel %vm8036, %v7961, 0
      %v8074 = vsel %vm8036, %v7963, 0
      %v8077 = vsel %vm8036, %v7965, 0
      %v8080 = vsel %vm8036, %v7967, 0
      %v8083 = vsel %vm8036, %v7969, 0
      %v8086 = vsel %vm8036, %v7971, 0
      %v8089 = vsel %vm8036, %v7973, 0
      %v8092 = vsel %vm8036, %v7975, 0
      %v8095 = vsel %vm8036, %v7977, 0
      %v8098 = vsel %vm8036, %v7979, 0
      %v8101 = vsel %vm8036, %v7981, 0
      %v8104 = vsel %vm8036, %v7983, 0
      %v8107 = vsel %vm8036, %v7985, 0
      %v8110 = vsel %vm8036, %v7987, 0
      %v8113 = vsel %vm8036, %v7989, 0
      %v8116 = vsel %vm8036, %v7991, 0
      %v8119 = vsel %vm8036, %v7993, 0
      %v8122 = vsel %vm8036, %v7995, 0
      %v8125 = vsel %vm8036, %v7997, 0
      %v8128 = vsel %vm8036, %v7999, 0
      %v8131 = vsel %vm8036, %v8001, 0
      %8133 = vmatprep.subr.mxu0 0.0
      %8134 = vmatpush1.msra.mxu0 %v8002
      %8135 = vmatprep.subr.mxu0 0.0
      %8136 = vmatpush1.msra.mxu0 %v8003
      %8137 = vmatprep.subr.mxu0 0.0
      %8138 = vmatpush1.msra.mxu0 %v8004
      %8139 = vmatprep.subr.mxu0 0.0
      %8140 = vmatpush1.msra.mxu0 %v8005
      %8141 = vmatprep.subr.mxu0 0.0
      %8142 = vmatpush1.msra.mxu0 %v8006
      %8143 = vmatprep.subr.mxu0 0.0
      %8144 = vmatpush1.msra.mxu0 %v8007
      %8145 = vmatprep.subr.mxu0 0.0
      %8146 = vmatpush1.msra.mxu0 %v8008
      %8147 = vmatprep.subr.mxu0 0.0
      %8148 = vmatpush1.msra.mxu0 %v8009
      %8149 = vmatprep.subr.mxu0 0.0
      %8150 = vmatpush1.msra.mxu0 %v8010
      %8151 = vmatprep.subr.mxu0 0.0
      %8152 = vmatpush1.msra.mxu0 %v8011
      %8153 = vmatprep.subr.mxu0 0.0
      %8154 = vmatpush1.msra.mxu0 %v8012
      %8155 = vmatprep.subr.mxu0 0.0
      %8156 = vmatpush1.msra.mxu0 %v8013
      %8157 = vmatprep.subr.mxu0 0.0
      %8158 = vmatpush1.msra.mxu0 %v8014
      %8159 = vmatprep.subr.mxu0 0.0
      %8160 = vmatpush1.msra.mxu0 %v8015
      %8161 = vmatprep.subr.mxu0 0.0
      %8162 = vmatpush1.msra.mxu0 %v8016
      %8163 = vmatprep.subr.mxu0 0.0
      %8164 = vmatpush1.msra.mxu0 %v8017
      %8165 = vmatprep.subr.mxu0 0.0
      %8166 = vmatpush1.msra.mxu0 %v8018
      %8167 = vmatprep.subr.mxu0 0.0
      %8168 = vmatpush1.msra.mxu0 %v8019
      %8169 = vmatprep.subr.mxu0 0.0
      %8170 = vmatpush1.msra.mxu0 %v8020
      %8171 = vmatprep.subr.mxu0 0.0
      %8172 = vmatpush1.msra.mxu0 %v8021
      %8173 = vmatprep.subr.mxu0 0.0
      %8174 = vmatpush1.msra.mxu0 %v8022
      %8175 = vmatprep.subr.mxu0 0.0
      %8176 = vmatpush1.msra.mxu0 %v8023
      %8177 = vmatprep.subr.mxu0 0.0
      %8178 = vmatpush1.msra.mxu0 %v8024
      %8179 = vmatprep.subr.mxu0 0.0
      %8180 = vmatpush1.msra.mxu0 %v8025
      %8181 = vmatprep.subr.mxu0 0.0
      %8182 = vmatpush1.msra.mxu0 %v8026
      %8183 = vmatprep.subr.mxu0 0.0
      %8184 = vmatpush1.msra.mxu0 %v8027
      %8185 = vmatprep.subr.mxu0 0.0
      %8186 = vmatpush1.msra.mxu0 %v8028
      %8187 = vmatprep.subr.mxu0 0.0
      %8188 = vmatpush1.msra.mxu0 0.0
      %8189 = vmatprep.subr.mxu0 0.0
      %8190 = vmatpush1.msra.mxu0 0.0
      %8191 = vmatprep.subr.mxu0 0.0
      %8192 = vmatpush1.msra.mxu0 0.0
      %8193 = vmatprep.subr.mxu0 0.0
      %8194 = vmatpush1.msra.mxu0 0.0
      %8195 = vmatprep.subr.mxu0 0.0
      %8196 = vmatpush1.msra.mxu0 0.0
      %8197 = vmatprep.mubr.f32.mxu0 %v8038
      %8198 = vmatmul.mubr.f32.gmra.mrb[0].mxu0 %v7938
      %v8199 = vpop.f32.mrb[0].mxu0
      %v8200 = vadd.f32 %v8034, %v8199
      %v8201 = vpop.f32.mrb[0].mxu0
      %8202 = vmatprep.mubr.f32.mxu0 %v8041
      %8203 = vmatmul.mubr.f32.gmra.mrb[0].mxu0 %v7940
      %v8204 = vpop.f32.mrb[0].mxu0
      %v8205 = vadd.f32 %v8034, %v8204
      %v8206 = vpop.f32.mrb[0].mxu0
      %8207 = vmatprep.mubr.f32.mxu0 %v8044
      %8208 = vmatmul.mubr.f32.gmra.mrb[0].mxu0 %v7942
      %v8209 = vpop.f32.mrb[0].mxu0
      %v8210 = vadd.f32 %v8034, %v8209
      %v8211 = vpop.f32.mrb[0].mxu0
      %8212 = vmatprep.mubr.f32.mxu0 %v8047
      %8213 = vmatmul.mubr.f32.gmra.mrb[0].mxu0 %v7944
      %v8214 = vpop.f32.mrb[0].mxu0
      %v8215 = vadd.f32 %v8034, %v8214
      %v8216 = vpop.f32.mrb[0].mxu0
      %8217 = vmatprep.mubr.f32.mxu0 %v8050
      %8218 = vmatmul.mubr.f32.gmra.mrb[0].mxu0 %v7946
      %v8219 = vpop.f32.mrb[0].mxu0
      %v8220 = vadd.f32 %v8034, %v8219
      %v8221 = vpop.f32.mrb[0].mxu0
      %8222 = vmatprep.mubr.f32.mxu0 %v8053
      %8223 = vmatmul.mubr.f32.gmra.mrb[0].mxu0 %v7948
      %v8224 = vpop.f32.mrb[0].mxu0
      %v8225 = vadd.f32 %v8034, %v8224
      %v8226 = vpop.f32.mrb[0].mxu0
      %8227 = vmatprep.mubr.f32.mxu0 %v8056
      %8228 = vmatmul.mubr.f32.gmra.mrb[0].mxu0 %v7950
      %v8229 = vpop.f32.mrb[0].mxu0
      %v8230 = vadd.f32 %v8034, %v8229
      %v8231 = vpop.f32.mrb[0].mxu0
      %8232 = vmatprep.mubr.f32.mxu0 %v8059
      %8233 = vmatmul.mubr.f32.gmra.mrb[0].mxu0 %v7952
      %v8234 = vpop.f32.mrb[0].mxu0
      %v8235 = vadd.f32 %v8034, %v8234
      %v8236 = vpop.f32.mrb[0].mxu0
      %8237 = vmatprep.mubr.f32.mxu0 %v8062
      %8238 = vmatmul.mubr.f32.gmra.mrb[0].mxu0 %v7954
      %v8239 = vpop.f32.mrb[0].mxu0
      %v8240 = vadd.f32 %v8034, %v8239
      %v8241 = vpop.f32.mrb[0].mxu0
      %8242 = vmatprep.mubr.f32.mxu0 %v8065
      %8243 = vmatmul.mubr.f32.gmra.mrb[0].mxu0 %v7956
      %v8244 = vpop.f32.mrb[0].mxu0
      %v8245 = vadd.f32 %v8034, %v8244
      %v8246 = vpop.f32.mrb[0].mxu0
      %8247 = vmatprep.mubr.f32.mxu0 %v8068
      %8248 = vmatmul.mubr.f32.gmra.mrb[0].mxu0 %v7958
      %v8249 = vpop.f32.mrb[0].mxu0
      %v8250 = vadd.f32 %v8034, %v8249
      %v8251 = vpop.f32.mrb[0].mxu0
      %8252 = vmatprep.mubr.f32.mxu0 %v8071
      %8253 = vmatmul.mubr.f32.gmra.mrb[0].mxu0 %v7960
      %v8254 = vpop.f32.mrb[0].mxu0
      %v8255 = vadd.f32 %v8034, %v8254
      %v8256 = vpop.f32.mrb[0].mxu0
      %8257 = vmatprep.mubr.f32.mxu0 %v8074
      %8258 = vmatmul.mubr.f32.gmra.mrb[0].mxu0 %v7962
      %v8259 = vpop.f32.mrb[0].mxu0
      %v8260 = vadd.f32 %v8034, %v8259
      %v8261 = vpop.f32.mrb[0].mxu0
      %8262 = vmatprep.mubr.f32.mxu0 %v8077
      %8263 = vmatmul.mubr.f32.gmra.mrb[0].mxu0 %v7964
      %v8264 = vpop.f32.mrb[0].mxu0
      %v8265 = vadd.f32 %v8034, %v8264
      %v8266 = vpop.f32.mrb[0].mxu0
      %8267 = vmatprep.mubr.f32.mxu0 %v8080
      %8268 = vmatmul.mubr.f32.gmra.mrb[0].mxu0 %v7966
      %v8269 = vpop.f32.mrb[0].mxu0
      %v8270 = vadd.f32 %v8034, %v8269
      %v8271 = vpop.f32.mrb[0].mxu0
      %8272 = vmatprep.mubr.f32.mxu0 %v8083
      %8273 = vmatmul.mubr.f32.gmra.mrb[0].mxu0 %v7968
      %v8274 = vpop.f32.mrb[0].mxu0
      %v8275 = vadd.f32 %v8034, %v8274
      %v8276 = vpop.f32.mrb[0].mxu0
      %8277 = vmatprep.mubr.f32.mxu0 %v8086
      %8278 = vmatmul.mubr.f32.gmra.mrb[0].mxu0 %v7970
      %v8279 = vpop.f32.mrb[0].mxu0
      %v8280 = vadd.f32 %v8034, %v8279
      %v8281 = vpop.f32.mrb[0].mxu0
      %8282 = vmatprep.mubr.f32.mxu0 %v8089
      %8283 = vmatmul.mubr.f32.gmra.mrb[0].mxu0 %v7972
      %v8284 = vpop.f32.mrb[0].mxu0
      %v8285 = vadd.f32 %v8034, %v8284
      %v8286 = vpop.f32.mrb[0].mxu0
      %8287 = vmatprep.mubr.f32.mxu0 %v8092
      %8288 = vmatmul.mubr.f32.gmra.mrb[0].mxu0 %v7974
      %v8289 = vpop.f32.mrb[0].mxu0
      %v8290 = vadd.f32 %v8034, %v8289
      %v8291 = vpop.f32.mrb[0].mxu0
      %8292 = vmatprep.mubr.f32.mxu0 %v8095
      %8293 = vmatmul.mubr.f32.gmra.mrb[0].mxu0 %v7976
      %v8294 = vpop.f32.mrb[0].mxu0
      %v8295 = vadd.f32 %v8034, %v8294
      %v8296 = vpop.f32.mrb[0].mxu0
      %8297 = vmatprep.mubr.f32.mxu0 %v8098
      %8298 = vmatmul.mubr.f32.gmra.mrb[0].mxu0 %v7978
      %v8299 = vpop.f32.mrb[0].mxu0
      %v8300 = vadd.f32 %v8034, %v8299
      %v8301 = vpop.f32.mrb[0].mxu0
      %8302 = vmatprep.mubr.f32.mxu0 %v8101
      %8303 = vmatmul.mubr.f32.gmra.mrb[0].mxu0 %v7980
      %v8304 = vpop.f32.mrb[0].mxu0
      %v8305 = vadd.f32 %v8034, %v8304
      %v8306 = vpop.f32.mrb[0].mxu0
      %8307 = vmatprep.mubr.f32.mxu0 %v8104
      %8308 = vmatmul.mubr.f32.gmra.mrb[0].mxu0 %v7982
      %v8309 = vpop.f32.mrb[0].mxu0
      %v8310 = vadd.f32 %v8034, %v8309
      %v8311 = vpop.f32.mrb[0].mxu0
      %8312 = vmatprep.mubr.f32.mxu0 %v8107
      %8313 = vmatmul.mubr.f32.gmra.mrb[0].mxu0 %v7984
      %v8314 = vpop.f32.mrb[0].mxu0
      %v8315 = vadd.f32 %v8034, %v8314
      %v8316 = vpop.f32.mrb[0].mxu0
      %8317 = vmatprep.mubr.f32.mxu0 %v8110
      %8318 = vmatmul.mubr.f32.gmra.mrb[0].mxu0 %v7986
      %v8319 = vpop.f32.mrb[0].mxu0
      %v8320 = vadd.f32 %v8034, %v8319
      %v8321 = vpop.f32.mrb[0].mxu0
      %8322 = vmatprep.mubr.f32.mxu0 %v8113
      %8323 = vmatmul.mubr.f32.gmra.mrb[0].mxu0 %v7988
      %v8324 = vpop.f32.mrb[0].mxu0
      %v8325 = vadd.f32 %v8034, %v8324
      %v8326 = vpop.f32.mrb[0].mxu0
      %8327 = vmatprep.mubr.f32.mxu0 %v8116
      %8328 = vmatmul.mubr.f32.gmra.mrb[0].mxu0 %v7990
      %v8329 = vpop.f32.mrb[0].mxu0
      %v8330 = vadd.f32 %v8034, %v8329
      %v8331 = vpop.f32.mrb[0].mxu0
      %8332 = vmatprep.mubr.f32.mxu0 %v8119
      %8333 = vmatmul.mubr.f32.gmra.mrb[0].mxu0 %v7992
      %v8334 = vpop.f32.mrb[0].mxu0
      %v8335 = vadd.f32 %v8034, %v8334
      %v8336 = vpop.f32.mrb[0].mxu0
      %8337 = vmatprep.mubr.f32.mxu0 %v8122
      %8338 = vmatmul.mubr.f32.gmra.mrb[0].mxu0 %v7994
      %v8339 = vpop.f32.mrb[0].mxu0
      %v8340 = vadd.f32 %v8034, %v8339
      %v8341 = vpop.f32.mrb[0].mxu0
      %8342 = vmatprep.mubr.f32.mxu0 %v8125
      %8343 = vmatmul.mubr.f32.gmra.mrb[0].mxu0 %v7996
      %v8344 = vpop.f32.mrb[0].mxu0
      %v8345 = vadd.f32 %v8034, %v8344
      %v8346 = vpop.f32.mrb[0].mxu0
      %8347 = vmatprep.mubr.f32.mxu0 %v8128
      %8348 = vmatmul.mubr.f32.gmra.mrb[0].mxu0 %v7998
      %v8349 = vpop.f32.mrb[0].mxu0
      %v8350 = vadd.f32 %v8034, %v8349
      %v8351 = vpop.f32.mrb[0].mxu0
      %8352 = vmatprep.mubr.f32.mxu0 %v8131
      %8353 = vmatmul.mubr.f32.gmra.mrb[0].mxu0 %v8000
      %v8354 = vpop.f32.mrb[0].mxu0
      %v8355 = vadd.f32 %v8034, %v8354
      %v8356 = vpop.f32.mrb[0].mxu0
      %8357 = vdwg.mxu0
      %v8358 = vmul.f32 %v8200, 0.1
      %v8359 = vmul.f32 %v8205, 0.1
      %v8360 = vmul.f32 %v8210, 0.1
      %v8361 = vmul.f32 %v8215, 0.1
      %v8362 = vmul.f32 %v8220, 0.1
      %v8363 = vmul.f32 %v8225, 0.1
      %v8364 = vmul.f32 %v8230, 0.1
      %v8365 = vmul.f32 %v8235, 0.1
      %v8366 = vmul.f32 %v8240, 0.1
      %v8367 = vmul.f32 %v8245, 0.1
      %v8368 = vmul.f32 %v8250, 0.1
      %v8369 = vmul.f32 %v8255, 0.1
      %v8370 = vmul.f32 %v8260, 0.1
      %v8371 = vmul.f32 %v8265, 0.1
      %v8372 = vmul.f32 %v8270, 0.1
      %v8373 = vmul.f32 %v8275, 0.1
      %v8374 = vmul.f32 %v8280, 0.1
      %v8375 = vmul.f32 %v8285, 0.1
      %v8376 = vmul.f32 %v8290, 0.1
      %v8377 = vmul.f32 %v8295, 0.1
      %v8378 = vmul.f32 %v8300, 0.1
      %v8379 = vmul.f32 %v8305, 0.1
      %v8380 = vmul.f32 %v8310, 0.1
      %v8381 = vmul.f32 %v8315, 0.1
      %v8382 = vmul.f32 %v8320, 0.1
      %v8383 = vmul.f32 %v8325, 0.1
      %v8384 = vmul.f32 %v8330, 0.1
      %v8385 = vmul.f32 %v8335, 0.1
      %v8386 = vmul.f32 %v8340, 0.1
      %v8387 = vmul.f32 %v8345, 0.1
      %v8388 = vmul.f32 %v8350, 0.1
      %v8389 = vmul.f32 %v8355, 0.1
      %v8390 = vmax.f32 %v8200, %v8358
      %v8391 = vmax.f32 %v8205, %v8359
      %v8392 = vmax.f32 %v8210, %v8360
      %v8393 = vmax.f32 %v8215, %v8361
      %v8394 = vmax.f32 %v8220, %v8362
      %v8395 = vmax.f32 %v8225, %v8363
      %v8396 = vmax.f32 %v8230, %v8364
      %v8397 = vmax.f32 %v8235, %v8365
      %v8398 = vmax.f32 %v8240, %v8366
      %v8399 = vmax.f32 %v8245, %v8367
      %v8400 = vmax.f32 %v8250, %v8368
      %v8401 = vmax.f32 %v8255, %v8369
      %v8402 = vmax.f32 %v8260, %v8370
      %v8403 = vmax.f32 %v8265, %v8371
      %v8404 = vmax.f32 %v8270, %v8372
      %v8405 = vmax.f32 %v8275, %v8373
      %v8406 = vmax.f32 %v8280, %v8374
      %v8407 = vmax.f32 %v8285, %v8375
      %v8408 = vmax.f32 %v8290, %v8376
      %v8409 = vmax.f32 %v8295, %v8377
      %v8410 = vmax.f32 %v8300, %v8378
      %v8411 = vmax.f32 %v8305, %v8379
      %v8412 = vmax.f32 %v8310, %v8380
      %v8413 = vmax.f32 %v8315, %v8381
      %v8414 = vmax.f32 %v8320, %v8382
      %v8415 = vmax.f32 %v8325, %v8383
      %v8416 = vmax.f32 %v8330, %v8384
      %v8417 = vmax.f32 %v8335, %v8385
      %v8418 = vmax.f32 %v8340, %v8386
      %v8419 = vmax.f32 %v8345, %v8387
      %v8420 = vmax.f32 %v8350, %v8388
      %v8421 = vmax.f32 %v8355, %v8389
      %v8422 = vld [vmem:[#allocation4] sm:$0xff]
      %v8423 = vld [vmem:[#allocation4 + $0x8] sm:$0xff]
      %v8424 = vld [vmem:[#allocation4 + $0x10] sm:$0xff]
      %v8425 = vld [vmem:[#allocation4 + $0x18] sm:$0xff]
      %v8426 = vld [vmem:[#allocation4 + $0x20] sm:$0xff]
      %v8427 = vld [vmem:[#allocation4 + $0x28] sm:$0xff]
      %v8428 = vld [vmem:[#allocation4 + $0x30] sm:$0xff]
      %v8429 = vld [vmem:[#allocation4 + $0x38] sm:$0xff]
      %v8430 = vld [vmem:[#allocation4 + $0x40] sm:$0xff]
      %v8431 = vld [vmem:[#allocation4 + $0x48] sm:$0xff]
      %v8432 = vld [vmem:[#allocation4 + $0x50] sm:$0xff]
      %v8433 = vld [vmem:[#allocation4 + $0x58] sm:$0xff]
      %v8434 = vld [vmem:[#allocation4 + $0x60] sm:$0xff]
      %v8435 = vld [vmem:[#allocation4 + $0x68] sm:$0xff]
      %v8436 = vld [vmem:[#allocation4 + $0x70] sm:$0xff]
      %v8437 = vld [vmem:[#allocation4 + $0x78] sm:$0xff]
      %v8438 = vld [vmem:[#allocation4 + $0x80] sm:$0xff]
      %v8439 = vld [vmem:[#allocation4 + $0x88] sm:$0xff]
      %v8440 = vld [vmem:[#allocation4 + $0x90] sm:$0xff]
      %v8441 = vld [vmem:[#allocation4 + $0x98] sm:$0xff]
      %v8442 = vld [vmem:[#allocation4 + $0xa0] sm:$0xff]
      %v8443 = vld [vmem:[#allocation4 + $0xa8] sm:$0xff]
      %v8444 = vld [vmem:[#allocation4 + $0xb0] sm:$0xff]
      %v8445 = vld [vmem:[#allocation4 + $0xb8] sm:$0xff]
      %v8446 = vld [vmem:[#allocation4 + $0xc0] sm:$0xff]
      %v8447 = vld [vmem:[#allocation4 + $0xc8] sm:$0xff]
      %v8448 = vld [vmem:[#allocation4 + $0xd0] sm:$0xff]
      %v8449 = vld [vmem:[#allocation4 + $0xd8] sm:$0xff]
      %v8450 = vld [vmem:[#allocation4 + $0xe0] sm:$0xff]
      %v8451 = vld [vmem:[#allocation4 + $0xe8] sm:$0xff]
      %v8452 = vld [vmem:[#allocation4 + $0xf0] sm:$0xff]
      %v8453 = vld [vmem:[#allocation4 + $0xf8] sm:$0xff]
      %v8454 = vld [vmem:[%s7 + $0x18] sm:$0xff]
      %v8456 = vsel %vm413, %v8390, 0
      %v8459 = vsel %vm413, %v8391, 0
      %v8462 = vsel %vm413, %v8392, 0
      %v8465 = vsel %vm413, %v8393, 0
      %v8468 = vsel %vm413, %v8394, 0
      %v8471 = vsel %vm413, %v8395, 0
      %v8474 = vsel %vm413, %v8396, 0
      %v8477 = vsel %vm413, %v8397, 0
      %v8480 = vsel %vm413, %v8398, 0
      %v8483 = vsel %vm413, %v8399, 0
      %v8486 = vsel %vm413, %v8400, 0
      %v8489 = vsel %vm413, %v8401, 0
      %v8492 = vsel %vm413, %v8402, 0
      %v8495 = vsel %vm413, %v8403, 0
      %v8498 = vsel %vm413, %v8404, 0
      %v8501 = vsel %vm413, %v8405, 0
      %v8504 = vsel %vm413, %v8406, 0
      %v8507 = vsel %vm413, %v8407, 0
      %v8510 = vsel %vm413, %v8408, 0
      %v8513 = vsel %vm413, %v8409, 0
      %v8516 = vsel %vm413, %v8410, 0
      %v8519 = vsel %vm413, %v8411, 0
      %v8522 = vsel %vm413, %v8412, 0
      %v8525 = vsel %vm413, %v8413, 0
      %v8528 = vsel %vm413, %v8414, 0
      %v8531 = vsel %vm413, %v8415, 0
      %v8534 = vsel %vm413, %v8416, 0
      %v8537 = vsel %vm413, %v8417, 0
      %v8540 = vsel %vm413, %v8418, 0
      %v8543 = vsel %vm413, %v8419, 0
      %v8546 = vsel %vm413, %v8420, 0
      %v8549 = vsel %vm413, %v8421, 0
      %8551 = vmatprep.subr.mxu0 0.0
      %8552 = vmatpush1.msra.mxu0 %v8454
      %8553 = vmatprep.subr.mxu0 0.0
      %8554 = vmatpush1.msra.mxu0 0.0
      %8555 = vmatprep.subr.mxu0 0.0
      %8556 = vmatpush1.msra.mxu0 0.0
      %8557 = vmatprep.subr.mxu0 0.0
      %8558 = vmatpush1.msra.mxu0 0.0
      %8559 = vmatprep.subr.mxu0 0.0
      %8560 = vmatpush1.msra.mxu0 0.0
      %8561 = vmatprep.subr.mxu0 0.0
      %8562 = vmatpush1.msra.mxu0 0.0
      %8563 = vmatprep.subr.mxu0 0.0
      %8564 = vmatpush1.msra.mxu0 0.0
      %8565 = vmatprep.subr.mxu0 0.0
      %8566 = vmatpush1.msra.mxu0 0.0
      %8567 = vmatprep.subr.mxu0 0.0
      %8568 = vmatpush1.msra.mxu0 0.0
      %8569 = vmatprep.subr.mxu0 0.0
      %8570 = vmatpush1.msra.mxu0 0.0
      %8571 = vmatprep.subr.mxu0 0.0
      %8572 = vmatpush1.msra.mxu0 0.0
      %8573 = vmatprep.subr.mxu0 0.0
      %8574 = vmatpush1.msra.mxu0 0.0
      %8575 = vmatprep.subr.mxu0 0.0
      %8576 = vmatpush1.msra.mxu0 0.0
      %8577 = vmatprep.subr.mxu0 0.0
      %8578 = vmatpush1.msra.mxu0 0.0
      %8579 = vmatprep.subr.mxu0 0.0
      %8580 = vmatpush1.msra.mxu0 0.0
      %8581 = vmatprep.subr.mxu0 0.0
      %8582 = vmatpush1.msra.mxu0 0.0
      %8583 = vmatprep.subr.mxu0 0.0
      %8584 = vmatpush1.msra.mxu0 0.0
      %8585 = vmatprep.subr.mxu0 0.0
      %8586 = vmatpush1.msra.mxu0 0.0
      %8587 = vmatprep.subr.mxu0 0.0
      %8588 = vmatpush1.msra.mxu0 0.0
      %8589 = vmatprep.subr.mxu0 0.0
      %8590 = vmatpush1.msra.mxu0 0.0
      %8591 = vmatprep.subr.mxu0 0.0
      %8592 = vmatpush1.msra.mxu0 0.0
      %8593 = vmatprep.subr.mxu0 0.0
      %8594 = vmatpush1.msra.mxu0 0.0
      %8595 = vmatprep.subr.mxu0 0.0
      %8596 = vmatpush1.msra.mxu0 0.0
      %8597 = vmatprep.subr.mxu0 0.0
      %8598 = vmatpush1.msra.mxu0 0.0
      %8599 = vmatprep.subr.mxu0 0.0
      %8600 = vmatpush1.msra.mxu0 0.0
      %8601 = vmatprep.subr.mxu0 0.0
      %8602 = vmatpush1.msra.mxu0 0.0
      %8603 = vmatprep.subr.mxu0 0.0
      %8604 = vmatpush1.msra.mxu0 0.0
      %8605 = vmatprep.subr.mxu0 0.0
      %8606 = vmatpush1.msra.mxu0 0.0
      %8607 = vmatprep.subr.mxu0 0.0
      %8608 = vmatpush1.msra.mxu0 0.0
      %8609 = vmatprep.subr.mxu0 0.0
      %8610 = vmatpush1.msra.mxu0 0.0
      %8611 = vmatprep.subr.mxu0 0.0
      %8612 = vmatpush1.msra.mxu0 0.0
      %8613 = vmatprep.subr.mxu0 0.0
      %8614 = vmatpush1.msra.mxu0 0.0
      %8615 = vmatprep.mubr.f32.mxu0 0.0
      %8616 = vmatmul.mubr.f32.gmra.mrb[0].mxu0 %v8456
      %v8617 = vpop.f32.mrb[0].mxu0
      %v8618 = vadd.f32 0.0, %v8617
      %v8619 = vpop.f32.mrb[0].mxu0
      %8620 = vmatprep.mubr.f32.mxu0 0.0
      %8621 = vmatmul.mubr.f32.gmra.mrb[0].mxu0 %v8459
      %v8622 = vpop.f32.mrb[0].mxu0
      %v8623 = vadd.f32 0.0, %v8622
      %v8624 = vpop.f32.mrb[0].mxu0
      %8625 = vmatprep.mubr.f32.mxu0 0.0
      %8626 = vmatmul.mubr.f32.gmra.mrb[0].mxu0 %v8462
      %v8627 = vpop.f32.mrb[0].mxu0
      %v8628 = vadd.f32 0.0, %v8627
      %v8629 = vpop.f32.mrb[0].mxu0
      %8630 = vmatprep.mubr.f32.mxu0 0.0
      %8631 = vmatmul.mubr.f32.gmra.mrb[0].mxu0 %v8465
      %v8632 = vpop.f32.mrb[0].mxu0
      %v8633 = vadd.f32 0.0, %v8632
      %v8634 = vpop.f32.mrb[0].mxu0
      %8635 = vmatprep.mubr.f32.mxu0 0.0
      %8636 = vmatmul.mubr.f32.gmra.mrb[0].mxu0 %v8468
      %v8637 = vpop.f32.mrb[0].mxu0
      %v8638 = vadd.f32 0.0, %v8637
      %v8639 = vpop.f32.mrb[0].mxu0
      %8640 = vmatprep.mubr.f32.mxu0 0.0
      %8641 = vmatmul.mubr.f32.gmra.mrb[0].mxu0 %v8471
      %v8642 = vpop.f32.mrb[0].mxu0
      %v8643 = vadd.f32 0.0, %v8642
      %v8644 = vpop.f32.mrb[0].mxu0
      %8645 = vmatprep.mubr.f32.mxu0 0.0
      %8646 = vmatmul.mubr.f32.gmra.mrb[0].mxu0 %v8474
      %v8647 = vpop.f32.mrb[0].mxu0
      %v8648 = vadd.f32 0.0, %v8647
      %v8649 = vpop.f32.mrb[0].mxu0
      %8650 = vmatprep.mubr.f32.mxu0 0.0
      %8651 = vmatmul.mubr.f32.gmra.mrb[0].mxu0 %v8477
      %v8652 = vpop.f32.mrb[0].mxu0
      %v8653 = vadd.f32 0.0, %v8652
      %v8654 = vpop.f32.mrb[0].mxu0
      %8655 = vmatprep.mubr.f32.mxu0 0.0
      %8656 = vmatmul.mubr.f32.gmra.mrb[0].mxu0 %v8480
      %v8657 = vpop.f32.mrb[0].mxu0
      %v8658 = vadd.f32 0.0, %v8657
      %v8659 = vpop.f32.mrb[0].mxu0
      %8660 = vmatprep.mubr.f32.mxu0 0.0
      %8661 = vmatmul.mubr.f32.gmra.mrb[0].mxu0 %v8483
      %v8662 = vpop.f32.mrb[0].mxu0
      %v8663 = vadd.f32 0.0, %v8662
      %v8664 = vpop.f32.mrb[0].mxu0
      %8665 = vmatprep.mubr.f32.mxu0 0.0
      %8666 = vmatmul.mubr.f32.gmra.mrb[0].mxu0 %v8486
      %v8667 = vpop.f32.mrb[0].mxu0
      %v8668 = vadd.f32 0.0, %v8667
      %v8669 = vpop.f32.mrb[0].mxu0
      %8670 = vmatprep.mubr.f32.mxu0 0.0
      %8671 = vmatmul.mubr.f32.gmra.mrb[0].mxu0 %v8489
      %v8672 = vpop.f32.mrb[0].mxu0
      %v8673 = vadd.f32 0.0, %v8672
      %v8674 = vpop.f32.mrb[0].mxu0
      %8675 = vmatprep.mubr.f32.mxu0 0.0
      %8676 = vmatmul.mubr.f32.gmra.mrb[0].mxu0 %v8492
      %v8677 = vpop.f32.mrb[0].mxu0
      %v8678 = vadd.f32 0.0, %v8677
      %v8679 = vpop.f32.mrb[0].mxu0
      %8680 = vmatprep.mubr.f32.mxu0 0.0
      %8681 = vmatmul.mubr.f32.gmra.mrb[0].mxu0 %v8495
      %v8682 = vpop.f32.mrb[0].mxu0
      %v8683 = vadd.f32 0.0, %v8682
      %v8684 = vpop.f32.mrb[0].mxu0
      %8685 = vmatprep.mubr.f32.mxu0 0.0
      %8686 = vmatmul.mubr.f32.gmra.mrb[0].mxu0 %v8498
      %v8687 = vpop.f32.mrb[0].mxu0
      %v8688 = vadd.f32 0.0, %v8687
      %v8689 = vpop.f32.mrb[0].mxu0
      %8690 = vmatprep.mubr.f32.mxu0 0.0
      %8691 = vmatmul.mubr.f32.gmra.mrb[0].mxu0 %v8501
      %v8692 = vpop.f32.mrb[0].mxu0
      %v8693 = vadd.f32 0.0, %v8692
      %v8694 = vpop.f32.mrb[0].mxu0
      %8695 = vmatprep.mubr.f32.mxu0 0.0
      %8696 = vmatmul.mubr.f32.gmra.mrb[0].mxu0 %v8504
      %v8697 = vpop.f32.mrb[0].mxu0
      %v8698 = vadd.f32 0.0, %v8697
      %v8699 = vpop.f32.mrb[0].mxu0
      %8700 = vmatprep.mubr.f32.mxu0 0.0
      %8701 = vmatmul.mubr.f32.gmra.mrb[0].mxu0 %v8507
      %v8702 = vpop.f32.mrb[0].mxu0
      %v8703 = vadd.f32 0.0, %v8702
      %v8704 = vpop.f32.mrb[0].mxu0
      %8705 = vmatprep.mubr.f32.mxu0 0.0
      %8706 = vmatmul.mubr.f32.gmra.mrb[0].mxu0 %v8510
      %v8707 = vpop.f32.mrb[0].mxu0
      %v8708 = vadd.f32 0.0, %v8707
      %v8709 = vpop.f32.mrb[0].mxu0
      %8710 = vmatprep.mubr.f32.mxu0 0.0
      %8711 = vmatmul.mubr.f32.gmra.mrb[0].mxu0 %v8513
      %v8712 = vpop.f32.mrb[0].mxu0
      %v8713 = vadd.f32 0.0, %v8712
      %v8714 = vpop.f32.mrb[0].mxu0
      %8715 = vmatprep.mubr.f32.mxu0 0.0
      %8716 = vmatmul.mubr.f32.gmra.mrb[0].mxu0 %v8516
      %v8717 = vpop.f32.mrb[0].mxu0
      %v8718 = vadd.f32 0.0, %v8717
      %v8719 = vpop.f32.mrb[0].mxu0
      %8720 = vmatprep.mubr.f32.mxu0 0.0
      %8721 = vmatmul.mubr.f32.gmra.mrb[0].mxu0 %v8519
      %v8722 = vpop.f32.mrb[0].mxu0
      %v8723 = vadd.f32 0.0, %v8722
      %v8724 = vpop.f32.mrb[0].mxu0
      %8725 = vmatprep.mubr.f32.mxu0 0.0
      %8726 = vmatmul.mubr.f32.gmra.mrb[0].mxu0 %v8522
      %v8727 = vpop.f32.mrb[0].mxu0
      %v8728 = vadd.f32 0.0, %v8727
      %v8729 = vpop.f32.mrb[0].mxu0
      %8730 = vmatprep.mubr.f32.mxu0 0.0
      %8731 = vmatmul.mubr.f32.gmra.mrb[0].mxu0 %v8525
      %v8732 = vpop.f32.mrb[0].mxu0
      %v8733 = vadd.f32 0.0, %v8732
      %v8734 = vpop.f32.mrb[0].mxu0
      %8735 = vmatprep.mubr.f32.mxu0 0.0
      %8736 = vmatmul.mubr.f32.gmra.mrb[0].mxu0 %v8528
      %v8737 = vpop.f32.mrb[0].mxu0
      %v8738 = vadd.f32 0.0, %v8737
      %v8739 = vpop.f32.mrb[0].mxu0
      %8740 = vmatprep.mubr.f32.mxu0 0.0
      %8741 = vmatmul.mubr.f32.gmra.mrb[0].mxu0 %v8531
      %v8742 = vpop.f32.mrb[0].mxu0
      %v8743 = vadd.f32 0.0, %v8742
      %v8744 = vpop.f32.mrb[0].mxu0
      %8745 = vmatprep.mubr.f32.mxu0 0.0
      %8746 = vmatmul.mubr.f32.gmra.mrb[0].mxu0 %v8534
      %v8747 = vpop.f32.mrb[0].mxu0
      %v8748 = vadd.f32 0.0, %v8747
      %v8749 = vpop.f32.mrb[0].mxu0
      %8750 = vmatprep.mubr.f32.mxu0 0.0
      %8751 = vmatmul.mubr.f32.gmra.mrb[0].mxu0 %v8537
      %v8752 = vpop.f32.mrb[0].mxu0
      %v8753 = vadd.f32 0.0, %v8752
      %v8754 = vpop.f32.mrb[0].mxu0
      %8755 = vmatprep.mubr.f32.mxu0 0.0
      %8756 = vmatmul.mubr.f32.gmra.mrb[0].mxu0 %v8540
      %v8757 = vpop.f32.mrb[0].mxu0
      %v8758 = vadd.f32 0.0, %v8757
      %v8759 = vpop.f32.mrb[0].mxu0
      %8760 = vmatprep.mubr.f32.mxu0 0.0
      %8761 = vmatmul.mubr.f32.gmra.mrb[0].mxu0 %v8543
      %v8762 = vpop.f32.mrb[0].mxu0
      %v8763 = vadd.f32 0.0, %v8762
      %v8764 = vpop.f32.mrb[0].mxu0
      %8765 = vmatprep.mubr.f32.mxu0 0.0
      %8766 = vmatmul.mubr.f32.gmra.mrb[0].mxu0 %v8546
      %v8767 = vpop.f32.mrb[0].mxu0
      %v8768 = vadd.f32 0.0, %v8767
      %v8769 = vpop.f32.mrb[0].mxu0
      %8770 = vmatprep.mubr.f32.mxu0 0.0
      %8771 = vmatmul.mubr.f32.gmra.mrb[0].mxu0 %v8549
      %v8772 = vpop.f32.mrb[0].mxu0
      %v8773 = vadd.f32 0.0, %v8772
      %v8774 = vpop.f32.mrb[0].mxu0
      %8775 = vdwg.mxu0
      %v8776 = vadd.f32 %v8422, %v8618
      %v8777 = vadd.f32 %v8423, %v8623
      %v8778 = vadd.f32 %v8424, %v8628
      %v8779 = vadd.f32 %v8425, %v8633
      %v8780 = vadd.f32 %v8426, %v8638
      %v8781 = vadd.f32 %v8427, %v8643
      %v8782 = vadd.f32 %v8428, %v8648
      %v8783 = vadd.f32 %v8429, %v8653
      %v8784 = vadd.f32 %v8430, %v8658
      %v8785 = vadd.f32 %v8431, %v8663
      %v8786 = vadd.f32 %v8432, %v8668
      %v8787 = vadd.f32 %v8433, %v8673
      %v8788 = vadd.f32 %v8434, %v8678
      %v8789 = vadd.f32 %v8435, %v8683
      %v8790 = vadd.f32 %v8436, %v8688
      %v8791 = vadd.f32 %v8437, %v8693
      %v8792 = vadd.f32 %v8438, %v8698
      %v8793 = vadd.f32 %v8439, %v8703
      %v8794 = vadd.f32 %v8440, %v8708
      %v8795 = vadd.f32 %v8441, %v8713
      %v8796 = vadd.f32 %v8442, %v8718
      %v8797 = vadd.f32 %v8443, %v8723
      %v8798 = vadd.f32 %v8444, %v8728
      %v8799 = vadd.f32 %v8445, %v8733
      %v8800 = vadd.f32 %v8446, %v8738
      %v8801 = vadd.f32 %v8447, %v8743
      %v8802 = vadd.f32 %v8448, %v8748
      %v8803 = vadd.f32 %v8449, %v8753
      %v8804 = vadd.f32 %v8450, %v8758
      %v8805 = vadd.f32 %v8451, %v8763
      %v8806 = vadd.f32 %v8452, %v8768
      %v8807 = vadd.f32 %v8453, %v8773
      %8808 = vst.msk [vmem:[#allocation4] sm:$0xff] %vm413, %v8776
      %8809 = vst.msk [vmem:[#allocation4 + $0x8] sm:$0xff] %vm413, %v8777
      %8810 = vst.msk [vmem:[#allocation4 + $0x10] sm:$0xff] %vm413, %v8778
      %8811 = vst.msk [vmem:[#allocation4 + $0x18] sm:$0xff] %vm413, %v8779
      %8812 = vst.msk [vmem:[#allocation4 + $0x20] sm:$0xff] %vm413, %v8780
      %8813 = vst.msk [vmem:[#allocation4 + $0x28] sm:$0xff] %vm413, %v8781
      %8814 = vst.msk [vmem:[#allocation4 + $0x30] sm:$0xff] %vm413, %v8782
      %8815 = vst.msk [vmem:[#allocation4 + $0x38] sm:$0xff] %vm413, %v8783
      %8816 = vst.msk [vmem:[#allocation4 + $0x40] sm:$0xff] %vm413, %v8784
      %8817 = vst.msk [vmem:[#allocation4 + $0x48] sm:$0xff] %vm413, %v8785
      %8818 = vst.msk [vmem:[#allocation4 + $0x50] sm:$0xff] %vm413, %v8786
      %8819 = vst.msk [vmem:[#allocation4 + $0x58] sm:$0xff] %vm413, %v8787
      %8820 = vst.msk [vmem:[#allocation4 + $0x60] sm:$0xff] %vm413, %v8788
      %8821 = vst.msk [vmem:[#allocation4 + $0x68] sm:$0xff] %vm413, %v8789
      %8822 = vst.msk [vmem:[#allocation4 + $0x70] sm:$0xff] %vm413, %v8790
      %8823 = vst.msk [vmem:[#allocation4 + $0x78] sm:$0xff] %vm413, %v8791
      %8824 = vst.msk [vmem:[#allocation4 + $0x80] sm:$0xff] %vm413, %v8792
      %8825 = vst.msk [vmem:[#allocation4 + $0x88] sm:$0xff] %vm413, %v8793
      %8826 = vst.msk [vmem:[#allocation4 + $0x90] sm:$0xff] %vm413, %v8794
      %8827 = vst.msk [vmem:[#allocation4 + $0x98] sm:$0xff] %vm413, %v8795
      %8828 = vst.msk [vmem:[#allocation4 + $0xa0] sm:$0xff] %vm413, %v8796
      %8829 = vst.msk [vmem:[#allocation4 + $0xa8] sm:$0xff] %vm413, %v8797
      %8830 = vst.msk [vmem:[#allocation4 + $0xb0] sm:$0xff] %vm413, %v8798
      %8831 = vst.msk [vmem:[#allocation4 + $0xb8] sm:$0xff] %vm413, %v8799
      %8832 = vst.msk [vmem:[#allocation4 + $0xc0] sm:$0xff] %vm413, %v8800
      %8833 = vst.msk [vmem:[#allocation4 + $0xc8] sm:$0xff] %vm413, %v8801
      %8834 = vst.msk [vmem:[#allocation4 + $0xd0] sm:$0xff] %vm413, %v8802
      %8835 = vst.msk [vmem:[#allocation4 + $0xd8] sm:$0xff] %vm413, %v8803
      %8836 = vst.msk [vmem:[#allocation4 + $0xe0] sm:$0xff] %vm413, %v8804
      %8837 = vst.msk [vmem:[#allocation4 + $0xe8] sm:$0xff] %vm413, %v8805
      %8838 = vst.msk [vmem:[#allocation4 + $0xf0] sm:$0xff] %vm413, %v8806
      %8839 = vst.msk [vmem:[#allocation4 + $0xf8] sm:$0xff] %vm413, %v8807
      %v8840 = vld [vmem:[#allocation4] sm:$0x1]
      %v8841 = vld [vmem:[#allocation4 + $0x10] sm:$0x1]
      %v8842 = vld [vmem:[#allocation4 + $0x20] sm:$0x1]
      %v8843 = vld [vmem:[#allocation4 + $0x30] sm:$0x1]
      %v8844 = vld [vmem:[#allocation4 + $0x40] sm:$0x1]
      %v8845 = vld [vmem:[#allocation4 + $0x50] sm:$0x1]
      %v8846 = vld [vmem:[#allocation4 + $0x60] sm:$0x1]
      %v8847 = vld [vmem:[#allocation4 + $0x70] sm:$0x1]
      %v8848 = vld [vmem:[#allocation4 + $0x80] sm:$0x1]
      %v8849 = vld [vmem:[#allocation4 + $0x90] sm:$0x1]
      %v8850 = vld [vmem:[#allocation4 + $0xa0] sm:$0x1]
      %v8851 = vld [vmem:[#allocation4 + $0xb0] sm:$0x1]
      %v8852 = vld [vmem:[#allocation4 + $0xc0] sm:$0x1]
      %v8853 = vld [vmem:[#allocation4 + $0xd0] sm:$0x1]
      %v8854 = vld [vmem:[#allocation4 + $0xe0] sm:$0x1]
      %v8855 = vld [vmem:[#allocation4 + $0xf0] sm:$0x1]
      %v8856 = vld [vmem:[%s327] sm:$0x1]
      %v8857 = vld [vmem:[%s327 + $0x10] sm:$0x1]
      %v8858 = vld [vmem:[%s327 + $0x20] sm:$0x1]
      %v8859 = vld [vmem:[%s327 + $0x30] sm:$0x1]
      %v8860 = vld [vmem:[%s327 + $0x40] sm:$0x1]
      %v8861 = vld [vmem:[%s327 + $0x50] sm:$0x1]
      %v8862 = vld [vmem:[%s327 + $0x60] sm:$0x1]
      %v8863 = vld [vmem:[%s327 + $0x70] sm:$0x1]
      %v8864 = vld [vmem:[%s327 + $0x80] sm:$0x1]
      %v8865 = vld [vmem:[%s327 + $0x90] sm:$0x1]
      %v8866 = vld [vmem:[%s327 + $0xa0] sm:$0x1]
      %v8867 = vld [vmem:[%s327 + $0xb0] sm:$0x1]
      %v8868 = vld [vmem:[%s327 + $0xc0] sm:$0x1]
      %v8869 = vld [vmem:[%s327 + $0xd0] sm:$0x1]
      %v8870 = vld [vmem:[%s327 + $0xe0] sm:$0x1]
      %v8871 = vld [vmem:[%s327 + $0xf0] sm:$0x1]
      %v8872 = vadd.f32 %v8840, %v8856
      %v8873 = vadd.f32 %v8841, %v8857
      %v8874 = vadd.f32 %v8842, %v8858
      %v8875 = vadd.f32 %v8843, %v8859
      %v8876 = vadd.f32 %v8844, %v8860
      %v8877 = vadd.f32 %v8845, %v8861
      %v8878 = vadd.f32 %v8846, %v8862
      %v8879 = vadd.f32 %v8847, %v8863
      %v8880 = vadd.f32 %v8848, %v8864
      %v8881 = vadd.f32 %v8849, %v8865
      %v8882 = vadd.f32 %v8850, %v8866
      %v8883 = vadd.f32 %v8851, %v8867
      %v8884 = vadd.f32 %v8852, %v8868
      %v8885 = vadd.f32 %v8853, %v8869
      %v8886 = vadd.f32 %v8854, %v8870
      %v8887 = vadd.f32 %v8855, %v8871
      %v8888 = vld [vmem:[#allocation4 + $0x1] sm:$0x1]
      %v8889 = vld [vmem:[#allocation4 + $0x11] sm:$0x1]
      %v8890 = vld [vmem:[#allocation4 + $0x21] sm:$0x1]
      %v8891 = vld [vmem:[#allocation4 + $0x31] sm:$0x1]
      %v8892 = vld [vmem:[#allocation4 + $0x41] sm:$0x1]
      %v8893 = vld [vmem:[#allocation4 + $0x51] sm:$0x1]
      %v8894 = vld [vmem:[#allocation4 + $0x61] sm:$0x1]
      %v8895 = vld [vmem:[#allocation4 + $0x71] sm:$0x1]
      %v8896 = vld [vmem:[#allocation4 + $0x81] sm:$0x1]
      %v8897 = vld [vmem:[#allocation4 + $0x91] sm:$0x1]
      %v8898 = vld [vmem:[#allocation4 + $0xa1] sm:$0x1]
      %v8899 = vld [vmem:[#allocation4 + $0xb1] sm:$0x1]
      %v8900 = vld [vmem:[#allocation4 + $0xc1] sm:$0x1]
      %v8901 = vld [vmem:[#allocation4 + $0xd1] sm:$0x1]
      %v8902 = vld [vmem:[#allocation4 + $0xe1] sm:$0x1]
      %v8903 = vld [vmem:[#allocation4 + $0xf1] sm:$0x1]
      %v8904 = vld [vmem:[%s327 + $0x1] sm:$0x1]
      %v8905 = vld [vmem:[%s327 + $0x11] sm:$0x1]
      %v8906 = vld [vmem:[%s327 + $0x21] sm:$0x1]
      %v8907 = vld [vmem:[%s327 + $0x31] sm:$0x1]
      %v8908 = vld [vmem:[%s327 + $0x41] sm:$0x1]
      %v8909 = vld [vmem:[%s327 + $0x51] sm:$0x1]
      %v8910 = vld [vmem:[%s327 + $0x61] sm:$0x1]
      %v8911 = vld [vmem:[%s327 + $0x71] sm:$0x1]
      %v8912 = vld [vmem:[%s327 + $0x81] sm:$0x1]
      %v8913 = vld [vmem:[%s327 + $0x91] sm:$0x1]
      %v8914 = vld [vmem:[%s327 + $0xa1] sm:$0x1]
      %v8915 = vld [vmem:[%s327 + $0xb1] sm:$0x1]
      %v8916 = vld [vmem:[%s327 + $0xc1] sm:$0x1]
      %v8917 = vld [vmem:[%s327 + $0xd1] sm:$0x1]
      %v8918 = vld [vmem:[%s327 + $0xe1] sm:$0x1]
      %v8919 = vld [vmem:[%s327 + $0xf1] sm:$0x1]
      %v8920 = vadd.f32 %v8888, %v8904
      %v8921 = vadd.f32 %v8889, %v8905
      %v8922 = vadd.f32 %v8890, %v8906
      %v8923 = vadd.f32 %v8891, %v8907
      %v8924 = vadd.f32 %v8892, %v8908
      %v8925 = vadd.f32 %v8893, %v8909
      %v8926 = vadd.f32 %v8894, %v8910
      %v8927 = vadd.f32 %v8895, %v8911
      %v8928 = vadd.f32 %v8896, %v8912
      %v8929 = vadd.f32 %v8897, %v8913
      %v8930 = vadd.f32 %v8898, %v8914
      %v8931 = vadd.f32 %v8899, %v8915
      %v8932 = vadd.f32 %v8900, %v8916
      %v8933 = vadd.f32 %v8901, %v8917
      %v8934 = vadd.f32 %v8902, %v8918
      %v8935 = vadd.f32 %v8903, %v8919
      %v8936 = vld [vmem:[#allocation4 + $0x2] sm:$0x1]
      %v8937 = vld [vmem:[#allocation4 + $0x12] sm:$0x1]
      %v8938 = vld [vmem:[#allocation4 + $0x22] sm:$0x1]
      %v8939 = vld [vmem:[#allocation4 + $0x32] sm:$0x1]
      %v8940 = vld [vmem:[#allocation4 + $0x42] sm:$0x1]
      %v8941 = vld [vmem:[#allocation4 + $0x52] sm:$0x1]
      %v8942 = vld [vmem:[#allocation4 + $0x62] sm:$0x1]
      %v8943 = vld [vmem:[#allocation4 + $0x72] sm:$0x1]
      %v8944 = vld [vmem:[#allocation4 + $0x82] sm:$0x1]
      %v8945 = vld [vmem:[#allocation4 + $0x92] sm:$0x1]
      %v8946 = vld [vmem:[#allocation4 + $0xa2] sm:$0x1]
      %v8947 = vld [vmem:[#allocation4 + $0xb2] sm:$0x1]
      %v8948 = vld [vmem:[#allocation4 + $0xc2] sm:$0x1]
      %v8949 = vld [vmem:[#allocation4 + $0xd2] sm:$0x1]
      %v8950 = vld [vmem:[#allocation4 + $0xe2] sm:$0x1]
      %v8951 = vld [vmem:[#allocation4 + $0xf2] sm:$0x1]
      %v8952 = vld [vmem:[%s327 + $0x2] sm:$0x1]
      %v8953 = vld [vmem:[%s327 + $0x12] sm:$0x1]
      %v8954 = vld [vmem:[%s327 + $0x22] sm:$0x1]
      %v8955 = vld [vmem:[%s327 + $0x32] sm:$0x1]
      %v8956 = vld [vmem:[%s327 + $0x42] sm:$0x1]
      %v8957 = vld [vmem:[%s327 + $0x52] sm:$0x1]
      %v8958 = vld [vmem:[%s327 + $0x62] sm:$0x1]
      %v8959 = vld [vmem:[%s327 + $0x72] sm:$0x1]
      %v8960 = vld [vmem:[%s327 + $0x82] sm:$0x1]
      %v8961 = vld [vmem:[%s327 + $0x92] sm:$0x1]
      %v8962 = vld [vmem:[%s327 + $0xa2] sm:$0x1]
      %v8963 = vld [vmem:[%s327 + $0xb2] sm:$0x1]
      %v8964 = vld [vmem:[%s327 + $0xc2] sm:$0x1]
      %v8965 = vld [vmem:[%s327 + $0xd2] sm:$0x1]
      %v8966 = vld [vmem:[%s327 + $0xe2] sm:$0x1]
      %v8967 = vld [vmem:[%s327 + $0xf2] sm:$0x1]
      %v8968 = vadd.f32 %v8936, %v8952
      %v8969 = vadd.f32 %v8937, %v8953
      %v8970 = vadd.f32 %v8938, %v8954
      %v8971 = vadd.f32 %v8939, %v8955
      %v8972 = vadd.f32 %v8940, %v8956
      %v8973 = vadd.f32 %v8941, %v8957
      %v8974 = vadd.f32 %v8942, %v8958
      %v8975 = vadd.f32 %v8943, %v8959
      %v8976 = vadd.f32 %v8944, %v8960
      %v8977 = vadd.f32 %v8945, %v8961
      %v8978 = vadd.f32 %v8946, %v8962
      %v8979 = vadd.f32 %v8947, %v8963
      %v8980 = vadd.f32 %v8948, %v8964
      %v8981 = vadd.f32 %v8949, %v8965
      %v8982 = vadd.f32 %v8950, %v8966
      %v8983 = vadd.f32 %v8951, %v8967
      %v8984 = vld [vmem:[#allocation4 + $0x3] sm:$0x1]
      %v8985 = vld [vmem:[#allocation4 + $0x13] sm:$0x1]
      %v8986 = vld [vmem:[#allocation4 + $0x23] sm:$0x1]
      %v8987 = vld [vmem:[#allocation4 + $0x33] sm:$0x1]
      %v8988 = vld [vmem:[#allocation4 + $0x43] sm:$0x1]
      %v8989 = vld [vmem:[#allocation4 + $0x53] sm:$0x1]
      %v8990 = vld [vmem:[#allocation4 + $0x63] sm:$0x1]
      %v8991 = vld [vmem:[#allocation4 + $0x73] sm:$0x1]
      %v8992 = vld [vmem:[#allocation4 + $0x83] sm:$0x1]
      %v8993 = vld [vmem:[#allocation4 + $0x93] sm:$0x1]
      %v8994 = vld [vmem:[#allocation4 + $0xa3] sm:$0x1]
      %v8995 = vld [vmem:[#allocation4 + $0xb3] sm:$0x1]
      %v8996 = vld [vmem:[#allocation4 + $0xc3] sm:$0x1]
      %v8997 = vld [vmem:[#allocation4 + $0xd3] sm:$0x1]
      %v8998 = vld [vmem:[#allocation4 + $0xe3] sm:$0x1]
      %v8999 = vld [vmem:[#allocation4 + $0xf3] sm:$0x1]
      %v9000 = vld [vmem:[%s327 + $0x3] sm:$0x1]
      %v9001 = vld [vmem:[%s327 + $0x13] sm:$0x1]
      %v9002 = vld [vmem:[%s327 + $0x23] sm:$0x1]
      %v9003 = vld [vmem:[%s327 + $0x33] sm:$0x1]
      %v9004 = vld [vmem:[%s327 + $0x43] sm:$0x1]
      %v9005 = vld [vmem:[%s327 + $0x53] sm:$0x1]
      %v9006 = vld [vmem:[%s327 + $0x63] sm:$0x1]
      %v9007 = vld [vmem:[%s327 + $0x73] sm:$0x1]
      %v9008 = vld [vmem:[%s327 + $0x83] sm:$0x1]
      %v9009 = vld [vmem:[%s327 + $0x93] sm:$0x1]
      %v9010 = vld [vmem:[%s327 + $0xa3] sm:$0x1]
      %v9011 = vld [vmem:[%s327 + $0xb3] sm:$0x1]
      %v9012 = vld [vmem:[%s327 + $0xc3] sm:$0x1]
      %v9013 = vld [vmem:[%s327 + $0xd3] sm:$0x1]
      %v9014 = vld [vmem:[%s327 + $0xe3] sm:$0x1]
      %v9015 = vld [vmem:[%s327 + $0xf3] sm:$0x1]
      %v9016 = vadd.f32 %v8984, %v9000
      %v9017 = vadd.f32 %v8985, %v9001
      %v9018 = vadd.f32 %v8986, %v9002
      %v9019 = vadd.f32 %v8987, %v9003
      %v9020 = vadd.f32 %v8988, %v9004
      %v9021 = vadd.f32 %v8989, %v9005
      %v9022 = vadd.f32 %v8990, %v9006
      %v9023 = vadd.f32 %v8991, %v9007
      %v9024 = vadd.f32 %v8992, %v9008
      %v9025 = vadd.f32 %v8993, %v9009
      %v9026 = vadd.f32 %v8994, %v9010
      %v9027 = vadd.f32 %v8995, %v9011
      %v9028 = vadd.f32 %v8996, %v9012
      %v9029 = vadd.f32 %v8997, %v9013
      %v9030 = vadd.f32 %v8998, %v9014
      %v9031 = vadd.f32 %v8999, %v9015
      %v9032 = vld [vmem:[#allocation4 + $0x4] sm:$0x1]
      %v9033 = vld [vmem:[#allocation4 + $0x14] sm:$0x1]
      %v9034 = vld [vmem:[#allocation4 + $0x24] sm:$0x1]
      %v9035 = vld [vmem:[#allocation4 + $0x34] sm:$0x1]
      %v9036 = vld [vmem:[#allocation4 + $0x44] sm:$0x1]
      %v9037 = vld [vmem:[#allocation4 + $0x54] sm:$0x1]
      %v9038 = vld [vmem:[#allocation4 + $0x64] sm:$0x1]
      %v9039 = vld [vmem:[#allocation4 + $0x74] sm:$0x1]
      %v9040 = vld [vmem:[#allocation4 + $0x84] sm:$0x1]
      %v9041 = vld [vmem:[#allocation4 + $0x94] sm:$0x1]
      %v9042 = vld [vmem:[#allocation4 + $0xa4] sm:$0x1]
      %v9043 = vld [vmem:[#allocation4 + $0xb4] sm:$0x1]
      %v9044 = vld [vmem:[#allocation4 + $0xc4] sm:$0x1]
      %v9045 = vld [vmem:[#allocation4 + $0xd4] sm:$0x1]
      %v9046 = vld [vmem:[#allocation4 + $0xe4] sm:$0x1]
      %v9047 = vld [vmem:[#allocation4 + $0xf4] sm:$0x1]
      %v9048 = vld [vmem:[%s327 + $0x4] sm:$0x1]
      %v9049 = vld [vmem:[%s327 + $0x14] sm:$0x1]
      %v9050 = vld [vmem:[%s327 + $0x24] sm:$0x1]
      %v9051 = vld [vmem:[%s327 + $0x34] sm:$0x1]
      %v9052 = vld [vmem:[%s327 + $0x44] sm:$0x1]
      %v9053 = vld [vmem:[%s327 + $0x54] sm:$0x1]
      %v9054 = vld [vmem:[%s327 + $0x64] sm:$0x1]
      %v9055 = vld [vmem:[%s327 + $0x74] sm:$0x1]
      %v9056 = vld [vmem:[%s327 + $0x84] sm:$0x1]
      %v9057 = vld [vmem:[%s327 + $0x94] sm:$0x1]
      %v9058 = vld [vmem:[%s327 + $0xa4] sm:$0x1]
      %v9059 = vld [vmem:[%s327 + $0xb4] sm:$0x1]
      %v9060 = vld [vmem:[%s327 + $0xc4] sm:$0x1]
      %v9061 = vld [vmem:[%s327 + $0xd4] sm:$0x1]
      %v9062 = vld [vmem:[%s327 + $0xe4] sm:$0x1]
      %v9063 = vld [vmem:[%s327 + $0xf4] sm:$0x1]
      %v9064 = vadd.f32 %v9032, %v9048
      %v9065 = vadd.f32 %v9033, %v9049
      %v9066 = vadd.f32 %v9034, %v9050
      %v9067 = vadd.f32 %v9035, %v9051
      %v9068 = vadd.f32 %v9036, %v9052
      %v9069 = vadd.f32 %v9037, %v9053
      %v9070 = vadd.f32 %v9038, %v9054
      %v9071 = vadd.f32 %v9039, %v9055
      %v9072 = vadd.f32 %v9040, %v9056
      %v9073 = vadd.f32 %v9041, %v9057
      %v9074 = vadd.f32 %v9042, %v9058
      %v9075 = vadd.f32 %v9043, %v9059
      %v9076 = vadd.f32 %v9044, %v9060
      %v9077 = vadd.f32 %v9045, %v9061
      %v9078 = vadd.f32 %v9046, %v9062
      %v9079 = vadd.f32 %v9047, %v9063
      %v9080 = vld [vmem:[#allocation4 + $0x5] sm:$0x1]
      %v9081 = vld [vmem:[#allocation4 + $0x15] sm:$0x1]
      %v9082 = vld [vmem:[#allocation4 + $0x25] sm:$0x1]
      %v9083 = vld [vmem:[#allocation4 + $0x35] sm:$0x1]
      %v9084 = vld [vmem:[#allocation4 + $0x45] sm:$0x1]
      %v9085 = vld [vmem:[#allocation4 + $0x55] sm:$0x1]
      %v9086 = vld [vmem:[#allocation4 + $0x65] sm:$0x1]
      %v9087 = vld [vmem:[#allocation4 + $0x75] sm:$0x1]
      %v9088 = vld [vmem:[#allocation4 + $0x85] sm:$0x1]
      %v9089 = vld [vmem:[#allocation4 + $0x95] sm:$0x1]
      %v9090 = vld [vmem:[#allocation4 + $0xa5] sm:$0x1]
      %v9091 = vld [vmem:[#allocation4 + $0xb5] sm:$0x1]
      %v9092 = vld [vmem:[#allocation4 + $0xc5] sm:$0x1]
      %v9093 = vld [vmem:[#allocation4 + $0xd5] sm:$0x1]
      %v9094 = vld [vmem:[#allocation4 + $0xe5] sm:$0x1]
      %v9095 = vld [vmem:[#allocation4 + $0xf5] sm:$0x1]
      %v9096 = vld [vmem:[%s327 + $0x5] sm:$0x1]
      %v9097 = vld [vmem:[%s327 + $0x15] sm:$0x1]
      %v9098 = vld [vmem:[%s327 + $0x25] sm:$0x1]
      %v9099 = vld [vmem:[%s327 + $0x35] sm:$0x1]
      %v9100 = vld [vmem:[%s327 + $0x45] sm:$0x1]
      %v9101 = vld [vmem:[%s327 + $0x55] sm:$0x1]
      %v9102 = vld [vmem:[%s327 + $0x65] sm:$0x1]
      %v9103 = vld [vmem:[%s327 + $0x75] sm:$0x1]
      %v9104 = vld [vmem:[%s327 + $0x85] sm:$0x1]
      %v9105 = vld [vmem:[%s327 + $0x95] sm:$0x1]
      %v9106 = vld [vmem:[%s327 + $0xa5] sm:$0x1]
      %v9107 = vld [vmem:[%s327 + $0xb5] sm:$0x1]
      %v9108 = vld [vmem:[%s327 + $0xc5] sm:$0x1]
      %v9109 = vld [vmem:[%s327 + $0xd5] sm:$0x1]
      %v9110 = vld [vmem:[%s327 + $0xe5] sm:$0x1]
      %v9111 = vld [vmem:[%s327 + $0xf5] sm:$0x1]
      %v9112 = vadd.f32 %v9080, %v9096
      %v9113 = vadd.f32 %v9081, %v9097
      %v9114 = vadd.f32 %v9082, %v9098
      %v9115 = vadd.f32 %v9083, %v9099
      %v9116 = vadd.f32 %v9084, %v9100
      %v9117 = vadd.f32 %v9085, %v9101
      %v9118 = vadd.f32 %v9086, %v9102
      %v9119 = vadd.f32 %v9087, %v9103
      %v9120 = vadd.f32 %v9088, %v9104
      %v9121 = vadd.f32 %v9089, %v9105
      %v9122 = vadd.f32 %v9090, %v9106
      %v9123 = vadd.f32 %v9091, %v9107
      %v9124 = vadd.f32 %v9092, %v9108
      %v9125 = vadd.f32 %v9093, %v9109
      %v9126 = vadd.f32 %v9094, %v9110
      %v9127 = vadd.f32 %v9095, %v9111
      %v9128 = vld [vmem:[#allocation4 + $0x6] sm:$0x1]
      %v9129 = vld [vmem:[#allocation4 + $0x16] sm:$0x1]
      %v9130 = vld [vmem:[#allocation4 + $0x26] sm:$0x1]
      %v9131 = vld [vmem:[#allocation4 + $0x36] sm:$0x1]
      %v9132 = vld [vmem:[#allocation4 + $0x46] sm:$0x1]
      %v9133 = vld [vmem:[#allocation4 + $0x56] sm:$0x1]
      %v9134 = vld [vmem:[#allocation4 + $0x66] sm:$0x1]
      %v9135 = vld [vmem:[#allocation4 + $0x76] sm:$0x1]
      %v9136 = vld [vmem:[#allocation4 + $0x86] sm:$0x1]
      %v9137 = vld [vmem:[#allocation4 + $0x96] sm:$0x1]
      %v9138 = vld [vmem:[#allocation4 + $0xa6] sm:$0x1]
      %v9139 = vld [vmem:[#allocation4 + $0xb6] sm:$0x1]
      %v9140 = vld [vmem:[#allocation4 + $0xc6] sm:$0x1]
      %v9141 = vld [vmem:[#allocation4 + $0xd6] sm:$0x1]
      %v9142 = vld [vmem:[#allocation4 + $0xe6] sm:$0x1]
      %v9143 = vld [vmem:[#allocation4 + $0xf6] sm:$0x1]
      %v9144 = vld [vmem:[%s327 + $0x6] sm:$0x1]
      %v9145 = vld [vmem:[%s327 + $0x16] sm:$0x1]
      %v9146 = vld [vmem:[%s327 + $0x26] sm:$0x1]
      %v9147 = vld [vmem:[%s327 + $0x36] sm:$0x1]
      %v9148 = vld [vmem:[%s327 + $0x46] sm:$0x1]
      %v9149 = vld [vmem:[%s327 + $0x56] sm:$0x1]
      %v9150 = vld [vmem:[%s327 + $0x66] sm:$0x1]
      %v9151 = vld [vmem:[%s327 + $0x76] sm:$0x1]
      %v9152 = vld [vmem:[%s327 + $0x86] sm:$0x1]
      %v9153 = vld [vmem:[%s327 + $0x96] sm:$0x1]
      %v9154 = vld [vmem:[%s327 + $0xa6] sm:$0x1]
      %v9155 = vld [vmem:[%s327 + $0xb6] sm:$0x1]
      %v9156 = vld [vmem:[%s327 + $0xc6] sm:$0x1]
      %v9157 = vld [vmem:[%s327 + $0xd6] sm:$0x1]
      %v9158 = vld [vmem:[%s327 + $0xe6] sm:$0x1]
      %v9159 = vld [vmem:[%s327 + $0xf6] sm:$0x1]
      %v9160 = vadd.f32 %v9128, %v9144
      %v9161 = vadd.f32 %v9129, %v9145
      %v9162 = vadd.f32 %v9130, %v9146
      %v9163 = vadd.f32 %v9131, %v9147
      %v9164 = vadd.f32 %v9132, %v9148
      %v9165 = vadd.f32 %v9133, %v9149
      %v9166 = vadd.f32 %v9134, %v9150
      %v9167 = vadd.f32 %v9135, %v9151
      %v9168 = vadd.f32 %v9136, %v9152
      %v9169 = vadd.f32 %v9137, %v9153
      %v9170 = vadd.f32 %v9138, %v9154
      %v9171 = vadd.f32 %v9139, %v9155
      %v9172 = vadd.f32 %v9140, %v9156
      %v9173 = vadd.f32 %v9141, %v9157
      %v9174 = vadd.f32 %v9142, %v9158
      %v9175 = vadd.f32 %v9143, %v9159
      %v9176 = vld [vmem:[#allocation4 + $0x7] sm:$0x1]
      %v9177 = vld [vmem:[#allocation4 + $0x17] sm:$0x1]
      %v9178 = vld [vmem:[#allocation4 + $0x27] sm:$0x1]
      %v9179 = vld [vmem:[#allocation4 + $0x37] sm:$0x1]
      %v9180 = vld [vmem:[#allocation4 + $0x47] sm:$0x1]
      %v9181 = vld [vmem:[#allocation4 + $0x57] sm:$0x1]
      %v9182 = vld [vmem:[#allocation4 + $0x67] sm:$0x1]
      %v9183 = vld [vmem:[#allocation4 + $0x77] sm:$0x1]
      %v9184 = vld [vmem:[#allocation4 + $0x87] sm:$0x1]
      %v9185 = vld [vmem:[#allocation4 + $0x97] sm:$0x1]
      %v9186 = vld [vmem:[#allocation4 + $0xa7] sm:$0x1]
      %v9187 = vld [vmem:[#allocation4 + $0xb7] sm:$0x1]
      %v9188 = vld [vmem:[#allocation4 + $0xc7] sm:$0x1]
      %v9189 = vld [vmem:[#allocation4 + $0xd7] sm:$0x1]
      %v9190 = vld [vmem:[#allocation4 + $0xe7] sm:$0x1]
      %v9191 = vld [vmem:[#allocation4 + $0xf7] sm:$0x1]
      %v9192 = vld [vmem:[%s327 + $0x7] sm:$0x1]
      %v9193 = vld [vmem:[%s327 + $0x17] sm:$0x1]
      %v9194 = vld [vmem:[%s327 + $0x27] sm:$0x1]
      %v9195 = vld [vmem:[%s327 + $0x37] sm:$0x1]
      %v9196 = vld [vmem:[%s327 + $0x47] sm:$0x1]
      %v9197 = vld [vmem:[%s327 + $0x57] sm:$0x1]
      %v9198 = vld [vmem:[%s327 + $0x67] sm:$0x1]
      %v9199 = vld [vmem:[%s327 + $0x77] sm:$0x1]
      %v9200 = vld [vmem:[%s327 + $0x87] sm:$0x1]
      %v9201 = vld [vmem:[%s327 + $0x97] sm:$0x1]
      %v9202 = vld [vmem:[%s327 + $0xa7] sm:$0x1]
      %v9203 = vld [vmem:[%s327 + $0xb7] sm:$0x1]
      %v9204 = vld [vmem:[%s327 + $0xc7] sm:$0x1]
      %v9205 = vld [vmem:[%s327 + $0xd7] sm:$0x1]
      %v9206 = vld [vmem:[%s327 + $0xe7] sm:$0x1]
      %v9207 = vld [vmem:[%s327 + $0xf7] sm:$0x1]
      %v9208 = vadd.f32 %v9176, %v9192
      %v9209 = vadd.f32 %v9177, %v9193
      %v9210 = vadd.f32 %v9178, %v9194
      %v9211 = vadd.f32 %v9179, %v9195
      %v9212 = vadd.f32 %v9180, %v9196
      %v9213 = vadd.f32 %v9181, %v9197
      %v9214 = vadd.f32 %v9182, %v9198
      %v9215 = vadd.f32 %v9183, %v9199
      %v9216 = vadd.f32 %v9184, %v9200
      %v9217 = vadd.f32 %v9185, %v9201
      %v9218 = vadd.f32 %v9186, %v9202
      %v9219 = vadd.f32 %v9187, %v9203
      %v9220 = vadd.f32 %v9188, %v9204
      %v9221 = vadd.f32 %v9189, %v9205
      %v9222 = vadd.f32 %v9190, %v9206
      %v9223 = vadd.f32 %v9191, %v9207
      %v9224 = vld [vmem:[#allocation4 + $0x8] sm:$0x1]
      %v9225 = vld [vmem:[#allocation4 + $0x18] sm:$0x1]
      %v9226 = vld [vmem:[#allocation4 + $0x28] sm:$0x1]
      %v9227 = vld [vmem:[#allocation4 + $0x38] sm:$0x1]
      %v9228 = vld [vmem:[#allocation4 + $0x48] sm:$0x1]
      %v9229 = vld [vmem:[#allocation4 + $0x58] sm:$0x1]
      %v9230 = vld [vmem:[#allocation4 + $0x68] sm:$0x1]
      %v9231 = vld [vmem:[#allocation4 + $0x78] sm:$0x1]
      %v9232 = vld [vmem:[#allocation4 + $0x88] sm:$0x1]
      %v9233 = vld [vmem:[#allocation4 + $0x98] sm:$0x1]
      %v9234 = vld [vmem:[#allocation4 + $0xa8] sm:$0x1]
      %v9235 = vld [vmem:[#allocation4 + $0xb8] sm:$0x1]
      %v9236 = vld [vmem:[#allocation4 + $0xc8] sm:$0x1]
      %v9237 = vld [vmem:[#allocation4 + $0xd8] sm:$0x1]
      %v9238 = vld [vmem:[#allocation4 + $0xe8] sm:$0x1]
      %v9239 = vld [vmem:[#allocation4 + $0xf8] sm:$0x1]
      %v9240 = vld [vmem:[%s327 + $0x8] sm:$0x1]
      %v9241 = vld [vmem:[%s327 + $0x18] sm:$0x1]
      %v9242 = vld [vmem:[%s327 + $0x28] sm:$0x1]
      %v9243 = vld [vmem:[%s327 + $0x38] sm:$0x1]
      %v9244 = vld [vmem:[%s327 + $0x48] sm:$0x1]
      %v9245 = vld [vmem:[%s327 + $0x58] sm:$0x1]
      %v9246 = vld [vmem:[%s327 + $0x68] sm:$0x1]
      %v9247 = vld [vmem:[%s327 + $0x78] sm:$0x1]
      %v9248 = vld [vmem:[%s327 + $0x88] sm:$0x1]
      %v9249 = vld [vmem:[%s327 + $0x98] sm:$0x1]
      %v9250 = vld [vmem:[%s327 + $0xa8] sm:$0x1]
      %v9251 = vld [vmem:[%s327 + $0xb8] sm:$0x1]
      %v9252 = vld [vmem:[%s327 + $0xc8] sm:$0x1]
      %v9253 = vld [vmem:[%s327 + $0xd8] sm:$0x1]
      %v9254 = vld [vmem:[%s327 + $0xe8] sm:$0x1]
      %v9255 = vld [vmem:[%s327 + $0xf8] sm:$0x1]
      %v9256 = vadd.f32 %v9224, %v9240
      %v9257 = vadd.f32 %v9225, %v9241
      %v9258 = vadd.f32 %v9226, %v9242
      %v9259 = vadd.f32 %v9227, %v9243
      %v9260 = vadd.f32 %v9228, %v9244
      %v9261 = vadd.f32 %v9229, %v9245
      %v9262 = vadd.f32 %v9230, %v9246
      %v9263 = vadd.f32 %v9231, %v9247
      %v9264 = vadd.f32 %v9232, %v9248
      %v9265 = vadd.f32 %v9233, %v9249
      %v9266 = vadd.f32 %v9234, %v9250
      %v9267 = vadd.f32 %v9235, %v9251
      %v9268 = vadd.f32 %v9236, %v9252
      %v9269 = vadd.f32 %v9237, %v9253
      %v9270 = vadd.f32 %v9238, %v9254
      %v9271 = vadd.f32 %v9239, %v9255
      %v9272 = vld [vmem:[#allocation4 + $0x9] sm:$0x1]
      %v9273 = vld [vmem:[#allocation4 + $0x19] sm:$0x1]
      %v9274 = vld [vmem:[#allocation4 + $0x29] sm:$0x1]
      %v9275 = vld [vmem:[#allocation4 + $0x39] sm:$0x1]
      %v9276 = vld [vmem:[#allocation4 + $0x49] sm:$0x1]
      %v9277 = vld [vmem:[#allocation4 + $0x59] sm:$0x1]
      %v9278 = vld [vmem:[#allocation4 + $0x69] sm:$0x1]
      %v9279 = vld [vmem:[#allocation4 + $0x79] sm:$0x1]
      %v9280 = vld [vmem:[#allocation4 + $0x89] sm:$0x1]
      %v9281 = vld [vmem:[#allocation4 + $0x99] sm:$0x1]
      %v9282 = vld [vmem:[#allocation4 + $0xa9] sm:$0x1]
      %v9283 = vld [vmem:[#allocation4 + $0xb9] sm:$0x1]
      %v9284 = vld [vmem:[#allocation4 + $0xc9] sm:$0x1]
      %v9285 = vld [vmem:[#allocation4 + $0xd9] sm:$0x1]
      %v9286 = vld [vmem:[#allocation4 + $0xe9] sm:$0x1]
      %v9287 = vld [vmem:[#allocation4 + $0xf9] sm:$0x1]
      %v9288 = vld [vmem:[%s327 + $0x9] sm:$0x1]
      %v9289 = vld [vmem:[%s327 + $0x19] sm:$0x1]
      %v9290 = vld [vmem:[%s327 + $0x29] sm:$0x1]
      %v9291 = vld [vmem:[%s327 + $0x39] sm:$0x1]
      %v9292 = vld [vmem:[%s327 + $0x49] sm:$0x1]
      %v9293 = vld [vmem:[%s327 + $0x59] sm:$0x1]
      %v9294 = vld [vmem:[%s327 + $0x69] sm:$0x1]
      %v9295 = vld [vmem:[%s327 + $0x79] sm:$0x1]
      %v9296 = vld [vmem:[%s327 + $0x89] sm:$0x1]
      %v9297 = vld [vmem:[%s327 + $0x99] sm:$0x1]
      %v9298 = vld [vmem:[%s327 + $0xa9] sm:$0x1]
      %v9299 = vld [vmem:[%s327 + $0xb9] sm:$0x1]
      %v9300 = vld [vmem:[%s327 + $0xc9] sm:$0x1]
      %v9301 = vld [vmem:[%s327 + $0xd9] sm:$0x1]
      %v9302 = vld [vmem:[%s327 + $0xe9] sm:$0x1]
      %v9303 = vld [vmem:[%s327 + $0xf9] sm:$0x1]
      %v9304 = vadd.f32 %v9272, %v9288
      %v9305 = vadd.f32 %v9273, %v9289
      %v9306 = vadd.f32 %v9274, %v9290
      %v9307 = vadd.f32 %v9275, %v9291
      %v9308 = vadd.f32 %v9276, %v9292
      %v9309 = vadd.f32 %v9277, %v9293
      %v9310 = vadd.f32 %v9278, %v9294
      %v9311 = vadd.f32 %v9279, %v9295
      %v9312 = vadd.f32 %v9280, %v9296
      %v9313 = vadd.f32 %v9281, %v9297
      %v9314 = vadd.f32 %v9282, %v9298
      %v9315 = vadd.f32 %v9283, %v9299
      %v9316 = vadd.f32 %v9284, %v9300
      %v9317 = vadd.f32 %v9285, %v9301
      %v9318 = vadd.f32 %v9286, %v9302
      %v9319 = vadd.f32 %v9287, %v9303
      %v9320 = vld [vmem:[#allocation4 + $0xa] sm:$0x1]
      %v9321 = vld [vmem:[#allocation4 + $0x1a] sm:$0x1]
      %v9322 = vld [vmem:[#allocation4 + $0x2a] sm:$0x1]
      %v9323 = vld [vmem:[#allocation4 + $0x3a] sm:$0x1]
      %v9324 = vld [vmem:[#allocation4 + $0x4a] sm:$0x1]
      %v9325 = vld [vmem:[#allocation4 + $0x5a] sm:$0x1]
      %v9326 = vld [vmem:[#allocation4 + $0x6a] sm:$0x1]
      %v9327 = vld [vmem:[#allocation4 + $0x7a] sm:$0x1]
      %v9328 = vld [vmem:[#allocation4 + $0x8a] sm:$0x1]
      %v9329 = vld [vmem:[#allocation4 + $0x9a] sm:$0x1]
      %v9330 = vld [vmem:[#allocation4 + $0xaa] sm:$0x1]
      %v9331 = vld [vmem:[#allocation4 + $0xba] sm:$0x1]
      %v9332 = vld [vmem:[#allocation4 + $0xca] sm:$0x1]
      %v9333 = vld [vmem:[#allocation4 + $0xda] sm:$0x1]
      %v9334 = vld [vmem:[#allocation4 + $0xea] sm:$0x1]
      %v9335 = vld [vmem:[#allocation4 + $0xfa] sm:$0x1]
      %v9336 = vld [vmem:[%s327 + $0xa] sm:$0x1]
      %v9337 = vld [vmem:[%s327 + $0x1a] sm:$0x1]
      %v9338 = vld [vmem:[%s327 + $0x2a] sm:$0x1]
      %v9339 = vld [vmem:[%s327 + $0x3a] sm:$0x1]
      %v9340 = vld [vmem:[%s327 + $0x4a] sm:$0x1]
      %v9341 = vld [vmem:[%s327 + $0x5a] sm:$0x1]
      %v9342 = vld [vmem:[%s327 + $0x6a] sm:$0x1]
      %v9343 = vld [vmem:[%s327 + $0x7a] sm:$0x1]
      %v9344 = vld [vmem:[%s327 + $0x8a] sm:$0x1]
      %v9345 = vld [vmem:[%s327 + $0x9a] sm:$0x1]
      %v9346 = vld [vmem:[%s327 + $0xaa] sm:$0x1]
      %v9347 = vld [vmem:[%s327 + $0xba] sm:$0x1]
      %v9348 = vld [vmem:[%s327 + $0xca] sm:$0x1]
      %v9349 = vld [vmem:[%s327 + $0xda] sm:$0x1]
      %v9350 = vld [vmem:[%s327 + $0xea] sm:$0x1]
      %v9351 = vld [vmem:[%s327 + $0xfa] sm:$0x1]
      %v9352 = vadd.f32 %v9320, %v9336
      %v9353 = vadd.f32 %v9321, %v9337
      %v9354 = vadd.f32 %v9322, %v9338
      %v9355 = vadd.f32 %v9323, %v9339
      %v9356 = vadd.f32 %v9324, %v9340
      %v9357 = vadd.f32 %v9325, %v9341
      %v9358 = vadd.f32 %v9326, %v9342
      %v9359 = vadd.f32 %v9327, %v9343
      %v9360 = vadd.f32 %v9328, %v9344
      %v9361 = vadd.f32 %v9329, %v9345
      %v9362 = vadd.f32 %v9330, %v9346
      %v9363 = vadd.f32 %v9331, %v9347
      %v9364 = vadd.f32 %v9332, %v9348
      %v9365 = vadd.f32 %v9333, %v9349
      %v9366 = vadd.f32 %v9334, %v9350
      %v9367 = vadd.f32 %v9335, %v9351
      %v9368 = vld [vmem:[#allocation4 + $0xb] sm:$0x1]
      %v9369 = vld [vmem:[#allocation4 + $0x1b] sm:$0x1]
      %v9370 = vld [vmem:[#allocation4 + $0x2b] sm:$0x1]
      %v9371 = vld [vmem:[#allocation4 + $0x3b] sm:$0x1]
      %v9372 = vld [vmem:[#allocation4 + $0x4b] sm:$0x1]
      %v9373 = vld [vmem:[#allocation4 + $0x5b] sm:$0x1]
      %v9374 = vld [vmem:[#allocation4 + $0x6b] sm:$0x1]
      %v9375 = vld [vmem:[#allocation4 + $0x7b] sm:$0x1]
      %v9376 = vld [vmem:[#allocation4 + $0x8b] sm:$0x1]
      %v9377 = vld [vmem:[#allocation4 + $0x9b] sm:$0x1]
      %v9378 = vld [vmem:[#allocation4 + $0xab] sm:$0x1]
      %v9379 = vld [vmem:[#allocation4 + $0xbb] sm:$0x1]
      %v9380 = vld [vmem:[#allocation4 + $0xcb] sm:$0x1]
      %v9381 = vld [vmem:[#allocation4 + $0xdb] sm:$0x1]
      %v9382 = vld [vmem:[#allocation4 + $0xeb] sm:$0x1]
      %v9383 = vld [vmem:[#allocation4 + $0xfb] sm:$0x1]
      %v9384 = vld [vmem:[%s327 + $0xb] sm:$0x1]
      %v9385 = vld [vmem:[%s327 + $0x1b] sm:$0x1]
      %v9386 = vld [vmem:[%s327 + $0x2b] sm:$0x1]
      %v9387 = vld [vmem:[%s327 + $0x3b] sm:$0x1]
      %v9388 = vld [vmem:[%s327 + $0x4b] sm:$0x1]
      %v9389 = vld [vmem:[%s327 + $0x5b] sm:$0x1]
      %v9390 = vld [vmem:[%s327 + $0x6b] sm:$0x1]
      %v9391 = vld [vmem:[%s327 + $0x7b] sm:$0x1]
      %v9392 = vld [vmem:[%s327 + $0x8b] sm:$0x1]
      %v9393 = vld [vmem:[%s327 + $0x9b] sm:$0x1]
      %v9394 = vld [vmem:[%s327 + $0xab] sm:$0x1]
      %v9395 = vld [vmem:[%s327 + $0xbb] sm:$0x1]
      %v9396 = vld [vmem:[%s327 + $0xcb] sm:$0x1]
      %v9397 = vld [vmem:[%s327 + $0xdb] sm:$0x1]
      %v9398 = vld [vmem:[%s327 + $0xeb] sm:$0x1]
      %v9399 = vld [vmem:[%s327 + $0xfb] sm:$0x1]
      %v9400 = vadd.f32 %v9368, %v9384
      %v9401 = vadd.f32 %v9369, %v9385
      %v9402 = vadd.f32 %v9370, %v9386
      %v9403 = vadd.f32 %v9371, %v9387
      %v9404 = vadd.f32 %v9372, %v9388
      %v9405 = vadd.f32 %v9373, %v9389
      %v9406 = vadd.f32 %v9374, %v9390
      %v9407 = vadd.f32 %v9375, %v9391
      %v9408 = vadd.f32 %v9376, %v9392
      %v9409 = vadd.f32 %v9377, %v9393
      %v9410 = vadd.f32 %v9378, %v9394
      %v9411 = vadd.f32 %v9379, %v9395
      %v9412 = vadd.f32 %v9380, %v9396
      %v9413 = vadd.f32 %v9381, %v9397
      %v9414 = vadd.f32 %v9382, %v9398
      %v9415 = vadd.f32 %v9383, %v9399
      %v9416 = vld [vmem:[#allocation4 + $0xc] sm:$0x1]
      %v9417 = vld [vmem:[#allocation4 + $0x1c] sm:$0x1]
      %v9418 = vld [vmem:[#allocation4 + $0x2c] sm:$0x1]
      %v9419 = vld [vmem:[#allocation4 + $0x3c] sm:$0x1]
      %v9420 = vld [vmem:[#allocation4 + $0x4c] sm:$0x1]
      %v9421 = vld [vmem:[#allocation4 + $0x5c] sm:$0x1]
      %v9422 = vld [vmem:[#allocation4 + $0x6c] sm:$0x1]
      %v9423 = vld [vmem:[#allocation4 + $0x7c] sm:$0x1]
      %v9424 = vld [vmem:[#allocation4 + $0x8c] sm:$0x1]
      %v9425 = vld [vmem:[#allocation4 + $0x9c] sm:$0x1]
      %v9426 = vld [vmem:[#allocation4 + $0xac] sm:$0x1]
      %v9427 = vld [vmem:[#allocation4 + $0xbc] sm:$0x1]
      %v9428 = vld [vmem:[#allocation4 + $0xcc] sm:$0x1]
      %v9429 = vld [vmem:[#allocation4 + $0xdc] sm:$0x1]
      %v9430 = vld [vmem:[#allocation4 + $0xec] sm:$0x1]
      %v9431 = vld [vmem:[#allocation4 + $0xfc] sm:$0x1]
      %v9432 = vld [vmem:[%s327 + $0xc] sm:$0x1]
      %v9433 = vld [vmem:[%s327 + $0x1c] sm:$0x1]
      %v9434 = vld [vmem:[%s327 + $0x2c] sm:$0x1]
      %v9435 = vld [vmem:[%s327 + $0x3c] sm:$0x1]
      %v9436 = vld [vmem:[%s327 + $0x4c] sm:$0x1]
      %v9437 = vld [vmem:[%s327 + $0x5c] sm:$0x1]
      %v9438 = vld [vmem:[%s327 + $0x6c] sm:$0x1]
      %v9439 = vld [vmem:[%s327 + $0x7c] sm:$0x1]
      %v9440 = vld [vmem:[%s327 + $0x8c] sm:$0x1]
      %v9441 = vld [vmem:[%s327 + $0x9c] sm:$0x1]
      %v9442 = vld [vmem:[%s327 + $0xac] sm:$0x1]
      %v9443 = vld [vmem:[%s327 + $0xbc] sm:$0x1]
      %v9444 = vld [vmem:[%s327 + $0xcc] sm:$0x1]
      %v9445 = vld [vmem:[%s327 + $0xdc] sm:$0x1]
      %v9446 = vld [vmem:[%s327 + $0xec] sm:$0x1]
      %v9447 = vld [vmem:[%s327 + $0xfc] sm:$0x1]
      %v9448 = vadd.f32 %v9416, %v9432
      %v9449 = vadd.f32 %v9417, %v9433
      %v9450 = vadd.f32 %v9418, %v9434
      %v9451 = vadd.f32 %v9419, %v9435
      %v9452 = vadd.f32 %v9420, %v9436
      %v9453 = vadd.f32 %v9421, %v9437
      %v9454 = vadd.f32 %v9422, %v9438
      %v9455 = vadd.f32 %v9423, %v9439
      %v9456 = vadd.f32 %v9424, %v9440
      %v9457 = vadd.f32 %v9425, %v9441
      %v9458 = vadd.f32 %v9426, %v9442
      %v9459 = vadd.f32 %v9427, %v9443
      %v9460 = vadd.f32 %v9428, %v9444
      %v9461 = vadd.f32 %v9429, %v9445
      %v9462 = vadd.f32 %v9430, %v9446
      %v9463 = vadd.f32 %v9431, %v9447
      %v9464 = vld [vmem:[#allocation4 + $0xd] sm:$0x1]
      %v9465 = vld [vmem:[#allocation4 + $0x1d] sm:$0x1]
      %v9466 = vld [vmem:[#allocation4 + $0x2d] sm:$0x1]
      %v9467 = vld [vmem:[#allocation4 + $0x3d] sm:$0x1]
      %v9468 = vld [vmem:[#allocation4 + $0x4d] sm:$0x1]
      %v9469 = vld [vmem:[#allocation4 + $0x5d] sm:$0x1]
      %v9470 = vld [vmem:[#allocation4 + $0x6d] sm:$0x1]
      %v9471 = vld [vmem:[#allocation4 + $0x7d] sm:$0x1]
      %v9472 = vld [vmem:[#allocation4 + $0x8d] sm:$0x1]
      %v9473 = vld [vmem:[#allocation4 + $0x9d] sm:$0x1]
      %v9474 = vld [vmem:[#allocation4 + $0xad] sm:$0x1]
      %v9475 = vld [vmem:[#allocation4 + $0xbd] sm:$0x1]
      %v9476 = vld [vmem:[#allocation4 + $0xcd] sm:$0x1]
      %v9477 = vld [vmem:[#allocation4 + $0xdd] sm:$0x1]
      %v9478 = vld [vmem:[#allocation4 + $0xed] sm:$0x1]
      %v9479 = vld [vmem:[#allocation4 + $0xfd] sm:$0x1]
      %v9480 = vld [vmem:[%s327 + $0xd] sm:$0x1]
      %v9481 = vld [vmem:[%s327 + $0x1d] sm:$0x1]
      %v9482 = vld [vmem:[%s327 + $0x2d] sm:$0x1]
      %v9483 = vld [vmem:[%s327 + $0x3d] sm:$0x1]
      %v9484 = vld [vmem:[%s327 + $0x4d] sm:$0x1]
      %v9485 = vld [vmem:[%s327 + $0x5d] sm:$0x1]
      %v9486 = vld [vmem:[%s327 + $0x6d] sm:$0x1]
      %v9487 = vld [vmem:[%s327 + $0x7d] sm:$0x1]
      %v9488 = vld [vmem:[%s327 + $0x8d] sm:$0x1]
      %v9489 = vld [vmem:[%s327 + $0x9d] sm:$0x1]
      %v9490 = vld [vmem:[%s327 + $0xad] sm:$0x1]
      %v9491 = vld [vmem:[%s327 + $0xbd] sm:$0x1]
      %v9492 = vld [vmem:[%s327 + $0xcd] sm:$0x1]
      %v9493 = vld [vmem:[%s327 + $0xdd] sm:$0x1]
      %v9494 = vld [vmem:[%s327 + $0xed] sm:$0x1]
      %v9495 = vld [vmem:[%s327 + $0xfd] sm:$0x1]
      %v9496 = vadd.f32 %v9464, %v9480
      %v9497 = vadd.f32 %v9465, %v9481
      %v9498 = vadd.f32 %v9466, %v9482
      %v9499 = vadd.f32 %v9467, %v9483
      %v9500 = vadd.f32 %v9468, %v9484
      %v9501 = vadd.f32 %v9469, %v9485
      %v9502 = vadd.f32 %v9470, %v9486
      %v9503 = vadd.f32 %v9471, %v9487
      %v9504 = vadd.f32 %v9472, %v9488
      %v9505 = vadd.f32 %v9473, %v9489
      %v9506 = vadd.f32 %v9474, %v9490
      %v9507 = vadd.f32 %v9475, %v9491
      %v9508 = vadd.f32 %v9476, %v9492
      %v9509 = vadd.f32 %v9477, %v9493
      %v9510 = vadd.f32 %v9478, %v9494
      %v9511 = vadd.f32 %v9479, %v9495
      %v9512 = vld [vmem:[#allocation4 + $0xe] sm:$0x1]
      %v9513 = vld [vmem:[#allocation4 + $0x1e] sm:$0x1]
      %v9514 = vld [vmem:[#allocation4 + $0x2e] sm:$0x1]
      %v9515 = vld [vmem:[#allocation4 + $0x3e] sm:$0x1]
      %v9516 = vld [vmem:[#allocation4 + $0x4e] sm:$0x1]
      %v9517 = vld [vmem:[#allocation4 + $0x5e] sm:$0x1]
      %v9518 = vld [vmem:[#allocation4 + $0x6e] sm:$0x1]
      %v9519 = vld [vmem:[#allocation4 + $0x7e] sm:$0x1]
      %v9520 = vld [vmem:[#allocation4 + $0x8e] sm:$0x1]
      %v9521 = vld [vmem:[#allocation4 + $0x9e] sm:$0x1]
      %v9522 = vld [vmem:[#allocation4 + $0xae] sm:$0x1]
      %v9523 = vld [vmem:[#allocation4 + $0xbe] sm:$0x1]
      %v9524 = vld [vmem:[#allocation4 + $0xce] sm:$0x1]
      %v9525 = vld [vmem:[#allocation4 + $0xde] sm:$0x1]
      %v9526 = vld [vmem:[#allocation4 + $0xee] sm:$0x1]
      %v9527 = vld [vmem:[#allocation4 + $0xfe] sm:$0x1]
      %v9528 = vld [vmem:[%s327 + $0xe] sm:$0x1]
      %v9529 = vld [vmem:[%s327 + $0x1e] sm:$0x1]
      %v9530 = vld [vmem:[%s327 + $0x2e] sm:$0x1]
      %v9531 = vld [vmem:[%s327 + $0x3e] sm:$0x1]
      %v9532 = vld [vmem:[%s327 + $0x4e] sm:$0x1]
      %v9533 = vld [vmem:[%s327 + $0x5e] sm:$0x1]
      %v9534 = vld [vmem:[%s327 + $0x6e] sm:$0x1]
      %v9535 = vld [vmem:[%s327 + $0x7e] sm:$0x1]
      %v9536 = vld [vmem:[%s327 + $0x8e] sm:$0x1]
      %v9537 = vld [vmem:[%s327 + $0x9e] sm:$0x1]
      %v9538 = vld [vmem:[%s327 + $0xae] sm:$0x1]
      %v9539 = vld [vmem:[%s327 + $0xbe] sm:$0x1]
      %v9540 = vld [vmem:[%s327 + $0xce] sm:$0x1]
      %v9541 = vld [vmem:[%s327 + $0xde] sm:$0x1]
      %v9542 = vld [vmem:[%s327 + $0xee] sm:$0x1]
      %v9543 = vld [vmem:[%s327 + $0xfe] sm:$0x1]
      %v9544 = vadd.f32 %v9512, %v9528
      %v9545 = vadd.f32 %v9513, %v9529
      %v9546 = vadd.f32 %v9514, %v9530
      %v9547 = vadd.f32 %v9515, %v9531
      %v9548 = vadd.f32 %v9516, %v9532
      %v9549 = vadd.f32 %v9517, %v9533
      %v9550 = vadd.f32 %v9518, %v9534
      %v9551 = vadd.f32 %v9519, %v9535
      %v9552 = vadd.f32 %v9520, %v9536
      %v9553 = vadd.f32 %v9521, %v9537
      %v9554 = vadd.f32 %v9522, %v9538
      %v9555 = vadd.f32 %v9523, %v9539
      %v9556 = vadd.f32 %v9524, %v9540
      %v9557 = vadd.f32 %v9525, %v9541
      %v9558 = vadd.f32 %v9526, %v9542
      %v9559 = vadd.f32 %v9527, %v9543
      %v9560 = vld [vmem:[#allocation4 + $0xf] sm:$0x1]
      %v9561 = vld [vmem:[#allocation4 + $0x1f] sm:$0x1]
      %v9562 = vld [vmem:[#allocation4 + $0x2f] sm:$0x1]
      %v9563 = vld [vmem:[#allocation4 + $0x3f] sm:$0x1]
      %v9564 = vld [vmem:[#allocation4 + $0x4f] sm:$0x1]
      %v9565 = vld [vmem:[#allocation4 + $0x5f] sm:$0x1]
      %v9566 = vld [vmem:[#allocation4 + $0x6f] sm:$0x1]
      %v9567 = vld [vmem:[#allocation4 + $0x7f] sm:$0x1]
      %v9568 = vld [vmem:[#allocation4 + $0x8f] sm:$0x1]
      %v9569 = vld [vmem:[#allocation4 + $0x9f] sm:$0x1]
      %v9570 = vld [vmem:[#allocation4 + $0xaf] sm:$0x1]
      %v9571 = vld [vmem:[#allocation4 + $0xbf] sm:$0x1]
      %v9572 = vld [vmem:[#allocation4 + $0xcf] sm:$0x1]
      %v9573 = vld [vmem:[#allocation4 + $0xdf] sm:$0x1]
      %v9574 = vld [vmem:[#allocation4 + $0xef] sm:$0x1]
      %v9575 = vld [vmem:[#allocation4 + $0xff] sm:$0x1]
      %v9576 = vld [vmem:[%s327 + $0xf] sm:$0x1]
      %v9577 = vld [vmem:[%s327 + $0x1f] sm:$0x1]
      %v9578 = vld [vmem:[%s327 + $0x2f] sm:$0x1]
      %v9579 = vld [vmem:[%s327 + $0x3f] sm:$0x1]
      %v9580 = vld [vmem:[%s327 + $0x4f] sm:$0x1]
      %v9581 = vld [vmem:[%s327 + $0x5f] sm:$0x1]
      %v9582 = vld [vmem:[%s327 + $0x6f] sm:$0x1]
      %v9583 = vld [vmem:[%s327 + $0x7f] sm:$0x1]
      %v9584 = vld [vmem:[%s327 + $0x8f] sm:$0x1]
      %v9585 = vld [vmem:[%s327 + $0x9f] sm:$0x1]
      %v9586 = vld [vmem:[%s327 + $0xaf] sm:$0x1]
      %v9587 = vld [vmem:[%s327 + $0xbf] sm:$0x1]
      %v9588 = vld [vmem:[%s327 + $0xcf] sm:$0x1]
      %v9589 = vld [vmem:[%s327 + $0xdf] sm:$0x1]
      %v9590 = vld [vmem:[%s327 + $0xef] sm:$0x1]
      %v9591 = vld [vmem:[%s327 + $0xff] sm:$0x1]
      %v9592 = vadd.f32 %v9560, %v9576
      %v9593 = vadd.f32 %v9561, %v9577
      %v9594 = vadd.f32 %v9562, %v9578
      %v9595 = vadd.f32 %v9563, %v9579
      %v9596 = vadd.f32 %v9564, %v9580
      %v9597 = vadd.f32 %v9565, %v9581
      %v9598 = vadd.f32 %v9566, %v9582
      %v9599 = vadd.f32 %v9567, %v9583
      %v9600 = vadd.f32 %v9568, %v9584
      %v9601 = vadd.f32 %v9569, %v9585
      %v9602 = vadd.f32 %v9570, %v9586
      %v9603 = vadd.f32 %v9571, %v9587
      %v9604 = vadd.f32 %v9572, %v9588
      %v9605 = vadd.f32 %v9573, %v9589
      %v9606 = vadd.f32 %v9574, %v9590
      %v9607 = vadd.f32 %v9575, %v9591
      %v9624 = vrot.slane %v8873, 7
      %vm9625 = vcmask 1041409
      %v9626 = vsel %vm9625, %v9624, %v8872
      %v9627 = vrot.slane %v8874, 6
      %vm9628 = vcmask 1042434
      %v9629 = vsel %vm9628, %v9627, %v9626
      %v9630 = vrot.slane %v8875, 5
      %vm9631 = vcmask 1043459
      %v9632 = vsel %vm9631, %v9630, %v9629
      %v9633 = vrot.slane %v8876, 4
      %vm9634 = vcmask 1044484
      %v9635 = vsel %vm9634, %v9633, %v9632
      %v9636 = vrot.slane %v8877, 3
      %vm9637 = vcmask 1045509
      %v9638 = vsel %vm9637, %v9636, %v9635
      %v9639 = vrot.slane %v8878, 2
      %vm9640 = vcmask 1046534
      %v9641 = vsel %vm9640, %v9639, %v9638
      %v9642 = vrot.slane %v8879, 1
      %vm9643 = vcmask 1047559
      %v9644 = vsel %vm9643, %v9642, %v9641
      %v9645 = vrot.slane %v8881, 7
      %v9646 = vsel %vm9625, %v9645, %v8880
      %v9647 = vrot.slane %v8882, 6
      %v9648 = vsel %vm9628, %v9647, %v9646
      %v9649 = vrot.slane %v8883, 5
      %v9650 = vsel %vm9631, %v9649, %v9648
      %v9651 = vrot.slane %v8884, 4
      %v9652 = vsel %vm9634, %v9651, %v9650
      %v9653 = vrot.slane %v8885, 3
      %v9654 = vsel %vm9637, %v9653, %v9652
      %v9655 = vrot.slane %v8886, 2
      %v9656 = vsel %vm9640, %v9655, %v9654
      %v9657 = vrot.slane %v8887, 1
      %v9658 = vsel %vm9643, %v9657, %v9656
      %v9677 = vrot.slane %v8921, 7
      %v9678 = vsel %vm9625, %v9677, %v8920
      %v9679 = vrot.slane %v8922, 6
      %v9680 = vsel %vm9628, %v9679, %v9678
      %v9681 = vrot.slane %v8923, 5
      %v9682 = vsel %vm9631, %v9681, %v9680
      %v9683 = vrot.slane %v8924, 4
      %v9684 = vsel %vm9634, %v9683, %v9682
      %v9685 = vrot.slane %v8925, 3
      %v9686 = vsel %vm9637, %v9685, %v9684
      %v9687 = vrot.slane %v8926, 2
      %v9688 = vsel %vm9640, %v9687, %v9686
      %v9689 = vrot.slane %v8927, 1
      %v9690 = vsel %vm9643, %v9689, %v9688
      %v9691 = vrot.slane %v8929, 7
      %v9692 = vsel %vm9625, %v9691, %v8928
      %v9693 = vrot.slane %v8930, 6
      %v9694 = vsel %vm9628, %v9693, %v9692
      %v9695 = vrot.slane %v8931, 5
      %v9696 = vsel %vm9631, %v9695, %v9694
      %v9697 = vrot.slane %v8932, 4
      %v9698 = vsel %vm9634, %v9697, %v9696
      %v9699 = vrot.slane %v8933, 3
      %v9700 = vsel %vm9637, %v9699, %v9698
      %v9701 = vrot.slane %v8934, 2
      %v9702 = vsel %vm9640, %v9701, %v9700
      %v9703 = vrot.slane %v8935, 1
      %v9704 = vsel %vm9643, %v9703, %v9702
      %9705 = vrot.lane.b32.xlu0 %v9690, 8
      %v9706 = vpop.permute.xlu0 %9705
      %9707 = vrot.lane.b32.xlu0 %v9704, 8
      %v9708 = vpop.permute.xlu0 %9707
      %v9727 = vrot.slane %v8969, 7
      %v9728 = vsel %vm9625, %v9727, %v8968
      %v9729 = vrot.slane %v8970, 6
      %v9730 = vsel %vm9628, %v9729, %v9728
      %v9731 = vrot.slane %v8971, 5
      %v9732 = vsel %vm9631, %v9731, %v9730
      %v9733 = vrot.slane %v8972, 4
      %v9734 = vsel %vm9634, %v9733, %v9732
      %v9735 = vrot.slane %v8973, 3
      %v9736 = vsel %vm9637, %v9735, %v9734
      %v9737 = vrot.slane %v8974, 2
      %v9738 = vsel %vm9640, %v9737, %v9736
      %v9739 = vrot.slane %v8975, 1
      %v9740 = vsel %vm9643, %v9739, %v9738
      %v9741 = vrot.slane %v8977, 7
      %v9742 = vsel %vm9625, %v9741, %v8976
      %v9743 = vrot.slane %v8978, 6
      %v9744 = vsel %vm9628, %v9743, %v9742
      %v9745 = vrot.slane %v8979, 5
      %v9746 = vsel %vm9631, %v9745, %v9744
      %v9747 = vrot.slane %v8980, 4
      %v9748 = vsel %vm9634, %v9747, %v9746
      %v9749 = vrot.slane %v8981, 3
      %v9750 = vsel %vm9637, %v9749, %v9748
      %v9751 = vrot.slane %v8982, 2
      %v9752 = vsel %vm9640, %v9751, %v9750
      %v9753 = vrot.slane %v8983, 1
      %v9754 = vsel %vm9643, %v9753, %v9752
      %9755 = vrot.lane.b32.xlu0 %v9740, 16
      %v9756 = vpop.permute.xlu0 %9755
      %9757 = vrot.lane.b32.xlu0 %v9754, 16
      %v9758 = vpop.permute.xlu0 %9757
      %v9777 = vrot.slane %v9017, 7
      %v9778 = vsel %vm9625, %v9777, %v9016
      %v9779 = vrot.slane %v9018, 6
      %v9780 = vsel %vm9628, %v9779, %v9778
      %v9781 = vrot.slane %v9019, 5
      %v9782 = vsel %vm9631, %v9781, %v9780
      %v9783 = vrot.slane %v9020, 4
      %v9784 = vsel %vm9634, %v9783, %v9782
      %v9785 = vrot.slane %v9021, 3
      %v9786 = vsel %vm9637, %v9785, %v9784
      %v9787 = vrot.slane %v9022, 2
      %v9788 = vsel %vm9640, %v9787, %v9786
      %v9789 = vrot.slane %v9023, 1
      %v9790 = vsel %vm9643, %v9789, %v9788
      %v9791 = vrot.slane %v9025, 7
      %v9792 = vsel %vm9625, %v9791, %v9024
      %v9793 = vrot.slane %v9026, 6
      %v9794 = vsel %vm9628, %v9793, %v9792
      %v9795 = vrot.slane %v9027, 5
      %v9796 = vsel %vm9631, %v9795, %v9794
      %v9797 = vrot.slane %v9028, 4
      %v9798 = vsel %vm9634, %v9797, %v9796
      %v9799 = vrot.slane %v9029, 3
      %v9800 = vsel %vm9637, %v9799, %v9798
      %v9801 = vrot.slane %v9030, 2
      %v9802 = vsel %vm9640, %v9801, %v9800
      %v9803 = vrot.slane %v9031, 1
      %v9804 = vsel %vm9643, %v9803, %v9802
      %9805 = vrot.lane.b32.xlu0 %v9790, 24
      %v9806 = vpop.permute.xlu0 %9805
      %9807 = vrot.lane.b32.xlu0 %v9804, 24
      %v9808 = vpop.permute.xlu0 %9807
      %v9827 = vrot.slane %v9065, 7
      %v9828 = vsel %vm9625, %v9827, %v9064
      %v9829 = vrot.slane %v9066, 6
      %v9830 = vsel %vm9628, %v9829, %v9828
      %v9831 = vrot.slane %v9067, 5
      %v9832 = vsel %vm9631, %v9831, %v9830
      %v9833 = vrot.slane %v9068, 4
      %v9834 = vsel %vm9634, %v9833, %v9832
      %v9835 = vrot.slane %v9069, 3
      %v9836 = vsel %vm9637, %v9835, %v9834
      %v9837 = vrot.slane %v9070, 2
      %v9838 = vsel %vm9640, %v9837, %v9836
      %v9839 = vrot.slane %v9071, 1
      %v9840 = vsel %vm9643, %v9839, %v9838
      %v9841 = vrot.slane %v9073, 7
      %v9842 = vsel %vm9625, %v9841, %v9072
      %v9843 = vrot.slane %v9074, 6
      %v9844 = vsel %vm9628, %v9843, %v9842
      %v9845 = vrot.slane %v9075, 5
      %v9846 = vsel %vm9631, %v9845, %v9844
      %v9847 = vrot.slane %v9076, 4
      %v9848 = vsel %vm9634, %v9847, %v9846
      %v9849 = vrot.slane %v9077, 3
      %v9850 = vsel %vm9637, %v9849, %v9848
      %v9851 = vrot.slane %v9078, 2
      %v9852 = vsel %vm9640, %v9851, %v9850
      %v9853 = vrot.slane %v9079, 1
      %v9854 = vsel %vm9643, %v9853, %v9852
      %9855 = vrot.lane.b32.xlu0 %v9840, 32
      %v9856 = vpop.permute.xlu0 %9855
      %9857 = vrot.lane.b32.xlu0 %v9854, 32
      %v9858 = vpop.permute.xlu0 %9857
      %v9877 = vrot.slane %v9113, 7
      %v9878 = vsel %vm9625, %v9877, %v9112
      %v9879 = vrot.slane %v9114, 6
      %v9880 = vsel %vm9628, %v9879, %v9878
      %v9881 = vrot.slane %v9115, 5
      %v9882 = vsel %vm9631, %v9881, %v9880
      %v9883 = vrot.slane %v9116, 4
      %v9884 = vsel %vm9634, %v9883, %v9882
      %v9885 = vrot.slane %v9117, 3
      %v9886 = vsel %vm9637, %v9885, %v9884
      %v9887 = vrot.slane %v9118, 2
      %v9888 = vsel %vm9640, %v9887, %v9886
      %v9889 = vrot.slane %v9119, 1
      %v9890 = vsel %vm9643, %v9889, %v9888
      %v9891 = vrot.slane %v9121, 7
      %v9892 = vsel %vm9625, %v9891, %v9120
      %v9893 = vrot.slane %v9122, 6
      %v9894 = vsel %vm9628, %v9893, %v9892
      %v9895 = vrot.slane %v9123, 5
      %v9896 = vsel %vm9631, %v9895, %v9894
      %v9897 = vrot.slane %v9124, 4
      %v9898 = vsel %vm9634, %v9897, %v9896
      %v9899 = vrot.slane %v9125, 3
      %v9900 = vsel %vm9637, %v9899, %v9898
      %v9901 = vrot.slane %v9126, 2
      %v9902 = vsel %vm9640, %v9901, %v9900
      %v9903 = vrot.slane %v9127, 1
      %v9904 = vsel %vm9643, %v9903, %v9902
      %9905 = vrot.lane.b32.xlu0 %v9890, 40
      %v9906 = vpop.permute.xlu0 %9905
      %9907 = vrot.lane.b32.xlu0 %v9904, 40
      %v9908 = vpop.permute.xlu0 %9907
      %v9927 = vrot.slane %v9161, 7
      %v9928 = vsel %vm9625, %v9927, %v9160
      %v9929 = vrot.slane %v9162, 6
      %v9930 = vsel %vm9628, %v9929, %v9928
      %v9931 = vrot.slane %v9163, 5
      %v9932 = vsel %vm9631, %v9931, %v9930
      %v9933 = vrot.slane %v9164, 4
      %v9934 = vsel %vm9634, %v9933, %v9932
      %v9935 = vrot.slane %v9165, 3
      %v9936 = vsel %vm9637, %v9935, %v9934
      %v9937 = vrot.slane %v9166, 2
      %v9938 = vsel %vm9640, %v9937, %v9936
      %v9939 = vrot.slane %v9167, 1
      %v9940 = vsel %vm9643, %v9939, %v9938
      %v9941 = vrot.slane %v9169, 7
      %v9942 = vsel %vm9625, %v9941, %v9168
      %v9943 = vrot.slane %v9170, 6
      %v9944 = vsel %vm9628, %v9943, %v9942
      %v9945 = vrot.slane %v9171, 5
      %v9946 = vsel %vm9631, %v9945, %v9944
      %v9947 = vrot.slane %v9172, 4
      %v9948 = vsel %vm9634, %v9947, %v9946
      %v9949 = vrot.slane %v9173, 3
      %v9950 = vsel %vm9637, %v9949, %v9948
      %v9951 = vrot.slane %v9174, 2
      %v9952 = vsel %vm9640, %v9951, %v9950
      %v9953 = vrot.slane %v9175, 1
      %v9954 = vsel %vm9643, %v9953, %v9952
      %9955 = vrot.lane.b32.xlu0 %v9940, 48
      %v9956 = vpop.permute.xlu0 %9955
      %9957 = vrot.lane.b32.xlu0 %v9954, 48
      %v9958 = vpop.permute.xlu0 %9957
      %v9977 = vrot.slane %v9209, 7
      %v9978 = vsel %vm9625, %v9977, %v9208
      %v9979 = vrot.slane %v9210, 6
      %v9980 = vsel %vm9628, %v9979, %v9978
      %v9981 = vrot.slane %v9211, 5
      %v9982 = vsel %vm9631, %v9981, %v9980
      %v9983 = vrot.slane %v9212, 4
      %v9984 = vsel %vm9634, %v9983, %v9982
      %v9985 = vrot.slane %v9213, 3
      %v9986 = vsel %vm9637, %v9985, %v9984
      %v9987 = vrot.slane %v9214, 2
      %v9988 = vsel %vm9640, %v9987, %v9986
      %v9989 = vrot.slane %v9215, 1
      %v9990 = vsel %vm9643, %v9989, %v9988
      %v9991 = vrot.slane %v9217, 7
      %v9992 = vsel %vm9625, %v9991, %v9216
      %v9993 = vrot.slane %v9218, 6
      %v9994 = vsel %vm9628, %v9993, %v9992
      %v9995 = vrot.slane %v9219, 5
      %v9996 = vsel %vm9631, %v9995, %v9994
      %v9997 = vrot.slane %v9220, 4
      %v9998 = vsel %vm9634, %v9997, %v9996
      %v9999 = vrot.slane %v9221, 3
      %v10000 = vsel %vm9637, %v9999, %v9998
      %v10001 = vrot.slane %v9222, 2
      %v10002 = vsel %vm9640, %v10001, %v10000
      %v10003 = vrot.slane %v9223, 1
      %v10004 = vsel %vm9643, %v10003, %v10002
      %10005 = vrot.lane.b32.xlu0 %v9990, 56
      %v10006 = vpop.permute.xlu0 %10005
      %10007 = vrot.lane.b32.xlu0 %v10004, 56
      %v10008 = vpop.permute.xlu0 %10007
      %v10027 = vrot.slane %v9257, 7
      %v10028 = vsel %vm9625, %v10027, %v9256
      %v10029 = vrot.slane %v9258, 6
      %v10030 = vsel %vm9628, %v10029, %v10028
      %v10031 = vrot.slane %v9259, 5
      %v10032 = vsel %vm9631, %v10031, %v10030
      %v10033 = vrot.slane %v9260, 4
      %v10034 = vsel %vm9634, %v10033, %v10032
      %v10035 = vrot.slane %v9261, 3
      %v10036 = vsel %vm9637, %v10035, %v10034
      %v10037 = vrot.slane %v9262, 2
      %v10038 = vsel %vm9640, %v10037, %v10036
      %v10039 = vrot.slane %v9263, 1
      %v10040 = vsel %vm9643, %v10039, %v10038
      %v10041 = vrot.slane %v9265, 7
      %v10042 = vsel %vm9625, %v10041, %v9264
      %v10043 = vrot.slane %v9266, 6
      %v10044 = vsel %vm9628, %v10043, %v10042
      %v10045 = vrot.slane %v9267, 5
      %v10046 = vsel %vm9631, %v10045, %v10044
      %v10047 = vrot.slane %v9268, 4
      %v10048 = vsel %vm9634, %v10047, %v10046
      %v10049 = vrot.slane %v9269, 3
      %v10050 = vsel %vm9637, %v10049, %v10048
      %v10051 = vrot.slane %v9270, 2
      %v10052 = vsel %vm9640, %v10051, %v10050
      %v10053 = vrot.slane %v9271, 1
      %v10054 = vsel %vm9643, %v10053, %v10052
      %10055 = vrot.lane.b32.xlu0 %v10040, 64
      %v10056 = vpop.permute.xlu0 %10055
      %10057 = vrot.lane.b32.xlu0 %v10054, 64
      %v10058 = vpop.permute.xlu0 %10057
      %v10077 = vrot.slane %v9305, 7
      %v10078 = vsel %vm9625, %v10077, %v9304
      %v10079 = vrot.slane %v9306, 6
      %v10080 = vsel %vm9628, %v10079, %v10078
      %v10081 = vrot.slane %v9307, 5
      %v10082 = vsel %vm9631, %v10081, %v10080
      %v10083 = vrot.slane %v9308, 4
      %v10084 = vsel %vm9634, %v10083, %v10082
      %v10085 = vrot.slane %v9309, 3
      %v10086 = vsel %vm9637, %v10085, %v10084
      %v10087 = vrot.slane %v9310, 2
      %v10088 = vsel %vm9640, %v10087, %v10086
      %v10089 = vrot.slane %v9311, 1
      %v10090 = vsel %vm9643, %v10089, %v10088
      %v10091 = vrot.slane %v9313, 7
      %v10092 = vsel %vm9625, %v10091, %v9312
      %v10093 = vrot.slane %v9314, 6
      %v10094 = vsel %vm9628, %v10093, %v10092
      %v10095 = vrot.slane %v9315, 5
      %v10096 = vsel %vm9631, %v10095, %v10094
      %v10097 = vrot.slane %v9316, 4
      %v10098 = vsel %vm9634, %v10097, %v10096
      %v10099 = vrot.slane %v9317, 3
      %v10100 = vsel %vm9637, %v10099, %v10098
      %v10101 = vrot.slane %v9318, 2
      %v10102 = vsel %vm9640, %v10101, %v10100
      %v10103 = vrot.slane %v9319, 1
      %v10104 = vsel %vm9643, %v10103, %v10102
      %10105 = vrot.lane.b32.xlu0 %v10090, 72
      %v10106 = vpop.permute.xlu0 %10105
      %10107 = vrot.lane.b32.xlu0 %v10104, 72
      %v10108 = vpop.permute.xlu0 %10107
      %v10127 = vrot.slane %v9353, 7
      %v10128 = vsel %vm9625, %v10127, %v9352
      %v10129 = vrot.slane %v9354, 6
      %v10130 = vsel %vm9628, %v10129, %v10128
      %v10131 = vrot.slane %v9355, 5
      %v10132 = vsel %vm9631, %v10131, %v10130
      %v10133 = vrot.slane %v9356, 4
      %v10134 = vsel %vm9634, %v10133, %v10132
      %v10135 = vrot.slane %v9357, 3
      %v10136 = vsel %vm9637, %v10135, %v10134
      %v10137 = vrot.slane %v9358, 2
      %v10138 = vsel %vm9640, %v10137, %v10136
      %v10139 = vrot.slane %v9359, 1
      %v10140 = vsel %vm9643, %v10139, %v10138
      %v10141 = vrot.slane %v9361, 7
      %v10142 = vsel %vm9625, %v10141, %v9360
      %v10143 = vrot.slane %v9362, 6
      %v10144 = vsel %vm9628, %v10143, %v10142
      %v10145 = vrot.slane %v9363, 5
      %v10146 = vsel %vm9631, %v10145, %v10144
      %v10147 = vrot.slane %v9364, 4
      %v10148 = vsel %vm9634, %v10147, %v10146
      %v10149 = vrot.slane %v9365, 3
      %v10150 = vsel %vm9637, %v10149, %v10148
      %v10151 = vrot.slane %v9366, 2
      %v10152 = vsel %vm9640, %v10151, %v10150
      %v10153 = vrot.slane %v9367, 1
      %v10154 = vsel %vm9643, %v10153, %v10152
      %10155 = vrot.lane.b32.xlu0 %v10140, 80
      %v10156 = vpop.permute.xlu0 %10155
      %10157 = vrot.lane.b32.xlu0 %v10154, 80
      %v10158 = vpop.permute.xlu0 %10157
      %v10177 = vrot.slane %v9401, 7
      %v10178 = vsel %vm9625, %v10177, %v9400
      %v10179 = vrot.slane %v9402, 6
      %v10180 = vsel %vm9628, %v10179, %v10178
      %v10181 = vrot.slane %v9403, 5
      %v10182 = vsel %vm9631, %v10181, %v10180
      %v10183 = vrot.slane %v9404, 4
      %v10184 = vsel %vm9634, %v10183, %v10182
      %v10185 = vrot.slane %v9405, 3
      %v10186 = vsel %vm9637, %v10185, %v10184
      %v10187 = vrot.slane %v9406, 2
      %v10188 = vsel %vm9640, %v10187, %v10186
      %v10189 = vrot.slane %v9407, 1
      %v10190 = vsel %vm9643, %v10189, %v10188
      %v10191 = vrot.slane %v9409, 7
      %v10192 = vsel %vm9625, %v10191, %v9408
      %v10193 = vrot.slane %v9410, 6
      %v10194 = vsel %vm9628, %v10193, %v10192
      %v10195 = vrot.slane %v9411, 5
      %v10196 = vsel %vm9631, %v10195, %v10194
      %v10197 = vrot.slane %v9412, 4
      %v10198 = vsel %vm9634, %v10197, %v10196
      %v10199 = vrot.slane %v9413, 3
      %v10200 = vsel %vm9637, %v10199, %v10198
      %v10201 = vrot.slane %v9414, 2
      %v10202 = vsel %vm9640, %v10201, %v10200
      %v10203 = vrot.slane %v9415, 1
      %v10204 = vsel %vm9643, %v10203, %v10202
      %10205 = vrot.lane.b32.xlu0 %v10190, 88
      %v10206 = vpop.permute.xlu0 %10205
      %10207 = vrot.lane.b32.xlu0 %v10204, 88
      %v10208 = vpop.permute.xlu0 %10207
      %v10227 = vrot.slane %v9449, 7
      %v10228 = vsel %vm9625, %v10227, %v9448
      %v10229 = vrot.slane %v9450, 6
      %v10230 = vsel %vm9628, %v10229, %v10228
      %v10231 = vrot.slane %v9451, 5
      %v10232 = vsel %vm9631, %v10231, %v10230
      %v10233 = vrot.slane %v9452, 4
      %v10234 = vsel %vm9634, %v10233, %v10232
      %v10235 = vrot.slane %v9453, 3
      %v10236 = vsel %vm9637, %v10235, %v10234
      %v10237 = vrot.slane %v9454, 2
      %v10238 = vsel %vm9640, %v10237, %v10236
      %v10239 = vrot.slane %v9455, 1
      %v10240 = vsel %vm9643, %v10239, %v10238
      %v10241 = vrot.slane %v9457, 7
      %v10242 = vsel %vm9625, %v10241, %v9456
      %v10243 = vrot.slane %v9458, 6
      %v10244 = vsel %vm9628, %v10243, %v10242
      %v10245 = vrot.slane %v9459, 5
      %v10246 = vsel %vm9631, %v10245, %v10244
      %v10247 = vrot.slane %v9460, 4
      %v10248 = vsel %vm9634, %v10247, %v10246
      %v10249 = vrot.slane %v9461, 3
      %v10250 = vsel %vm9637, %v10249, %v10248
      %v10251 = vrot.slane %v9462, 2
      %v10252 = vsel %vm9640, %v10251, %v10250
      %v10253 = vrot.slane %v9463, 1
      %v10254 = vsel %vm9643, %v10253, %v10252
      %10255 = vrot.lane.b32.xlu0 %v10240, 96
      %v10256 = vpop.permute.xlu0 %10255
      %10257 = vrot.lane.b32.xlu0 %v10254, 96
      %v10258 = vpop.permute.xlu0 %10257
      %v10277 = vrot.slane %v9497, 7
      %v10278 = vsel %vm9625, %v10277, %v9496
      %v10279 = vrot.slane %v9498, 6
      %v10280 = vsel %vm9628, %v10279, %v10278
      %v10281 = vrot.slane %v9499, 5
      %v10282 = vsel %vm9631, %v10281, %v10280
      %v10283 = vrot.slane %v9500, 4
      %v10284 = vsel %vm9634, %v10283, %v10282
      %v10285 = vrot.slane %v9501, 3
      %v10286 = vsel %vm9637, %v10285, %v10284
      %v10287 = vrot.slane %v9502, 2
      %v10288 = vsel %vm9640, %v10287, %v10286
      %v10289 = vrot.slane %v9503, 1
      %v10290 = vsel %vm9643, %v10289, %v10288
      %v10291 = vrot.slane %v9505, 7
      %v10292 = vsel %vm9625, %v10291, %v9504
      %v10293 = vrot.slane %v9506, 6
      %v10294 = vsel %vm9628, %v10293, %v10292
      %v10295 = vrot.slane %v9507, 5
      %v10296 = vsel %vm9631, %v10295, %v10294
      %v10297 = vrot.slane %v9508, 4
      %v10298 = vsel %vm9634, %v10297, %v10296
      %v10299 = vrot.slane %v9509, 3
      %v10300 = vsel %vm9637, %v10299, %v10298
      %v10301 = vrot.slane %v9510, 2
      %v10302 = vsel %vm9640, %v10301, %v10300
      %v10303 = vrot.slane %v9511, 1
      %v10304 = vsel %vm9643, %v10303, %v10302
      %10305 = vrot.lane.b32.xlu0 %v10290, 104
      %v10306 = vpop.permute.xlu0 %10305
      %10307 = vrot.lane.b32.xlu0 %v10304, 104
      %v10308 = vpop.permute.xlu0 %10307
      %v10327 = vrot.slane %v9545, 7
      %v10328 = vsel %vm9625, %v10327, %v9544
      %v10329 = vrot.slane %v9546, 6
      %v10330 = vsel %vm9628, %v10329, %v10328
      %v10331 = vrot.slane %v9547, 5
      %v10332 = vsel %vm9631, %v10331, %v10330
      %v10333 = vrot.slane %v9548, 4
      %v10334 = vsel %vm9634, %v10333, %v10332
      %v10335 = vrot.slane %v9549, 3
      %v10336 = vsel %vm9637, %v10335, %v10334
      %v10337 = vrot.slane %v9550, 2
      %v10338 = vsel %vm9640, %v10337, %v10336
      %v10339 = vrot.slane %v9551, 1
      %v10340 = vsel %vm9643, %v10339, %v10338
      %v10341 = vrot.slane %v9553, 7
      %v10342 = vsel %vm9625, %v10341, %v9552
      %v10343 = vrot.slane %v9554, 6
      %v10344 = vsel %vm9628, %v10343, %v10342
      %v10345 = vrot.slane %v9555, 5
      %v10346 = vsel %vm9631, %v10345, %v10344
      %v10347 = vrot.slane %v9556, 4
      %v10348 = vsel %vm9634, %v10347, %v10346
      %v10349 = vrot.slane %v9557, 3
      %v10350 = vsel %vm9637, %v10349, %v10348
      %v10351 = vrot.slane %v9558, 2
      %v10352 = vsel %vm9640, %v10351, %v10350
      %v10353 = vrot.slane %v9559, 1
      %v10354 = vsel %vm9643, %v10353, %v10352
      %10355 = vrot.lane.b32.xlu0 %v10340, 112
      %v10356 = vpop.permute.xlu0 %10355
      %10357 = vrot.lane.b32.xlu0 %v10354, 112
      %v10358 = vpop.permute.xlu0 %10357
      %v10377 = vrot.slane %v9593, 7
      %v10378 = vsel %vm9625, %v10377, %v9592
      %v10379 = vrot.slane %v9594, 6
      %v10380 = vsel %vm9628, %v10379, %v10378
      %v10381 = vrot.slane %v9595, 5
      %v10382 = vsel %vm9631, %v10381, %v10380
      %v10383 = vrot.slane %v9596, 4
      %v10384 = vsel %vm9634, %v10383, %v10382
      %v10385 = vrot.slane %v9597, 3
      %v10386 = vsel %vm9637, %v10385, %v10384
      %v10387 = vrot.slane %v9598, 2
      %v10388 = vsel %vm9640, %v10387, %v10386
      %v10389 = vrot.slane %v9599, 1
      %v10390 = vsel %vm9643, %v10389, %v10388
      %v10391 = vrot.slane %v9601, 7
      %v10392 = vsel %vm9625, %v10391, %v9600
      %v10393 = vrot.slane %v9602, 6
      %v10394 = vsel %vm9628, %v10393, %v10392
      %v10395 = vrot.slane %v9603, 5
      %v10396 = vsel %vm9631, %v10395, %v10394
      %v10397 = vrot.slane %v9604, 4
      %v10398 = vsel %vm9634, %v10397, %v10396
      %v10399 = vrot.slane %v9605, 3
      %v10400 = vsel %vm9637, %v10399, %v10398
      %v10401 = vrot.slane %v9606, 2
      %v10402 = vsel %vm9640, %v10401, %v10400
      %v10403 = vrot.slane %v9607, 1
      %v10404 = vsel %vm9643, %v10403, %v10402
      %10405 = vrot.lane.b32.xlu0 %v10390, 120
      %v10406 = vpop.permute.xlu0 %10405
      %10407 = vrot.lane.b32.xlu0 %v10404, 120
      %v10408 = vpop.permute.xlu0 %10407
      %v10411 = vsel %vm413, %v9644, %v9706
      %v10412 = vsel %vm413, %v9658, %v9708
      %v10413 = vsel %vm1791, %v10411, %v9756
      %v10414 = vsel %vm1791, %v10412, %v9758
      %v10415 = vsel %vm334, %v10413, %v9806
      %v10416 = vsel %vm334, %v10414, %v9808
      %v10417 = vsel %vm1856, %v10415, %v9856
      %v10418 = vsel %vm1856, %v10416, %v9858
      %v10419 = vsel %vm1889, %v10417, %v9906
      %v10420 = vsel %vm1889, %v10418, %v9908
      %v10421 = vsel %vm1922, %v10419, %v9956
      %v10422 = vsel %vm1922, %v10420, %v9958
      %v10423 = vsel %vm1955, %v10421, %v10006
      %v10424 = vsel %vm1955, %v10422, %v10008
      %v10425 = vsel %vm1988, %v10423, %v10056
      %v10426 = vsel %vm1988, %v10424, %v10058
      %v10427 = vsel %vm2021, %v10425, %v10106
      %v10428 = vsel %vm2021, %v10426, %v10108
      %vm10429 = vcmask 654336
      %v10430 = vsel %vm10429, %v10427, %v10156
      %v10431 = vsel %vm10429, %v10428, %v10158
      %v10432 = vsel %vm8036, %v10430, %v10206
      %v10433 = vsel %vm8036, %v10431, %v10208
      %vm10434 = vcmask 785408
      %v10435 = vsel %vm10434, %v10432, %v10256
      %v10436 = vsel %vm10434, %v10433, %v10258
      %vm10437 = vcmask 850944
      %v10438 = vsel %vm10437, %v10435, %v10306
      %v10439 = vsel %vm10437, %v10436, %v10308
      %vm10440 = vcmask 916480
      %v10441 = vsel %vm10440, %v10438, %v10356
      %v10442 = vsel %vm10440, %v10439, %v10358
      %vm10443 = vcmask 982016
      %v10444 = vsel %vm10443, %v10441, %v10406
      %v10445 = vsel %vm10443, %v10442, %v10408
      %10446 = vst [vmem:[%s332] sm:$0xff] %v10444
      %10447 = vst [vmem:[%s332 + $0x8] sm:$0xff] %v10445
      %s10448 = smul.u32 2, %s20
      %p10449 = scmp.lt.s32.totalorder %s10448, 3
      %s10450 = scalar_select %p10449, %s10448, 3
      %s10451 = smul.addr %s10450, 8
      %s10452 = scalar_lea.vmem %s9, %s10451
      // Predicated region
      $region57: #{rdb_forward.1} parent=55 // pred_check
        %p10453 = pneg %p232
      $region58: #{rdb_forward.1} parent=55 // pred_check_branch
        %10455 = sbr.rel (%p10453) target = $region60
      $region59: #{rdb_forward.1} parent=55 // pred_region
        %s10456 = smul.u32 2, %s20
      $region60: #{rdb_forward.1} parent=55 // pred_fallthru
        _
    $region56: #{rdb_forward.1} parent=5 // pred_fallthru
      _
    %p10457 = scmp.le.s32.totalorder 2, %s15
    // Predicated region
    $region61: #{rdb_forward.1} parent=5 // pred_check
      %p10458 = pneg %p10457
    $region62: #{rdb_forward.1} parent=5 // pred_check_branch
      %10460 = sbr.rel (%p10458) target = $region64
    $region63: #{rdb_forward.1} parent=5 // pred_region
      %s10461 = ssub.s32 %s15, 2
      // Predicated region
      $region65: #{rdb_forward.1} parent=63 // pred_check
        %p10462 = pneg %p238
      $region66: #{rdb_forward.1} parent=63 // pred_check_branch
        %10464 = sbr.rel (%p10462) target = $region68
      $region67: #{rdb_forward.1} parent=63 // pred_region
        %s10465 = smul.u32 2, %s21
        %p10466 = scmp.lt.s32.totalorder %s10465, 3
        %s10467 = scalar_select %p10466, %s10465, 3
        %s10468 = smul.addr %s10467, 8
        %s10469 = scalar_lea.vmem %s9, %s10468
      $region68: #{rdb_forward.1} parent=63 // pred_fallthru
        _
    $region64: #{rdb_forward.1} parent=5 // pred_fallthru
      _
  $region6: #{rdb_forward.1} parent=0 // loop_footer
    %s19 = sadd.s32 1, %s15
  $region7: #{rdb_forward.1} parent=0 // loop_footer_branch
    %14 = sbr.rel target = $region3
  $region8: #{rdb_forward.1} parent=0 // loop_exit
    _

</llo_original>
